<compile_context>
chip_gen: v7x
topology: tpu7x:2x2x1
jax: 0.10.0
libtpu: 0.0.40
codegen_flags: <defaults>
</compile_context>

<pallas_src>
import functools
import math

import jax
import jax.numpy as jnp
from jax.experimental import pallas as pl
from jax.experimental.pallas import tpu as pltpu

# ----------------------------------------------------------------------------
# Small configuration consistent with the module's forward pass
# ----------------------------------------------------------------------------
BS = 2              # batch size
NC = 2              # num choices
N_NODE = 16         # nodes per graph (node 0 == context node)
SENT_DIM = 32       # LM sentence dim
D = 64              # concept_out_dim == GNN hidden size
N_NTYPE = 4
N_ETYPE = 6
K_LAYERS = 2        # number of GNN layers (k)
GAT_HEADS = 4
DPH = D // GAT_HEADS
POOL_HEADS = 2
POOL_DK = D // POOL_HEADS
N_CONCEPT = 50
FC_DIM = 32
E_PER_GRAPH = 10


# ----------------------------------------------------------------------------
# Pallas kernels
# ----------------------------------------------------------------------------
def _gelu(x):
    c = 0.7978845608028654  # sqrt(2/pi)
    return 0.5 * x * (1.0 + jnp.tanh(c * (x + 0.044715 * x * x * x)))


def _linear_kernel(x_ref, w_ref, b_ref, o_ref, *, act):
    y = jnp.dot(x_ref[...], w_ref[...], preferred_element_type=jnp.float32) + b_ref[...]
    if act == "gelu":
        y = _gelu(y)
    elif act == "relu":
        y = jnp.maximum(y, 0.0)
    o_ref[...] = y


def linear(x, w, b, act="none"):
    """act(x @ w + b) in a single grid=(1,) kernel on full (unpadded) blocks."""
    M, K = x.shape
    N = w.shape[1]
    return pl.pallas_call(
        functools.partial(_linear_kernel, act=act),
        out_shape=jax.ShapeDtypeStruct((M, N), jnp.float32),
        grid=(1,),
        in_specs=[
            pl.BlockSpec((M, K), lambda i: (0, 0)),
            pl.BlockSpec((K, N), lambda i: (0, 0)),
            pl.BlockSpec((1, N), lambda i: (0, 0)),
        ],
        out_specs=pl.BlockSpec((M, N), lambda i: (0, 0)),
    )(x, w, b.reshape(1, N))


def _edge_encoder_kernel(x_ref, w1_ref, b1_ref, w2_ref, b2_ref, o_ref):
    # Linear -> (folded BN) -> ReLU -> Linear, intermediate kept in VMEM.
    h = jnp.dot(x_ref[...], w1_ref[...], preferred_element_type=jnp.float32) + b1_ref[...]
    h = jnp.maximum(h, 0.0)
    o_ref[...] = jnp.dot(h, w2_ref[...], preferred_element_type=jnp.float32) + b2_ref[...]


def edge_encoder(x, w1f, b1f, w2, b2):
    M, K = x.shape
    Nh = w1f.shape[1]
    N = w2.shape[1]
    return pl.pallas_call(
        _edge_encoder_kernel,
        out_shape=jax.ShapeDtypeStruct((M, N), jnp.float32),
        grid=(1,),
        in_specs=[
            pl.BlockSpec((M, K), lambda i: (0, 0)),
            pl.BlockSpec((K, Nh), lambda i: (0, 0)),
            pl.BlockSpec((1, Nh), lambda i: (0, 0)),
            pl.BlockSpec((Nh, N), lambda i: (0, 0)),
            pl.BlockSpec((1, N), lambda i: (0, 0)),
        ],
        out_specs=pl.BlockSpec((M, N), lambda i: (0, 0)),
    )(x, w1f, b1f.reshape(1, Nh), w2, b2.reshape(1, N))


def _gnn_layers_kernel(x0_ref, nfe_ref, ee_ref, S_ref, St_ref, Tm_ref, Tt_ref, P_ref,
                       wki_ref, wjmq_ref, we_ref, bkmq_ref,
                       w1_ref, b1_ref, w2_ref, b2_ref,
                       wvh_ref, bvh_ref, wvx_ref, bvx_ref,
                       out_ref, xbuf, *, inv_sqrt_dh):
    """One grid step == one GAT layer.  X is carried across layers in `xbuf`."""
    k = pl.program_id(0)

    @pl.when(k == 0)
    def _():
        xbuf[...] = x0_ref[...]

    X = xbuf[...]
    nfe = nfe_ref[...]
    S = S_ref[...]
    St = St_ref[...]

    wki = wki_ref[0]      # (2D, 3D)   key projection rows for [X | nfe]
    wjmq = wjmq_ref[0]    # (2D, 3D)   msg+query projection rows for [X | nfe]

    # Node-level projections of concat([X, node_feature_extra]) (the concat is
    # folded into split matmuls), then gathered to edges with one-hot matmuls:
    #   x_i (target rows) -> Tm @ .,   x_j (source rows) -> S @ .
    proj_i = (jnp.dot(X, wki[0:D], preferred_element_type=jnp.float32)
              + jnp.dot(nfe, wki[D:2 * D], preferred_element_type=jnp.float32))    # (Ntot, 3D)
    proj_j = (jnp.dot(X, wjmq[0:D], preferred_element_type=jnp.float32)
              + jnp.dot(nfe, wjmq[D:2 * D], preferred_element_type=jnp.float32))   # (Ntot, 3D)
    kmq = (jnp.dot(Tm_ref[...], proj_i, preferred_element_type=jnp.float32)
           + jnp.dot(S, proj_j, preferred_element_type=jnp.float32)
           + jnp.dot(ee_ref[...], we_ref[0], preferred_element_type=jnp.float32)
           + bkmq_ref[0])                                                           # (Et, 3D)

    key = kmq[:, 0:D]
    msg = kmq[:, D:2 * D]
    qry = kmq[:, 2 * D:3 * D] * inv_sqrt_dh

    # Per-head attention scores, broadcast over each head's DPH lanes via the
    # block-ones matrix P (replaces the degenerate K=4 / N=4 head matmuls and
    # keeps every intermediate lane-dense at width D).
    scores = jnp.dot(qry * key, P_ref[...], preferred_element_type=jnp.float32)     # (Et, D)

    # Grouped (per source node) softmax.  Global max subtraction is exact per
    # group (shift invariance); the clamp keeps every group's denominator
    # >= exp(-60) so no 0/0 can occur.
    p = jnp.exp(jnp.maximum(scores - jnp.max(scores), -60.0))                       # (Et, D)
    denom = jnp.dot(St, p, preferred_element_type=jnp.float32)                      # (Ntot, D)
    deg = jnp.sum(St, axis=1, keepdims=True)                                        # (Ntot, 1) out-degree (>=1, self loops)
    ratio = deg / denom                                                             # (Ntot, D)
    alpha = p * jnp.dot(S, ratio, preferred_element_type=jnp.float32)               # softmax * src edge count
    aggr = jnp.dot(Tt_ref[...], msg * alpha, preferred_element_type=jnp.float32)    # scatter-add by target (Ntot, D)

    # GAT mlp: Linear -> (folded BN) -> ReLU -> Linear, then mp_helper's GELU.
    h1 = jnp.maximum(
        jnp.dot(aggr, w1_ref[0], preferred_element_type=jnp.float32) + b1_ref[0], 0.0)
    x_new = _gelu(jnp.dot(h1, w2_ref[0], preferred_element_type=jnp.float32) + b2_ref[0])
    xbuf[...] = x_new

    @pl.when(k == pl.num_programs(0) - 1)
    def _():
        # output = GELU(Vh(H) + Vx(X_final)); dropout == identity (eval).
        out_ref[...] = _gelu(
            jnp.dot(x0_ref[...], wvh_ref[...], preferred_element_type=jnp.float32) + bvh_ref[...]
            + jnp.dot(x_new, wvx_ref[...], preferred_element_type=jnp.float32) + bvx_ref[...])


def gnn_layers_call(x0, nfe, ee, S, St, Tm, Tt, P, stacked, vh_w, vh_b, vx_w, vx_b):
    Ntot = x0.shape[0]
    Et = ee.shape[0]
    wki, wjmq, we, bkmq, w1, b1, w2, b2 = stacked
    full2 = lambda i: (0, 0)
    perk3 = lambda i: (i, 0, 0)
    return pl.pallas_call(
        functools.partial(_gnn_layers_kernel, inv_sqrt_dh=1.0 / math.sqrt(DPH)),
        out_shape=jax.ShapeDtypeStruct((Ntot, D), jnp.float32),
        grid=(K_LAYERS,),
        in_specs=[
            pl.BlockSpec((Ntot, D), full2),           # x0 (== H flattened)
            pl.BlockSpec((Ntot, D), full2),           # node_feature_extra
            pl.BlockSpec((Et, D), full2),             # edge embeddings
            pl.BlockSpec((Et, Ntot), full2),          # S   (source one-hot)
            pl.BlockSpec((Ntot, Et), full2),          # S^T
            pl.BlockSpec((Et, Ntot), full2),          # Tm  (target one-hot)
            pl.BlockSpec((Ntot, Et), full2),          # Tm^T
            pl.BlockSpec((D, D), full2),              # P   (head block-ones)
            pl.BlockSpec((1, 2 * D, 3 * D), perk3),   # W key    (per layer)
            pl.BlockSpec((1, 2 * D, 3 * D), perk3),   # W msg|qry (per layer)
            pl.BlockSpec((1, D, 3 * D), perk3),       # W edge   (per layer)
            pl.BlockSpec((1, 1, 3 * D), perk3),       # b key|msg|qry
            pl.BlockSpec((1, D, D), perk3),           # mlp W1 (BN folded)
            pl.BlockSpec((1, 1, D), perk3),           # mlp b1 (BN folded)
            pl.BlockSpec((1, D, D), perk3),           # mlp W2
            pl.BlockSpec((1, 1, D), perk3),           # mlp b2
            pl.BlockSpec((D, D), full2),              # Vh W
            pl.BlockSpec((1, D), full2),              # Vh b
            pl.BlockSpec((D, D), full2),              # Vx W
            pl.BlockSpec((1, D), full2),              # Vx b
        ],
        out_specs=pl.BlockSpec((Ntot, D), full2),
        scratch_shapes=[pltpu.VMEM((Ntot, D), jnp.float32)],
        compiler_params=pltpu.CompilerParams(dimension_semantics=("arbitrary",)),
    )(x0, nfe, ee, S, St, Tm, Tt, P, wki, wjmq, we, bkmq, w1, b1, w2, b2,
      vh_w, vh_b.reshape(1, D), vx_w, vx_b.reshape(1, D))


def _pool_attn_kernel(q_ref, k_ref, v_ref, m_ref, out_ref, attn_ref, *, inv_temp):
    # All BH (head, graph) rows in one shot; scores are a lane-dense (BH, BH*L)
    # tile, with a block-diagonal + node mask restricting each row to its graph.
    scores = jax.lax.dot_general(q_ref[...], k_ref[...], (((1,), (1,)), ((), ())),
                                 preferred_element_type=jnp.float32) * inv_temp
    scores = jnp.where(m_ref[...] > 0.5, jnp.float32(-1e30), scores)
    mx = jnp.max(scores, axis=1, keepdims=True)
    p = jnp.exp(scores - mx)
    p = p / jnp.sum(p, axis=1, keepdims=True)
    attn_ref[...] = p
    out_ref[...] = jnp.dot(p, v_ref[...], preferred_element_type=jnp.float32)


def pooled_attention(qs, ks_flat, vs_flat, big_mask, temperature):
    BH, dk = qs.shape
    KL, dv = vs_flat.shape
    out, attn = pl.pallas_call(
        functools.partial(_pool_attn_kernel, inv_temp=1.0 / temperature),
        out_shape=(jax.ShapeDtypeStruct((BH, dv), jnp.float32),
                   jax.ShapeDtypeStruct((BH, KL), jnp.float32)),
        grid=(1,),
        in_specs=[
            pl.BlockSpec((BH, dk), lambda i: (0, 0)),
            pl.BlockSpec((KL, dk), lambda i: (0, 0)),
            pl.BlockSpec((KL, dv), lambda i: (0, 0)),
            pl.BlockSpec((BH, KL), lambda i: (0, 0)),
        ],
        out_specs=(pl.BlockSpec((BH, dv), lambda i: (0, 0)),
                   pl.BlockSpec((BH, KL), lambda i: (0, 0))),
    )(qs, ks_flat, vs_flat, big_mask)
    return out, attn


def _fc_tail_kernel(x_ref, w0_ref, b0_ref, g_ref, be_ref, w1_ref, b1_ref, o_ref, *, eps):
    # fc0 -> LayerNorm -> GELU -> fc1, all intermediates stay in VMEM.
    h = jnp.dot(x_ref[...], w0_ref[...], preferred_element_type=jnp.float32) + b0_ref[...]
    mu = jnp.mean(h, axis=-1, keepdims=True)
    hc = h - mu
    var = jnp.mean(hc * hc, axis=-1, keepdims=True)
    h = _gelu(hc * jax.lax.rsqrt(var + eps) * g_ref[...] + be_ref[...])
    o_ref[...] = jnp.dot(h, w1_ref[...], preferred_element_type=jnp.float32) + b1_ref[...]


def fc_tail(x, w0, b0, gamma, beta, w1, b1, eps=1e-5):
    M, K = x.shape
    Nh = w0.shape[1]
    N = w1.shape[1]
    return pl.pallas_call(
        functools.partial(_fc_tail_kernel, eps=eps),
        out_shape=jax.ShapeDtypeStruct((M, N), jnp.float32),
        grid=(1,),
        in_specs=[
            pl.BlockSpec((M, K), lambda i: (0, 0)),
            pl.BlockSpec((K, Nh), lambda i: (0, 0)),
            pl.BlockSpec((1, Nh), lambda i: (0, 0)),
            pl.BlockSpec((1, Nh), lambda i: (0, 0)),
            pl.BlockSpec((1, Nh), lambda i: (0, 0)),
            pl.BlockSpec((Nh, N), lambda i: (0, 0)),
            pl.BlockSpec((1, N), lambda i: (0, 0)),
        ],
        out_specs=pl.BlockSpec((M, N), lambda i: (0, 0)),
    )(x, w0, b0.reshape(1, Nh), gamma.reshape(1, Nh), beta.reshape(1, Nh),
      w1, b1.reshape(1, N))


# ----------------------------------------------------------------------------
# Parameters (deterministic synthetic init; shapes follow the module __init__)
# ----------------------------------------------------------------------------
def _bn_fold(bn, eps=1e-5):
    scale = bn["gamma"] / jnp.sqrt(bn["var"] + eps)
    shift = bn["beta"] - bn["mean"] * scale
    return scale, shift


def init_params(key):
    it = iter(jax.random.split(key, 40))

    def lin(fin, fout, std=0.05):
        kw, kb = jax.random.split(next(it))
        return {"w": jax.random.normal(kw, (fin, fout), jnp.float32) * std,
                "b": jax.random.normal(kb, (fout,), jnp.float32) * 0.01}

    def bn(n):
        return {"gamma": jnp.ones((n,), jnp.float32), "beta": jnp.zeros((n,), jnp.float32),
                "mean": jnp.zeros((n,), jnp.float32), "var": jnp.ones((n,), jnp.float32)}

    return {
        "concept_emb": jax.random.normal(next(it), (N_CONCEPT + 2, D), jnp.float32) * 0.05,
        "svec2nvec": lin(SENT_DIM, D),
        "emb_node_type": lin(N_NTYPE, D // 2),
        "emb_score": lin(D // 2, D // 2),
        "edge_enc1": lin(N_ETYPE + 1 + 2 * N_NTYPE, D),
        "edge_enc_bn": bn(D),
        "edge_enc2": lin(D, D),
        "gnn_layers": [
            {"key": lin(3 * D, D), "msg": lin(3 * D, D), "query": lin(2 * D, D),
             "mlp1": lin(D, D), "mlp_bn": bn(D), "mlp2": lin(D, D)}
            for _ in range(K_LAYERS)
        ],
        "Vh": lin(D, D),
        "Vx": lin(D, D),
        "pool_q": lin(SENT_DIM, POOL_HEADS * POOL_DK),
        "pool_k": lin(D, POOL_HEADS * POOL_DK),
        "pool_v": lin(D, POOL_HEADS * POOL_DK),
        "fc0": lin(2 * D + SENT_DIM, FC_DIM),
        "fc_ln": {"gamma": jnp.ones((FC_DIM,), jnp.float32),
                  "beta": jnp.zeros((FC_DIM,), jnp.float32)},
        "fc1": lin(FC_DIM, 1),
    }


def _prep_gnn_layer_weights(params):
    """Host-side weight fusion: key|msg|qry concatenated to one N=3D projection
    (split per input block) and BatchNorm folded into the first mlp Linear."""
    wki_l, wjmq_l, we_l, bkmq_l, w1_l, b1_l, w2_l, b2_l = [], [], [], [], [], [], [], []
    for lp in params["gnn_layers"]:
        wk, bk = lp["key"]["w"], lp["key"]["b"]       # (3D, D), (D,)
        wm, bm = lp["msg"]["w"], lp["msg"]["b"]       # (3D, D), (D,)
        wq, bq = lp["query"]["w"], lp["query"]["b"]   # (2D, D), (D,)
        wki = jnp.zeros((2 * D, 3 * D), jnp.float32).at[:, 0:D].set(wk[0:2 * D])
        wjmq = (jnp.zeros((2 * D, 3 * D), jnp.float32)
                .at[:, D:2 * D].set(wm[0:2 * D])
                .at[:, 2 * D:3 * D].set(wq))
        we = (jnp.zeros((D, 3 * D), jnp.float32)
              .at[:, 0:D].set(wk[2 * D:3 * D])
              .at[:, D:2 * D].set(wm[2 * D:3 * D]))
        bkmq = jnp.concatenate([bk, bm, bq])[None, :]                     # (1, 3D)
        sm, sh = _bn_fold(lp["mlp_bn"])
        w1f = lp["mlp1"]["w"] * sm[None, :]
        b1f = (lp["mlp1"]["b"] * sm + sh)[None, :]
        wki_l.append(wki); wjmq_l.append(wjmq); we_l.append(we); bkmq_l.append(bkmq)
        w1_l.append(w1f); b1_l.append(b1f)
        w2_l.append(lp["mlp2"]["w"]); b2_l.append(lp["mlp2"]["b"][None, :])
    stack = lambda xs: jnp.stack(xs, axis=0)
    return (stack(wki_l), stack(wjmq_l), stack(we_l), stack(bkmq_l),
            stack(w1_l), stack(b1_l), stack(w2_l), stack(b2_l))


# ----------------------------------------------------------------------------
# Model forward (QAGNN_Message_Passing_Decouple / QAGNNDecouple / LM_QAGNN)
# ----------------------------------------------------------------------------
def gnn_message_passing(params, H, node_type_flat, node_score, edge_index, edge_type):
    """QAGNN_Message_Passing_Decouple.forward.  H: (B, n_node, D)."""
    B_, L_, _ = H.shape
    Ntot = B_ * L_
    nt = node_type_flat

    # node-type / node-score embeddings fused into one lane-dense (N=D) linear:
    # nfe = GELU([onehot(nt), sin(js*score)] @ blockdiag(W_nt, W_sc) + [b_nt, b_sc])
    T = jax.nn.one_hot(nt, N_NTYPE, dtype=jnp.float32)                    # (Ntot, 4)
    js = jnp.power(1.1, jnp.arange(D // 2, dtype=jnp.float32))[None, None, :]
    Bsin = jnp.sin(js * node_score).reshape(Ntot, D // 2)                 # (Ntot, D/2)
    nfe_in = jnp.concatenate([T, Bsin], axis=1)                           # (Ntot, 4 + D/2)
    w_nfe = jnp.zeros((N_NTYPE + D // 2, D), jnp.float32)
    w_nfe = w_nfe.at[0:N_NTYPE, 0:D // 2].set(params["emb_node_type"]["w"])
    w_nfe = w_nfe.at[N_NTYPE:, D // 2:].set(params["emb_score"]["w"])
    b_nfe = jnp.concatenate([params["emb_node_type"]["b"], params["emb_score"]["b"]])
    node_feature_extra = linear(nfe_in, w_nfe, b_nfe, act="gelu")         # (Ntot, D)

    # shared edge encoder (inputs identical across GNN layers -> computed once);
    # both Linears fused in one kernel, BN folded into the first.
    src0, tgt0 = edge_index[0], edge_index[1]
    ev = jax.nn.one_hot(edge_type, N_ETYPE + 1, dtype=jnp.float32)
    self_ev = jnp.zeros((Ntot, N_ETYPE + 1), jnp.float32).at[:, N_ETYPE].set(1.0)
    head_vec = jax.nn.one_hot(nt[src0], N_NTYPE, dtype=jnp.float32)
    tail_vec = jax.nn.one_hot(nt[tgt0], N_NTYPE, dtype=jnp.float32)
    headtail = jnp.concatenate([head_vec, tail_vec], axis=1)
    self_head = jax.nn.one_hot(nt, N_NTYPE, dtype=jnp.float32)
    self_headtail = jnp.concatenate([self_head, self_head], axis=1)
    ee_in = jnp.concatenate(
        [jnp.concatenate([ev, self_ev], axis=0),
         jnp.concatenate([headtail, self_headtail], axis=0)], axis=1)     # (E+Ntot, 23)
    s1, t1 = _bn_fold(params["edge_enc_bn"])
    w1f = params["edge_enc1"]["w"] * s1[None, :]
    b1f = params["edge_enc1"]["b"] * s1 + t1
    edge_emb = edge_encoder(ee_in, w1f, b1f,
                            params["edge_enc2"]["w"], params["edge_enc2"]["b"])  # (Et, D)

    # edge index with self loops -> dense one-hot gather / scatter matrices
    loop = jnp.arange(Ntot, dtype=jnp.int32)
    src = jnp.concatenate([src0, loop])
    tgt = jnp.concatenate([tgt0, loop])
    S = jax.nn.one_hot(src, Ntot, dtype=jnp.float32)       # (Et, Ntot) source one-hot
    Tm = jax.nn.one_hot(tgt, Ntot, dtype=jnp.float32)      # (Et, Ntot) target one-hot
    # head block-ones matrix: per-head score summed and broadcast over DPH lanes
    P = jnp.kron(jnp.eye(GAT_HEADS, dtype=jnp.float32),
                 jnp.ones((DPH, DPH), jnp.float32))        # (D, D)

    stacked = _prep_gnn_layer_weights(params)
    out = gnn_layers_call(H.reshape(Ntot, D), node_feature_extra, edge_emb,
                          S, S.T, Tm, Tm.T, P, stacked,
                          params["Vh"]["w"], params["Vh"]["b"],
                          params["Vx"]["w"], params["Vx"]["b"])
    return out.reshape(B_, L_, D)


def qagnn_decoder_forward(params, sent_vecs, concept_ids, node_type_ids, node_scores,
                          adj_lengths, edge_index, edge_type):
    B_ = sent_vecs.shape[0]
    L_ = node_type_ids.shape[1]

    gnn_input0 = linear(sent_vecs, params["svec2nvec"]["w"], params["svec2nvec"]["b"],
                        act="gelu")[:, None, :]                           # (B, 1, D)
    gnn_input1 = params["concept_emb"][concept_ids[:, 1:] - 1]            # (B, n_node-1, D)
    gnn_input = jnp.concatenate([gnn_input0, gnn_input1], axis=1)         # dropout_e == identity

    # node-score normalisation (tiny elementwise / reduction -> plain JAX glue)
    adj_f = adj_lengths.astype(jnp.float32)
    _mask = (jnp.arange(L_)[None, :] < adj_lengths[:, None]).astype(jnp.float32)
    ns = -node_scores
    ns = ns - ns[:, 0:1, :]
    ns = ns[..., 0] * _mask
    mean_norm = jnp.sum(jnp.abs(ns), axis=1) / adj_f
    ns = ns / (mean_norm[:, None] + 1e-5)
    node_scores_n = ns[..., None]

    gnn_output = gnn_message_passing(params, gnn_input, node_type_ids.reshape(-1),
                                     node_scores_n, edge_index, edge_type)
    Z_vecs = gnn_output[:, 0]

    mask = jnp.arange(L_)[None, :] >= adj_lengths[:, None]
    mask = mask | (node_type_ids == 3)
    all_masked = jnp.all(mask, axis=1)
    mask = mask.at[:, 0].set(jnp.where(all_masked, False, mask[:, 0]))

    # MultiheadAttPoolLayer: q projection + one fused k|v projection (N=128),
    # then a single batched attention kernel over all BH rows.
    qs = linear(sent_vecs, params["pool_q"]["w"], params["pool_q"]["b"])  # (B, H*dk)
    w_kv = jnp.concatenate([params["pool_k"]["w"], params["pool_v"]["w"]], axis=1)
    b_kv = jnp.concatenate([params["pool_k"]["b"], params["pool_v"]["b"]])
    kv = linear(gnn_output.reshape(B_ * L_, D), w_kv, b_kv)               # (B*L, 2*H*dk)
    ks = kv[:, :POOL_HEADS * POOL_DK]
    vs = kv[:, POOL_HEADS * POOL_DK:]

    BH = POOL_HEADS * B_
    qs = qs.reshape(B_, POOL_HEADS, POOL_DK).transpose(1, 0, 2).reshape(BH, POOL_DK)
    # flat key/value rows ordered (head, graph, node): row (h*B + b)*L + l
    ks_flat = ks.reshape(B_, L_, POOL_HEADS, POOL_DK).transpose(2, 0, 1, 3).reshape(BH * L_, POOL_DK)
    vs_flat = vs.reshape(B_, L_, POOL_HEADS, POOL_DK).transpose(2, 0, 1, 3).reshape(BH * L_, POOL_DK)
    mask_rep = jnp.tile(mask, (POOL_HEADS, 1))                            # (BH, L) True == masked
    col_row = jnp.arange(BH * L_) // L_
    off_block = jnp.arange(BH)[:, None] != col_row[None, :]
    big_mask = (off_block | mask_rep.reshape(-1)[None, :]).astype(jnp.float32)   # (BH, BH*L)
    pooled, attn_full = pooled_attention(qs, ks_flat, vs_flat, big_mask,
                                         math.sqrt(POOL_DK))
    # pool_attn[i, l] = attn_full[i, i*L + l]  (block-diagonal extraction)
    pool_attn = jnp.diagonal(attn_full.reshape(BH, BH, L_), axis1=0, axis2=1).T   # (BH, L)
    graph_vecs = pooled.reshape(POOL_HEADS, B_, POOL_DK).transpose(1, 0, 2).reshape(B_, D)

    concat = jnp.concatenate([graph_vecs, sent_vecs, Z_vecs], axis=1)     # dropout_fc == identity
    logits = fc_tail(concat, params["fc0"]["w"], params["fc0"]["b"],
                     params["fc_ln"]["gamma"], params["fc_ln"]["beta"],
                     params["fc1"]["w"], params["fc1"]["b"])              # (B, 1)
    return logits, pool_attn


_decoder_forward_jit = jax.jit(qagnn_decoder_forward)


def batch_graph(edge_index_list, edge_type_list, n_nodes):
    edge_index = jnp.concatenate(
        [ei + i * n_nodes for i, ei in enumerate(edge_index_list)], axis=1)
    edge_type = jnp.concatenate(edge_type_list, axis=0)
    return edge_index, edge_type


def lm_qagnn_pca_decouple_forward(params, sent_vecs, concept_ids, node_type_ids,
                                  node_scores, adj_lengths, edge_index_list, edge_type_list):
    """LM_QAGNN_PCA_Decouple.forward (detail=False).  Returns (logits[bs, nc], pool_attn)."""
    bs, nc = sent_vecs.shape[0], sent_vecs.shape[1]
    sent_flat = sent_vecs.reshape(bs * nc, -1)
    cid = concept_ids.reshape(bs * nc, -1)
    ntid = node_type_ids.reshape(bs * nc, -1)
    nsc = node_scores.reshape(bs * nc, node_scores.shape[2], 1)
    alen = adj_lengths.reshape(bs * nc)
    edge_index, edge_type = batch_graph(edge_index_list, edge_type_list, cid.shape[1])
    logits, attn = _decoder_forward_jit(params, sent_flat, cid, ntid, nsc, alen,
                                        edge_index, edge_type)
    return logits.reshape(bs, nc), attn


# ----------------------------------------------------------------------------
if __name__ == "__main__":
    key = jax.random.PRNGKey(0)
    kp, k1, k2, k3, k4, k5, k6 = jax.random.split(key, 7)
    params = init_params(kp)

    # TODO(synk): sent_vecs stands in for the (un-implemented) TextEncoder output.
    sent_vecs = jax.random.normal(k1, (BS, NC, SENT_DIM), jnp.float32)
    concept_ids = jax.random.randint(k2, (BS, NC, N_NODE), 1, N_CONCEPT + 1)
    node_type_ids = jax.random.randint(k3, (BS, NC, N_NODE), 0, 3)
    node_type_ids = node_type_ids.at[:, :, 0].set(3)          # node 0 == context node
    node_scores = jax.random.normal(k4, (BS, NC, N_NODE, 1), jnp.float32)
    adj_lengths = jax.random.randint(k5, (BS, NC), 4, N_NODE + 1)

    edge_index_list, edge_type_list = [], []
    ek = jax.random.split(k6, BS * NC * 2)
    for i in range(BS * NC):
        edge_index_list.append(jax.random.randint(ek[2 * i], (2, E_PER_GRAPH), 0, N_NODE))
        edge_type_list.append(jax.random.randint(ek[2 * i + 1], (E_PER_GRAPH,), 0, N_ETYPE))

    logits, attn = lm_qagnn_pca_decouple_forward(
        params, sent_vecs, concept_ids, node_type_ids, node_scores, adj_lengths,
        edge_index_list, edge_type_list)
    logits = jax.block_until_ready(logits)
    attn = jax.block_until_ready(attn)
    assert logits.shape == (BS, NC)
    assert attn.shape == (POOL_HEADS * BS * NC, N_NODE)
    assert bool(jnp.all(jnp.isfinite(logits)))
    assert bool(jnp.all(jnp.isfinite(attn)))
    print("KERNEL_OK")
</pallas_src>

<mosaic_0001>
module attributes {stable_mosaic.version = 11 : i64} {
  func.func @_linear_kernel(%arg0: i32, %arg1: memref<4x32xf32, #tpu.memory_space<vmem>>, %arg2: memref<32x64xf32, #tpu.memory_space<vmem>>, %arg3: memref<1x64xf32, #tpu.memory_space<vmem>>, %arg4: memref<4x64xf32, #tpu.memory_space<vmem>>) attributes {dimension_semantics = [#tpu.dimension_semantics<arbitrary>], iteration_bounds = array<i64: 1>, scalar_prefetch = 0 : i64, scratch_operands = 0 : i64, tpu.core_type = #tpu.core_type<tc>, window_params = [{pipeline_mode = #tpu.pipeline_mode<synchronous>, transform_indices = @transform_0, window_bounds = array<i64: 4, 32>}, {pipeline_mode = #tpu.pipeline_mode<synchronous>, transform_indices = @transform_1, window_bounds = array<i64: 32, 64>}, {pipeline_mode = #tpu.pipeline_mode<synchronous>, transform_indices = @transform_2, window_bounds = array<i64: 1, 64>}, {pipeline_mode = #tpu.pipeline_mode<synchronous>, transform_indices = @transform_3, window_bounds = array<i64: 4, 64>}]} {
    %c0 = arith.constant 0 : index
    %c0_0 = arith.constant 0 : index
    %0 = vector.load %arg1[%c0, %c0_0] : memref<4x32xf32, #tpu.memory_space<vmem>>, vector<4x32xf32>
    %c0_1 = arith.constant 0 : index
    %c0_2 = arith.constant 0 : index
    %1 = vector.load %arg2[%c0_1, %c0_2] : memref<32x64xf32, #tpu.memory_space<vmem>>, vector<32x64xf32>
    %cst = arith.constant dense<0.000000e+00> : vector<4x64xf32>
    %2 = tpu.matmul %0, %1, %cst {dimension_numbers = #tpu.dot_dimension_numbers<[1], [0], [0], [1], [0, 0, 1, 1], [], []>} : vector<4x32xf32>, vector<32x64xf32>, vector<4x64xf32> -> vector<4x64xf32>
    %c0_3 = arith.constant 0 : index
    %c0_4 = arith.constant 0 : index
    %3 = vector.load %arg3[%c0_3, %c0_4] : memref<1x64xf32, #tpu.memory_space<vmem>>, vector<1x64xf32>
    %4 = vector.broadcast %3 : vector<1x64xf32> to vector<4x64xf32>
    %5 = arith.addf %2, %4 : vector<4x64xf32>
    %cst_5 = arith.constant 5.000000e-01 : f32
    %6 = vector.broadcast %cst_5 : f32 to vector<4x64xf32>
    %7 = arith.mulf %6, %5 : vector<4x64xf32>
    %cst_6 = arith.constant 4.471500e-02 : f32
    %8 = vector.broadcast %cst_6 : f32 to vector<4x64xf32>
    %9 = arith.mulf %8, %5 : vector<4x64xf32>
    %10 = arith.mulf %9, %5 : vector<4x64xf32>
    %11 = arith.mulf %10, %5 : vector<4x64xf32>
    %12 = arith.addf %5, %11 : vector<4x64xf32>
    %cst_7 = arith.constant 0.797884583 : f32
    %13 = vector.broadcast %cst_7 : f32 to vector<4x64xf32>
    %14 = arith.mulf %13, %12 : vector<4x64xf32>
    %15 = math.tanh %14 : vector<4x64xf32>
    %cst_8 = arith.constant 1.000000e+00 : f32
    %16 = vector.broadcast %cst_8 : f32 to vector<4x64xf32>
    %17 = arith.addf %16, %15 : vector<4x64xf32>
    %18 = arith.mulf %7, %17 : vector<4x64xf32>
    %c0_9 = arith.constant 0 : index
    %c0_10 = arith.constant 0 : index
    %19 = vector.load %arg4[%c0_9, %c0_10] : memref<4x64xf32, #tpu.memory_space<vmem>>, vector<4x64xf32>
    tpu.vector_store %arg4[%c0_9, %c0_10], %18 {strides = array<i32>} : memref<4x64xf32, #tpu.memory_space<vmem>>, vector<4x64xf32>,
    return
  }
  func.func @transform_0(%arg0: i32) -> (i32, i32) {
    %c0_i32 = arith.constant 0 : i32
    %c0_i32_0 = arith.constant 0 : i32
    %c0_i32_1 = arith.constant 0 : i32
    return %c0_i32, %c0_i32_0 : i32, i32
  }
  func.func @transform_1(%arg0: i32) -> (i32, i32) {
    %c0_i32 = arith.constant 0 : i32
    %c0_i32_0 = arith.constant 0 : i32
    %c0_i32_1 = arith.constant 0 : i32
    return %c0_i32, %c0_i32_0 : i32, i32
  }
  func.func @transform_2(%arg0: i32) -> (i32, i32) {
    %c0_i32 = arith.constant 0 : i32
    %c0_i32_0 = arith.constant 0 : i32
    %c0_i32_1 = arith.constant 0 : i32
    return %c0_i32, %c0_i32_0 : i32, i32
  }
  func.func @transform_3(%arg0: i32) -> (i32, i32) {
    %c0_i32 = arith.constant 0 : i32
    %c0_i32_0 = arith.constant 0 : i32
    %c0_i32_1 = arith.constant 0 : i32
    return %c0_i32, %c0_i32_0 : i32, i32
  }
}

module attributes {stable_mosaic.version = 11 : i64} {
  func.func @_linear_kernel(%arg0: i32, %arg1: memref<64x36xf32, #tpu.memory_space<vmem>>, %arg2: memref<36x64xf32, #tpu.memory_space<vmem>>, %arg3: memref<1x64xf32, #tpu.memory_space<vmem>>, %arg4: memref<64x64xf32, #tpu.memory_space<vmem>>) attributes {dimension_semantics = [#tpu.dimension_semantics<arbitrary>], iteration_bounds = array<i64: 1>, scalar_prefetch = 0 : i64, scratch_operands = 0 : i64, tpu.core_type = #tpu.core_type<tc>, window_params = [{pipeline_mode = #tpu.pipeline_mode<synchronous>, transform_indices = @transform_0, window_bounds = array<i64: 64, 36>}, {pipeline_mode = #tpu.pipeline_mode<synchronous>, transform_indices = @transform_1, window_bounds = array<i64: 36, 64>}, {pipeline_mode = #tpu.pipeline_mode<synchronous>, transform_indices = @transform_2, window_bounds = array<i64: 1, 64>}, {pipeline_mode = #tpu.pipeline_mode<synchronous>, transform_indices = @transform_3, window_bounds = array<i64: 64, 64>}]} {
    %c0 = arith.constant 0 : index
    %c0_0 = arith.constant 0 : index
    %0 = vector.load %arg1[%c0, %c0_0] : memref<64x36xf32, #tpu.memory_space<vmem>>, vector<64x36xf32>
    %c0_1 = arith.constant 0 : index
    %c0_2 = arith.constant 0 : index
    %1 = vector.load %arg2[%c0_1, %c0_2] : memref<36x64xf32, #tpu.memory_space<vmem>>, vector<36x64xf32>
    %cst = arith.constant dense<0.000000e+00> : vector<64x64xf32>
    %2 = tpu.matmul %0, %1, %cst {dimension_numbers = #tpu.dot_dimension_numbers<[1], [0], [0], [1], [0, 0, 1, 1], [], []>} : vector<64x36xf32>, vector<36x64xf32>, vector<64x64xf32> -> vector<64x64xf32>
    %c0_3 = arith.constant 0 : index
    %c0_4 = arith.constant 0 : index
    %3 = vector.load %arg3[%c0_3, %c0_4] : memref<1x64xf32, #tpu.memory_space<vmem>>, vector<1x64xf32>
    %4 = vector.broadcast %3 : vector<1x64xf32> to vector<64x64xf32>
    %5 = arith.addf %2, %4 : vector<64x64xf32>
    %cst_5 = arith.constant 5.000000e-01 : f32
    %6 = vector.broadcast %cst_5 : f32 to vector<64x64xf32>
    %7 = arith.mulf %6, %5 : vector<64x64xf32>
    %cst_6 = arith.constant 4.471500e-02 : f32
    %8 = vector.broadcast %cst_6 : f32 to vector<64x64xf32>
    %9 = arith.mulf %8, %5 : vector<64x64xf32>
    %10 = arith.mulf %9, %5 : vector<64x64xf32>
    %11 = arith.mulf %10, %5 : vector<64x64xf32>
    %12 = arith.addf %5, %11 : vector<64x64xf32>
    %cst_7 = arith.constant 0.797884583 : f32
    %13 = vector.broadcast %cst_7 : f32 to vector<64x64xf32>
    %14 = arith.mulf %13, %12 : vector<64x64xf32>
    %15 = math.tanh %14 : vector<64x64xf32>
    %cst_8 = arith.constant 1.000000e+00 : f32
    %16 = vector.broadcast %cst_8 : f32 to vector<64x64xf32>
    %17 = arith.addf %16, %15 : vector<64x64xf32>
    %18 = arith.mulf %7, %17 : vector<64x64xf32>
    %c0_9 = arith.constant 0 : index
    %c0_10 = arith.constant 0 : index
    %19 = vector.load %arg4[%c0_9, %c0_10] : memref<64x64xf32, #tpu.memory_space<vmem>>, vector<64x64xf32>
    tpu.vector_store %arg4[%c0_9, %c0_10], %18 {strides = array<i32>} : memref<64x64xf32, #tpu.memory_space<vmem>>, vector<64x64xf32>,
    return
  }
  func.func @transform_0(%arg0: i32) -> (i32, i32) {
    %c0_i32 = arith.constant 0 : i32
    %c0_i32_0 = arith.constant 0 : i32
    %c0_i32_1 = arith.constant 0 : i32
    return %c0_i32, %c0_i32_0 : i32, i32
  }
  func.func @transform_1(%arg0: i32) -> (i32, i32) {
    %c0_i32 = arith.constant 0 : i32
    %c0_i32_0 = arith.constant 0 : i32
    %c0_i32_1 = arith.constant 0 : i32
    return %c0_i32, %c0_i32_0 : i32, i32
  }
  func.func @transform_2(%arg0: i32) -> (i32, i32) {
    %c0_i32 = arith.constant 0 : i32
    %c0_i32_0 = arith.constant 0 : i32
    %c0_i32_1 = arith.constant 0 : i32
    return %c0_i32, %c0_i32_0 : i32, i32
  }
  func.func @transform_3(%arg0: i32) -> (i32, i32) {
    %c0_i32 = arith.constant 0 : i32
    %c0_i32_0 = arith.constant 0 : i32
    %c0_i32_1 = arith.constant 0 : i32
    return %c0_i32, %c0_i32_0 : i32, i32
  }
}

module attributes {stable_mosaic.version = 11 : i64} {
  func.func @_edge_encoder_kernel(%arg0: i32, %arg1: memref<104x15xf32, #tpu.memory_space<vmem>>, %arg2: memref<15x64xf32, #tpu.memory_space<vmem>>, %arg3: memref<1x64xf32, #tpu.memory_space<vmem>>, %arg4: memref<64x64xf32, #tpu.memory_space<vmem>>, %arg5: memref<1x64xf32, #tpu.memory_space<vmem>>, %arg6: memref<104x64xf32, #tpu.memory_space<vmem>>) attributes {dimension_semantics = [#tpu.dimension_semantics<arbitrary>], iteration_bounds = array<i64: 1>, scalar_prefetch = 0 : i64, scratch_operands = 0 : i64, tpu.core_type = #tpu.core_type<tc>, window_params = [{pipeline_mode = #tpu.pipeline_mode<synchronous>, transform_indices = @transform_0, window_bounds = array<i64: 104, 15>}, {pipeline_mode = #tpu.pipeline_mode<synchronous>, transform_indices = @transform_1, window_bounds = array<i64: 15, 64>}, {pipeline_mode = #tpu.pipeline_mode<synchronous>, transform_indices = @transform_2, window_bounds = array<i64: 1, 64>}, {pipeline_mode = #tpu.pipeline_mode<synchronous>, transform_indices = @transform_3, window_bounds = array<i64: 64, 64>}, {pipeline_mode = #tpu.pipeline_mode<synchronous>, transform_indices = @transform_4, window_bounds = array<i64: 1, 64>}, {pipeline_mode = #tpu.pipeline_mode<synchronous>, transform_indices = @transform_5, window_bounds = array<i64: 104, 64>}]} {
    %c0 = arith.constant 0 : index
    %c0_0 = arith.constant 0 : index
    %0 = vector.load %arg1[%c0, %c0_0] : memref<104x15xf32, #tpu.memory_space<vmem>>, vector<104x15xf32>
    %c0_1 = arith.constant 0 : index
    %c0_2 = arith.constant 0 : index
    %1 = vector.load %arg2[%c0_1, %c0_2] : memref<15x64xf32, #tpu.memory_space<vmem>>, vector<15x64xf32>
    %cst = arith.constant dense<0.000000e+00> : vector<104x64xf32>
    %2 = tpu.matmul %0, %1, %cst {dimension_numbers = #tpu.dot_dimension_numbers<[1], [0], [0], [1], [0, 0, 1, 1], [], []>} : vector<104x15xf32>, vector<15x64xf32>, vector<104x64xf32> -> vector<104x64xf32>
    %c0_3 = arith.constant 0 : index
    %c0_4 = arith.constant 0 : index
    %3 = vector.load %arg3[%c0_3, %c0_4] : memref<1x64xf32, #tpu.memory_space<vmem>>, vector<1x64xf32>
    %4 = vector.broadcast %3 : vector<1x64xf32> to vector<104x64xf32>
    %5 = arith.addf %2, %4 : vector<104x64xf32>
    %cst_5 = arith.constant 0.000000e+00 : f32
    %6 = vector.broadcast %cst_5 : f32 to vector<104x64xf32>
    %7 = arith.maximumf %5, %6 : vector<104x64xf32>
    %c0_6 = arith.constant 0 : index
    %c0_7 = arith.constant 0 : index
    %8 = vector.load %arg4[%c0_6, %c0_7] : memref<64x64xf32, #tpu.memory_space<vmem>>, vector<64x64xf32>
    %cst_8 = arith.constant dense<0.000000e+00> : vector<104x64xf32>
    %9 = tpu.matmul %7, %8, %cst_8 {dimension_numbers = #tpu.dot_dimension_numbers<[1], [0], [0], [1], [0, 0, 1, 1], [], []>} : vector<104x64xf32>, vector<64x64xf32>, vector<104x64xf32> -> vector<104x64xf32>
    %c0_9 = arith.constant 0 : index
    %c0_10 = arith.constant 0 : index
    %10 = vector.load %arg5[%c0_9, %c0_10] : memref<1x64xf32, #tpu.memory_space<vmem>>, vector<1x64xf32>
    %11 = vector.broadcast %10 : vector<1x64xf32> to vector<104x64xf32>
    %12 = arith.addf %9, %11 : vector<104x64xf32>
    %c0_11 = arith.constant 0 : index
    %c0_12 = arith.constant 0 : index
    %13 = vector.load %arg6[%c0_11, %c0_12] : memref<104x64xf32, #tpu.memory_space<vmem>>, vector<104x64xf32>
    tpu.vector_store %arg6[%c0_11, %c0_12], %12 {strides = array<i32>} : memref<104x64xf32, #tpu.memory_space<vmem>>, vector<104x64xf32>,
    return
  }
  func.func @transform_0(%arg0: i32) -> (i32, i32) {
    %c0_i32 = arith.constant 0 : i32
    %c0_i32_0 = arith.constant 0 : i32
    %c0_i32_1 = arith.constant 0 : i32
    return %c0_i32, %c0_i32_0 : i32, i32
  }
  func.func @transform_1(%arg0: i32) -> (i32, i32) {
    %c0_i32 = arith.constant 0 : i32
    %c0_i32_0 = arith.constant 0 : i32
    %c0_i32_1 = arith.constant 0 : i32
    return %c0_i32, %c0_i32_0 : i32, i32
  }
  func.func @transform_2(%arg0: i32) -> (i32, i32) {
    %c0_i32 = arith.constant 0 : i32
    %c0_i32_0 = arith.constant 0 : i32
    %c0_i32_1 = arith.constant 0 : i32
    return %c0_i32, %c0_i32_0 : i32, i32
  }
  func.func @transform_3(%arg0: i32) -> (i32, i32) {
    %c0_i32 = arith.constant 0 : i32
    %c0_i32_0 = arith.constant 0 : i32
    %c0_i32_1 = arith.constant 0 : i32
    return %c0_i32, %c0_i32_0 : i32, i32
  }
  func.func @transform_4(%arg0: i32) -> (i32, i32) {
    %c0_i32 = arith.constant 0 : i32
    %c0_i32_0 = arith.constant 0 : i32
    %c0_i32_1 = arith.constant 0 : i32
    return %c0_i32, %c0_i32_0 : i32, i32
  }
  func.func @transform_5(%arg0: i32) -> (i32, i32) {
    %c0_i32 = arith.constant 0 : i32
    %c0_i32_0 = arith.constant 0 : i32
    %c0_i32_1 = arith.constant 0 : i32
    return %c0_i32, %c0_i32_0 : i32, i32
  }
}

module attributes {stable_mosaic.version = 11 : i64} {
  func.func @_linear_kernel(%arg0: i32, %arg1: memref<64x64xf32, #tpu.memory_space<vmem>>, %arg2: memref<64x128xf32, #tpu.memory_space<vmem>>, %arg3: memref<1x128xf32, #tpu.memory_space<vmem>>, %arg4: memref<64x128xf32, #tpu.memory_space<vmem>>) attributes {dimension_semantics = [#tpu.dimension_semantics<arbitrary>], iteration_bounds = array<i64: 1>, scalar_prefetch = 0 : i64, scratch_operands = 0 : i64, tpu.core_type = #tpu.core_type<tc>, window_params = [{pipeline_mode = #tpu.pipeline_mode<synchronous>, transform_indices = @transform_0, window_bounds = array<i64: 64, 64>}, {pipeline_mode = #tpu.pipeline_mode<synchronous>, transform_indices = @transform_1, window_bounds = array<i64: 64, 128>}, {pipeline_mode = #tpu.pipeline_mode<synchronous>, transform_indices = @transform_2, window_bounds = array<i64: 1, 128>}, {pipeline_mode = #tpu.pipeline_mode<synchronous>, transform_indices = @transform_3, window_bounds = array<i64: 64, 128>}]} {
    %c0 = arith.constant 0 : index
    %c0_0 = arith.constant 0 : index
    %0 = vector.load %arg1[%c0, %c0_0] : memref<64x64xf32, #tpu.memory_space<vmem>>, vector<64x64xf32>
    %c0_1 = arith.constant 0 : index
    %c0_2 = arith.constant 0 : index
    %1 = vector.load %arg2[%c0_1, %c0_2] : memref<64x128xf32, #tpu.memory_space<vmem>>, vector<64x128xf32>
    %cst = arith.constant dense<0.000000e+00> : vector<64x128xf32>
    %2 = tpu.matmul %0, %1, %cst {dimension_numbers = #tpu.dot_dimension_numbers<[1], [0], [0], [1], [0, 0, 1, 1], [], []>} : vector<64x64xf32>, vector<64x128xf32>, vector<64x128xf32> -> vector<64x128xf32>
    %c0_3 = arith.constant 0 : index
    %c0_4 = arith.constant 0 : index
    %3 = vector.load %arg3[%c0_3, %c0_4] : memref<1x128xf32, #tpu.memory_space<vmem>>, vector<1x128xf32>
    %4 = vector.broadcast %3 : vector<1x128xf32> to vector<64x128xf32>
    %5 = arith.addf %2, %4 : vector<64x128xf32>
    %c0_5 = arith.constant 0 : index
    %c0_6 = arith.constant 0 : index
    %6 = vector.load %arg4[%c0_5, %c0_6] : memref<64x128xf32, #tpu.memory_space<vmem>>, vector<64x128xf32>
    tpu.vector_store %arg4[%c0_5, %c0_6], %5 {strides = array<i32>} : memref<64x128xf32, #tpu.memory_space<vmem>>, vector<64x128xf32>,
    return
  }
  func.func @transform_0(%arg0: i32) -> (i32, i32) {
    %c0_i32 = arith.constant 0 : i32
    %c0_i32_0 = arith.constant 0 : i32
    %c0_i32_1 = arith.constant 0 : i32
    return %c0_i32, %c0_i32_0 : i32, i32
  }
  func.func @transform_1(%arg0: i32) -> (i32, i32) {
    %c0_i32 = arith.constant 0 : i32
    %c0_i32_0 = arith.constant 0 : i32
    %c0_i32_1 = arith.constant 0 : i32
    return %c0_i32, %c0_i32_0 : i32, i32
  }
  func.func @transform_2(%arg0: i32) -> (i32, i32) {
    %c0_i32 = arith.constant 0 : i32
    %c0_i32_0 = arith.constant 0 : i32
    %c0_i32_1 = arith.constant 0 : i32
    return %c0_i32, %c0_i32_0 : i32, i32
  }
  func.func @transform_3(%arg0: i32) -> (i32, i32) {
    %c0_i32 = arith.constant 0 : i32
    %c0_i32_0 = arith.constant 0 : i32
    %c0_i32_1 = arith.constant 0 : i32
    return %c0_i32, %c0_i32_0 : i32, i32
  }
}

module attributes {stable_mosaic.version = 11 : i64} {
  func.func @_linear_kernel(%arg0: i32, %arg1: memref<4x32xf32, #tpu.memory_space<vmem>>, %arg2: memref<32x64xf32, #tpu.memory_space<vmem>>, %arg3: memref<1x64xf32, #tpu.memory_space<vmem>>, %arg4: memref<4x64xf32, #tpu.memory_space<vmem>>) attributes {dimension_semantics = [#tpu.dimension_semantics<arbitrary>], iteration_bounds = array<i64: 1>, scalar_prefetch = 0 : i64, scratch_operands = 0 : i64, tpu.core_type = #tpu.core_type<tc>, window_params = [{pipeline_mode = #tpu.pipeline_mode<synchronous>, transform_indices = @transform_0, window_bounds = array<i64: 4, 32>}, {pipeline_mode = #tpu.pipeline_mode<synchronous>, transform_indices = @transform_1, window_bounds = array<i64: 32, 64>}, {pipeline_mode = #tpu.pipeline_mode<synchronous>, transform_indices = @transform_2, window_bounds = array<i64: 1, 64>}, {pipeline_mode = #tpu.pipeline_mode<synchronous>, transform_indices = @transform_3, window_bounds = array<i64: 4, 64>}]} {
    %c0 = arith.constant 0 : index
    %c0_0 = arith.constant 0 : index
    %0 = vector.load %arg1[%c0, %c0_0] : memref<4x32xf32, #tpu.memory_space<vmem>>, vector<4x32xf32>
    %c0_1 = arith.constant 0 : index
    %c0_2 = arith.constant 0 : index
    %1 = vector.load %arg2[%c0_1, %c0_2] : memref<32x64xf32, #tpu.memory_space<vmem>>, vector<32x64xf32>
    %cst = arith.constant dense<0.000000e+00> : vector<4x64xf32>
    %2 = tpu.matmul %0, %1, %cst {dimension_numbers = #tpu.dot_dimension_numbers<[1], [0], [0], [1], [0, 0, 1, 1], [], []>} : vector<4x32xf32>, vector<32x64xf32>, vector<4x64xf32> -> vector<4x64xf32>
    %c0_3 = arith.constant 0 : index
    %c0_4 = arith.constant 0 : index
    %3 = vector.load %arg3[%c0_3, %c0_4] : memref<1x64xf32, #tpu.memory_space<vmem>>, vector<1x64xf32>
    %4 = vector.broadcast %3 : vector<1x64xf32> to vector<4x64xf32>
    %5 = arith.addf %2, %4 : vector<4x64xf32>
    %c0_5 = arith.constant 0 : index
    %c0_6 = arith.constant 0 : index
    %6 = vector.load %arg4[%c0_5, %c0_6] : memref<4x64xf32, #tpu.memory_space<vmem>>, vector<4x64xf32>
    tpu.vector_store %arg4[%c0_5, %c0_6], %5 {strides = array<i32>} : memref<4x64xf32, #tpu.memory_space<vmem>>, vector<4x64xf32>,
    return
  }
  func.func @transform_0(%arg0: i32) -> (i32, i32) {
    %c0_i32 = arith.constant 0 : i32
    %c0_i32_0 = arith.constant 0 : i32
    %c0_i32_1 = arith.constant 0 : i32
    return %c0_i32, %c0_i32_0 : i32, i32
  }
  func.func @transform_1(%arg0: i32) -> (i32, i32) {
    %c0_i32 = arith.constant 0 : i32
    %c0_i32_0 = arith.constant 0 : i32
    %c0_i32_1 = arith.constant 0 : i32
    return %c0_i32, %c0_i32_0 : i32, i32
  }
  func.func @transform_2(%arg0: i32) -> (i32, i32) {
    %c0_i32 = arith.constant 0 : i32
    %c0_i32_0 = arith.constant 0 : i32
    %c0_i32_1 = arith.constant 0 : i32
    return %c0_i32, %c0_i32_0 : i32, i32
  }
  func.func @transform_3(%arg0: i32) -> (i32, i32) {
    %c0_i32 = arith.constant 0 : i32
    %c0_i32_0 = arith.constant 0 : i32
    %c0_i32_1 = arith.constant 0 : i32
    return %c0_i32, %c0_i32_0 : i32, i32
  }
}

module attributes {stable_mosaic.version = 11 : i64} {
  func.func @_gnn_layers_kernel(%arg0: i32, %arg1: memref<64x64xf32, #tpu.memory_space<vmem>>, %arg2: memref<64x64xf32, #tpu.memory_space<vmem>>, %arg3: memref<104x64xf32, #tpu.memory_space<vmem>>, %arg4: memref<104x64xf32, #tpu.memory_space<vmem>>, %arg5: memref<64x104xf32, #tpu.memory_space<vmem>>, %arg6: memref<104x64xf32, #tpu.memory_space<vmem>>, %arg7: memref<64x104xf32, #tpu.memory_space<vmem>>, %arg8: memref<64x64xf32, #tpu.memory_space<vmem>>, %arg9: memref<1x128x192xf32, #tpu.memory_space<vmem>>, %arg10: memref<1x128x192xf32, #tpu.memory_space<vmem>>, %arg11: memref<1x64x192xf32, #tpu.memory_space<vmem>>, %arg12: memref<1x1x192xf32, #tpu.memory_space<vmem>>, %arg13: memref<1x64x64xf32, #tpu.memory_space<vmem>>, %arg14: memref<1x1x64xf32, #tpu.memory_space<vmem>>, %arg15: memref<1x64x64xf32, #tpu.memory_space<vmem>>, %arg16: memref<1x1x64xf32, #tpu.memory_space<vmem>>, %arg17: memref<64x64xf32, #tpu.memory_space<vmem>>, %arg18: memref<1x64xf32, #tpu.memory_space<vmem>>, %arg19: memref<64x64xf32, #tpu.memory_space<vmem>>, %arg20: memref<1x64xf32, #tpu.memory_space<vmem>>, %arg21: memref<64x64xf32, #tpu.memory_space<vmem>>, %arg22: memref<64x64xf32, #tpu.memory_space<vmem>>) attributes {dimension_semantics = [#tpu.dimension_semantics<arbitrary>], iteration_bounds = array<i64: 2>, scalar_prefetch = 0 : i64, scratch_operands = 1 : i64, tpu.core_type = #tpu.core_type<tc>, window_params = [{pipeline_mode = #tpu.pipeline_mode<synchronous>, transform_indices = @transform_0, window_bounds = array<i64: 64, 64>}, {pipeline_mode = #tpu.pipeline_mode<synchronous>, transform_indices = @transform_1, window_bounds = array<i64: 64, 64>}, {pipeline_mode = #tpu.pipeline_mode<synchronous>, transform_indices = @transform_2, window_bounds = array<i64: 104, 64>}, {pipeline_mode = #tpu.pipeline_mode<synchronous>, transform_indices = @transform_3, window_bounds = array<i64: 104, 64>}, {pipeline_mode = #tpu.pipeline_mode<synchronous>, transform_indices = @transform_4, window_bounds = array<i64: 64, 104>}, {pipeline_mode = #tpu.pipeline_mode<synchronous>, transform_indices = @transform_5, window_bounds = array<i64: 104, 64>}, {pipeline_mode = #tpu.pipeline_mode<synchronous>, transform_indices = @transform_6, window_bounds = array<i64: 64, 104>}, {pipeline_mode = #tpu.pipeline_mode<synchronous>, transform_indices = @transform_7, window_bounds = array<i64: 64, 64>}, {transform_indices = @transform_8, window_bounds = array<i64: 1, 128, 192>}, {transform_indices = @transform_9, window_bounds = array<i64: 1, 128, 192>}, {transform_indices = @transform_10, window_bounds = array<i64: 1, 64, 192>}, {transform_indices = @transform_11, window_bounds = array<i64: 1, 1, 192>}, {transform_indices = @transform_12, window_bounds = array<i64: 1, 64, 64>}, {transform_indices = @transform_13, window_bounds = array<i64: 1, 1, 64>}, {transform_indices = @transform_14, window_bounds = array<i64: 1, 64, 64>}, {transform_indices = @transform_15, window_bounds = array<i64: 1, 1, 64>}, {pipeline_mode = #tpu.pipeline_mode<synchronous>, transform_indices = @transform_16, window_bounds = array<i64: 64, 64>}, {pipeline_mode = #tpu.pipeline_mode<synchronous>, transform_indices = @transform_17, window_bounds = array<i64: 1, 64>}, {pipeline_mode = #tpu.pipeline_mode<synchronous>, transform_indices = @transform_18, window_bounds = array<i64: 64, 64>}, {pipeline_mode = #tpu.pipeline_mode<synchronous>, transform_indices = @transform_19, window_bounds = array<i64: 1, 64>}, {pipeline_mode = #tpu.pipeline_mode<synchronous>, transform_indices = @transform_20, window_bounds = array<i64: 64, 64>}]} {
    %c0_i32 = arith.constant 0 : i32
    %0 = arith.cmpi eq, %arg0, %c0_i32 : i32
    %1 = arith.extui %0 : i1 to i32
    %c0_i32_0 = arith.constant 0 : i32
    %2 = arith.cmpi ne, %1, %c0_i32_0 : i32
    scf.if %2 {
      %c0_64 = arith.constant 0 : index
      %c0_65 = arith.constant 0 : index
      %94 = vector.load %arg1[%c0_64, %c0_65] : memref<64x64xf32, #tpu.memory_space<vmem>>, vector<64x64xf32>
      %c0_66 = arith.constant 0 : index
      %c0_67 = arith.constant 0 : index
      %95 = vector.load %arg22[%c0_66, %c0_67] : memref<64x64xf32, #tpu.memory_space<vmem>>, vector<64x64xf32>
      tpu.vector_store %arg22[%c0_66, %c0_67], %94 {strides = array<i32>} : memref<64x64xf32, #tpu.memory_space<vmem>>, vector<64x64xf32>,
    } else {
    }
    %c0 = arith.constant 0 : index
    %c0_1 = arith.constant 0 : index
    %3 = vector.load %arg22[%c0, %c0_1] : memref<64x64xf32, #tpu.memory_space<vmem>>, vector<64x64xf32>
    %c0_2 = arith.constant 0 : index
    %c0_3 = arith.constant 0 : index
    %4 = vector.load %arg2[%c0_2, %c0_3] : memref<64x64xf32, #tpu.memory_space<vmem>>, vector<64x64xf32>
    %c0_4 = arith.constant 0 : index
    %c0_5 = arith.constant 0 : index
    %5 = vector.load %arg4[%c0_4, %c0_5] : memref<104x64xf32, #tpu.memory_space<vmem>>, vector<104x64xf32>
    %c0_6 = arith.constant 0 : index
    %c0_7 = arith.constant 0 : index
    %6 = vector.load %arg5[%c0_6, %c0_7] : memref<64x104xf32, #tpu.memory_space<vmem>>, vector<64x104xf32>
    %c0_8 = arith.constant 0 : index
    %c0_9 = arith.constant 0 : index
    %c0_10 = arith.constant 0 : index
    %7 = vector.load %arg9[%c0_8, %c0_9, %c0_10] : memref<1x128x192xf32, #tpu.memory_space<vmem>>, vector<1x128x192xf32>
    %8 = vector.shape_cast %7 : vector<1x128x192xf32> to vector<128x192xf32>
    %c0_11 = arith.constant 0 : index
    %c0_12 = arith.constant 0 : index
    %c0_13 = arith.constant 0 : index
    %9 = vector.load %arg10[%c0_11, %c0_12, %c0_13] : memref<1x128x192xf32, #tpu.memory_space<vmem>>, vector<1x128x192xf32>
    %10 = vector.shape_cast %9 : vector<1x128x192xf32> to vector<128x192xf32>
    %11 = vector.extract_strided_slice %8 {offsets = [0, 0], sizes = [64, 192], strides = [1, 1]} : vector<128x192xf32> to vector<64x192xf32>
    %cst = arith.constant dense<0.000000e+00> : vector<64x192xf32>
    %12 = tpu.matmul %3, %11, %cst {dimension_numbers = #tpu.dot_dimension_numbers<[1], [0], [0], [1], [0, 0, 1, 1], [], []>} : vector<64x64xf32>, vector<64x192xf32>, vector<64x192xf32> -> vector<64x192xf32>
    %13 = vector.extract_strided_slice %8 {offsets = [64, 0], sizes = [64, 192], strides = [1, 1]} : vector<128x192xf32> to vector<64x192xf32>
    %cst_14 = arith.constant dense<0.000000e+00> : vector<64x192xf32>
    %14 = tpu.matmul %4, %13, %cst_14 {dimension_numbers = #tpu.dot_dimension_numbers<[1], [0], [0], [1], [0, 0, 1, 1], [], []>} : vector<64x64xf32>, vector<64x192xf32>, vector<64x192xf32> -> vector<64x192xf32>
    %15 = arith.addf %12, %14 : vector<64x192xf32>
    %16 = vector.extract_strided_slice %10 {offsets = [0, 0], sizes = [64, 192], strides = [1, 1]} : vector<128x192xf32> to vector<64x192xf32>
    %cst_15 = arith.constant dense<0.000000e+00> : vector<64x192xf32>
    %17 = tpu.matmul %3, %16, %cst_15 {dimension_numbers = #tpu.dot_dimension_numbers<[1], [0], [0], [1], [0, 0, 1, 1], [], []>} : vector<64x64xf32>, vector<64x192xf32>, vector<64x192xf32> -> vector<64x192xf32>
    %18 = vector.extract_strided_slice %10 {offsets = [64, 0], sizes = [64, 192], strides = [1, 1]} : vector<128x192xf32> to vector<64x192xf32>
    %cst_16 = arith.constant dense<0.000000e+00> : vector<64x192xf32>
    %19 = tpu.matmul %4, %18, %cst_16 {dimension_numbers = #tpu.dot_dimension_numbers<[1], [0], [0], [1], [0, 0, 1, 1], [], []>} : vector<64x64xf32>, vector<64x192xf32>, vector<64x192xf32> -> vector<64x192xf32>
    %20 = arith.addf %17, %19 : vector<64x192xf32>
    %c0_17 = arith.constant 0 : index
    %c0_18 = arith.constant 0 : index
    %21 = vector.load %arg6[%c0_17, %c0_18] : memref<104x64xf32, #tpu.memory_space<vmem>>, vector<104x64xf32>
    %cst_19 = arith.constant dense<0.000000e+00> : vector<104x192xf32>
    %22 = tpu.matmul %21, %15, %cst_19 {dimension_numbers = #tpu.dot_dimension_numbers<[1], [0], [0], [1], [0, 0, 1, 1], [], []>} : vector<104x64xf32>, vector<64x192xf32>, vector<104x192xf32> -> vector<104x192xf32>
    %cst_20 = arith.constant dense<0.000000e+00> : vector<104x192xf32>
    %23 = tpu.matmul %5, %20, %cst_20 {dimension_numbers = #tpu.dot_dimension_numbers<[1], [0], [0], [1], [0, 0, 1, 1], [], []>} : vector<104x64xf32>, vector<64x192xf32>, vector<104x192xf32> -> vector<104x192xf32>
    %24 = arith.addf %22, %23 : vector<104x192xf32>
    %c0_21 = arith.constant 0 : index
    %c0_22 = arith.constant 0 : index
    %25 = vector.load %arg3[%c0_21, %c0_22] : memref<104x64xf32, #tpu.memory_space<vmem>>, vector<104x64xf32>
    %c0_23 = arith.constant 0 : index
    %c0_24 = arith.constant 0 : index
    %c0_25 = arith.constant 0 : index
    %26 = vector.load %arg11[%c0_23, %c0_24, %c0_25] : memref<1x64x192xf32, #tpu.memory_space<vmem>>, vector<1x64x192xf32>
    %27 = vector.shape_cast %26 : vector<1x64x192xf32> to vector<64x192xf32>
    %cst_26 = arith.constant dense<0.000000e+00> : vector<104x192xf32>
    %28 = tpu.matmul %25, %27, %cst_26 {dimension_numbers = #tpu.dot_dimension_numbers<[1], [0], [0], [1], [0, 0, 1, 1], [], []>} : vector<104x64xf32>, vector<64x192xf32>, vector<104x192xf32> -> vector<104x192xf32>
    %29 = arith.addf %24, %28 : vector<104x192xf32>
    %c0_27 = arith.constant 0 : index
    %c0_28 = arith.constant 0 : index
    %c0_29 = arith.constant 0 : index
    %30 = vector.load %arg12[%c0_27, %c0_28, %c0_29] : memref<1x1x192xf32, #tpu.memory_space<vmem>>, vector<1x1x192xf32>
    %31 = vector.shape_cast %30 : vector<1x1x192xf32> to vector<1x192xf32>
    %32 = vector.broadcast %31 : vector<1x192xf32> to vector<104x192xf32>
    %33 = arith.addf %29, %32 : vector<104x192xf32>
    %34 = vector.extract_strided_slice %33 {offsets = [0, 0], sizes = [104, 64], strides = [1, 1]} : vector<104x192xf32> to vector<104x64xf32>
    %35 = vector.extract_strided_slice %33 {offsets = [0, 64], sizes = [104, 64], strides = [1, 1]} : vector<104x192xf32> to vector<104x64xf32>
    %36 = vector.extract_strided_slice %33 {offsets = [0, 128], sizes = [104, 64], strides = [1, 1]} : vector<104x192xf32> to vector<104x64xf32>
    %cst_30 = arith.constant 2.500000e-01 : f32
    %37 = vector.broadcast %cst_30 : f32 to vector<104x64xf32>
    %38 = arith.mulf %36, %37 : vector<104x64xf32>
    %39 = arith.mulf %38, %34 : vector<104x64xf32>
    %c0_31 = arith.constant 0 : index
    %c0_32 = arith.constant 0 : index
    %40 = vector.load %arg8[%c0_31, %c0_32] : memref<64x64xf32, #tpu.memory_space<vmem>>, vector<64x64xf32>
    %cst_33 = arith.constant dense<0.000000e+00> : vector<104x64xf32>
    %41 = tpu.matmul %39, %40, %cst_33 {dimension_numbers = #tpu.dot_dimension_numbers<[1], [0], [0], [1], [0, 0, 1, 1], [], []>} : vector<104x64xf32>, vector<64x64xf32>, vector<104x64xf32> -> vector<104x64xf32>
    %42 = vector.shape_cast %41 : vector<104x64xf32> to vector<1x104x64xf32>
    %cst_34 = arith.constant dense<0xFF800000> : vector<1xf32>
    %43 = vector.multi_reduction <maximumf>, %42, %cst_34 [1, 2] : vector<1x104x64xf32> to vector<1xf32>
    %44 = vector.shape_cast %43 : vector<1xf32> to vector<1x1x1xf32>
    %45 = vector.extract %44[0, 0, 0] : f32 from vector<1x1x1xf32>
    %46 = vector.broadcast %45 : f32 to vector<104x64xf32>
    %47 = arith.subf %41, %46 : vector<104x64xf32>
    %cst_35 = arith.constant -6.000000e+01 : f32
    %48 = vector.broadcast %cst_35 : f32 to vector<104x64xf32>
    %49 = arith.maximumf %47, %48 : vector<104x64xf32>
    %50 = math.exp %49 : vector<104x64xf32>
    %cst_36 = arith.constant dense<0.000000e+00> : vector<64x64xf32>
    %51 = tpu.matmul %6, %50, %cst_36 {dimension_numbers = #tpu.dot_dimension_numbers<[1], [0], [0], [1], [0, 0, 1, 1], [], []>} : vector<64x104xf32>, vector<104x64xf32>, vector<64x64xf32> -> vector<64x64xf32>
    %cst_37 = arith.constant dense<0.000000e+00> : vector<64xf32>
    %52 = vector.multi_reduction <add>, %6, %cst_37 [1] : vector<64x104xf32> to vector<64xf32>
    %53 = vector.shape_cast %52 : vector<64xf32> to vector<64x1xf32>
    %54 = vector.broadcast %53 : vector<64x1xf32> to vector<64x64xf32>
    %55 = arith.divf %54, %51 : vector<64x64xf32>
    %cst_38 = arith.constant dense<0.000000e+00> : vector<104x64xf32>
    %56 = tpu.matmul %5, %55, %cst_38 {dimension_numbers = #tpu.dot_dimension_numbers<[1], [0], [0], [1], [0, 0, 1, 1], [], []>} : vector<104x64xf32>, vector<64x64xf32>, vector<104x64xf32> -> vector<104x64xf32>
    %57 = arith.mulf %50, %56 : vector<104x64xf32>
    %c0_39 = arith.constant 0 : index
    %c0_40 = arith.constant 0 : index
    %58 = vector.load %arg7[%c0_39, %c0_40] : memref<64x104xf32, #tpu.memory_space<vmem>>, vector<64x104xf32>
    %59 = arith.mulf %35, %57 : vector<104x64xf32>
    %cst_41 = arith.constant dense<0.000000e+00> : vector<64x64xf32>
    %60 = tpu.matmul %58, %59, %cst_41 {dimension_numbers = #tpu.dot_dimension_numbers<[1], [0], [0], [1], [0, 0, 1, 1], [], []>} : vector<64x104xf32>, vector<104x64xf32>, vector<64x64xf32> -> vector<64x64xf32>
    %c0_42 = arith.constant 0 : index
    %c0_43 = arith.constant 0 : index
    %c0_44 = arith.constant 0 : index
    %61 = vector.load %arg13[%c0_42, %c0_43, %c0_44] : memref<1x64x64xf32, #tpu.memory_space<vmem>>, vector<1x64x64xf32>
    %62 = vector.shape_cast %61 : vector<1x64x64xf32> to vector<64x64xf32>
    %cst_45 = arith.constant dense<0.000000e+00> : vector<64x64xf32>
    %63 = tpu.matmul %60, %62, %cst_45 {dimension_numbers = #tpu.dot_dimension_numbers<[1], [0], [0], [1], [0, 0, 1, 1], [], []>} : vector<64x64xf32>, vector<64x64xf32>, vector<64x64xf32> -> vector<64x64xf32>
    %c0_46 = arith.constant 0 : index
    %c0_47 = arith.constant 0 : index
    %c0_48 = arith.constant 0 : index
    %64 = vector.load %arg14[%c0_46, %c0_47, %c0_48] : memref<1x1x64xf32, #tpu.memory_space<vmem>>, vector<1x1x64xf32>
    %65 = vector.shape_cast %64 : vector<1x1x64xf32> to vector<1x64xf32>
    %66 = vector.broadcast %65 : vector<1x64xf32> to vector<64x64xf32>
    %67 = arith.addf %63, %66 : vector<64x64xf32>
    %cst_49 = arith.constant 0.000000e+00 : f32
    %68 = vector.broadcast %cst_49 : f32 to vector<64x64xf32>
    %69 = arith.maximumf %67, %68 : vector<64x64xf32>
    %c0_50 = arith.constant 0 : index
    %c0_51 = arith.constant 0 : index
    %c0_52 = arith.constant 0 : index
    %70 = vector.load %arg15[%c0_50, %c0_51, %c0_52] : memref<1x64x64xf32, #tpu.memory_space<vmem>>, vector<1x64x64xf32>
    %71 = vector.shape_cast %70 : vector<1x64x64xf32> to vector<64x64xf32>
    %cst_53 = arith.constant dense<0.000000e+00> : vector<64x64xf32>
    %72 = tpu.matmul %69, %71, %cst_53 {dimension_numbers = #tpu.dot_dimension_numbers<[1], [0], [0], [1], [0, 0, 1, 1], [], []>} : vector<64x64xf32>, vector<64x64xf32>, vector<64x64xf32> -> vector<64x64xf32>
    %c0_54 = arith.constant 0 : index
    %c0_55 = arith.constant 0 : index
    %c0_56 = arith.constant 0 : index
    %73 = vector.load %arg16[%c0_54, %c0_55, %c0_56] : memref<1x1x64xf32, #tpu.memory_space<vmem>>, vector<1x1x64xf32>
    %74 = vector.shape_cast %73 : vector<1x1x64xf32> to vector<1x64xf32>
    %75 = vector.broadcast %74 : vector<1x64xf32> to vector<64x64xf32>
    %76 = arith.addf %72, %75 : vector<64x64xf32>
    %cst_57 = arith.constant 5.000000e-01 : f32
    %77 = vector.broadcast %cst_57 : f32 to vector<64x64xf32>
    %78 = arith.mulf %77, %76 : vector<64x64xf32>
    %cst_58 = arith.constant 4.471500e-02 : f32
    %79 = vector.broadcast %cst_58 : f32 to vector<64x64xf32>
    %80 = arith.mulf %79, %76 : vector<64x64xf32>
    %81 = arith.mulf %80, %76 : vector<64x64xf32>
    %82 = arith.mulf %81, %76 : vector<64x64xf32>
    %83 = arith.addf %76, %82 : vector<64x64xf32>
    %cst_59 = arith.constant 0.797884583 : f32
    %84 = vector.broadcast %cst_59 : f32 to vector<64x64xf32>
    %85 = arith.mulf %84, %83 : vector<64x64xf32>
    %86 = math.tanh %85 : vector<64x64xf32>
    %cst_60 = arith.constant 1.000000e+00 : f32
    %87 = vector.broadcast %cst_60 : f32 to vector<64x64xf32>
    %88 = arith.addf %87, %86 : vector<64x64xf32>
    %89 = arith.mulf %78, %88 : vector<64x64xf32>
    %c0_61 = arith.constant 0 : index
    %c0_62 = arith.constant 0 : index
    %90 = vector.load %arg22[%c0_61, %c0_62] : memref<64x64xf32, #tpu.memory_space<vmem>>, vector<64x64xf32>
    tpu.vector_store %arg22[%c0_61, %c0_62], %89 {strides = array<i32>} : memref<64x64xf32, #tpu.memory_space<vmem>>, vector<64x64xf32>,
    %c1_i32 = arith.constant 1 : i32
    %91 = arith.cmpi eq, %arg0, %c1_i32 : i32
    %92 = arith.extui %91 : i1 to i32
    %c0_i32_63 = arith.constant 0 : i32
    %93 = arith.cmpi ne, %92, %c0_i32_63 : i32
    scf.if %93 {
      %c0_64 = arith.constant 0 : index
      %c0_65 = arith.constant 0 : index
      %94 = vector.load %arg1[%c0_64, %c0_65] : memref<64x64xf32, #tpu.memory_space<vmem>>, vector<64x64xf32>
      %c0_66 = arith.constant 0 : index
      %c0_67 = arith.constant 0 : index
      %95 = vector.load %arg17[%c0_66, %c0_67] : memref<64x64xf32, #tpu.memory_space<vmem>>, vector<64x64xf32>
      %cst_68 = arith.constant dense<0.000000e+00> : vector<64x64xf32>
      %96 = tpu.matmul %94, %95, %cst_68 {dimension_numbers = #tpu.dot_dimension_numbers<[1], [0], [0], [1], [0, 0, 1, 1], [], []>} : vector<64x64xf32>, vector<64x64xf32>, vector<64x64xf32> -> vector<64x64xf32>
      %c0_69 = arith.constant 0 : index
      %c0_70 = arith.constant 0 : index
      %97 = vector.load %arg18[%c0_69, %c0_70] : memref<1x64xf32, #tpu.memory_space<vmem>>, vector<1x64xf32>
      %98 = vector.broadcast %97 : vector<1x64xf32> to vector<64x64xf32>
      %99 = arith.addf %96, %98 : vector<64x64xf32>
      %c0_71 = arith.constant 0 : index
      %c0_72 = arith.constant 0 : index
      %100 = vector.load %arg19[%c0_71, %c0_72] : memref<64x64xf32, #tpu.memory_space<vmem>>, vector<64x64xf32>
      %cst_73 = arith.constant dense<0.000000e+00> : vector<64x64xf32>
      %101 = tpu.matmul %89, %100, %cst_73 {dimension_numbers = #tpu.dot_dimension_numbers<[1], [0], [0], [1], [0, 0, 1, 1], [], []>} : vector<64x64xf32>, vector<64x64xf32>, vector<64x64xf32> -> vector<64x64xf32>
      %102 = arith.addf %99, %101 : vector<64x64xf32>
      %c0_74 = arith.constant 0 : index
      %c0_75 = arith.constant 0 : index
      %103 = vector.load %arg20[%c0_74, %c0_75] : memref<1x64xf32, #tpu.memory_space<vmem>>, vector<1x64xf32>
      %104 = vector.broadcast %103 : vector<1x64xf32> to vector<64x64xf32>
      %105 = arith.addf %102, %104 : vector<64x64xf32>
      %cst_76 = arith.constant 5.000000e-01 : f32
      %106 = vector.broadcast %cst_76 : f32 to vector<64x64xf32>
      %107 = arith.mulf %106, %105 : vector<64x64xf32>
      %cst_77 = arith.constant 4.471500e-02 : f32
      %108 = vector.broadcast %cst_77 : f32 to vector<64x64xf32>
      %109 = arith.mulf %108, %105 : vector<64x64xf32>
      %110 = arith.mulf %109, %105 : vector<64x64xf32>
      %111 = arith.mulf %110, %105 : vector<64x64xf32>
      %112 = arith.addf %105, %111 : vector<64x64xf32>
      %cst_78 = arith.constant 0.797884583 : f32
      %113 = vector.broadcast %cst_78 : f32 to vector<64x64xf32>
      %114 = arith.mulf %113, %112 : vector<64x64xf32>
      %115 = math.tanh %114 : vector<64x64xf32>
      %cst_79 = arith.constant 1.000000e+00 : f32
      %116 = vector.broadcast %cst_79 : f32 to vector<64x64xf32>
      %117 = arith.addf %116, %115 : vector<64x64xf32>
      %118 = arith.mulf %107, %117 : vector<64x64xf32>
      %c0_80 = arith.constant 0 : index
      %c0_81 = arith.constant 0 : index
      %119 = vector.load %arg21[%c0_80, %c0_81] : memref<64x64xf32, #tpu.memory_space<vmem>>, vector<64x64xf32>
      tpu.vector_store %arg21[%c0_80, %c0_81], %118 {strides = array<i32>} : memref<64x64xf32, #tpu.memory_space<vmem>>, vector<64x64xf32>,
    } else {
    }
    return
  }
  func.func @transform_0(%arg0: i32) -> (i32, i32) {
    %c0_i32 = arith.constant 0 : i32
    %c0_i32_0 = arith.constant 0 : i32
    %c0_i32_1 = arith.constant 0 : i32
    return %c0_i32, %c0_i32_0 : i32, i32
  }
  func.func @transform_1(%arg0: i32) -> (i32, i32) {
    %c0_i32 = arith.constant 0 : i32
    %c0_i32_0 = arith.constant 0 : i32
    %c0_i32_1 = arith.constant 0 : i32
    return %c0_i32, %c0_i32_0 : i32, i32
  }
  func.func @transform_2(%arg0: i32) -> (i32, i32) {
    %c0_i32 = arith.constant 0 : i32
    %c0_i32_0 = arith.constant 0 : i32
    %c0_i32_1 = arith.constant 0 : i32
    return %c0_i32, %c0_i32_0 : i32, i32
  }
  func.func @transform_3(%arg0: i32) -> (i32, i32) {
    %c0_i32 = arith.constant 0 : i32
    %c0_i32_0 = arith.constant 0 : i32
    %c0_i32_1 = arith.constant 0 : i32
    return %c0_i32, %c0_i32_0 : i32, i32
  }
  func.func @transform_4(%arg0: i32) -> (i32, i32) {
    %c0_i32 = arith.constant 0 : i32
    %c0_i32_0 = arith.constant 0 : i32
    %c0_i32_1 = arith.constant 0 : i32
    return %c0_i32, %c0_i32_0 : i32, i32
  }
  func.func @transform_5(%arg0: i32) -> (i32, i32) {
    %c0_i32 = arith.constant 0 : i32
    %c0_i32_0 = arith.constant 0 : i32
    %c0_i32_1 = arith.constant 0 : i32
    return %c0_i32, %c0_i32_0 : i32, i32
  }
  func.func @transform_6(%arg0: i32) -> (i32, i32) {
    %c0_i32 = arith.constant 0 : i32
    %c0_i32_0 = arith.constant 0 : i32
    %c0_i32_1 = arith.constant 0 : i32
    return %c0_i32, %c0_i32_0 : i32, i32
  }
  func.func @transform_7(%arg0: i32) -> (i32, i32) {
    %c0_i32 = arith.constant 0 : i32
    %c0_i32_0 = arith.constant 0 : i32
    %c0_i32_1 = arith.constant 0 : i32
    return %c0_i32, %c0_i32_0 : i32, i32
  }
  func.func @transform_8(%arg0: i32) -> (i32, i32, i32) {
    %c0_i32 = arith.constant 0 : i32
    %c0_i32_0 = arith.constant 0 : i32
    %c0_i32_1 = arith.constant 0 : i32
    return %arg0, %c0_i32, %c0_i32_0 : i32, i32, i32
  }
  func.func @transform_9(%arg0: i32) -> (i32, i32, i32) {
    %c0_i32 = arith.constant 0 : i32
    %c0_i32_0 = arith.constant 0 : i32
    %c0_i32_1 = arith.constant 0 : i32
    return %arg0, %c0_i32, %c0_i32_0 : i32, i32, i32
  }
  func.func @transform_10(%arg0: i32) -> (i32, i32, i32) {
    %c0_i32 = arith.constant 0 : i32
    %c0_i32_0 = arith.constant 0 : i32
    %c0_i32_1 = arith.constant 0 : i32
    return %arg0, %c0_i32, %c0_i32_0 : i32, i32, i32
  }
  func.func @transform_11(%arg0: i32) -> (i32, i32, i32) {
    %c0_i32 = arith.constant 0 : i32
    %c0_i32_0 = arith.constant 0 : i32
    %c0_i32_1 = arith.constant 0 : i32
    return %arg0, %c0_i32, %c0_i32_0 : i32, i32, i32
  }
  func.func @transform_12(%arg0: i32) -> (i32, i32, i32) {
    %c0_i32 = arith.constant 0 : i32
    %c0_i32_0 = arith.constant 0 : i32
    %c0_i32_1 = arith.constant 0 : i32
    return %arg0, %c0_i32, %c0_i32_0 : i32, i32, i32
  }
  func.func @transform_13(%arg0: i32) -> (i32, i32, i32) {
    %c0_i32 = arith.constant 0 : i32
    %c0_i32_0 = arith.constant 0 : i32
    %c0_i32_1 = arith.constant 0 : i32
    return %arg0, %c0_i32, %c0_i32_0 : i32, i32, i32
  }
  func.func @transform_14(%arg0: i32) -> (i32, i32, i32) {
    %c0_i32 = arith.constant 0 : i32
    %c0_i32_0 = arith.constant 0 : i32
    %c0_i32_1 = arith.constant 0 : i32
    return %arg0, %c0_i32, %c0_i32_0 : i32, i32, i32
  }
  func.func @transform_15(%arg0: i32) -> (i32, i32, i32) {
    %c0_i32 = arith.constant 0 : i32
    %c0_i32_0 = arith.constant 0 : i32
    %c0_i32_1 = arith.constant 0 : i32
    return %arg0, %c0_i32, %c0_i32_0 : i32, i32, i32
  }
  func.func @transform_16(%arg0: i32) -> (i32, i32) {
    %c0_i32 = arith.constant 0 : i32
    %c0_i32_0 = arith.constant 0 : i32
    %c0_i32_1 = arith.constant 0 : i32
    return %c0_i32, %c0_i32_0 : i32, i32
  }
  func.func @transform_17(%arg0: i32) -> (i32, i32) {
    %c0_i32 = arith.constant 0 : i32
    %c0_i32_0 = arith.constant 0 : i32
    %c0_i32_1 = arith.constant 0 : i32
    return %c0_i32, %c0_i32_0 : i32, i32
  }
  func.func @transform_18(%arg0: i32) -> (i32, i32) {
    %c0_i32 = arith.constant 0 : i32
    %c0_i32_0 = arith.constant 0 : i32
    %c0_i32_1 = arith.constant 0 : i32
    return %c0_i32, %c0_i32_0 : i32, i32
  }
  func.func @transform_19(%arg0: i32) -> (i32, i32) {
    %c0_i32 = arith.constant 0 : i32
    %c0_i32_0 = arith.constant 0 : i32
    %c0_i32_1 = arith.constant 0 : i32
    return %c0_i32, %c0_i32_0 : i32, i32
  }
  func.func @transform_20(%arg0: i32) -> (i32, i32) {
    %c0_i32 = arith.constant 0 : i32
    %c0_i32_0 = arith.constant 0 : i32
    %c0_i32_1 = arith.constant 0 : i32
    return %c0_i32, %c0_i32_0 : i32, i32
  }
}

module attributes {stable_mosaic.version = 11 : i64} {
  func.func @_pool_attn_kernel(%arg0: i32, %arg1: memref<8x32xf32, #tpu.memory_space<vmem>>, %arg2: memref<128x32xf32, #tpu.memory_space<vmem>>, %arg3: memref<128x32xf32, #tpu.memory_space<vmem>>, %arg4: memref<8x128xf32, #tpu.memory_space<vmem>>, %arg5: memref<8x32xf32, #tpu.memory_space<vmem>>, %arg6: memref<8x128xf32, #tpu.memory_space<vmem>>) attributes {dimension_semantics = [#tpu.dimension_semantics<arbitrary>], iteration_bounds = array<i64: 1>, scalar_prefetch = 0 : i64, scratch_operands = 0 : i64, tpu.core_type = #tpu.core_type<tc>, window_params = [{pipeline_mode = #tpu.pipeline_mode<synchronous>, transform_indices = @transform_0, window_bounds = array<i64: 8, 32>}, {pipeline_mode = #tpu.pipeline_mode<synchronous>, transform_indices = @transform_1, window_bounds = array<i64: 128, 32>}, {pipeline_mode = #tpu.pipeline_mode<synchronous>, transform_indices = @transform_2, window_bounds = array<i64: 128, 32>}, {pipeline_mode = #tpu.pipeline_mode<synchronous>, transform_indices = @transform_3, window_bounds = array<i64: 8, 128>}, {pipeline_mode = #tpu.pipeline_mode<synchronous>, transform_indices = @transform_4, window_bounds = array<i64: 8, 32>}, {pipeline_mode = #tpu.pipeline_mode<synchronous>, transform_indices = @transform_5, window_bounds = array<i64: 8, 128>}]} {
    %c0 = arith.constant 0 : index
    %c0_0 = arith.constant 0 : index
    %0 = vector.load %arg1[%c0, %c0_0] : memref<8x32xf32, #tpu.memory_space<vmem>>, vector<8x32xf32>
    %c0_1 = arith.constant 0 : index
    %c0_2 = arith.constant 0 : index
    %1 = vector.load %arg2[%c0_1, %c0_2] : memref<128x32xf32, #tpu.memory_space<vmem>>, vector<128x32xf32>
    %cst = arith.constant dense<0.000000e+00> : vector<8x128xf32>
    %2 = tpu.matmul %0, %1, %cst {dimension_numbers = #tpu.dot_dimension_numbers<[1], [1], [0], [0], [0, 0, 1, 0], [], []>} : vector<8x32xf32>, vector<128x32xf32>, vector<8x128xf32> -> vector<8x128xf32>
    %cst_3 = arith.constant 0.176776692 : f32
    %3 = vector.broadcast %cst_3 : f32 to vector<8x128xf32>
    %4 = arith.mulf %2, %3 : vector<8x128xf32>
    %c0_4 = arith.constant 0 : index
    %c0_5 = arith.constant 0 : index
    %5 = vector.load %arg4[%c0_4, %c0_5] : memref<8x128xf32, #tpu.memory_space<vmem>>, vector<8x128xf32>
    %cst_6 = arith.constant 5.000000e-01 : f32
    %6 = vector.broadcast %cst_6 : f32 to vector<8x128xf32>
    %7 = arith.cmpf ogt, %5, %6 : vector<8x128xf32>
    %cst_7 = arith.constant -1.000000e+30 : f32
    %8 = vector.broadcast %cst_7 : f32 to vector<8x128xf32>
    %9 = arith.select %7, %8, %4 : vector<8x128xi1>, vector<8x128xf32>
    %cst_8 = arith.constant dense<0xFF800000> : vector<8xf32>
    %10 = vector.multi_reduction <maximumf>, %9, %cst_8 [1] : vector<8x128xf32> to vector<8xf32>
    %11 = vector.shape_cast %10 : vector<8xf32> to vector<8x1xf32>
    %12 = vector.broadcast %11 : vector<8x1xf32> to vector<8x128xf32>
    %13 = arith.subf %9, %12 : vector<8x128xf32>
    %14 = math.exp %13 : vector<8x128xf32>
    %cst_9 = arith.constant dense<0.000000e+00> : vector<8xf32>
    %15 = vector.multi_reduction <add>, %14, %cst_9 [1] : vector<8x128xf32> to vector<8xf32>
    %16 = vector.shape_cast %15 : vector<8xf32> to vector<8x1xf32>
    %17 = vector.broadcast %16 : vector<8x1xf32> to vector<8x128xf32>
    %18 = arith.divf %14, %17 : vector<8x128xf32>
    %c0_10 = arith.constant 0 : index
    %c0_11 = arith.constant 0 : index
    %19 = vector.load %arg6[%c0_10, %c0_11] : memref<8x128xf32, #tpu.memory_space<vmem>>, vector<8x128xf32>
    tpu.vector_store %arg6[%c0_10, %c0_11], %18 {strides = array<i32>} : memref<8x128xf32, #tpu.memory_space<vmem>>, vector<8x128xf32>,
    %c0_12 = arith.constant 0 : index
    %c0_13 = arith.constant 0 : index
    %20 = vector.load %arg3[%c0_12, %c0_13] : memref<128x32xf32, #tpu.memory_space<vmem>>, vector<128x32xf32>
    %cst_14 = arith.constant dense<0.000000e+00> : vector<8x32xf32>
    %21 = tpu.matmul %18, %20, %cst_14 {dimension_numbers = #tpu.dot_dimension_numbers<[1], [0], [0], [1], [0, 0, 1, 1], [], []>} : vector<8x128xf32>, vector<128x32xf32>, vector<8x32xf32> -> vector<8x32xf32>
    %c0_15 = arith.constant 0 : index
    %c0_16 = arith.constant 0 : index
    %22 = vector.load %arg5[%c0_15, %c0_16] : memref<8x32xf32, #tpu.memory_space<vmem>>, vector<8x32xf32>
    tpu.vector_store %arg5[%c0_15, %c0_16], %21 {strides = array<i32>} : memref<8x32xf32, #tpu.memory_space<vmem>>, vector<8x32xf32>,
    return
  }
  func.func @transform_0(%arg0: i32) -> (i32, i32) {
    %c0_i32 = arith.constant 0 : i32
    %c0_i32_0 = arith.constant 0 : i32
    %c0_i32_1 = arith.constant 0 : i32
    return %c0_i32, %c0_i32_0 : i32, i32
  }
  func.func @transform_1(%arg0: i32) -> (i32, i32) {
    %c0_i32 = arith.constant 0 : i32
    %c0_i32_0 = arith.constant 0 : i32
    %c0_i32_1 = arith.constant 0 : i32
    return %c0_i32, %c0_i32_0 : i32, i32
  }
  func.func @transform_2(%arg0: i32) -> (i32, i32) {
    %c0_i32 = arith.constant 0 : i32
    %c0_i32_0 = arith.constant 0 : i32
    %c0_i32_1 = arith.constant 0 : i32
    return %c0_i32, %c0_i32_0 : i32, i32
  }
  func.func @transform_3(%arg0: i32) -> (i32, i32) {
    %c0_i32 = arith.constant 0 : i32
    %c0_i32_0 = arith.constant 0 : i32
    %c0_i32_1 = arith.constant 0 : i32
    return %c0_i32, %c0_i32_0 : i32, i32
  }
  func.func @transform_4(%arg0: i32) -> (i32, i32) {
    %c0_i32 = arith.constant 0 : i32
    %c0_i32_0 = arith.constant 0 : i32
    %c0_i32_1 = arith.constant 0 : i32
    return %c0_i32, %c0_i32_0 : i32, i32
  }
  func.func @transform_5(%arg0: i32) -> (i32, i32) {
    %c0_i32 = arith.constant 0 : i32
    %c0_i32_0 = arith.constant 0 : i32
    %c0_i32_1 = arith.constant 0 : i32
    return %c0_i32, %c0_i32_0 : i32, i32
  }
}

module attributes {stable_mosaic.version = 11 : i64} {
  func.func @_fc_tail_kernel(%arg0: i32, %arg1: memref<4x160xf32, #tpu.memory_space<vmem>>, %arg2: memref<160x32xf32, #tpu.memory_space<vmem>>, %arg3: memref<1x32xf32, #tpu.memory_space<vmem>>, %arg4: memref<1x32xf32, #tpu.memory_space<vmem>>, %arg5: memref<1x32xf32, #tpu.memory_space<vmem>>, %arg6: memref<32x1xf32, #tpu.memory_space<vmem>>, %arg7: memref<1x1xf32, #tpu.memory_space<vmem>>, %arg8: memref<4x1xf32, #tpu.memory_space<vmem>>) attributes {dimension_semantics = [#tpu.dimension_semantics<arbitrary>], iteration_bounds = array<i64: 1>, scalar_prefetch = 0 : i64, scratch_operands = 0 : i64, tpu.core_type = #tpu.core_type<tc>, window_params = [{pipeline_mode = #tpu.pipeline_mode<synchronous>, transform_indices = @transform_0, window_bounds = array<i64: 4, 160>}, {pipeline_mode = #tpu.pipeline_mode<synchronous>, transform_indices = @transform_1, window_bounds = array<i64: 160, 32>}, {pipeline_mode = #tpu.pipeline_mode<synchronous>, transform_indices = @transform_2, window_bounds = array<i64: 1, 32>}, {pipeline_mode = #tpu.pipeline_mode<synchronous>, transform_indices = @transform_3, window_bounds = array<i64: 1, 32>}, {pipeline_mode = #tpu.pipeline_mode<synchronous>, transform_indices = @transform_4, window_bounds = array<i64: 1, 32>}, {pipeline_mode = #tpu.pipeline_mode<synchronous>, transform_indices = @transform_5, window_bounds = array<i64: 32, 1>}, {pipeline_mode = #tpu.pipeline_mode<synchronous>, transform_indices = @transform_6, window_bounds = array<i64: 1, 1>}, {pipeline_mode = #tpu.pipeline_mode<synchronous>, transform_indices = @transform_7, window_bounds = array<i64: 4, 1>}]} {
    %c0 = arith.constant 0 : index
    %c0_0 = arith.constant 0 : index
    %0 = vector.load %arg1[%c0, %c0_0] : memref<4x160xf32, #tpu.memory_space<vmem>>, vector<4x160xf32>
    %c0_1 = arith.constant 0 : index
    %c0_2 = arith.constant 0 : index
    %1 = vector.load %arg2[%c0_1, %c0_2] : memref<160x32xf32, #tpu.memory_space<vmem>>, vector<160x32xf32>
    %cst = arith.constant dense<0.000000e+00> : vector<4x32xf32>
    %2 = tpu.matmul %0, %1, %cst {dimension_numbers = #tpu.dot_dimension_numbers<[1], [0], [0], [1], [0, 0, 1, 1], [], []>} : vector<4x160xf32>, vector<160x32xf32>, vector<4x32xf32> -> vector<4x32xf32>
    %c0_3 = arith.constant 0 : index
    %c0_4 = arith.constant 0 : index
    %3 = vector.load %arg3[%c0_3, %c0_4] : memref<1x32xf32, #tpu.memory_space<vmem>>, vector<1x32xf32>
    %4 = vector.broadcast %3 : vector<1x32xf32> to vector<4x32xf32>
    %5 = arith.addf %2, %4 : vector<4x32xf32>
    %cst_5 = arith.constant dense<0.000000e+00> : vector<4xf32>
    %6 = vector.multi_reduction <add>, %5, %cst_5 [1] : vector<4x32xf32> to vector<4xf32>
    %7 = vector.shape_cast %6 : vector<4xf32> to vector<4x1xf32>
    %cst_6 = arith.constant 3.200000e+01 : f32
    %8 = vector.broadcast %cst_6 : f32 to vector<4x1xf32>
    %9 = arith.divf %7, %8 : vector<4x1xf32>
    %10 = vector.broadcast %9 : vector<4x1xf32> to vector<4x32xf32>
    %11 = arith.subf %5, %10 : vector<4x32xf32>
    %12 = arith.mulf %11, %11 : vector<4x32xf32>
    %cst_7 = arith.constant dense<0.000000e+00> : vector<4xf32>
    %13 = vector.multi_reduction <add>, %12, %cst_7 [1] : vector<4x32xf32> to vector<4xf32>
    %14 = vector.shape_cast %13 : vector<4xf32> to vector<4x1xf32>
    %cst_8 = arith.constant 3.200000e+01 : f32
    %15 = vector.broadcast %cst_8 : f32 to vector<4x1xf32>
    %16 = arith.divf %14, %15 : vector<4x1xf32>
    %cst_9 = arith.constant 9.99999974E-6 : f32
    %17 = vector.broadcast %cst_9 : f32 to vector<4x1xf32>
    %18 = arith.addf %16, %17 : vector<4x1xf32>
    %19 = math.rsqrt %18 : vector<4x1xf32>
    %20 = vector.broadcast %19 : vector<4x1xf32> to vector<4x32xf32>
    %21 = arith.mulf %11, %20 : vector<4x32xf32>
    %c0_10 = arith.constant 0 : index
    %c0_11 = arith.constant 0 : index
    %22 = vector.load %arg4[%c0_10, %c0_11] : memref<1x32xf32, #tpu.memory_space<vmem>>, vector<1x32xf32>
    %23 = vector.broadcast %22 : vector<1x32xf32> to vector<4x32xf32>
    %24 = arith.mulf %21, %23 : vector<4x32xf32>
    %c0_12 = arith.constant 0 : index
    %c0_13 = arith.constant 0 : index
    %25 = vector.load %arg5[%c0_12, %c0_13] : memref<1x32xf32, #tpu.memory_space<vmem>>, vector<1x32xf32>
    %26 = vector.broadcast %25 : vector<1x32xf32> to vector<4x32xf32>
    %27 = arith.addf %24, %26 : vector<4x32xf32>
    %cst_14 = arith.constant 5.000000e-01 : f32
    %28 = vector.broadcast %cst_14 : f32 to vector<4x32xf32>
    %29 = arith.mulf %28, %27 : vector<4x32xf32>
    %cst_15 = arith.constant 4.471500e-02 : f32
    %30 = vector.broadcast %cst_15 : f32 to vector<4x32xf32>
    %31 = arith.mulf %30, %27 : vector<4x32xf32>
    %32 = arith.mulf %31, %27 : vector<4x32xf32>
    %33 = arith.mulf %32, %27 : vector<4x32xf32>
    %34 = arith.addf %27, %33 : vector<4x32xf32>
    %cst_16 = arith.constant 0.797884583 : f32
    %35 = vector.broadcast %cst_16 : f32 to vector<4x32xf32>
    %36 = arith.mulf %35, %34 : vector<4x32xf32>
    %37 = math.tanh %36 : vector<4x32xf32>
    %cst_17 = arith.constant 1.000000e+00 : f32
    %38 = vector.broadcast %cst_17 : f32 to vector<4x32xf32>
    %39 = arith.addf %38, %37 : vector<4x32xf32>
    %40 = arith.mulf %29, %39 : vector<4x32xf32>
    %c0_18 = arith.constant 0 : index
    %c0_19 = arith.constant 0 : index
    %41 = vector.load %arg6[%c0_18, %c0_19] : memref<32x1xf32, #tpu.memory_space<vmem>>, vector<32x1xf32>
    %cst_20 = arith.constant dense<0.000000e+00> : vector<4x1xf32>
    %42 = tpu.matmul %40, %41, %cst_20 {dimension_numbers = #tpu.dot_dimension_numbers<[1], [0], [0], [1], [0, 0, 1, 1], [], []>} : vector<4x32xf32>, vector<32x1xf32>, vector<4x1xf32> -> vector<4x1xf32>
    %c0_21 = arith.constant 0 : index
    %c0_22 = arith.constant 0 : index
    %43 = vector.load %arg7[%c0_21, %c0_22] : memref<1x1xf32, #tpu.memory_space<vmem>>, vector<1x1xf32>
    %44 = vector.broadcast %43 : vector<1x1xf32> to vector<4x1xf32>
    %45 = arith.addf %42, %44 : vector<4x1xf32>
    %c0_23 = arith.constant 0 : index
    %c0_24 = arith.constant 0 : index
    %46 = vector.load %arg8[%c0_23, %c0_24] : memref<4x1xf32, #tpu.memory_space<vmem>>, vector<4x1xf32>
    tpu.vector_store %arg8[%c0_23, %c0_24], %45 {strides = array<i32>} : memref<4x1xf32, #tpu.memory_space<vmem>>, vector<4x1xf32>,
    return
  }
  func.func @transform_0(%arg0: i32) -> (i32, i32) {
    %c0_i32 = arith.constant 0 : i32
    %c0_i32_0 = arith.constant 0 : i32
    %c0_i32_1 = arith.constant 0 : i32
    return %c0_i32, %c0_i32_0 : i32, i32
  }
  func.func @transform_1(%arg0: i32) -> (i32, i32) {
    %c0_i32 = arith.constant 0 : i32
    %c0_i32_0 = arith.constant 0 : i32
    %c0_i32_1 = arith.constant 0 : i32
    return %c0_i32, %c0_i32_0 : i32, i32
  }
  func.func @transform_2(%arg0: i32) -> (i32, i32) {
    %c0_i32 = arith.constant 0 : i32
    %c0_i32_0 = arith.constant 0 : i32
    %c0_i32_1 = arith.constant 0 : i32
    return %c0_i32, %c0_i32_0 : i32, i32
  }
  func.func @transform_3(%arg0: i32) -> (i32, i32) {
    %c0_i32 = arith.constant 0 : i32
    %c0_i32_0 = arith.constant 0 : i32
    %c0_i32_1 = arith.constant 0 : i32
    return %c0_i32, %c0_i32_0 : i32, i32
  }
  func.func @transform_4(%arg0: i32) -> (i32, i32) {
    %c0_i32 = arith.constant 0 : i32
    %c0_i32_0 = arith.constant 0 : i32
    %c0_i32_1 = arith.constant 0 : i32
    return %c0_i32, %c0_i32_0 : i32, i32
  }
  func.func @transform_5(%arg0: i32) -> (i32, i32) {
    %c0_i32 = arith.constant 0 : i32
    %c0_i32_0 = arith.constant 0 : i32
    %c0_i32_1 = arith.constant 0 : i32
    return %c0_i32, %c0_i32_0 : i32, i32
  }
  func.func @transform_6(%arg0: i32) -> (i32, i32) {
    %c0_i32 = arith.constant 0 : i32
    %c0_i32_0 = arith.constant 0 : i32
    %c0_i32_1 = arith.constant 0 : i32
    return %c0_i32, %c0_i32_0 : i32, i32
  }
  func.func @transform_7(%arg0: i32) -> (i32, i32) {
    %c0_i32 = arith.constant 0 : i32
    %c0_i32_0 = arith.constant 0 : i32
    %c0_i32_1 = arith.constant 0 : i32
    return %c0_i32, %c0_i32_0 : i32, i32
  }
}

</mosaic_0001>

<llo_original>
// kernel: neg.1
$region0: #{neg.1}
  #allocation0 [shape = 's32[1]{0}', space=sflag, size = 0x4, scoped, tag = 'scoped memory for neg.1']
  %s0 = inlined_call_operand.vmem [shape: f32[4,16,1], index: 0, kind: input, shape index: {}]
  %s1 = inlined_call_operand.vmem [shape: f32[4,16,1], index: 1, kind: output, shape index: {}]
  %v2 = vld [vmem:[%s0] sm:$0x1]
  %3 = xla_tuple %v2
  %4 = xla_tuple %3
  %v5 = vxor.u32 %v2, 2147483648
  %6 = xla_tuple %v5
  %7 = vst [vmem:[%s1] sm:$0x1] %v5
  %s8 = scalar_lea.vmem %s0, 1
  %v9 = vld [vmem:[%s8] sm:$0x1]
  %10 = xla_tuple %v9
  %11 = xla_tuple %10
  %v12 = vxor.u32 %v9, 2147483648
  %13 = xla_tuple %v12
  %s14 = scalar_lea.vmem %s1, 1
  %15 = vst [vmem:[%s14] sm:$0x1] %v12
  %s16 = scalar_lea.vmem %s0, 2
  %v17 = vld [vmem:[%s16] sm:$0x1]
  %18 = xla_tuple %v17
  %19 = xla_tuple %18
  %v20 = vxor.u32 %v17, 2147483648
  %21 = xla_tuple %v20
  %s22 = scalar_lea.vmem %s1, 2
  %23 = vst [vmem:[%s22] sm:$0x1] %v20
  %s24 = scalar_lea.vmem %s0, 3
  %v25 = vld [vmem:[%s24] sm:$0x1]
  %26 = xla_tuple %v25
  %27 = xla_tuple %26
  %v28 = vxor.u32 %v25, 2147483648
  %29 = xla_tuple %v28
  %s30 = scalar_lea.vmem %s1, 3
  %31 = vst [vmem:[%s30] sm:$0x1] %v28

// kernel: eq.1
$region0: #{eq.1}
  %s0 = inlined_call_operand.vmem [shape: s32[4,16], index: 0, kind: input, shape index: {}]
  %s1 = inlined_call_operand.vmem [shape: s32[64], index: 1, kind: output, shape index: {}]
  $region1: #{eq.1} parent=0
    #allocation0 [shape = 'u8[4096]{0}', space=vmem, size = 0x1000, scoped, tag = 'scoped mem for output reshape']
    #allocation1 [shape = 'u8[4096]{0}', space=vmem, size = 0x1000, scoped, tag = 'scoped mem for input reshape']
    %s3 = sshllo.u32 0, 4
    %v4 = vld [vmem:[%s0] sm:%s3]
    %5 = vst [vmem:[#allocation1] sm:%s3] %v4
    %v6 = vld [vmem:[#allocation1] sm:$0x1]
    %vm7 = vcmask 130048
    %8 = vst.msk [vmem:[#allocation0] sm:$0x1] %vm7, %v6
    %s9 = scalar_lea.vmem [#allocation1], 3
    %v10 = vld [vmem:[%s9] sm:$0x1]
    %11 = vrot.lane.b32.xlu0 %v10, 48
    %v12 = vpop.permute.xlu0 %11
    %vm13 = vcmask 523648
    %14 = vst.msk [vmem:[#allocation0] sm:$0x1] %vm13, %v12
    %s15 = scalar_lea.vmem [#allocation1], 2
    %v16 = vld [vmem:[%s15] sm:$0x1]
    %17 = vrot.lane.b32.xlu0 %v16, 32
    %v18 = vpop.permute.xlu0 %17
    %vm19 = vcmask 392448
    %20 = vst.msk [vmem:[#allocation0] sm:$0x1] %vm19, %v18
    %s21 = scalar_lea.vmem [#allocation1], 1
    %v22 = vld [vmem:[%s21] sm:$0x1]
    %23 = vrot.lane.b32.xlu0 %v22, 16
    %v24 = vpop.permute.xlu0 %23
    %vm25 = vcmask 261248
    %26 = vst.msk [vmem:[#allocation0] sm:$0x1] %vm25, %v24
    %s28 = sshllo.u32 0, 1
    %v30 = vld [vmem:[#allocation0] sm:%s28]
    %s31 = sshllo.u32 0, 1
    %32 = vst [vmem:[%s1] sm:%s31] %v30

// kernel: qagnn_decoder_forward.8
$region0: #{qagnn_decoder_forward.8}
  #allocation0 [shape = 'u32[]', space=smem, size = 0x4, offset = 0x4, fixed_abs, tag = 'smem constant byte address 0x4 - core index']
  #allocation1 [shape = 'u32[144,128]{1,0:T(1,128)}', space=vmem, size = 0x12000, scoped, tag = 'internal scratch']
  %s0 = inlined_call_operand.vmem [shape: f32[4,32], index: 0, kind: input, shape index: {}]
  %s1 = inlined_call_operand.vmem [shape: f32[32,64], index: 1, kind: input, shape index: {}]
  %s2 = inlined_call_operand.vmem [shape: f32[1,64], index: 2, kind: input, shape index: {}]
  %s3 = inlined_call_operand.vmem [shape: f32[4,64], index: 3, kind: output, shape index: {}]
  %s4 = sld [smem:[#allocation0]]
  $region22: #{qagnn_decoder_forward.8} parent=0
    _
  %s6 = ssub.s32 1, %s4
  %s7 = scalar_select 0, %s6, %s4
  // Predicated region
  $region2: #{qagnn_decoder_forward.8} parent=0 // pred_check
    _
  $region3: #{qagnn_decoder_forward.8} parent=0 // pred_check_branch
    %9 = sbr.rel (0) target = $region5
  $region4: #{qagnn_decoder_forward.8} parent=0 // pred_region
    _
  $region5: #{qagnn_decoder_forward.8} parent=0 // pred_fallthru
    _
  // Predicated region
  $region6: #{qagnn_decoder_forward.8} parent=0 // pred_check
    _
  $region7: #{qagnn_decoder_forward.8} parent=0 // pred_check_branch
    %11 = sbr.rel (0) target = $region9
  $region8: #{qagnn_decoder_forward.8} parent=0 // pred_region
    _
  $region9: #{qagnn_decoder_forward.8} parent=0 // pred_fallthru
    _
  // Predicated region
  $region10: #{qagnn_decoder_forward.8} parent=0 // pred_check
    _
  $region11: #{qagnn_decoder_forward.8} parent=0 // pred_check_branch
    %13 = sbr.rel (0) target = $region13
  $region12: #{qagnn_decoder_forward.8} parent=0 // pred_region
    _
  $region13: #{qagnn_decoder_forward.8} parent=0 // pred_fallthru
    _
  %v14 = vld [vmem:[%s0] sm:$0xf]
  %v15 = vld [vmem:[%s1] sm:$0xff]
  %v16 = vld [vmem:[%s1 + $0x8] sm:$0xff]
  %v17 = vld [vmem:[%s1 + $0x10] sm:$0xff]
  %v18 = vld [vmem:[%s1 + $0x18] sm:$0xff]
  %v19 = vld [vmem:[%s2] sm:$0x1]
  %v21 = vlaneseq
  %v22 = vshrl.u32 %v21, 7
  %v23 = vsub.s32 0, %v22
  %v24 = vrot.slane %v19, %v23
  %vm26 = vcmask 261120
  %v28 = vsel %vm26, %v14, 0
  %30 = vmatprep.subr.mxu0 0.0
  %31 = vmatpush1.msra.mxu0 %v15
  %32 = vmatprep.subr.mxu0 0.0
  %33 = vmatpush1.msra.mxu0 %v16
  %34 = vmatprep.subr.mxu0 0.0
  %35 = vmatpush1.msra.mxu0 %v17
  %36 = vmatprep.subr.mxu0 0.0
  %37 = vmatpush1.msra.mxu0 %v18
  %38 = vmatprep.subr.mxu0 0.0
  %39 = vmatpush1.msra.mxu0 0.0
  %40 = vmatprep.subr.mxu0 0.0
  %41 = vmatpush1.msra.mxu0 0.0
  %42 = vmatprep.subr.mxu0 0.0
  %43 = vmatpush1.msra.mxu0 0.0
  %44 = vmatprep.subr.mxu0 0.0
  %45 = vmatpush1.msra.mxu0 0.0
  %46 = vmatprep.subr.mxu0 0.0
  %47 = vmatpush1.msra.mxu0 0.0
  %48 = vmatprep.subr.mxu0 0.0
  %49 = vmatpush1.msra.mxu0 0.0
  %50 = vmatprep.subr.mxu0 0.0
  %51 = vmatpush1.msra.mxu0 0.0
  %52 = vmatprep.subr.mxu0 0.0
  %53 = vmatpush1.msra.mxu0 0.0
  %54 = vmatprep.subr.mxu0 0.0
  %55 = vmatpush1.msra.mxu0 0.0
  %56 = vmatprep.subr.mxu0 0.0
  %57 = vmatpush1.msra.mxu0 0.0
  %58 = vmatprep.subr.mxu0 0.0
  %59 = vmatpush1.msra.mxu0 0.0
  %60 = vmatprep.subr.mxu0 0.0
  %61 = vmatpush1.msra.mxu0 0.0
  %62 = vmatprep.subr.mxu0 0.0
  %63 = vmatpush1.msra.mxu0 0.0
  %64 = vmatprep.subr.mxu0 0.0
  %65 = vmatpush1.msra.mxu0 0.0
  %66 = vmatprep.subr.mxu0 0.0
  %67 = vmatpush1.msra.mxu0 0.0
  %68 = vmatprep.subr.mxu0 0.0
  %69 = vmatpush1.msra.mxu0 0.0
  %70 = vmatprep.subr.mxu0 0.0
  %71 = vmatpush1.msra.mxu0 0.0
  %72 = vmatprep.subr.mxu0 0.0
  %73 = vmatpush1.msra.mxu0 0.0
  %74 = vmatprep.subr.mxu0 0.0
  %75 = vmatpush1.msra.mxu0 0.0
  %76 = vmatprep.subr.mxu0 0.0
  %77 = vmatpush1.msra.mxu0 0.0
  %78 = vmatprep.subr.mxu0 0.0
  %79 = vmatpush1.msra.mxu0 0.0
  %80 = vmatprep.subr.mxu0 0.0
  %81 = vmatpush1.msra.mxu0 0.0
  %82 = vmatprep.subr.mxu0 0.0
  %83 = vmatpush1.msra.mxu0 0.0
  %84 = vmatprep.subr.mxu0 0.0
  %85 = vmatpush1.msra.mxu0 0.0
  %86 = vmatprep.subr.mxu0 0.0
  %87 = vmatpush1.msra.mxu0 0.0
  %88 = vmatprep.subr.mxu0 0.0
  %89 = vmatpush1.msra.mxu0 0.0
  %90 = vmatprep.subr.mxu0 0.0
  %91 = vmatpush1.msra.mxu0 0.0
  %92 = vmatprep.subr.mxu0 0.0
  %93 = vmatpush1.msra.mxu0 0.0
  %94 = vmatprep.mubr.f32.mxu0 0.0
  %95 = vmatmul.mubr.f32.gmra.mrb[0].mxu0 %v28
  %v96 = vpop.f32.mrb[0].mxu0
  %v97 = vadd.f32 %v24, %v96
  %v98 = vpop.f32.mrb[0].mxu0
  %99 = vdwg.mxu0
  %v100 = vmul.f32 %v97, 0.5
  %v101 = vmul.f32 %v97, 0.044715
  %v102 = vmul.f32 %v101, %v97
  %v103 = vmul.f32 %v102, %v97
  %v104 = vadd.f32 %v97, %v103
  %v105 = vmul.f32 %v104, 0.7978846
  %v106 = vtanh.pop %v105
  %v107 = vadd.f32 %v106, 1.0
  %v108 = vmul.f32 %v100, %v107
  %vm109 = vcmask 519168
  %110 = vst.msk [vmem:[%s3] sm:$0xf] %vm109, %v108
  // Predicated region
  $region14: #{qagnn_decoder_forward.8} parent=0 // pred_check
    _
  $region15: #{qagnn_decoder_forward.8} parent=0 // pred_check_branch
    %112 = sbr.rel (0) target = $region17
  $region16: #{qagnn_decoder_forward.8} parent=0 // pred_region
    _
  $region17: #{qagnn_decoder_forward.8} parent=0 // pred_fallthru
    _
  // Predicated region
  $region18: #{qagnn_decoder_forward.8} parent=0 // pred_check
    _
  $region19: #{qagnn_decoder_forward.8} parent=0 // pred_check_branch
    %114 = sbr.rel (0) target = $region21
  $region20: #{qagnn_decoder_forward.8} parent=0 // pred_region
    _
  $region21: #{qagnn_decoder_forward.8} parent=0 // pred_fallthru
    _

// kernel: qagnn_decoder_forward.9
$region0: #{qagnn_decoder_forward.9}
  #allocation0 [shape = 'u32[]', space=smem, size = 0x4, offset = 0x4, fixed_abs, tag = 'smem constant byte address 0x4 - core index']
  #allocation1 [shape = 'u32[144,128]{1,0:T(1,128)}', space=vmem, size = 0x12000, scoped, tag = 'internal scratch']
  %s0 = inlined_call_operand.vmem [shape: f32[64,36], index: 0, kind: input, shape index: {}]
  %s1 = inlined_call_operand.vmem [shape: f32[36,64], index: 1, kind: input, shape index: {}]
  %s2 = inlined_call_operand.vmem [shape: f32[1,64], index: 2, kind: input, shape index: {}]
  %s3 = inlined_call_operand.vmem [shape: f32[64,64], index: 3, kind: output, shape index: {}]
  %s4 = sld [smem:[#allocation0]]
  $region22: #{qagnn_decoder_forward.9} parent=0
    _
  %s6 = ssub.s32 1, %s4
  %s7 = scalar_select 0, %s6, %s4
  // Predicated region
  $region2: #{qagnn_decoder_forward.9} parent=0 // pred_check
    _
  $region3: #{qagnn_decoder_forward.9} parent=0 // pred_check_branch
    %9 = sbr.rel (0) target = $region5
  $region4: #{qagnn_decoder_forward.9} parent=0 // pred_region
    _
  $region5: #{qagnn_decoder_forward.9} parent=0 // pred_fallthru
    _
  // Predicated region
  $region6: #{qagnn_decoder_forward.9} parent=0 // pred_check
    _
  $region7: #{qagnn_decoder_forward.9} parent=0 // pred_check_branch
    %11 = sbr.rel (0) target = $region9
  $region8: #{qagnn_decoder_forward.9} parent=0 // pred_region
    _
  $region9: #{qagnn_decoder_forward.9} parent=0 // pred_fallthru
    _
  // Predicated region
  $region10: #{qagnn_decoder_forward.9} parent=0 // pred_check
    _
  $region11: #{qagnn_decoder_forward.9} parent=0 // pred_check_branch
    %13 = sbr.rel (0) target = $region13
  $region12: #{qagnn_decoder_forward.9} parent=0 // pred_region
    _
  $region13: #{qagnn_decoder_forward.9} parent=0 // pred_fallthru
    _
  %v14 = vld [vmem:[%s0] sm:$0xff]
  %v15 = vld [vmem:[%s0 + $0x8] sm:$0xff]
  %v16 = vld [vmem:[%s0 + $0x10] sm:$0xff]
  %v17 = vld [vmem:[%s0 + $0x18] sm:$0xff]
  %v18 = vld [vmem:[%s0 + $0x20] sm:$0xff]
  %v19 = vld [vmem:[%s0 + $0x28] sm:$0xff]
  %v20 = vld [vmem:[%s0 + $0x30] sm:$0xff]
  %v21 = vld [vmem:[%s0 + $0x38] sm:$0xff]
  %v22 = vld [vmem:[%s1] sm:$0xff]
  %v23 = vld [vmem:[%s1 + $0x8] sm:$0xff]
  %v24 = vld [vmem:[%s1 + $0x10] sm:$0xff]
  %v25 = vld [vmem:[%s1 + $0x18] sm:$0xff]
  %v26 = vld [vmem:[%s1 + $0x20] sm:$0xf]
  %v27 = vld [vmem:[%s2] sm:$0x1]
  %v29 = vlaneseq
  %v30 = vshrl.u32 %v29, 7
  %v31 = vsub.s32 0, %v30
  %v32 = vrot.slane %v27, %v31
  %vm34 = vcmask 293888
  %v36 = vsel %vm34, %v14, 0
  %v39 = vsel %vm34, %v15, 0
  %v42 = vsel %vm34, %v16, 0
  %v45 = vsel %vm34, %v17, 0
  %v48 = vsel %vm34, %v18, 0
  %v51 = vsel %vm34, %v19, 0
  %v54 = vsel %vm34, %v20, 0
  %v57 = vsel %vm34, %v21, 0
  %vm59 = vcmask 1043456
  %v61 = vsel %vm59, %v26, 0
  %63 = vmatprep.subr.mxu0 0.0
  %64 = vmatpush1.msra.mxu0 %v22
  %65 = vmatprep.subr.mxu0 0.0
  %66 = vmatpush1.msra.mxu0 %v23
  %67 = vmatprep.subr.mxu0 0.0
  %68 = vmatpush1.msra.mxu0 %v24
  %69 = vmatprep.subr.mxu0 0.0
  %70 = vmatpush1.msra.mxu0 %v25
  %71 = vmatprep.subr.mxu0 0.0
  %72 = vmatpush1.msra.mxu0 %v61
  %73 = vmatprep.subr.mxu0 0.0
  %74 = vmatpush1.msra.mxu0 0.0
  %75 = vmatprep.subr.mxu0 0.0
  %76 = vmatpush1.msra.mxu0 0.0
  %77 = vmatprep.subr.mxu0 0.0
  %78 = vmatpush1.msra.mxu0 0.0
  %79 = vmatprep.subr.mxu0 0.0
  %80 = vmatpush1.msra.mxu0 0.0
  %81 = vmatprep.subr.mxu0 0.0
  %82 = vmatpush1.msra.mxu0 0.0
  %83 = vmatprep.subr.mxu0 0.0
  %84 = vmatpush1.msra.mxu0 0.0
  %85 = vmatprep.subr.mxu0 0.0
  %86 = vmatpush1.msra.mxu0 0.0
  %87 = vmatprep.subr.mxu0 0.0
  %88 = vmatpush1.msra.mxu0 0.0
  %89 = vmatprep.subr.mxu0 0.0
  %90 = vmatpush1.msra.mxu0 0.0
  %91 = vmatprep.subr.mxu0 0.0
  %92 = vmatpush1.msra.mxu0 0.0
  %93 = vmatprep.subr.mxu0 0.0
  %94 = vmatpush1.msra.mxu0 0.0
  %95 = vmatprep.subr.mxu0 0.0
  %96 = vmatpush1.msra.mxu0 0.0
  %97 = vmatprep.subr.mxu0 0.0
  %98 = vmatpush1.msra.mxu0 0.0
  %99 = vmatprep.subr.mxu0 0.0
  %100 = vmatpush1.msra.mxu0 0.0
  %101 = vmatprep.subr.mxu0 0.0
  %102 = vmatpush1.msra.mxu0 0.0
  %103 = vmatprep.subr.mxu0 0.0
  %104 = vmatpush1.msra.mxu0 0.0
  %105 = vmatprep.subr.mxu0 0.0
  %106 = vmatpush1.msra.mxu0 0.0
  %107 = vmatprep.subr.mxu0 0.0
  %108 = vmatpush1.msra.mxu0 0.0
  %109 = vmatprep.subr.mxu0 0.0
  %110 = vmatpush1.msra.mxu0 0.0
  %111 = vmatprep.subr.mxu0 0.0
  %112 = vmatpush1.msra.mxu0 0.0
  %113 = vmatprep.subr.mxu0 0.0
  %114 = vmatpush1.msra.mxu0 0.0
  %115 = vmatprep.subr.mxu0 0.0
  %116 = vmatpush1.msra.mxu0 0.0
  %117 = vmatprep.subr.mxu0 0.0
  %118 = vmatpush1.msra.mxu0 0.0
  %119 = vmatprep.subr.mxu0 0.0
  %120 = vmatpush1.msra.mxu0 0.0
  %121 = vmatprep.subr.mxu0 0.0
  %122 = vmatpush1.msra.mxu0 0.0
  %123 = vmatprep.subr.mxu0 0.0
  %124 = vmatpush1.msra.mxu0 0.0
  %125 = vmatprep.subr.mxu0 0.0
  %126 = vmatpush1.msra.mxu0 0.0
  %127 = vmatprep.mubr.f32.mxu0 0.0
  %128 = vmatmul.mubr.f32.gmra.mrb[0].mxu0 %v36
  %v129 = vpop.f32.mrb[0].mxu0
  %v130 = vadd.f32 %v32, %v129
  %v131 = vpop.f32.mrb[0].mxu0
  %132 = vmatprep.mubr.f32.mxu0 0.0
  %133 = vmatmul.mubr.f32.gmra.mrb[0].mxu0 %v39
  %v134 = vpop.f32.mrb[0].mxu0
  %v135 = vadd.f32 %v32, %v134
  %v136 = vpop.f32.mrb[0].mxu0
  %137 = vmatprep.mubr.f32.mxu0 0.0
  %138 = vmatmul.mubr.f32.gmra.mrb[0].mxu0 %v42
  %v139 = vpop.f32.mrb[0].mxu0
  %v140 = vadd.f32 %v32, %v139
  %v141 = vpop.f32.mrb[0].mxu0
  %142 = vmatprep.mubr.f32.mxu0 0.0
  %143 = vmatmul.mubr.f32.gmra.mrb[0].mxu0 %v45
  %v144 = vpop.f32.mrb[0].mxu0
  %v145 = vadd.f32 %v32, %v144
  %v146 = vpop.f32.mrb[0].mxu0
  %147 = vmatprep.mubr.f32.mxu0 0.0
  %148 = vmatmul.mubr.f32.gmra.mrb[0].mxu0 %v48
  %v149 = vpop.f32.mrb[0].mxu0
  %v150 = vadd.f32 %v32, %v149
  %v151 = vpop.f32.mrb[0].mxu0
  %152 = vmatprep.mubr.f32.mxu0 0.0
  %153 = vmatmul.mubr.f32.gmra.mrb[0].mxu0 %v51
  %v154 = vpop.f32.mrb[0].mxu0
  %v155 = vadd.f32 %v32, %v154
  %v156 = vpop.f32.mrb[0].mxu0
  %157 = vmatprep.mubr.f32.mxu0 0.0
  %158 = vmatmul.mubr.f32.gmra.mrb[0].mxu0 %v54
  %v159 = vpop.f32.mrb[0].mxu0
  %v160 = vadd.f32 %v32, %v159
  %v161 = vpop.f32.mrb[0].mxu0
  %162 = vmatprep.mubr.f32.mxu0 0.0
  %163 = vmatmul.mubr.f32.gmra.mrb[0].mxu0 %v57
  %v164 = vpop.f32.mrb[0].mxu0
  %v165 = vadd.f32 %v32, %v164
  %v166 = vpop.f32.mrb[0].mxu0
  %167 = vdwg.mxu0
  %v168 = vmul.f32 %v130, 0.5
  %v169 = vmul.f32 %v135, 0.5
  %v170 = vmul.f32 %v140, 0.5
  %v171 = vmul.f32 %v145, 0.5
  %v172 = vmul.f32 %v150, 0.5
  %v173 = vmul.f32 %v155, 0.5
  %v174 = vmul.f32 %v160, 0.5
  %v175 = vmul.f32 %v165, 0.5
  %v176 = vmul.f32 %v130, 0.044715
  %v177 = vmul.f32 %v135, 0.044715
  %v178 = vmul.f32 %v140, 0.044715
  %v179 = vmul.f32 %v145, 0.044715
  %v180 = vmul.f32 %v150, 0.044715
  %v181 = vmul.f32 %v155, 0.044715
  %v182 = vmul.f32 %v160, 0.044715
  %v183 = vmul.f32 %v165, 0.044715
  %v184 = vmul.f32 %v176, %v130
  %v185 = vmul.f32 %v177, %v135
  %v186 = vmul.f32 %v178, %v140
  %v187 = vmul.f32 %v179, %v145
  %v188 = vmul.f32 %v180, %v150
  %v189 = vmul.f32 %v181, %v155
  %v190 = vmul.f32 %v182, %v160
  %v191 = vmul.f32 %v183, %v165
  %v192 = vmul.f32 %v184, %v130
  %v193 = vmul.f32 %v185, %v135
  %v194 = vmul.f32 %v186, %v140
  %v195 = vmul.f32 %v187, %v145
  %v196 = vmul.f32 %v188, %v150
  %v197 = vmul.f32 %v189, %v155
  %v198 = vmul.f32 %v190, %v160
  %v199 = vmul.f32 %v191, %v165
  %v200 = vadd.f32 %v130, %v192
  %v201 = vadd.f32 %v135, %v193
  %v202 = vadd.f32 %v140, %v194
  %v203 = vadd.f32 %v145, %v195
  %v204 = vadd.f32 %v150, %v196
  %v205 = vadd.f32 %v155, %v197
  %v206 = vadd.f32 %v160, %v198
  %v207 = vadd.f32 %v165, %v199
  %v208 = vmul.f32 %v200, 0.7978846
  %v209 = vmul.f32 %v201, 0.7978846
  %v210 = vmul.f32 %v202, 0.7978846
  %v211 = vmul.f32 %v203, 0.7978846
  %v212 = vmul.f32 %v204, 0.7978846
  %v213 = vmul.f32 %v205, 0.7978846
  %v214 = vmul.f32 %v206, 0.7978846
  %v215 = vmul.f32 %v207, 0.7978846
  %v216 = vtanh.pop %v208
  %v217 = vtanh.pop %v209
  %v218 = vtanh.pop %v210
  %v219 = vtanh.pop %v211
  %v220 = vtanh.pop %v212
  %v221 = vtanh.pop %v213
  %v222 = vtanh.pop %v214
  %v223 = vtanh.pop %v215
  %v224 = vadd.f32 %v216, 1.0
  %v225 = vadd.f32 %v217, 1.0
  %v226 = vadd.f32 %v218, 1.0
  %v227 = vadd.f32 %v219, 1.0
  %v228 = vadd.f32 %v220, 1.0
  %v229 = vadd.f32 %v221, 1.0
  %v230 = vadd.f32 %v222, 1.0
  %v231 = vadd.f32 %v223, 1.0
  %v232 = vmul.f32 %v168, %v224
  %v233 = vmul.f32 %v169, %v225
  %v234 = vmul.f32 %v170, %v226
  %v235 = vmul.f32 %v171, %v227
  %v236 = vmul.f32 %v172, %v228
  %v237 = vmul.f32 %v173, %v229
  %v238 = vmul.f32 %v174, %v230
  %v239 = vmul.f32 %v175, %v231
  %vm240 = vcmask 523264
  %241 = vst.msk [vmem:[%s3] sm:$0xff] %vm240, %v232
  %242 = vst.msk [vmem:[%s3 + $0x8] sm:$0xff] %vm240, %v233
  %243 = vst.msk [vmem:[%s3 + $0x10] sm:$0xff] %vm240, %v234
  %244 = vst.msk [vmem:[%s3 + $0x18] sm:$0xff] %vm240, %v235
  %245 = vst.msk [vmem:[%s3 + $0x20] sm:$0xff] %vm240, %v236
  %246 = vst.msk [vmem:[%s3 + $0x28] sm:$0xff] %vm240, %v237
  %247 = vst.msk [vmem:[%s3 + $0x30] sm:$0xff] %vm240, %v238
  %248 = vst.msk [vmem:[%s3 + $0x38] sm:$0xff] %vm240, %v239
  // Predicated region
  $region14: #{qagnn_decoder_forward.9} parent=0 // pred_check
    _
  $region15: #{qagnn_decoder_forward.9} parent=0 // pred_check_branch
    %250 = sbr.rel (0) target = $region17
  $region16: #{qagnn_decoder_forward.9} parent=0 // pred_region
    _
  $region17: #{qagnn_decoder_forward.9} parent=0 // pred_fallthru
    _
  // Predicated region
  $region18: #{qagnn_decoder_forward.9} parent=0 // pred_check
    _
  $region19: #{qagnn_decoder_forward.9} parent=0 // pred_check_branch
    %252 = sbr.rel (0) target = $region21
  $region20: #{qagnn_decoder_forward.9} parent=0 // pred_region
    _
  $region21: #{qagnn_decoder_forward.9} parent=0 // pred_fallthru
    _

// kernel: qagnn_decoder_forward.10
$region0: #{qagnn_decoder_forward.10}
  #allocation0 [shape = 'u32[]', space=smem, size = 0x4, offset = 0x4, fixed_abs, tag = 'smem constant byte address 0x4 - core index']
  #allocation1 [shape = 'u32[144,128]{1,0:T(1,128)}', space=vmem, size = 0x12000, scoped, tag = 'internal scratch']
  %s0 = inlined_call_operand.vmem [shape: f32[104,15], index: 0, kind: input, shape index: {}]
  %s1 = inlined_call_operand.vmem [shape: f32[15,64], index: 1, kind: input, shape index: {}]
  %s2 = inlined_call_operand.vmem [shape: f32[1,64], index: 2, kind: input, shape index: {}]
  %s3 = inlined_call_operand.vmem [shape: f32[64,64], index: 3, kind: input, shape index: {}]
  %s4 = inlined_call_operand.vmem [shape: f32[1,64], index: 4, kind: input, shape index: {}]
  %s5 = inlined_call_operand.vmem [shape: f32[104,64], index: 5, kind: output, shape index: {}]
  %s6 = sld [smem:[#allocation0]]
  $region30: #{qagnn_decoder_forward.10} parent=0
    _
  %s8 = ssub.s32 1, %s6
  %s9 = scalar_select 0, %s8, %s6
  // Predicated region
  $region2: #{qagnn_decoder_forward.10} parent=0 // pred_check
    _
  $region3: #{qagnn_decoder_forward.10} parent=0 // pred_check_branch
    %11 = sbr.rel (0) target = $region5
  $region4: #{qagnn_decoder_forward.10} parent=0 // pred_region
    _
  $region5: #{qagnn_decoder_forward.10} parent=0 // pred_fallthru
    _
  // Predicated region
  $region6: #{qagnn_decoder_forward.10} parent=0 // pred_check
    _
  $region7: #{qagnn_decoder_forward.10} parent=0 // pred_check_branch
    %13 = sbr.rel (0) target = $region9
  $region8: #{qagnn_decoder_forward.10} parent=0 // pred_region
    _
  $region9: #{qagnn_decoder_forward.10} parent=0 // pred_fallthru
    _
  // Predicated region
  $region10: #{qagnn_decoder_forward.10} parent=0 // pred_check
    _
  $region11: #{qagnn_decoder_forward.10} parent=0 // pred_check_branch
    %15 = sbr.rel (0) target = $region13
  $region12: #{qagnn_decoder_forward.10} parent=0 // pred_region
    _
  $region13: #{qagnn_decoder_forward.10} parent=0 // pred_fallthru
    _
  // Predicated region
  $region14: #{qagnn_decoder_forward.10} parent=0 // pred_check
    _
  $region15: #{qagnn_decoder_forward.10} parent=0 // pred_check_branch
    %17 = sbr.rel (0) target = $region17
  $region16: #{qagnn_decoder_forward.10} parent=0 // pred_region
    _
  $region17: #{qagnn_decoder_forward.10} parent=0 // pred_fallthru
    _
  // Predicated region
  $region18: #{qagnn_decoder_forward.10} parent=0 // pred_check
    _
  $region19: #{qagnn_decoder_forward.10} parent=0 // pred_check_branch
    %19 = sbr.rel (0) target = $region21
  $region20: #{qagnn_decoder_forward.10} parent=0 // pred_region
    _
  $region21: #{qagnn_decoder_forward.10} parent=0 // pred_fallthru
    _
  %v20 = vld [vmem:[%s0] sm:$0xff]
  %v21 = vld [vmem:[%s0 + $0x8] sm:$0xff]
  %v22 = vld [vmem:[%s0 + $0x10] sm:$0xff]
  %v23 = vld [vmem:[%s0 + $0x18] sm:$0xff]
  %v24 = vld [vmem:[%s0 + $0x20] sm:$0xff]
  %v25 = vld [vmem:[%s0 + $0x28] sm:$0xff]
  %v26 = vld [vmem:[%s0 + $0x30] sm:$0xff]
  %v27 = vld [vmem:[%s0 + $0x38] sm:$0xff]
  %v28 = vld [vmem:[%s0 + $0x40] sm:$0xff]
  %v29 = vld [vmem:[%s0 + $0x48] sm:$0xff]
  %v30 = vld [vmem:[%s0 + $0x50] sm:$0xff]
  %v31 = vld [vmem:[%s0 + $0x58] sm:$0xff]
  %v32 = vld [vmem:[%s0 + $0x60] sm:$0xff]
  %v33 = vld [vmem:[%s1] sm:$0xff]
  %v34 = vld [vmem:[%s1 + $0x8] sm:$0x7f]
  %v35 = vld [vmem:[%s2] sm:$0x1]
  %v37 = vlaneseq
  %v38 = vshrl.u32 %v37, 7
  %v39 = vsub.s32 0, %v38
  %v40 = vrot.slane %v35, %v39
  %vm42 = vcmask 121856
  %v44 = vsel %vm42, %v20, 0
  %v47 = vsel %vm42, %v21, 0
  %v50 = vsel %vm42, %v22, 0
  %v53 = vsel %vm42, %v23, 0
  %v56 = vsel %vm42, %v24, 0
  %v59 = vsel %vm42, %v25, 0
  %v62 = vsel %vm42, %v26, 0
  %v65 = vsel %vm42, %v27, 0
  %v68 = vsel %vm42, %v28, 0
  %v71 = vsel %vm42, %v29, 0
  %v74 = vsel %vm42, %v30, 0
  %v77 = vsel %vm42, %v31, 0
  %v80 = vsel %vm42, %v32, 0
  %vm82 = vcmask 1046528
  %v84 = vsel %vm82, %v34, 0
  %86 = vmatprep.subr.mxu0 0.0
  %87 = vmatpush1.msra.mxu0 %v33
  %88 = vmatprep.subr.mxu0 0.0
  %89 = vmatpush1.msra.mxu0 %v84
  %90 = vmatprep.subr.mxu0 0.0
  %91 = vmatpush1.msra.mxu0 0.0
  %92 = vmatprep.subr.mxu0 0.0
  %93 = vmatpush1.msra.mxu0 0.0
  %94 = vmatprep.subr.mxu0 0.0
  %95 = vmatpush1.msra.mxu0 0.0
  %96 = vmatprep.subr.mxu0 0.0
  %97 = vmatpush1.msra.mxu0 0.0
  %98 = vmatprep.subr.mxu0 0.0
  %99 = vmatpush1.msra.mxu0 0.0
  %100 = vmatprep.subr.mxu0 0.0
  %101 = vmatpush1.msra.mxu0 0.0
  %102 = vmatprep.subr.mxu0 0.0
  %103 = vmatpush1.msra.mxu0 0.0
  %104 = vmatprep.subr.mxu0 0.0
  %105 = vmatpush1.msra.mxu0 0.0
  %106 = vmatprep.subr.mxu0 0.0
  %107 = vmatpush1.msra.mxu0 0.0
  %108 = vmatprep.subr.mxu0 0.0
  %109 = vmatpush1.msra.mxu0 0.0
  %110 = vmatprep.subr.mxu0 0.0
  %111 = vmatpush1.msra.mxu0 0.0
  %112 = vmatprep.subr.mxu0 0.0
  %113 = vmatpush1.msra.mxu0 0.0
  %114 = vmatprep.subr.mxu0 0.0
  %115 = vmatpush1.msra.mxu0 0.0
  %116 = vmatprep.subr.mxu0 0.0
  %117 = vmatpush1.msra.mxu0 0.0
  %118 = vmatprep.subr.mxu0 0.0
  %119 = vmatpush1.msra.mxu0 0.0
  %120 = vmatprep.subr.mxu0 0.0
  %121 = vmatpush1.msra.mxu0 0.0
  %122 = vmatprep.subr.mxu0 0.0
  %123 = vmatpush1.msra.mxu0 0.0
  %124 = vmatprep.subr.mxu0 0.0
  %125 = vmatpush1.msra.mxu0 0.0
  %126 = vmatprep.subr.mxu0 0.0
  %127 = vmatpush1.msra.mxu0 0.0
  %128 = vmatprep.subr.mxu0 0.0
  %129 = vmatpush1.msra.mxu0 0.0
  %130 = vmatprep.subr.mxu0 0.0
  %131 = vmatpush1.msra.mxu0 0.0
  %132 = vmatprep.subr.mxu0 0.0
  %133 = vmatpush1.msra.mxu0 0.0
  %134 = vmatprep.subr.mxu0 0.0
  %135 = vmatpush1.msra.mxu0 0.0
  %136 = vmatprep.subr.mxu0 0.0
  %137 = vmatpush1.msra.mxu0 0.0
  %138 = vmatprep.subr.mxu0 0.0
  %139 = vmatpush1.msra.mxu0 0.0
  %140 = vmatprep.subr.mxu0 0.0
  %141 = vmatpush1.msra.mxu0 0.0
  %142 = vmatprep.subr.mxu0 0.0
  %143 = vmatpush1.msra.mxu0 0.0
  %144 = vmatprep.subr.mxu0 0.0
  %145 = vmatpush1.msra.mxu0 0.0
  %146 = vmatprep.subr.mxu0 0.0
  %147 = vmatpush1.msra.mxu0 0.0
  %148 = vmatprep.subr.mxu0 0.0
  %149 = vmatpush1.msra.mxu0 0.0
  %150 = vmatprep.mubr.f32.mxu0 0.0
  %151 = vmatmul.mubr.f32.gmra.mrb[0].mxu0 %v44
  %v152 = vpop.f32.mrb[0].mxu0
  %v153 = vadd.f32 %v40, %v152
  %v154 = vpop.f32.mrb[0].mxu0
  %155 = vmatprep.mubr.f32.mxu0 0.0
  %156 = vmatmul.mubr.f32.gmra.mrb[0].mxu0 %v47
  %v157 = vpop.f32.mrb[0].mxu0
  %v158 = vadd.f32 %v40, %v157
  %v159 = vpop.f32.mrb[0].mxu0
  %160 = vmatprep.mubr.f32.mxu0 0.0
  %161 = vmatmul.mubr.f32.gmra.mrb[0].mxu0 %v50
  %v162 = vpop.f32.mrb[0].mxu0
  %v163 = vadd.f32 %v40, %v162
  %v164 = vpop.f32.mrb[0].mxu0
  %165 = vmatprep.mubr.f32.mxu0 0.0
  %166 = vmatmul.mubr.f32.gmra.mrb[0].mxu0 %v53
  %v167 = vpop.f32.mrb[0].mxu0
  %v168 = vadd.f32 %v40, %v167
  %v169 = vpop.f32.mrb[0].mxu0
  %170 = vmatprep.mubr.f32.mxu0 0.0
  %171 = vmatmul.mubr.f32.gmra.mrb[0].mxu0 %v56
  %v172 = vpop.f32.mrb[0].mxu0
  %v173 = vadd.f32 %v40, %v172
  %v174 = vpop.f32.mrb[0].mxu0
  %175 = vmatprep.mubr.f32.mxu0 0.0
  %176 = vmatmul.mubr.f32.gmra.mrb[0].mxu0 %v59
  %v177 = vpop.f32.mrb[0].mxu0
  %v178 = vadd.f32 %v40, %v177
  %v179 = vpop.f32.mrb[0].mxu0
  %180 = vmatprep.mubr.f32.mxu0 0.0
  %181 = vmatmul.mubr.f32.gmra.mrb[0].mxu0 %v62
  %v182 = vpop.f32.mrb[0].mxu0
  %v183 = vadd.f32 %v40, %v182
  %v184 = vpop.f32.mrb[0].mxu0
  %185 = vmatprep.mubr.f32.mxu0 0.0
  %186 = vmatmul.mubr.f32.gmra.mrb[0].mxu0 %v65
  %v187 = vpop.f32.mrb[0].mxu0
  %v188 = vadd.f32 %v40, %v187
  %v189 = vpop.f32.mrb[0].mxu0
  %190 = vmatprep.mubr.f32.mxu0 0.0
  %191 = vmatmul.mubr.f32.gmra.mrb[0].mxu0 %v68
  %v192 = vpop.f32.mrb[0].mxu0
  %v193 = vadd.f32 %v40, %v192
  %v194 = vpop.f32.mrb[0].mxu0
  %195 = vmatprep.mubr.f32.mxu0 0.0
  %196 = vmatmul.mubr.f32.gmra.mrb[0].mxu0 %v71
  %v197 = vpop.f32.mrb[0].mxu0
  %v198 = vadd.f32 %v40, %v197
  %v199 = vpop.f32.mrb[0].mxu0
  %200 = vmatprep.mubr.f32.mxu0 0.0
  %201 = vmatmul.mubr.f32.gmra.mrb[0].mxu0 %v74
  %v202 = vpop.f32.mrb[0].mxu0
  %v203 = vadd.f32 %v40, %v202
  %v204 = vpop.f32.mrb[0].mxu0
  %205 = vmatprep.mubr.f32.mxu0 0.0
  %206 = vmatmul.mubr.f32.gmra.mrb[0].mxu0 %v77
  %v207 = vpop.f32.mrb[0].mxu0
  %v208 = vadd.f32 %v40, %v207
  %v209 = vpop.f32.mrb[0].mxu0
  %210 = vmatprep.mubr.f32.mxu0 0.0
  %211 = vmatmul.mubr.f32.gmra.mrb[0].mxu0 %v80
  %v212 = vpop.f32.mrb[0].mxu0
  %v213 = vadd.f32 %v40, %v212
  %v214 = vpop.f32.mrb[0].mxu0
  %215 = vdwg.mxu0
  %v216 = vmax.f32 %v153, 0.0
  %v217 = vmax.f32 %v158, 0.0
  %v218 = vmax.f32 %v163, 0.0
  %v219 = vmax.f32 %v168, 0.0
  %v220 = vmax.f32 %v173, 0.0
  %v221 = vmax.f32 %v178, 0.0
  %v222 = vmax.f32 %v183, 0.0
  %v223 = vmax.f32 %v188, 0.0
  %v224 = vmax.f32 %v193, 0.0
  %v225 = vmax.f32 %v198, 0.0
  %v226 = vmax.f32 %v203, 0.0
  %v227 = vmax.f32 %v208, 0.0
  %v228 = vmax.f32 %v213, 0.0
  %v229 = vld [vmem:[%s3] sm:$0xff]
  %v230 = vld [vmem:[%s3 + $0x8] sm:$0xff]
  %v231 = vld [vmem:[%s3 + $0x10] sm:$0xff]
  %v232 = vld [vmem:[%s3 + $0x18] sm:$0xff]
  %v233 = vld [vmem:[%s3 + $0x20] sm:$0xff]
  %v234 = vld [vmem:[%s3 + $0x28] sm:$0xff]
  %v235 = vld [vmem:[%s3 + $0x30] sm:$0xff]
  %v236 = vld [vmem:[%s3 + $0x38] sm:$0xff]
  %v237 = vld [vmem:[%s4] sm:$0x1]
  %v239 = vlaneseq
  %v240 = vshrl.u32 %v239, 7
  %v241 = vsub.s32 0, %v240
  %v242 = vrot.slane %v237, %v241
  %vm244 = vcmask 523264
  %v246 = vsel %vm244, %v216, 0
  %v249 = vsel %vm244, %v217, 0
  %v252 = vsel %vm244, %v218, 0
  %v255 = vsel %vm244, %v219, 0
  %v258 = vsel %vm244, %v220, 0
  %v261 = vsel %vm244, %v221, 0
  %v264 = vsel %vm244, %v222, 0
  %v267 = vsel %vm244, %v223, 0
  %v270 = vsel %vm244, %v224, 0
  %v273 = vsel %vm244, %v225, 0
  %v276 = vsel %vm244, %v226, 0
  %v279 = vsel %vm244, %v227, 0
  %v282 = vsel %vm244, %v228, 0
  %284 = vmatprep.subr.mxu0 0.0
  %285 = vmatpush1.msra.mxu0 %v229
  %286 = vmatprep.subr.mxu0 0.0
  %287 = vmatpush1.msra.mxu0 %v230
  %288 = vmatprep.subr.mxu0 0.0
  %289 = vmatpush1.msra.mxu0 %v231
  %290 = vmatprep.subr.mxu0 0.0
  %291 = vmatpush1.msra.mxu0 %v232
  %292 = vmatprep.subr.mxu0 0.0
  %293 = vmatpush1.msra.mxu0 %v233
  %294 = vmatprep.subr.mxu0 0.0
  %295 = vmatpush1.msra.mxu0 %v234
  %296 = vmatprep.subr.mxu0 0.0
  %297 = vmatpush1.msra.mxu0 %v235
  %298 = vmatprep.subr.mxu0 0.0
  %299 = vmatpush1.msra.mxu0 %v236
  %300 = vmatprep.subr.mxu0 0.0
  %301 = vmatpush1.msra.mxu0 0.0
  %302 = vmatprep.subr.mxu0 0.0
  %303 = vmatpush1.msra.mxu0 0.0
  %304 = vmatprep.subr.mxu0 0.0
  %305 = vmatpush1.msra.mxu0 0.0
  %306 = vmatprep.subr.mxu0 0.0
  %307 = vmatpush1.msra.mxu0 0.0
  %308 = vmatprep.subr.mxu0 0.0
  %309 = vmatpush1.msra.mxu0 0.0
  %310 = vmatprep.subr.mxu0 0.0
  %311 = vmatpush1.msra.mxu0 0.0
  %312 = vmatprep.subr.mxu0 0.0
  %313 = vmatpush1.msra.mxu0 0.0
  %314 = vmatprep.subr.mxu0 0.0
  %315 = vmatpush1.msra.mxu0 0.0
  %316 = vmatprep.subr.mxu0 0.0
  %317 = vmatpush1.msra.mxu0 0.0
  %318 = vmatprep.subr.mxu0 0.0
  %319 = vmatpush1.msra.mxu0 0.0
  %320 = vmatprep.subr.mxu0 0.0
  %321 = vmatpush1.msra.mxu0 0.0
  %322 = vmatprep.subr.mxu0 0.0
  %323 = vmatpush1.msra.mxu0 0.0
  %324 = vmatprep.subr.mxu0 0.0
  %325 = vmatpush1.msra.mxu0 0.0
  %326 = vmatprep.subr.mxu0 0.0
  %327 = vmatpush1.msra.mxu0 0.0
  %328 = vmatprep.subr.mxu0 0.0
  %329 = vmatpush1.msra.mxu0 0.0
  %330 = vmatprep.subr.mxu0 0.0
  %331 = vmatpush1.msra.mxu0 0.0
  %332 = vmatprep.subr.mxu0 0.0
  %333 = vmatpush1.msra.mxu0 0.0
  %334 = vmatprep.subr.mxu0 0.0
  %335 = vmatpush1.msra.mxu0 0.0
  %336 = vmatprep.subr.mxu0 0.0
  %337 = vmatpush1.msra.mxu0 0.0
  %338 = vmatprep.subr.mxu0 0.0
  %339 = vmatpush1.msra.mxu0 0.0
  %340 = vmatprep.subr.mxu0 0.0
  %341 = vmatpush1.msra.mxu0 0.0
  %342 = vmatprep.subr.mxu0 0.0
  %343 = vmatpush1.msra.mxu0 0.0
  %344 = vmatprep.subr.mxu0 0.0
  %345 = vmatpush1.msra.mxu0 0.0
  %346 = vmatprep.subr.mxu0 0.0
  %347 = vmatpush1.msra.mxu0 0.0
  %348 = vmatprep.mubr.f32.mxu0 0.0
  %349 = vmatmul.mubr.f32.gmra.mrb[0].mxu0 %v246
  %v350 = vpop.f32.mrb[0].mxu0
  %v351 = vadd.f32 %v242, %v350
  %v352 = vpop.f32.mrb[0].mxu0
  %353 = vmatprep.mubr.f32.mxu0 0.0
  %354 = vmatmul.mubr.f32.gmra.mrb[0].mxu0 %v249
  %v355 = vpop.f32.mrb[0].mxu0
  %v356 = vadd.f32 %v242, %v355
  %v357 = vpop.f32.mrb[0].mxu0
  %358 = vmatprep.mubr.f32.mxu0 0.0
  %359 = vmatmul.mubr.f32.gmra.mrb[0].mxu0 %v252
  %v360 = vpop.f32.mrb[0].mxu0
  %v361 = vadd.f32 %v242, %v360
  %v362 = vpop.f32.mrb[0].mxu0
  %363 = vmatprep.mubr.f32.mxu0 0.0
  %364 = vmatmul.mubr.f32.gmra.mrb[0].mxu0 %v255
  %v365 = vpop.f32.mrb[0].mxu0
  %v366 = vadd.f32 %v242, %v365
  %v367 = vpop.f32.mrb[0].mxu0
  %368 = vmatprep.mubr.f32.mxu0 0.0
  %369 = vmatmul.mubr.f32.gmra.mrb[0].mxu0 %v258
  %v370 = vpop.f32.mrb[0].mxu0
  %v371 = vadd.f32 %v242, %v370
  %v372 = vpop.f32.mrb[0].mxu0
  %373 = vmatprep.mubr.f32.mxu0 0.0
  %374 = vmatmul.mubr.f32.gmra.mrb[0].mxu0 %v261
  %v375 = vpop.f32.mrb[0].mxu0
  %v376 = vadd.f32 %v242, %v375
  %v377 = vpop.f32.mrb[0].mxu0
  %378 = vmatprep.mubr.f32.mxu0 0.0
  %379 = vmatmul.mubr.f32.gmra.mrb[0].mxu0 %v264
  %v380 = vpop.f32.mrb[0].mxu0
  %v381 = vadd.f32 %v242, %v380
  %v382 = vpop.f32.mrb[0].mxu0
  %383 = vmatprep.mubr.f32.mxu0 0.0
  %384 = vmatmul.mubr.f32.gmra.mrb[0].mxu0 %v267
  %v385 = vpop.f32.mrb[0].mxu0
  %v386 = vadd.f32 %v242, %v385
  %v387 = vpop.f32.mrb[0].mxu0
  %388 = vmatprep.mubr.f32.mxu0 0.0
  %389 = vmatmul.mubr.f32.gmra.mrb[0].mxu0 %v270
  %v390 = vpop.f32.mrb[0].mxu0
  %v391 = vadd.f32 %v242, %v390
  %v392 = vpop.f32.mrb[0].mxu0
  %393 = vmatprep.mubr.f32.mxu0 0.0
  %394 = vmatmul.mubr.f32.gmra.mrb[0].mxu0 %v273
  %v395 = vpop.f32.mrb[0].mxu0
  %v396 = vadd.f32 %v242, %v395
  %v397 = vpop.f32.mrb[0].mxu0
  %398 = vmatprep.mubr.f32.mxu0 0.0
  %399 = vmatmul.mubr.f32.gmra.mrb[0].mxu0 %v276
  %v400 = vpop.f32.mrb[0].mxu0
  %v401 = vadd.f32 %v242, %v400
  %v402 = vpop.f32.mrb[0].mxu0
  %403 = vmatprep.mubr.f32.mxu0 0.0
  %404 = vmatmul.mubr.f32.gmra.mrb[0].mxu0 %v279
  %v405 = vpop.f32.mrb[0].mxu0
  %v406 = vadd.f32 %v242, %v405
  %v407 = vpop.f32.mrb[0].mxu0
  %408 = vmatprep.mubr.f32.mxu0 0.0
  %409 = vmatmul.mubr.f32.gmra.mrb[0].mxu0 %v282
  %v410 = vpop.f32.mrb[0].mxu0
  %v411 = vadd.f32 %v242, %v410
  %v412 = vpop.f32.mrb[0].mxu0
  %413 = vdwg.mxu0
  %414 = vst.msk [vmem:[%s5] sm:$0xff] %vm244, %v351
  %415 = vst.msk [vmem:[%s5 + $0x8] sm:$0xff] %vm244, %v356
  %416 = vst.msk [vmem:[%s5 + $0x10] sm:$0xff] %vm244, %v361
  %417 = vst.msk [vmem:[%s5 + $0x18] sm:$0xff] %vm244, %v366
  %418 = vst.msk [vmem:[%s5 + $0x20] sm:$0xff] %vm244, %v371
  %419 = vst.msk [vmem:[%s5 + $0x28] sm:$0xff] %vm244, %v376
  %420 = vst.msk [vmem:[%s5 + $0x30] sm:$0xff] %vm244, %v381
  %421 = vst.msk [vmem:[%s5 + $0x38] sm:$0xff] %vm244, %v386
  %422 = vst.msk [vmem:[%s5 + $0x40] sm:$0xff] %vm244, %v391
  %423 = vst.msk [vmem:[%s5 + $0x48] sm:$0xff] %vm244, %v396
  %424 = vst.msk [vmem:[%s5 + $0x50] sm:$0xff] %vm244, %v401
  %425 = vst.msk [vmem:[%s5 + $0x58] sm:$0xff] %vm244, %v406
  %426 = vst.msk [vmem:[%s5 + $0x60] sm:$0xff] %vm244, %v411
  // Predicated region
  $region22: #{qagnn_decoder_forward.10} parent=0 // pred_check
    _
  $region23: #{qagnn_decoder_forward.10} parent=0 // pred_check_branch
    %428 = sbr.rel (0) target = $region25
  $region24: #{qagnn_decoder_forward.10} parent=0 // pred_region
    _
  $region25: #{qagnn_decoder_forward.10} parent=0 // pred_fallthru
    _
  // Predicated region
  $region26: #{qagnn_decoder_forward.10} parent=0 // pred_check
    _
  $region27: #{qagnn_decoder_forward.10} parent=0 // pred_check_branch
    %430 = sbr.rel (0) target = $region29
  $region28: #{qagnn_decoder_forward.10} parent=0 // pred_region
    _
  $region29: #{qagnn_decoder_forward.10} parent=0 // pred_fallthru
    _

// kernel: qagnn_decoder_forward.12
$region0: #{qagnn_decoder_forward.12}
  #allocation0 [shape = 'u32[]', space=smem, size = 0x4, offset = 0x4, fixed_abs, tag = 'smem constant byte address 0x4 - core index']
  #allocation1 [shape = 'u32[144,128]{1,0:T(1,128)}', space=vmem, size = 0x12000, scoped, tag = 'internal scratch']
  %s0 = inlined_call_operand.vmem [shape: f32[4,32], index: 0, kind: input, shape index: {}]
  %s1 = inlined_call_operand.vmem [shape: f32[32,64], index: 1, kind: input, shape index: {}]
  %s2 = inlined_call_operand.vmem [shape: f32[1,64], index: 2, kind: input, shape index: {}]
  %s3 = inlined_call_operand.vmem [shape: f32[4,64], index: 3, kind: output, shape index: {}]
  %s4 = sld [smem:[#allocation0]]
  $region22: #{qagnn_decoder_forward.12} parent=0
    _
  %s6 = ssub.s32 1, %s4
  %s7 = scalar_select 0, %s6, %s4
  // Predicated region
  $region2: #{qagnn_decoder_forward.12} parent=0 // pred_check
    _
  $region3: #{qagnn_decoder_forward.12} parent=0 // pred_check_branch
    %9 = sbr.rel (0) target = $region5
  $region4: #{qagnn_decoder_forward.12} parent=0 // pred_region
    _
  $region5: #{qagnn_decoder_forward.12} parent=0 // pred_fallthru
    _
  // Predicated region
  $region6: #{qagnn_decoder_forward.12} parent=0 // pred_check
    _
  $region7: #{qagnn_decoder_forward.12} parent=0 // pred_check_branch
    %11 = sbr.rel (0) target = $region9
  $region8: #{qagnn_decoder_forward.12} parent=0 // pred_region
    _
  $region9: #{qagnn_decoder_forward.12} parent=0 // pred_fallthru
    _
  // Predicated region
  $region10: #{qagnn_decoder_forward.12} parent=0 // pred_check
    _
  $region11: #{qagnn_decoder_forward.12} parent=0 // pred_check_branch
    %13 = sbr.rel (0) target = $region13
  $region12: #{qagnn_decoder_forward.12} parent=0 // pred_region
    _
  $region13: #{qagnn_decoder_forward.12} parent=0 // pred_fallthru
    _
  %v14 = vld [vmem:[%s0] sm:$0xf]
  %v15 = vld [vmem:[%s1] sm:$0xff]
  %v16 = vld [vmem:[%s1 + $0x8] sm:$0xff]
  %v17 = vld [vmem:[%s1 + $0x10] sm:$0xff]
  %v18 = vld [vmem:[%s1 + $0x18] sm:$0xff]
  %v19 = vld [vmem:[%s2] sm:$0x1]
  %v21 = vlaneseq
  %v22 = vshrl.u32 %v21, 7
  %v23 = vsub.s32 0, %v22
  %v24 = vrot.slane %v19, %v23
  %vm26 = vcmask 261120
  %v28 = vsel %vm26, %v14, 0
  %30 = vmatprep.subr.mxu0 0.0
  %31 = vmatpush1.msra.mxu0 %v15
  %32 = vmatprep.subr.mxu0 0.0
  %33 = vmatpush1.msra.mxu0 %v16
  %34 = vmatprep.subr.mxu0 0.0
  %35 = vmatpush1.msra.mxu0 %v17
  %36 = vmatprep.subr.mxu0 0.0
  %37 = vmatpush1.msra.mxu0 %v18
  %38 = vmatprep.subr.mxu0 0.0
  %39 = vmatpush1.msra.mxu0 0.0
  %40 = vmatprep.subr.mxu0 0.0
  %41 = vmatpush1.msra.mxu0 0.0
  %42 = vmatprep.subr.mxu0 0.0
  %43 = vmatpush1.msra.mxu0 0.0
  %44 = vmatprep.subr.mxu0 0.0
  %45 = vmatpush1.msra.mxu0 0.0
  %46 = vmatprep.subr.mxu0 0.0
  %47 = vmatpush1.msra.mxu0 0.0
  %48 = vmatprep.subr.mxu0 0.0
  %49 = vmatpush1.msra.mxu0 0.0
  %50 = vmatprep.subr.mxu0 0.0
  %51 = vmatpush1.msra.mxu0 0.0
  %52 = vmatprep.subr.mxu0 0.0
  %53 = vmatpush1.msra.mxu0 0.0
  %54 = vmatprep.subr.mxu0 0.0
  %55 = vmatpush1.msra.mxu0 0.0
  %56 = vmatprep.subr.mxu0 0.0
  %57 = vmatpush1.msra.mxu0 0.0
  %58 = vmatprep.subr.mxu0 0.0
  %59 = vmatpush1.msra.mxu0 0.0
  %60 = vmatprep.subr.mxu0 0.0
  %61 = vmatpush1.msra.mxu0 0.0
  %62 = vmatprep.subr.mxu0 0.0
  %63 = vmatpush1.msra.mxu0 0.0
  %64 = vmatprep.subr.mxu0 0.0
  %65 = vmatpush1.msra.mxu0 0.0
  %66 = vmatprep.subr.mxu0 0.0
  %67 = vmatpush1.msra.mxu0 0.0
  %68 = vmatprep.subr.mxu0 0.0
  %69 = vmatpush1.msra.mxu0 0.0
  %70 = vmatprep.subr.mxu0 0.0
  %71 = vmatpush1.msra.mxu0 0.0
  %72 = vmatprep.subr.mxu0 0.0
  %73 = vmatpush1.msra.mxu0 0.0
  %74 = vmatprep.subr.mxu0 0.0
  %75 = vmatpush1.msra.mxu0 0.0
  %76 = vmatprep.subr.mxu0 0.0
  %77 = vmatpush1.msra.mxu0 0.0
  %78 = vmatprep.subr.mxu0 0.0
  %79 = vmatpush1.msra.mxu0 0.0
  %80 = vmatprep.subr.mxu0 0.0
  %81 = vmatpush1.msra.mxu0 0.0
  %82 = vmatprep.subr.mxu0 0.0
  %83 = vmatpush1.msra.mxu0 0.0
  %84 = vmatprep.subr.mxu0 0.0
  %85 = vmatpush1.msra.mxu0 0.0
  %86 = vmatprep.subr.mxu0 0.0
  %87 = vmatpush1.msra.mxu0 0.0
  %88 = vmatprep.subr.mxu0 0.0
  %89 = vmatpush1.msra.mxu0 0.0
  %90 = vmatprep.subr.mxu0 0.0
  %91 = vmatpush1.msra.mxu0 0.0
  %92 = vmatprep.subr.mxu0 0.0
  %93 = vmatpush1.msra.mxu0 0.0
  %94 = vmatprep.mubr.f32.mxu0 0.0
  %95 = vmatmul.mubr.f32.gmra.mrb[0].mxu0 %v28
  %v96 = vpop.f32.mrb[0].mxu0
  %v97 = vadd.f32 %v24, %v96
  %v98 = vpop.f32.mrb[0].mxu0
  %99 = vdwg.mxu0
  %vm100 = vcmask 519168
  %101 = vst.msk [vmem:[%s3] sm:$0xf] %vm100, %v97
  // Predicated region
  $region14: #{qagnn_decoder_forward.12} parent=0 // pred_check
    _
  $region15: #{qagnn_decoder_forward.12} parent=0 // pred_check_branch
    %103 = sbr.rel (0) target = $region17
  $region16: #{qagnn_decoder_forward.12} parent=0 // pred_region
    _
  $region17: #{qagnn_decoder_forward.12} parent=0 // pred_fallthru
    _
  // Predicated region
  $region18: #{qagnn_decoder_forward.12} parent=0 // pred_check
    _
  $region19: #{qagnn_decoder_forward.12} parent=0 // pred_check_branch
    %105 = sbr.rel (0) target = $region21
  $region20: #{qagnn_decoder_forward.12} parent=0 // pred_region
    _
  $region21: #{qagnn_decoder_forward.12} parent=0 // pred_fallthru
    _

// kernel: qagnn_decoder_forward.13
$region0: #{qagnn_decoder_forward.13}
  #allocation0 [shape = 'u32[]', space=smem, size = 0x4, offset = 0x4, fixed_abs, tag = 'smem constant byte address 0x4 - core index']
  #allocation1 [shape = 'u32[144,128]{1,0:T(1,128)}', space=vmem, size = 0x12000, scoped, tag = 'internal scratch']
  %s0 = inlined_call_operand.vmem [shape: f32[64,64], index: 0, kind: input, shape index: {}]
  %s1 = inlined_call_operand.vmem [shape: f32[64,128], index: 1, kind: input, shape index: {}]
  %s2 = inlined_call_operand.vmem [shape: f32[1,128], index: 2, kind: input, shape index: {}]
  %s3 = inlined_call_operand.vmem [shape: f32[64,128], index: 3, kind: output, shape index: {}]
  %s4 = sld [smem:[#allocation0]]
  $region22: #{qagnn_decoder_forward.13} parent=0
    _
  %s6 = ssub.s32 1, %s4
  %s7 = scalar_select 0, %s6, %s4
  // Predicated region
  $region2: #{qagnn_decoder_forward.13} parent=0 // pred_check
    _
  $region3: #{qagnn_decoder_forward.13} parent=0 // pred_check_branch
    %9 = sbr.rel (0) target = $region5
  $region4: #{qagnn_decoder_forward.13} parent=0 // pred_region
    _
  $region5: #{qagnn_decoder_forward.13} parent=0 // pred_fallthru
    _
  // Predicated region
  $region6: #{qagnn_decoder_forward.13} parent=0 // pred_check
    _
  $region7: #{qagnn_decoder_forward.13} parent=0 // pred_check_branch
    %11 = sbr.rel (0) target = $region9
  $region8: #{qagnn_decoder_forward.13} parent=0 // pred_region
    _
  $region9: #{qagnn_decoder_forward.13} parent=0 // pred_fallthru
    _
  // Predicated region
  $region10: #{qagnn_decoder_forward.13} parent=0 // pred_check
    _
  $region11: #{qagnn_decoder_forward.13} parent=0 // pred_check_branch
    %13 = sbr.rel (0) target = $region13
  $region12: #{qagnn_decoder_forward.13} parent=0 // pred_region
    _
  $region13: #{qagnn_decoder_forward.13} parent=0 // pred_fallthru
    _
  %v14 = vld [vmem:[%s0] sm:$0xff]
  %v15 = vld [vmem:[%s0 + $0x8] sm:$0xff]
  %v16 = vld [vmem:[%s0 + $0x10] sm:$0xff]
  %v17 = vld [vmem:[%s0 + $0x18] sm:$0xff]
  %v18 = vld [vmem:[%s0 + $0x20] sm:$0xff]
  %v19 = vld [vmem:[%s0 + $0x28] sm:$0xff]
  %v20 = vld [vmem:[%s0 + $0x30] sm:$0xff]
  %v21 = vld [vmem:[%s0 + $0x38] sm:$0xff]
  %v22 = vld [vmem:[%s1] sm:$0xff]
  %v23 = vld [vmem:[%s1 + $0x8] sm:$0xff]
  %v24 = vld [vmem:[%s1 + $0x10] sm:$0xff]
  %v25 = vld [vmem:[%s1 + $0x18] sm:$0xff]
  %v26 = vld [vmem:[%s1 + $0x20] sm:$0xff]
  %v27 = vld [vmem:[%s1 + $0x28] sm:$0xff]
  %v28 = vld [vmem:[%s1 + $0x30] sm:$0xff]
  %v29 = vld [vmem:[%s1 + $0x38] sm:$0xff]
  %v30 = vld [vmem:[%s2] sm:$0x1]
  %v32 = vlaneseq
  %v33 = vshrl.u32 %v32, 7
  %v34 = vsub.s32 0, %v33
  %v35 = vrot.slane %v30, %v34
  %vm37 = vcmask 523264
  %v39 = vsel %vm37, %v14, 0
  %v42 = vsel %vm37, %v15, 0
  %v45 = vsel %vm37, %v16, 0
  %v48 = vsel %vm37, %v17, 0
  %v51 = vsel %vm37, %v18, 0
  %v54 = vsel %vm37, %v19, 0
  %v57 = vsel %vm37, %v20, 0
  %v60 = vsel %vm37, %v21, 0
  %62 = vmatprep.subr.mxu0 0.0
  %63 = vmatpush1.msra.mxu0 %v22
  %64 = vmatprep.subr.mxu0 0.0
  %65 = vmatpush1.msra.mxu0 %v23
  %66 = vmatprep.subr.mxu0 0.0
  %67 = vmatpush1.msra.mxu0 %v24
  %68 = vmatprep.subr.mxu0 0.0
  %69 = vmatpush1.msra.mxu0 %v25
  %70 = vmatprep.subr.mxu0 0.0
  %71 = vmatpush1.msra.mxu0 %v26
  %72 = vmatprep.subr.mxu0 0.0
  %73 = vmatpush1.msra.mxu0 %v27
  %74 = vmatprep.subr.mxu0 0.0
  %75 = vmatpush1.msra.mxu0 %v28
  %76 = vmatprep.subr.mxu0 0.0
  %77 = vmatpush1.msra.mxu0 %v29
  %78 = vmatprep.subr.mxu0 0.0
  %79 = vmatpush1.msra.mxu0 0.0
  %80 = vmatprep.subr.mxu0 0.0
  %81 = vmatpush1.msra.mxu0 0.0
  %82 = vmatprep.subr.mxu0 0.0
  %83 = vmatpush1.msra.mxu0 0.0
  %84 = vmatprep.subr.mxu0 0.0
  %85 = vmatpush1.msra.mxu0 0.0
  %86 = vmatprep.subr.mxu0 0.0
  %87 = vmatpush1.msra.mxu0 0.0
  %88 = vmatprep.subr.mxu0 0.0
  %89 = vmatpush1.msra.mxu0 0.0
  %90 = vmatprep.subr.mxu0 0.0
  %91 = vmatpush1.msra.mxu0 0.0
  %92 = vmatprep.subr.mxu0 0.0
  %93 = vmatpush1.msra.mxu0 0.0
  %94 = vmatprep.subr.mxu0 0.0
  %95 = vmatpush1.msra.mxu0 0.0
  %96 = vmatprep.subr.mxu0 0.0
  %97 = vmatpush1.msra.mxu0 0.0
  %98 = vmatprep.subr.mxu0 0.0
  %99 = vmatpush1.msra.mxu0 0.0
  %100 = vmatprep.subr.mxu0 0.0
  %101 = vmatpush1.msra.mxu0 0.0
  %102 = vmatprep.subr.mxu0 0.0
  %103 = vmatpush1.msra.mxu0 0.0
  %104 = vmatprep.subr.mxu0 0.0
  %105 = vmatpush1.msra.mxu0 0.0
  %106 = vmatprep.subr.mxu0 0.0
  %107 = vmatpush1.msra.mxu0 0.0
  %108 = vmatprep.subr.mxu0 0.0
  %109 = vmatpush1.msra.mxu0 0.0
  %110 = vmatprep.subr.mxu0 0.0
  %111 = vmatpush1.msra.mxu0 0.0
  %112 = vmatprep.subr.mxu0 0.0
  %113 = vmatpush1.msra.mxu0 0.0
  %114 = vmatprep.subr.mxu0 0.0
  %115 = vmatpush1.msra.mxu0 0.0
  %116 = vmatprep.subr.mxu0 0.0
  %117 = vmatpush1.msra.mxu0 0.0
  %118 = vmatprep.subr.mxu0 0.0
  %119 = vmatpush1.msra.mxu0 0.0
  %120 = vmatprep.subr.mxu0 0.0
  %121 = vmatpush1.msra.mxu0 0.0
  %122 = vmatprep.subr.mxu0 0.0
  %123 = vmatpush1.msra.mxu0 0.0
  %124 = vmatprep.subr.mxu0 0.0
  %125 = vmatpush1.msra.mxu0 0.0
  %126 = vmatprep.mubr.f32.mxu0 0.0
  %127 = vmatmul.mubr.f32.gmra.mrb[0].mxu0 %v39
  %v128 = vpop.f32.mrb[0].mxu0
  %v129 = vadd.f32 %v35, %v128
  %v130 = vpop.f32.mrb[0].mxu0
  %131 = vmatprep.mubr.f32.mxu0 0.0
  %132 = vmatmul.mubr.f32.gmra.mrb[0].mxu0 %v42
  %v133 = vpop.f32.mrb[0].mxu0
  %v134 = vadd.f32 %v35, %v133
  %v135 = vpop.f32.mrb[0].mxu0
  %136 = vmatprep.mubr.f32.mxu0 0.0
  %137 = vmatmul.mubr.f32.gmra.mrb[0].mxu0 %v45
  %v138 = vpop.f32.mrb[0].mxu0
  %v139 = vadd.f32 %v35, %v138
  %v140 = vpop.f32.mrb[0].mxu0
  %141 = vmatprep.mubr.f32.mxu0 0.0
  %142 = vmatmul.mubr.f32.gmra.mrb[0].mxu0 %v48
  %v143 = vpop.f32.mrb[0].mxu0
  %v144 = vadd.f32 %v35, %v143
  %v145 = vpop.f32.mrb[0].mxu0
  %146 = vmatprep.mubr.f32.mxu0 0.0
  %147 = vmatmul.mubr.f32.gmra.mrb[0].mxu0 %v51
  %v148 = vpop.f32.mrb[0].mxu0
  %v149 = vadd.f32 %v35, %v148
  %v150 = vpop.f32.mrb[0].mxu0
  %151 = vmatprep.mubr.f32.mxu0 0.0
  %152 = vmatmul.mubr.f32.gmra.mrb[0].mxu0 %v54
  %v153 = vpop.f32.mrb[0].mxu0
  %v154 = vadd.f32 %v35, %v153
  %v155 = vpop.f32.mrb[0].mxu0
  %156 = vmatprep.mubr.f32.mxu0 0.0
  %157 = vmatmul.mubr.f32.gmra.mrb[0].mxu0 %v57
  %v158 = vpop.f32.mrb[0].mxu0
  %v159 = vadd.f32 %v35, %v158
  %v160 = vpop.f32.mrb[0].mxu0
  %161 = vmatprep.mubr.f32.mxu0 0.0
  %162 = vmatmul.mubr.f32.gmra.mrb[0].mxu0 %v60
  %v163 = vpop.f32.mrb[0].mxu0
  %v164 = vadd.f32 %v35, %v163
  %v165 = vpop.f32.mrb[0].mxu0
  %166 = vdwg.mxu0
  %167 = vst [vmem:[%s3] sm:$0xff] %v129
  %168 = vst [vmem:[%s3 + $0x8] sm:$0xff] %v134
  %169 = vst [vmem:[%s3 + $0x10] sm:$0xff] %v139
  %170 = vst [vmem:[%s3 + $0x18] sm:$0xff] %v144
  %171 = vst [vmem:[%s3 + $0x20] sm:$0xff] %v149
  %172 = vst [vmem:[%s3 + $0x28] sm:$0xff] %v154
  %173 = vst [vmem:[%s3 + $0x30] sm:$0xff] %v159
  %174 = vst [vmem:[%s3 + $0x38] sm:$0xff] %v164
  // Predicated region
  $region14: #{qagnn_decoder_forward.13} parent=0 // pred_check
    _
  $region15: #{qagnn_decoder_forward.13} parent=0 // pred_check_branch
    %176 = sbr.rel (0) target = $region17
  $region16: #{qagnn_decoder_forward.13} parent=0 // pred_region
    _
  $region17: #{qagnn_decoder_forward.13} parent=0 // pred_fallthru
    _
  // Predicated region
  $region18: #{qagnn_decoder_forward.13} parent=0 // pred_check
    _
  $region19: #{qagnn_decoder_forward.13} parent=0 // pred_check_branch
    %178 = sbr.rel (0) target = $region21
  $region20: #{qagnn_decoder_forward.13} parent=0 // pred_region
    _
  $region21: #{qagnn_decoder_forward.13} parent=0 // pred_fallthru
    _

// kernel: tile.8
$region0: #{tile.8}
  #allocation0 [shape = 's32[1]{0}', space=sflag, size = 0x4, scoped, tag = 'scoped memory for tile.8']
  %s0 = inlined_call_operand.vmem [shape: pred[4,16], index: 0, kind: input, shape index: {}]
  %s1 = inlined_call_operand.vmem [shape: pred[2,4,1,16], index: 1, kind: output, shape index: {}]
  // Predicated region
  $region2: #{tile.8} parent=0 // pred_check
    _
  $region3: #{tile.8} parent=0 // pred_check_branch
    %3 = sbr.rel (0) target = $region5
  $region4: #{tile.8} parent=0 // pred_region
    _
  $region5: #{tile.8} parent=0 // pred_fallthru
    _
  %v4 = vld [vmem:[%s0] ss:$0 sm:$0x1]
  %v5 = vunpack.c.0.s8 %v4
  %v6 = vunpack.c.1.s8 %v4
  %v7 = vunpack.c.2.s8 %v4
  %v8 = vunpack.c.3.s8 %v4
  %v9 = vpack.c.b16 0, %v5
  %v10 = vpack.c.b8 0, %v9
  %12 = vst [vmem:[%s1] sm:$0x1] %v10
  %s13 = scalar_lea.vmem %s1, 1
  %v14 = vpack.c.b16 0, %v5
  %v15 = vpack.c.b8 0, %v14
  %17 = vst [vmem:[%s13] sm:$0x1] %v15

// kernel: qagnn_decoder_forward.14
$region0: #{qagnn_decoder_forward.14}
  #allocation0 [shape = 'u32[]', space=smem, size = 0x4, offset = 0x4, fixed_abs, tag = 'smem constant byte address 0x4 - core index']
  #allocation1 [shape = 'u32[144,128]{1,0:T(1,128)}', space=vmem, size = 0x12000, scoped, tag = 'internal scratch']
  %s0 = inlined_call_operand.vmem [shape: f32[8,32], index: 0, kind: input, shape index: {}]
  %s1 = inlined_call_operand.vmem [shape: f32[128,32], index: 1, kind: input, shape index: {}]
  %s2 = inlined_call_operand.vmem [shape: f32[128,32], index: 2, kind: input, shape index: {}]
  %s3 = inlined_call_operand.vmem [shape: f32[8,128], index: 3, kind: input, shape index: {}]
  %s4 = inlined_call_operand.vmem [shape: f32[8,32], index: 4, kind: output, shape index: {0}]
  %s5 = inlined_call_operand.vmem [shape: f32[8,128], index: 5, kind: output, shape index: {1}]
  %6 = xla_tuple %s4, %s5
  %s7 = sld [smem:[#allocation0]]
  $region34: #{qagnn_decoder_forward.14} parent=0
    _
  %s9 = ssub.s32 1, %s7
  %s10 = scalar_select 0, %s9, %s7
  // Predicated region
  $region2: #{qagnn_decoder_forward.14} parent=0 // pred_check
    _
  $region3: #{qagnn_decoder_forward.14} parent=0 // pred_check_branch
    %12 = sbr.rel (0) target = $region5
  $region4: #{qagnn_decoder_forward.14} parent=0 // pred_region
    _
  $region5: #{qagnn_decoder_forward.14} parent=0 // pred_fallthru
    _
  // Predicated region
  $region6: #{qagnn_decoder_forward.14} parent=0 // pred_check
    _
  $region7: #{qagnn_decoder_forward.14} parent=0 // pred_check_branch
    %14 = sbr.rel (0) target = $region9
  $region8: #{qagnn_decoder_forward.14} parent=0 // pred_region
    _
  $region9: #{qagnn_decoder_forward.14} parent=0 // pred_fallthru
    _
  // Predicated region
  $region10: #{qagnn_decoder_forward.14} parent=0 // pred_check
    _
  $region11: #{qagnn_decoder_forward.14} parent=0 // pred_check_branch
    %16 = sbr.rel (0) target = $region13
  $region12: #{qagnn_decoder_forward.14} parent=0 // pred_region
    _
  $region13: #{qagnn_decoder_forward.14} parent=0 // pred_fallthru
    _
  // Predicated region
  $region14: #{qagnn_decoder_forward.14} parent=0 // pred_check
    _
  $region15: #{qagnn_decoder_forward.14} parent=0 // pred_check_branch
    %18 = sbr.rel (0) target = $region17
  $region16: #{qagnn_decoder_forward.14} parent=0 // pred_region
    _
  $region17: #{qagnn_decoder_forward.14} parent=0 // pred_fallthru
    _
  %v19 = vld [vmem:[%s0] sm:$0xff]
  %v20 = vld [vmem:[%s1] sm:$0xff]
  %v21 = vld [vmem:[%s1 + $0x8] sm:$0xff]
  %v22 = vld [vmem:[%s1 + $0x10] sm:$0xff]
  %v23 = vld [vmem:[%s1 + $0x18] sm:$0xff]
  %v24 = vld [vmem:[%s1 + $0x20] sm:$0xff]
  %v25 = vld [vmem:[%s1 + $0x28] sm:$0xff]
  %v26 = vld [vmem:[%s1 + $0x30] sm:$0xff]
  %v27 = vld [vmem:[%s1 + $0x38] sm:$0xff]
  %v28 = vld [vmem:[%s1 + $0x40] sm:$0xff]
  %v29 = vld [vmem:[%s1 + $0x48] sm:$0xff]
  %v30 = vld [vmem:[%s1 + $0x50] sm:$0xff]
  %v31 = vld [vmem:[%s1 + $0x58] sm:$0xff]
  %v32 = vld [vmem:[%s1 + $0x60] sm:$0xff]
  %v33 = vld [vmem:[%s1 + $0x68] sm:$0xff]
  %v34 = vld [vmem:[%s1 + $0x70] sm:$0xff]
  %v35 = vld [vmem:[%s1 + $0x78] sm:$0xff]
  %vm36 = vcmask 261120
  %v38 = vsel %vm36, %v19, 0
  %v41 = vsel %vm36, %v20, 0
  %v44 = vsel %vm36, %v21, 0
  %v47 = vsel %vm36, %v22, 0
  %v50 = vsel %vm36, %v23, 0
  %v53 = vsel %vm36, %v24, 0
  %v56 = vsel %vm36, %v25, 0
  %v59 = vsel %vm36, %v26, 0
  %v62 = vsel %vm36, %v27, 0
  %v65 = vsel %vm36, %v28, 0
  %v68 = vsel %vm36, %v29, 0
  %v71 = vsel %vm36, %v30, 0
  %v74 = vsel %vm36, %v31, 0
  %v77 = vsel %vm36, %v32, 0
  %v80 = vsel %vm36, %v33, 0
  %v83 = vsel %vm36, %v34, 0
  %v86 = vsel %vm36, %v35, 0
  %88 = vmatprep.subr.mxu0 0.0
  %89 = vmatpush1.xpose.msra.mxu0 %v41
  %90 = vmatprep.subr.mxu0 0.0
  %91 = vmatpush1.xpose.msra.mxu0 %v44
  %92 = vmatprep.subr.mxu0 0.0
  %93 = vmatpush1.xpose.msra.mxu0 %v47
  %94 = vmatprep.subr.mxu0 0.0
  %95 = vmatpush1.xpose.msra.mxu0 %v50
  %96 = vmatprep.subr.mxu0 0.0
  %97 = vmatpush1.xpose.msra.mxu0 %v53
  %98 = vmatprep.subr.mxu0 0.0
  %99 = vmatpush1.xpose.msra.mxu0 %v56
  %100 = vmatprep.subr.mxu0 0.0
  %101 = vmatpush1.xpose.msra.mxu0 %v59
  %102 = vmatprep.subr.mxu0 0.0
  %103 = vmatpush1.xpose.msra.mxu0 %v62
  %104 = vmatprep.subr.mxu0 0.0
  %105 = vmatpush1.xpose.msra.mxu0 %v65
  %106 = vmatprep.subr.mxu0 0.0
  %107 = vmatpush1.xpose.msra.mxu0 %v68
  %108 = vmatprep.subr.mxu0 0.0
  %109 = vmatpush1.xpose.msra.mxu0 %v71
  %110 = vmatprep.subr.mxu0 0.0
  %111 = vmatpush1.xpose.msra.mxu0 %v74
  %112 = vmatprep.subr.mxu0 0.0
  %113 = vmatpush1.xpose.msra.mxu0 %v77
  %114 = vmatprep.subr.mxu0 0.0
  %115 = vmatpush1.xpose.msra.mxu0 %v80
  %116 = vmatprep.subr.mxu0 0.0
  %117 = vmatpush1.xpose.msra.mxu0 %v83
  %118 = vmatprep.subr.mxu0 0.0
  %119 = vmatpush1.xpose.msra.mxu0 %v86
  %120 = vmatprep.subr.mxu0 0.0
  %121 = vmatpush1.xpose.msra.mxu0 0.0
  %122 = vmatprep.subr.mxu0 0.0
  %123 = vmatpush1.xpose.msra.mxu0 0.0
  %124 = vmatprep.subr.mxu0 0.0
  %125 = vmatpush1.xpose.msra.mxu0 0.0
  %126 = vmatprep.subr.mxu0 0.0
  %127 = vmatpush1.xpose.msra.mxu0 0.0
  %128 = vmatprep.subr.mxu0 0.0
  %129 = vmatpush1.xpose.msra.mxu0 0.0
  %130 = vmatprep.subr.mxu0 0.0
  %131 = vmatpush1.xpose.msra.mxu0 0.0
  %132 = vmatprep.subr.mxu0 0.0
  %133 = vmatpush1.xpose.msra.mxu0 0.0
  %134 = vmatprep.subr.mxu0 0.0
  %135 = vmatpush1.xpose.msra.mxu0 0.0
  %136 = vmatprep.subr.mxu0 0.0
  %137 = vmatpush1.xpose.msra.mxu0 0.0
  %138 = vmatprep.subr.mxu0 0.0
  %139 = vmatpush1.xpose.msra.mxu0 0.0
  %140 = vmatprep.subr.mxu0 0.0
  %141 = vmatpush1.xpose.msra.mxu0 0.0
  %142 = vmatprep.subr.mxu0 0.0
  %143 = vmatpush1.xpose.msra.mxu0 0.0
  %144 = vmatprep.subr.mxu0 0.0
  %145 = vmatpush1.xpose.msra.mxu0 0.0
  %146 = vmatprep.subr.mxu0 0.0
  %147 = vmatpush1.xpose.msra.mxu0 0.0
  %148 = vmatprep.subr.mxu0 0.0
  %149 = vmatpush1.xpose.msra.mxu0 0.0
  %150 = vmatprep.subr.mxu0 0.0
  %151 = vmatpush1.xpose.msra.mxu0 0.0
  %152 = vmatprep.mubr.f32.mxu0 0.0
  %153 = vmatmul.mubr.f32.gmra.mrb[0].mxu0 %v38
  %v154 = vpop.f32.mrb[0].mxu0
  %v155 = vadd.f32 0.0, %v154
  %v156 = vpop.f32.mrb[0].mxu0
  %157 = vdwg.mxu0
  %v158 = vmul.f32 %v155, 0.17677669
  %v159 = vld [vmem:[%s3] sm:$0xff]
  %vm160 = vcmp.gt.f32.partialorder %v159, 0.5
  %v161 = vsel %vm160, -1e+30, %v158
  %162 = vmax.xlane.f32.xlu0 %v161
  %v163 = vpop.xlane.xlu0 %162
  %v164 = vsub.f32 %v161, %v163
  %v165 = vmul.f32 %v164, 1.442695
  %v166 = vpow.pop %v165
  %167 = vadd.xlane.f32.xlu0 %v166
  %v168 = vpop.xlane.xlu0 %167
  %v169 = vrcp.pop %v168
  %v170 = vmul.f32 %v166, %v169
  %171 = vst [vmem:[%s5] sm:$0xff] %v170
  %v172 = vld [vmem:[%s2] sm:$0xff]
  %v173 = vld [vmem:[%s2 + $0x8] sm:$0xff]
  %v174 = vld [vmem:[%s2 + $0x10] sm:$0xff]
  %v175 = vld [vmem:[%s2 + $0x18] sm:$0xff]
  %v176 = vld [vmem:[%s2 + $0x20] sm:$0xff]
  %v177 = vld [vmem:[%s2 + $0x28] sm:$0xff]
  %v178 = vld [vmem:[%s2 + $0x30] sm:$0xff]
  %v179 = vld [vmem:[%s2 + $0x38] sm:$0xff]
  %v180 = vld [vmem:[%s2 + $0x40] sm:$0xff]
  %v181 = vld [vmem:[%s2 + $0x48] sm:$0xff]
  %v182 = vld [vmem:[%s2 + $0x50] sm:$0xff]
  %v183 = vld [vmem:[%s2 + $0x58] sm:$0xff]
  %v184 = vld [vmem:[%s2 + $0x60] sm:$0xff]
  %v185 = vld [vmem:[%s2 + $0x68] sm:$0xff]
  %v186 = vld [vmem:[%s2 + $0x70] sm:$0xff]
  %v187 = vld [vmem:[%s2 + $0x78] sm:$0xff]
  %188 = vmatprep.subr.mxu0 0.0
  %189 = vmatpush1.msra.mxu0 %v172
  %190 = vmatprep.subr.mxu0 0.0
  %191 = vmatpush1.msra.mxu0 %v173
  %192 = vmatprep.subr.mxu0 0.0
  %193 = vmatpush1.msra.mxu0 %v174
  %194 = vmatprep.subr.mxu0 0.0
  %195 = vmatpush1.msra.mxu0 %v175
  %196 = vmatprep.subr.mxu0 0.0
  %197 = vmatpush1.msra.mxu0 %v176
  %198 = vmatprep.subr.mxu0 0.0
  %199 = vmatpush1.msra.mxu0 %v177
  %200 = vmatprep.subr.mxu0 0.0
  %201 = vmatpush1.msra.mxu0 %v178
  %202 = vmatprep.subr.mxu0 0.0
  %203 = vmatpush1.msra.mxu0 %v179
  %204 = vmatprep.subr.mxu0 0.0
  %205 = vmatpush1.msra.mxu0 %v180
  %206 = vmatprep.subr.mxu0 0.0
  %207 = vmatpush1.msra.mxu0 %v181
  %208 = vmatprep.subr.mxu0 0.0
  %209 = vmatpush1.msra.mxu0 %v182
  %210 = vmatprep.subr.mxu0 0.0
  %211 = vmatpush1.msra.mxu0 %v183
  %212 = vmatprep.subr.mxu0 0.0
  %213 = vmatpush1.msra.mxu0 %v184
  %214 = vmatprep.subr.mxu0 0.0
  %215 = vmatpush1.msra.mxu0 %v185
  %216 = vmatprep.subr.mxu0 0.0
  %217 = vmatpush1.msra.mxu0 %v186
  %218 = vmatprep.subr.mxu0 0.0
  %219 = vmatpush1.msra.mxu0 %v187
  %220 = vmatprep.subr.mxu0 0.0
  %221 = vmatpush1.msra.mxu0 0.0
  %222 = vmatprep.subr.mxu0 0.0
  %223 = vmatpush1.msra.mxu0 0.0
  %224 = vmatprep.subr.mxu0 0.0
  %225 = vmatpush1.msra.mxu0 0.0
  %226 = vmatprep.subr.mxu0 0.0
  %227 = vmatpush1.msra.mxu0 0.0
  %228 = vmatprep.subr.mxu0 0.0
  %229 = vmatpush1.msra.mxu0 0.0
  %230 = vmatprep.subr.mxu0 0.0
  %231 = vmatpush1.msra.mxu0 0.0
  %232 = vmatprep.subr.mxu0 0.0
  %233 = vmatpush1.msra.mxu0 0.0
  %234 = vmatprep.subr.mxu0 0.0
  %235 = vmatpush1.msra.mxu0 0.0
  %236 = vmatprep.subr.mxu0 0.0
  %237 = vmatpush1.msra.mxu0 0.0
  %238 = vmatprep.subr.mxu0 0.0
  %239 = vmatpush1.msra.mxu0 0.0
  %240 = vmatprep.subr.mxu0 0.0
  %241 = vmatpush1.msra.mxu0 0.0
  %242 = vmatprep.subr.mxu0 0.0
  %243 = vmatpush1.msra.mxu0 0.0
  %244 = vmatprep.subr.mxu0 0.0
  %245 = vmatpush1.msra.mxu0 0.0
  %246 = vmatprep.subr.mxu0 0.0
  %247 = vmatpush1.msra.mxu0 0.0
  %248 = vmatprep.subr.mxu0 0.0
  %249 = vmatpush1.msra.mxu0 0.0
  %250 = vmatprep.subr.mxu0 0.0
  %251 = vmatpush1.msra.mxu0 0.0
  %252 = vmatprep.mubr.f32.mxu0 0.0
  %253 = vmatmul.mubr.f32.gmra.mrb[0].mxu0 %v170
  %v254 = vpop.f32.mrb[0].mxu0
  %v255 = vadd.f32 0.0, %v254
  %v256 = vpop.f32.mrb[0].mxu0
  %257 = vdwg.mxu0
  %258 = vst.msk [vmem:[%s4] sm:$0xff] %vm36, %v255
  // Predicated region
  $region18: #{qagnn_decoder_forward.14} parent=0 // pred_check
    _
  $region19: #{qagnn_decoder_forward.14} parent=0 // pred_check_branch
    %260 = sbr.rel (0) target = $region21
  $region20: #{qagnn_decoder_forward.14} parent=0 // pred_region
    _
  $region21: #{qagnn_decoder_forward.14} parent=0 // pred_fallthru
    _
  // Predicated region
  $region22: #{qagnn_decoder_forward.14} parent=0 // pred_check
    _
  $region23: #{qagnn_decoder_forward.14} parent=0 // pred_check_branch
    %262 = sbr.rel (0) target = $region25
  $region24: #{qagnn_decoder_forward.14} parent=0 // pred_region
    _
  $region25: #{qagnn_decoder_forward.14} parent=0 // pred_fallthru
    _
  // Predicated region
  $region26: #{qagnn_decoder_forward.14} parent=0 // pred_check
    _
  $region27: #{qagnn_decoder_forward.14} parent=0 // pred_check_branch
    %264 = sbr.rel (0) target = $region29
  $region28: #{qagnn_decoder_forward.14} parent=0 // pred_region
    _
  $region29: #{qagnn_decoder_forward.14} parent=0 // pred_fallthru
    _
  // Predicated region
  $region30: #{qagnn_decoder_forward.14} parent=0 // pred_check
    _
  $region31: #{qagnn_decoder_forward.14} parent=0 // pred_check_branch
    %266 = sbr.rel (0) target = $region33
  $region32: #{qagnn_decoder_forward.14} parent=0 // pred_region
    _
  $region33: #{qagnn_decoder_forward.14} parent=0 // pred_fallthru
    _

// kernel: qagnn_decoder_forward.15
$region0: #{qagnn_decoder_forward.15}
  #allocation0 [shape = 'u32[]', space=smem, size = 0x4, offset = 0x4, fixed_abs, tag = 'smem constant byte address 0x4 - core index']
  #allocation1 [shape = 'u32[144,128]{1,0:T(1,128)}', space=vmem, size = 0x12000, scoped, tag = 'internal scratch']
  #allocation2 [shape = 'f32[1,1]{1,0:T(1,128)S(1)}', space=vmem, size = 0x200, scoped, tag = 'scoped memory for qagnn_decoder_forward.15']
  %s0 = inlined_call_operand.vmem [shape: f32[4,160], index: 0, kind: input, shape index: {}]
  %s1 = inlined_call_operand.vmem [shape: f32[160,32], index: 1, kind: input, shape index: {}]
  %s2 = inlined_call_operand.vmem [shape: f32[1,32], index: 2, kind: input, shape index: {}]
  %s3 = inlined_call_operand.vmem [shape: f32[1,32], index: 3, kind: input, shape index: {}]
  %s4 = inlined_call_operand.vmem [shape: f32[1,32], index: 4, kind: input, shape index: {}]
  %s5 = inlined_call_operand.vmem [shape: f32[32,1], index: 5, kind: input, shape index: {}]
  %s6 = inlined_call_operand.<no memory space> [shape: f32[1,1], index: 6, kind: input, shape index: {}]
  %s7 = inlined_call_operand.vmem [shape: f32[4,1], index: 7, kind: output, shape index: {}]
  %s8 = sld [smem:[#allocation0]]
  $region38: #{qagnn_decoder_forward.15} parent=0
    _
  %s10 = ssub.s32 1, %s8
  %s11 = scalar_select 0, %s10, %s8
  %v12 = vstv %s6
  %13 = vst [vmem:[#allocation2] sm:$0x1] %v12
  // Predicated region
  $region2: #{qagnn_decoder_forward.15} parent=0 // pred_check
    _
  $region3: #{qagnn_decoder_forward.15} parent=0 // pred_check_branch
    %15 = sbr.rel (0) target = $region5
  $region4: #{qagnn_decoder_forward.15} parent=0 // pred_region
    _
  $region5: #{qagnn_decoder_forward.15} parent=0 // pred_fallthru
    _
  // Predicated region
  $region6: #{qagnn_decoder_forward.15} parent=0 // pred_check
    _
  $region7: #{qagnn_decoder_forward.15} parent=0 // pred_check_branch
    %17 = sbr.rel (0) target = $region9
  $region8: #{qagnn_decoder_forward.15} parent=0 // pred_region
    _
  $region9: #{qagnn_decoder_forward.15} parent=0 // pred_fallthru
    _
  // Predicated region
  $region10: #{qagnn_decoder_forward.15} parent=0 // pred_check
    _
  $region11: #{qagnn_decoder_forward.15} parent=0 // pred_check_branch
    %19 = sbr.rel (0) target = $region13
  $region12: #{qagnn_decoder_forward.15} parent=0 // pred_region
    _
  $region13: #{qagnn_decoder_forward.15} parent=0 // pred_fallthru
    _
  // Predicated region
  $region14: #{qagnn_decoder_forward.15} parent=0 // pred_check
    _
  $region15: #{qagnn_decoder_forward.15} parent=0 // pred_check_branch
    %21 = sbr.rel (0) target = $region17
  $region16: #{qagnn_decoder_forward.15} parent=0 // pred_region
    _
  $region17: #{qagnn_decoder_forward.15} parent=0 // pred_fallthru
    _
  // Predicated region
  $region18: #{qagnn_decoder_forward.15} parent=0 // pred_check
    _
  $region19: #{qagnn_decoder_forward.15} parent=0 // pred_check_branch
    %23 = sbr.rel (0) target = $region21
  $region20: #{qagnn_decoder_forward.15} parent=0 // pred_region
    _
  $region21: #{qagnn_decoder_forward.15} parent=0 // pred_fallthru
    _
  // Predicated region
  $region22: #{qagnn_decoder_forward.15} parent=0 // pred_check
    _
  $region23: #{qagnn_decoder_forward.15} parent=0 // pred_check_branch
    %25 = sbr.rel (0) target = $region25
  $region24: #{qagnn_decoder_forward.15} parent=0 // pred_region
    _
  $region25: #{qagnn_decoder_forward.15} parent=0 // pred_fallthru
    _
  // Predicated region
  $region26: #{qagnn_decoder_forward.15} parent=0 // pred_check
    _
  $region27: #{qagnn_decoder_forward.15} parent=0 // pred_check_branch
    %27 = sbr.rel (0) target = $region29
  $region28: #{qagnn_decoder_forward.15} parent=0 // pred_region
    _
  $region29: #{qagnn_decoder_forward.15} parent=0 // pred_fallthru
    _
  %v28 = vld [vmem:[%s0] sm:$0xff]
  %v29 = vld [vmem:[%s1] sm:$0xff]
  %v30 = vld [vmem:[%s1 + $0x8] sm:$0xff]
  %v31 = vld [vmem:[%s1 + $0x10] sm:$0xff]
  %v32 = vld [vmem:[%s1 + $0x18] sm:$0xff]
  %v33 = vld [vmem:[%s1 + $0x20] sm:$0xff]
  %v34 = vld [vmem:[%s1 + $0x28] sm:$0xff]
  %v35 = vld [vmem:[%s1 + $0x30] sm:$0xff]
  %v36 = vld [vmem:[%s1 + $0x38] sm:$0xff]
  %v37 = vld [vmem:[%s1 + $0x40] sm:$0xff]
  %v38 = vld [vmem:[%s1 + $0x48] sm:$0xff]
  %v39 = vld [vmem:[%s1 + $0x50] sm:$0xff]
  %v40 = vld [vmem:[%s1 + $0x58] sm:$0xff]
  %v41 = vld [vmem:[%s1 + $0x60] sm:$0xff]
  %v42 = vld [vmem:[%s1 + $0x68] sm:$0xff]
  %v43 = vld [vmem:[%s1 + $0x70] sm:$0xff]
  %v44 = vld [vmem:[%s1 + $0x78] sm:$0xff]
  %v45 = vld [vmem:[%s1 + $0x80] sm:$0xff]
  %v46 = vld [vmem:[%s1 + $0x88] sm:$0xff]
  %v47 = vld [vmem:[%s1 + $0x90] sm:$0xff]
  %v48 = vld [vmem:[%s1 + $0x98] sm:$0xff]
  %v49 = vld [vmem:[%s2] sm:$0x1]
  %v51 = vlaneseq
  %v52 = vshrl.u32 %v51, 7
  %v53 = vsub.s32 0, %v52
  %v54 = vrot.slane %v49, %v53
  %v57 = vcombine.high %v28, %v28
  %vm58 = vcmask 261120
  %v59 = vsel %vm58, %v57, 0
  %61 = vmatprep.subr.mxu0 0.0
  %62 = vmatpush1.msra.mxu0 %v29
  %63 = vmatprep.subr.mxu0 0.0
  %64 = vmatpush1.msra.mxu0 %v30
  %65 = vmatprep.subr.mxu0 0.0
  %66 = vmatpush1.msra.mxu0 %v31
  %67 = vmatprep.subr.mxu0 0.0
  %68 = vmatpush1.msra.mxu0 %v32
  %69 = vmatprep.subr.mxu0 0.0
  %70 = vmatpush1.msra.mxu0 %v33
  %71 = vmatprep.subr.mxu0 0.0
  %72 = vmatpush1.msra.mxu0 %v34
  %73 = vmatprep.subr.mxu0 0.0
  %74 = vmatpush1.msra.mxu0 %v35
  %75 = vmatprep.subr.mxu0 0.0
  %76 = vmatpush1.msra.mxu0 %v36
  %77 = vmatprep.subr.mxu0 0.0
  %78 = vmatpush1.msra.mxu0 %v37
  %79 = vmatprep.subr.mxu0 0.0
  %80 = vmatpush1.msra.mxu0 %v38
  %81 = vmatprep.subr.mxu0 0.0
  %82 = vmatpush1.msra.mxu0 %v39
  %83 = vmatprep.subr.mxu0 0.0
  %84 = vmatpush1.msra.mxu0 %v40
  %85 = vmatprep.subr.mxu0 0.0
  %86 = vmatpush1.msra.mxu0 %v41
  %87 = vmatprep.subr.mxu0 0.0
  %88 = vmatpush1.msra.mxu0 %v42
  %89 = vmatprep.subr.mxu0 0.0
  %90 = vmatpush1.msra.mxu0 %v43
  %91 = vmatprep.subr.mxu0 0.0
  %92 = vmatpush1.msra.mxu0 %v44
  %93 = vmatprep.subr.mxu0 0.0
  %94 = vmatpush1.msra.mxu0 %v45
  %95 = vmatprep.subr.mxu0 0.0
  %96 = vmatpush1.msra.mxu0 %v46
  %97 = vmatprep.subr.mxu0 0.0
  %98 = vmatpush1.msra.mxu0 %v47
  %99 = vmatprep.subr.mxu0 0.0
  %100 = vmatpush1.msra.mxu0 %v48
  %101 = vmatprep.subr.mxu0 0.0
  %102 = vmatpush1.msra.mxu0 0.0
  %103 = vmatprep.subr.mxu0 0.0
  %104 = vmatpush1.msra.mxu0 0.0
  %105 = vmatprep.subr.mxu0 0.0
  %106 = vmatpush1.msra.mxu0 0.0
  %107 = vmatprep.subr.mxu0 0.0
  %108 = vmatpush1.msra.mxu0 0.0
  %109 = vmatprep.subr.mxu0 0.0
  %110 = vmatpush1.msra.mxu0 0.0
  %111 = vmatprep.subr.mxu0 0.0
  %112 = vmatpush1.msra.mxu0 0.0
  %113 = vmatprep.subr.mxu0 0.0
  %114 = vmatpush1.msra.mxu0 0.0
  %115 = vmatprep.subr.mxu0 0.0
  %116 = vmatpush1.msra.mxu0 0.0
  %117 = vmatprep.subr.mxu0 0.0
  %118 = vmatpush1.msra.mxu0 0.0
  %119 = vmatprep.subr.mxu0 0.0
  %120 = vmatpush1.msra.mxu0 0.0
  %121 = vmatprep.subr.mxu0 0.0
  %122 = vmatpush1.msra.mxu0 0.0
  %123 = vmatprep.subr.mxu0 0.0
  %124 = vmatpush1.msra.mxu0 0.0
  %125 = vmatprep.mubr.f32.mxu0 %v59
  %126 = vmatmul.mubr.f32.gmra.mrb[0].mxu0 %v28
  %v127 = vpop.f32.mrb[0].mxu0
  %v128 = vadd.f32 %v54, %v127
  %v129 = vpop.f32.mrb[0].mxu0
  %130 = vdwg.mxu0
  %vm131 = vcmask 257024
  %v132 = vsel %vm131, %v128, 0.0
  %133 = vadd.xlane.f32.xlu0 %v132
  %v134 = vpop.xlane.xlu0 %133
  %v135 = vrcp.pop 32.0
  %v136 = vmul.f32 %v134, %v135
  %v137 = vsub.f32 %v128, %v136
  %v138 = vmul.f32 %v137, %v137
  %v139 = vsel %vm131, %v138, 0.0
  %140 = vadd.xlane.f32.xlu0 %v139
  %v141 = vpop.xlane.xlu0 %140
  %v142 = vmul.f32 %v141, %v135
  %v143 = vadd.f32 %v142, 1e-05
  %v144 = vrsqrt.pop %v143
  %v145 = vmul.f32 %v137, %v144
  %v146 = vld [vmem:[%s3] sm:$0x1]
  %v148 = vlaneseq
  %v149 = vshrl.u32 %v148, 7
  %v150 = vsub.s32 0, %v149
  %v151 = vrot.slane %v146, %v150
  %v153 = vmul.f32 %v145, %v151
  %v154 = vld [vmem:[%s4] sm:$0x1]
  %v156 = vlaneseq
  %v157 = vshrl.u32 %v156, 7
  %v158 = vsub.s32 0, %v157
  %v159 = vrot.slane %v154, %v158
  %v161 = vadd.f32 %v153, %v159
  %v162 = vmul.f32 %v161, 0.5
  %v163 = vmul.f32 %v161, 0.044715
  %v164 = vmul.f32 %v163, %v161
  %v165 = vmul.f32 %v164, %v161
  %v166 = vadd.f32 %v161, %v165
  %v167 = vmul.f32 %v166, 0.7978846
  %v168 = vtanh.pop %v167
  %v169 = vadd.f32 %v168, 1.0
  %v170 = vmul.f32 %v162, %v169
  %v171 = vld [vmem:[%s5] sm:$0xff]
  %v172 = vld [vmem:[%s5 + $0x8] sm:$0xff]
  %v173 = vld [vmem:[%s5 + $0x10] sm:$0xff]
  %v174 = vld [vmem:[%s5 + $0x18] sm:$0xff]
  %v175 = vld [vmem:[#allocation2] sm:$0x1]
  %v177 = vlaneseq
  %v178 = vshrl.u32 %v177, 7
  %v179 = vsub.s32 0, %v178
  %v180 = vrot.slane %v175, %v179
  %v183 = vsel %vm58, %v170, 0
  %185 = vmatprep.subr.mxu0 0.0
  %186 = vmatpush1.msra.mxu0 %v171
  %187 = vmatprep.subr.mxu0 0.0
  %188 = vmatpush1.msra.mxu0 %v172
  %189 = vmatprep.subr.mxu0 0.0
  %190 = vmatpush1.msra.mxu0 %v173
  %191 = vmatprep.subr.mxu0 0.0
  %192 = vmatpush1.msra.mxu0 %v174
  %193 = vmatprep.subr.mxu0 0.0
  %194 = vmatpush1.msra.mxu0 0.0
  %195 = vmatprep.subr.mxu0 0.0
  %196 = vmatpush1.msra.mxu0 0.0
  %197 = vmatprep.subr.mxu0 0.0
  %198 = vmatpush1.msra.mxu0 0.0
  %199 = vmatprep.subr.mxu0 0.0
  %200 = vmatpush1.msra.mxu0 0.0
  %201 = vmatprep.subr.mxu0 0.0
  %202 = vmatpush1.msra.mxu0 0.0
  %203 = vmatprep.subr.mxu0 0.0
  %204 = vmatpush1.msra.mxu0 0.0
  %205 = vmatprep.subr.mxu0 0.0
  %206 = vmatpush1.msra.mxu0 0.0
  %207 = vmatprep.subr.mxu0 0.0
  %208 = vmatpush1.msra.mxu0 0.0
  %209 = vmatprep.subr.mxu0 0.0
  %210 = vmatpush1.msra.mxu0 0.0
  %211 = vmatprep.subr.mxu0 0.0
  %212 = vmatpush1.msra.mxu0 0.0
  %213 = vmatprep.subr.mxu0 0.0
  %214 = vmatpush1.msra.mxu0 0.0
  %215 = vmatprep.subr.mxu0 0.0
  %216 = vmatpush1.msra.mxu0 0.0
  %217 = vmatprep.subr.mxu0 0.0
  %218 = vmatpush1.msra.mxu0 0.0
  %219 = vmatprep.subr.mxu0 0.0
  %220 = vmatpush1.msra.mxu0 0.0
  %221 = vmatprep.subr.mxu0 0.0
  %222 = vmatpush1.msra.mxu0 0.0
  %223 = vmatprep.subr.mxu0 0.0
  %224 = vmatpush1.msra.mxu0 0.0
  %225 = vmatprep.subr.mxu0 0.0
  %226 = vmatpush1.msra.mxu0 0.0
  %227 = vmatprep.subr.mxu0 0.0
  %228 = vmatpush1.msra.mxu0 0.0
  %229 = vmatprep.subr.mxu0 0.0
  %230 = vmatpush1.msra.mxu0 0.0
  %231 = vmatprep.subr.mxu0 0.0
  %232 = vmatpush1.msra.mxu0 0.0
  %233 = vmatprep.subr.mxu0 0.0
  %234 = vmatpush1.msra.mxu0 0.0
  %235 = vmatprep.subr.mxu0 0.0
  %236 = vmatpush1.msra.mxu0 0.0
  %237 = vmatprep.subr.mxu0 0.0
  %238 = vmatpush1.msra.mxu0 0.0
  %239 = vmatprep.subr.mxu0 0.0
  %240 = vmatpush1.msra.mxu0 0.0
  %241 = vmatprep.subr.mxu0 0.0
  %242 = vmatpush1.msra.mxu0 0.0
  %243 = vmatprep.subr.mxu0 0.0
  %244 = vmatpush1.msra.mxu0 0.0
  %245 = vmatprep.subr.mxu0 0.0
  %246 = vmatpush1.msra.mxu0 0.0
  %247 = vmatprep.subr.mxu0 0.0
  %248 = vmatpush1.msra.mxu0 0.0
  %249 = vmatprep.mubr.f32.mxu0 0.0
  %250 = vmatmul.mubr.f32.gmra.mrb[0].mxu0 %v183
  %v251 = vpop.f32.mrb[0].mxu0
  %v252 = vadd.f32 %v180, %v251
  %v253 = vpop.f32.mrb[0].mxu0
  %254 = vdwg.mxu0
  %vm255 = vcmask 3072
  %256 = vst.msk [vmem:[%s7] sm:$0xf] %vm255, %v252
  // Predicated region
  $region30: #{qagnn_decoder_forward.15} parent=0 // pred_check
    _
  $region31: #{qagnn_decoder_forward.15} parent=0 // pred_check_branch
    %258 = sbr.rel (0) target = $region33
  $region32: #{qagnn_decoder_forward.15} parent=0 // pred_region
    _
  $region33: #{qagnn_decoder_forward.15} parent=0 // pred_fallthru
    _
  // Predicated region
  $region34: #{qagnn_decoder_forward.15} parent=0 // pred_check
    _
  $region35: #{qagnn_decoder_forward.15} parent=0 // pred_check_branch
    %260 = sbr.rel (0) target = $region37
  $region36: #{qagnn_decoder_forward.15} parent=0 // pred_region
    _
  $region37: #{qagnn_decoder_forward.15} parent=0 // pred_fallthru
    _

// kernel: qagnn_decoder_forward.11
$region0: #{qagnn_decoder_forward.11}
  #allocation0 [shape = 'u32[]', space=smem, size = 0x4, offset = 0x4, fixed_abs, tag = 'smem constant byte address 0x4 - core index']
  #allocation1 [shape = 'u32[144,128]{1,0:T(1,128)}', space=vmem, size = 0x12000, scoped, tag = 'internal scratch']
  #allocation2 [shape = 'f32[64,64]{1,0:T(8,128)}', space=vmem, size = 0x8000, scoped, tag = 'scratch operand']
  %s0 = inlined_call_operand.vmem [shape: f32[64,64], index: 0, kind: input, shape index: {}]
  %s1 = inlined_call_operand.vmem [shape: f32[64,64], index: 1, kind: input, shape index: {}]
  %s2 = inlined_call_operand.vmem [shape: f32[104,64], index: 2, kind: input, shape index: {}]
  %s3 = inlined_call_operand.vmem [shape: f32[104,64], index: 3, kind: input, shape index: {}]
  %s4 = inlined_call_operand.vmem [shape: f32[64,104], index: 4, kind: input, shape index: {}]
  %s5 = inlined_call_operand.vmem [shape: f32[104,64], index: 5, kind: input, shape index: {}]
  %s6 = inlined_call_operand.vmem [shape: f32[64,104], index: 6, kind: input, shape index: {}]
  %s7 = inlined_call_operand.vmem [shape: f32[64,64], index: 7, kind: input, shape index: {}]
  %s8 = inlined_call_operand.vmem [shape: f32[2,128,192], index: 8, kind: input, shape index: {}]
  %s9 = inlined_call_operand.vmem [shape: f32[2,128,192], index: 9, kind: input, shape index: {}]
  %s10 = inlined_call_operand.vmem [shape: f32[2,64,192], index: 10, kind: input, shape index: {}]
  %s11 = inlined_call_operand.vmem [shape: f32[2,1,192], index: 11, kind: input, shape index: {}]
  %s12 = inlined_call_operand.vmem [shape: f32[2,64,64], index: 12, kind: input, shape index: {}]
  %s13 = inlined_call_operand.vmem [shape: f32[2,1,64], index: 13, kind: input, shape index: {}]
  %s14 = inlined_call_operand.vmem [shape: f32[2,64,64], index: 14, kind: input, shape index: {}]
  %s15 = inlined_call_operand.vmem [shape: f32[2,1,64], index: 15, kind: input, shape index: {}]
  %s16 = inlined_call_operand.vmem [shape: f32[64,64], index: 16, kind: input, shape index: {}]
  %s17 = inlined_call_operand.vmem [shape: f32[1,64], index: 17, kind: input, shape index: {}]
  %s18 = inlined_call_operand.vmem [shape: f32[64,64], index: 18, kind: input, shape index: {}]
  %s19 = inlined_call_operand.vmem [shape: f32[1,64], index: 19, kind: input, shape index: {}]
  %s20 = inlined_call_operand.vmem [shape: f32[64,64], index: 20, kind: output, shape index: {}]
  %s21 = sld [smem:[#allocation0]]
  $region121: #{qagnn_decoder_forward.11} parent=0
    _
  %s23 = ssub.s32 1, %s21
  %s24 = scalar_select 0, %s23, %s21
  loop: start=0, step=1, limit=4
  $region2: #{qagnn_decoder_forward.11} parent=0 // loop_pre_header
    _
  $region3: #{qagnn_decoder_forward.11} parent=0 // loop_header
    %s26 = sphi 0, %s30
    %p27 = scmp.ge.s32.totalorder %s26, 4
    %s34 = sphi 0, %s34
    %s36 = sphi 0, %s34
    %s37 = sphi 0, %s36
    %s51 = sphi 0, %s37
    %s55 = sphi 0, %s55
    %s57 = sphi 0, %s55
    %s58 = sphi 0, %s57
    %s72 = sphi 0, %s58
    %s76 = sphi 0, %s76
    %s78 = sphi 0, %s76
    %s79 = sphi 0, %s78
    %s93 = sphi 0, %s79
    %s97 = sphi 0, %s97
    %s99 = sphi 0, %s97
    %s100 = sphi 0, %s99
    %s114 = sphi 0, %s100
    %s118 = sphi 0, %s118
    %s120 = sphi 0, %s118
    %s121 = sphi 0, %s120
    %s135 = sphi 0, %s121
    %s139 = sphi 0, %s139
    %s141 = sphi 0, %s139
    %s142 = sphi 0, %s141
    %s156 = sphi 0, %s142
    %s160 = sphi 0, %s160
    %s162 = sphi 0, %s160
    %s163 = sphi 0, %s162
    %s177 = sphi 0, %s163
    %s181 = sphi 0, %s181
    %s183 = sphi 0, %s181
    %s184 = sphi 0, %s183
    %s198 = sphi 0, %s184
    %s204 = sphi 0, %s206
    %s207 = sphi 0, %s204
    %s208 = sphi 0, %s207
    %s224 = sphi 0, %s208
    %s230 = sphi 0, %s232
    %s233 = sphi 0, %s230
    %s234 = sphi 0, %s233
    %s250 = sphi 0, %s234
    %s256 = sphi 0, %s258
    %s259 = sphi 0, %s256
    %s260 = sphi 0, %s259
    %s276 = sphi 0, %s260
    %s282 = sphi 0, %s284
    %s285 = sphi 0, %s282
    %s286 = sphi 0, %s285
    %s302 = sphi 0, %s286
    %s308 = sphi 0, %s310
    %s311 = sphi 0, %s308
    %s312 = sphi 0, %s311
    %s328 = sphi 0, %s312
    %s334 = sphi 0, %s336
    %s337 = sphi 0, %s334
    %s338 = sphi 0, %s337
    %s354 = sphi 0, %s338
    %s360 = sphi 0, %s362
    %s363 = sphi 0, %s360
    %s364 = sphi 0, %s363
    %s380 = sphi 0, %s364
    %s386 = sphi 0, %s388
    %s389 = sphi 0, %s386
    %s390 = sphi 0, %s389
    %s406 = sphi 0, %s390
    %s410 = sphi 0, %s410
    %s412 = sphi 0, %s410
    %s413 = sphi 0, %s412
    %s427 = sphi 0, %s413
    %s431 = sphi 0, %s431
    %s433 = sphi 0, %s431
    %s434 = sphi 0, %s433
    %s448 = sphi 0, %s434
    %s452 = sphi 0, %s452
    %s454 = sphi 0, %s452
    %s455 = sphi 0, %s454
    %s469 = sphi 0, %s455
    %s473 = sphi 0, %s473
    %s475 = sphi 0, %s473
    %s476 = sphi 0, %s475
    %s490 = sphi 0, %s476
    %s494 = sphi 0, %s494
    %s496 = sphi 0, %s494
    %s497 = sphi 0, %s496
    %s511 = sphi 0, %s497
  $region4: #{qagnn_decoder_forward.11} parent=0 // loop_header_branch
    %29 = sbr.rel (%p27) target = $region8
  $region5: #{qagnn_decoder_forward.11} parent=0 // loop_body
    %s31 = ssub.s32 %s26, 1
    %s32 = ssub.s32 %s26, 2
    %s33 = sadd.s32 %s26, 1
    %s35 = sadd.s32 %s34, 1
    %p38 = scmp.eq.s32.totalorder %s26, 1
    %p39 = scmp.ne.s32.totalorder %s34, %s36
    %p40 = scmp.eq.s32.totalorder %s26, 0
    %p41 = por %p39, %p40
    %p42 = scmp.ne.s32.totalorder %s34, %s36
    %p43 = scmp.eq.s32.totalorder %s31, 1
    %p44 = por %p42, %p43
    %p45 = scmp.ne.s32.totalorder %s36, %s37
    %p46 = scmp.eq.s32.totalorder %s31, 0
    %p47 = por %p45, %p46
    %p48 = scmp.ne.s32.totalorder %s36, %s37
    %p49 = scmp.eq.s32.totalorder %s32, 1
    %p50 = por %p48, %p49
    %p52 = scmp.ne.s32.totalorder %s37, %s51
    %p53 = scmp.eq.s32.totalorder %s32, 0
    %p54 = por %p52, %p53
    %s56 = sadd.s32 %s55, 1
    %p59 = scmp.eq.s32.totalorder %s26, 1
    %p60 = scmp.ne.s32.totalorder %s55, %s57
    %p61 = scmp.eq.s32.totalorder %s26, 0
    %p62 = por %p60, %p61
    %p63 = scmp.ne.s32.totalorder %s55, %s57
    %p64 = scmp.eq.s32.totalorder %s31, 1
    %p65 = por %p63, %p64
    %p66 = scmp.ne.s32.totalorder %s57, %s58
    %p67 = scmp.eq.s32.totalorder %s31, 0
    %p68 = por %p66, %p67
    %p69 = scmp.ne.s32.totalorder %s57, %s58
    %p70 = scmp.eq.s32.totalorder %s32, 1
    %p71 = por %p69, %p70
    %p73 = scmp.ne.s32.totalorder %s58, %s72
    %p74 = scmp.eq.s32.totalorder %s32, 0
    %p75 = por %p73, %p74
    %s77 = sadd.s32 %s76, 1
    %p80 = scmp.eq.s32.totalorder %s26, 1
    %p81 = scmp.ne.s32.totalorder %s76, %s78
    %p82 = scmp.eq.s32.totalorder %s26, 0
    %p83 = por %p81, %p82
    %p84 = scmp.ne.s32.totalorder %s76, %s78
    %p85 = scmp.eq.s32.totalorder %s31, 1
    %p86 = por %p84, %p85
    %p87 = scmp.ne.s32.totalorder %s78, %s79
    %p88 = scmp.eq.s32.totalorder %s31, 0
    %p89 = por %p87, %p88
    %p90 = scmp.ne.s32.totalorder %s78, %s79
    %p91 = scmp.eq.s32.totalorder %s32, 1
    %p92 = por %p90, %p91
    %p94 = scmp.ne.s32.totalorder %s79, %s93
    %p95 = scmp.eq.s32.totalorder %s32, 0
    %p96 = por %p94, %p95
    %s98 = sadd.s32 %s97, 1
    %p101 = scmp.eq.s32.totalorder %s26, 1
    %p102 = scmp.ne.s32.totalorder %s97, %s99
    %p103 = scmp.eq.s32.totalorder %s26, 0
    %p104 = por %p102, %p103
    %p105 = scmp.ne.s32.totalorder %s97, %s99
    %p106 = scmp.eq.s32.totalorder %s31, 1
    %p107 = por %p105, %p106
    %p108 = scmp.ne.s32.totalorder %s99, %s100
    %p109 = scmp.eq.s32.totalorder %s31, 0
    %p110 = por %p108, %p109
    %p111 = scmp.ne.s32.totalorder %s99, %s100
    %p112 = scmp.eq.s32.totalorder %s32, 1
    %p113 = por %p111, %p112
    %p115 = scmp.ne.s32.totalorder %s100, %s114
    %p116 = scmp.eq.s32.totalorder %s32, 0
    %p117 = por %p115, %p116
    %s119 = sadd.s32 %s118, 1
    %p122 = scmp.eq.s32.totalorder %s26, 1
    %p123 = scmp.ne.s32.totalorder %s118, %s120
    %p124 = scmp.eq.s32.totalorder %s26, 0
    %p125 = por %p123, %p124
    %p126 = scmp.ne.s32.totalorder %s118, %s120
    %p127 = scmp.eq.s32.totalorder %s31, 1
    %p128 = por %p126, %p127
    %p129 = scmp.ne.s32.totalorder %s120, %s121
    %p130 = scmp.eq.s32.totalorder %s31, 0
    %p131 = por %p129, %p130
    %p132 = scmp.ne.s32.totalorder %s120, %s121
    %p133 = scmp.eq.s32.totalorder %s32, 1
    %p134 = por %p132, %p133
    %p136 = scmp.ne.s32.totalorder %s121, %s135
    %p137 = scmp.eq.s32.totalorder %s32, 0
    %p138 = por %p136, %p137
    %s140 = sadd.s32 %s139, 1
    %p143 = scmp.eq.s32.totalorder %s26, 1
    %p144 = scmp.ne.s32.totalorder %s139, %s141
    %p145 = scmp.eq.s32.totalorder %s26, 0
    %p146 = por %p144, %p145
    %p147 = scmp.ne.s32.totalorder %s139, %s141
    %p148 = scmp.eq.s32.totalorder %s31, 1
    %p149 = por %p147, %p148
    %p150 = scmp.ne.s32.totalorder %s141, %s142
    %p151 = scmp.eq.s32.totalorder %s31, 0
    %p152 = por %p150, %p151
    %p153 = scmp.ne.s32.totalorder %s141, %s142
    %p154 = scmp.eq.s32.totalorder %s32, 1
    %p155 = por %p153, %p154
    %p157 = scmp.ne.s32.totalorder %s142, %s156
    %p158 = scmp.eq.s32.totalorder %s32, 0
    %p159 = por %p157, %p158
    %s161 = sadd.s32 %s160, 1
    %p164 = scmp.eq.s32.totalorder %s26, 1
    %p165 = scmp.ne.s32.totalorder %s160, %s162
    %p166 = scmp.eq.s32.totalorder %s26, 0
    %p167 = por %p165, %p166
    %p168 = scmp.ne.s32.totalorder %s160, %s162
    %p169 = scmp.eq.s32.totalorder %s31, 1
    %p170 = por %p168, %p169
    %p171 = scmp.ne.s32.totalorder %s162, %s163
    %p172 = scmp.eq.s32.totalorder %s31, 0
    %p173 = por %p171, %p172
    %p174 = scmp.ne.s32.totalorder %s162, %s163
    %p175 = scmp.eq.s32.totalorder %s32, 1
    %p176 = por %p174, %p175
    %p178 = scmp.ne.s32.totalorder %s163, %s177
    %p179 = scmp.eq.s32.totalorder %s32, 0
    %p180 = por %p178, %p179
    %s182 = sadd.s32 %s181, 1
    %p185 = scmp.eq.s32.totalorder %s26, 1
    %p186 = scmp.ne.s32.totalorder %s181, %s183
    %p187 = scmp.eq.s32.totalorder %s26, 0
    %p188 = por %p186, %p187
    %p189 = scmp.ne.s32.totalorder %s181, %s183
    %p190 = scmp.eq.s32.totalorder %s31, 1
    %p191 = por %p189, %p190
    %p192 = scmp.ne.s32.totalorder %s183, %s184
    %p193 = scmp.eq.s32.totalorder %s31, 0
    %p194 = por %p192, %p193
    %p195 = scmp.ne.s32.totalorder %s183, %s184
    %p196 = scmp.eq.s32.totalorder %s32, 1
    %p197 = por %p195, %p196
    %p199 = scmp.ne.s32.totalorder %s184, %s198
    %p200 = scmp.eq.s32.totalorder %s32, 0
    %p201 = por %p199, %p200
    %s202 = ssub.s32 %s26, %s33
    %p203 = scmp.eq.s32.totalorder %s202, 0
    %s205 = sadd.s32 %s204, 1
    %s206 = scalar_select %p203, %s204, %s205
    %p209 = pneg %p203
    %p210 = scmp.eq.s32.totalorder %s26, 1
    %p211 = por %p209, %p210
    %p212 = scmp.ne.s32.totalorder %s204, %s207
    %p213 = scmp.eq.s32.totalorder %s26, 0
    %p214 = por %p212, %p213
    %p215 = scmp.ne.s32.totalorder %s204, %s207
    %p216 = scmp.eq.s32.totalorder %s31, 1
    %p217 = por %p215, %p216
    %p218 = scmp.ne.s32.totalorder %s207, %s208
    %p219 = scmp.eq.s32.totalorder %s31, 0
    %p220 = por %p218, %p219
    %p221 = scmp.ne.s32.totalorder %s207, %s208
    %p222 = scmp.eq.s32.totalorder %s32, 1
    %p223 = por %p221, %p222
    %p225 = scmp.ne.s32.totalorder %s208, %s224
    %p226 = scmp.eq.s32.totalorder %s32, 0
    %p227 = por %p225, %p226
    %s228 = ssub.s32 %s26, %s33
    %p229 = scmp.eq.s32.totalorder %s228, 0
    %s231 = sadd.s32 %s230, 1
    %s232 = scalar_select %p229, %s230, %s231
    %p235 = pneg %p229
    %p236 = scmp.eq.s32.totalorder %s26, 1
    %p237 = por %p235, %p236
    %p238 = scmp.ne.s32.totalorder %s230, %s233
    %p239 = scmp.eq.s32.totalorder %s26, 0
    %p240 = por %p238, %p239
    %p241 = scmp.ne.s32.totalorder %s230, %s233
    %p242 = scmp.eq.s32.totalorder %s31, 1
    %p243 = por %p241, %p242
    %p244 = scmp.ne.s32.totalorder %s233, %s234
    %p245 = scmp.eq.s32.totalorder %s31, 0
    %p246 = por %p244, %p245
    %p247 = scmp.ne.s32.totalorder %s233, %s234
    %p248 = scmp.eq.s32.totalorder %s32, 1
    %p249 = por %p247, %p248
    %p251 = scmp.ne.s32.totalorder %s234, %s250
    %p252 = scmp.eq.s32.totalorder %s32, 0
    %p253 = por %p251, %p252
    %s254 = ssub.s32 %s26, %s33
    %p255 = scmp.eq.s32.totalorder %s254, 0
    %s257 = sadd.s32 %s256, 1
    %s258 = scalar_select %p255, %s256, %s257
    %p261 = pneg %p255
    %p262 = scmp.eq.s32.totalorder %s26, 1
    %p263 = por %p261, %p262
    %p264 = scmp.ne.s32.totalorder %s256, %s259
    %p265 = scmp.eq.s32.totalorder %s26, 0
    %p266 = por %p264, %p265
    %p267 = scmp.ne.s32.totalorder %s256, %s259
    %p268 = scmp.eq.s32.totalorder %s31, 1
    %p269 = por %p267, %p268
    %p270 = scmp.ne.s32.totalorder %s259, %s260
    %p271 = scmp.eq.s32.totalorder %s31, 0
    %p272 = por %p270, %p271
    %p273 = scmp.ne.s32.totalorder %s259, %s260
    %p274 = scmp.eq.s32.totalorder %s32, 1
    %p275 = por %p273, %p274
    %p277 = scmp.ne.s32.totalorder %s260, %s276
    %p278 = scmp.eq.s32.totalorder %s32, 0
    %p279 = por %p277, %p278
    %s280 = ssub.s32 %s26, %s33
    %p281 = scmp.eq.s32.totalorder %s280, 0
    %s283 = sadd.s32 %s282, 1
    %s284 = scalar_select %p281, %s282, %s283
    %p287 = pneg %p281
    %p288 = scmp.eq.s32.totalorder %s26, 1
    %p289 = por %p287, %p288
    %p290 = scmp.ne.s32.totalorder %s282, %s285
    %p291 = scmp.eq.s32.totalorder %s26, 0
    %p292 = por %p290, %p291
    %p293 = scmp.ne.s32.totalorder %s282, %s285
    %p294 = scmp.eq.s32.totalorder %s31, 1
    %p295 = por %p293, %p294
    %p296 = scmp.ne.s32.totalorder %s285, %s286
    %p297 = scmp.eq.s32.totalorder %s31, 0
    %p298 = por %p296, %p297
    %p299 = scmp.ne.s32.totalorder %s285, %s286
    %p300 = scmp.eq.s32.totalorder %s32, 1
    %p301 = por %p299, %p300
    %p303 = scmp.ne.s32.totalorder %s286, %s302
    %p304 = scmp.eq.s32.totalorder %s32, 0
    %p305 = por %p303, %p304
    %s306 = ssub.s32 %s26, %s33
    %p307 = scmp.eq.s32.totalorder %s306, 0
    %s309 = sadd.s32 %s308, 1
    %s310 = scalar_select %p307, %s308, %s309
    %p313 = pneg %p307
    %p314 = scmp.eq.s32.totalorder %s26, 1
    %p315 = por %p313, %p314
    %p316 = scmp.ne.s32.totalorder %s308, %s311
    %p317 = scmp.eq.s32.totalorder %s26, 0
    %p318 = por %p316, %p317
    %p319 = scmp.ne.s32.totalorder %s308, %s311
    %p320 = scmp.eq.s32.totalorder %s31, 1
    %p321 = por %p319, %p320
    %p322 = scmp.ne.s32.totalorder %s311, %s312
    %p323 = scmp.eq.s32.totalorder %s31, 0
    %p324 = por %p322, %p323
    %p325 = scmp.ne.s32.totalorder %s311, %s312
    %p326 = scmp.eq.s32.totalorder %s32, 1
    %p327 = por %p325, %p326
    %p329 = scmp.ne.s32.totalorder %s312, %s328
    %p330 = scmp.eq.s32.totalorder %s32, 0
    %p331 = por %p329, %p330
    %s332 = ssub.s32 %s26, %s33
    %p333 = scmp.eq.s32.totalorder %s332, 0
    %s335 = sadd.s32 %s334, 1
    %s336 = scalar_select %p333, %s334, %s335
    %p339 = pneg %p333
    %p340 = scmp.eq.s32.totalorder %s26, 1
    %p341 = por %p339, %p340
    %p342 = scmp.ne.s32.totalorder %s334, %s337
    %p343 = scmp.eq.s32.totalorder %s26, 0
    %p344 = por %p342, %p343
    %p345 = scmp.ne.s32.totalorder %s334, %s337
    %p346 = scmp.eq.s32.totalorder %s31, 1
    %p347 = por %p345, %p346
    %p348 = scmp.ne.s32.totalorder %s337, %s338
    %p349 = scmp.eq.s32.totalorder %s31, 0
    %p350 = por %p348, %p349
    %p351 = scmp.ne.s32.totalorder %s337, %s338
    %p352 = scmp.eq.s32.totalorder %s32, 1
    %p353 = por %p351, %p352
    %p355 = scmp.ne.s32.totalorder %s338, %s354
    %p356 = scmp.eq.s32.totalorder %s32, 0
    %p357 = por %p355, %p356
    %s358 = ssub.s32 %s26, %s33
    %p359 = scmp.eq.s32.totalorder %s358, 0
    %s361 = sadd.s32 %s360, 1
    %s362 = scalar_select %p359, %s360, %s361
    %p365 = pneg %p359
    %p366 = scmp.eq.s32.totalorder %s26, 1
    %p367 = por %p365, %p366
    %p368 = scmp.ne.s32.totalorder %s360, %s363
    %p369 = scmp.eq.s32.totalorder %s26, 0
    %p370 = por %p368, %p369
    %p371 = scmp.ne.s32.totalorder %s360, %s363
    %p372 = scmp.eq.s32.totalorder %s31, 1
    %p373 = por %p371, %p372
    %p374 = scmp.ne.s32.totalorder %s363, %s364
    %p375 = scmp.eq.s32.totalorder %s31, 0
    %p376 = por %p374, %p375
    %p377 = scmp.ne.s32.totalorder %s363, %s364
    %p378 = scmp.eq.s32.totalorder %s32, 1
    %p379 = por %p377, %p378
    %p381 = scmp.ne.s32.totalorder %s364, %s380
    %p382 = scmp.eq.s32.totalorder %s32, 0
    %p383 = por %p381, %p382
    %s384 = ssub.s32 %s26, %s33
    %p385 = scmp.eq.s32.totalorder %s384, 0
    %s387 = sadd.s32 %s386, 1
    %s388 = scalar_select %p385, %s386, %s387
    %p391 = pneg %p385
    %p392 = scmp.eq.s32.totalorder %s26, 1
    %p393 = por %p391, %p392
    %p394 = scmp.ne.s32.totalorder %s386, %s389
    %p395 = scmp.eq.s32.totalorder %s26, 0
    %p396 = por %p394, %p395
    %p397 = scmp.ne.s32.totalorder %s386, %s389
    %p398 = scmp.eq.s32.totalorder %s31, 1
    %p399 = por %p397, %p398
    %p400 = scmp.ne.s32.totalorder %s389, %s390
    %p401 = scmp.eq.s32.totalorder %s31, 0
    %p402 = por %p400, %p401
    %p403 = scmp.ne.s32.totalorder %s389, %s390
    %p404 = scmp.eq.s32.totalorder %s32, 1
    %p405 = por %p403, %p404
    %p407 = scmp.ne.s32.totalorder %s390, %s406
    %p408 = scmp.eq.s32.totalorder %s32, 0
    %p409 = por %p407, %p408
    %s411 = sadd.s32 %s410, 1
    %p414 = scmp.eq.s32.totalorder %s26, 1
    %p415 = scmp.ne.s32.totalorder %s410, %s412
    %p416 = scmp.eq.s32.totalorder %s26, 0
    %p417 = por %p415, %p416
    %p418 = scmp.ne.s32.totalorder %s410, %s412
    %p419 = scmp.eq.s32.totalorder %s31, 1
    %p420 = por %p418, %p419
    %p421 = scmp.ne.s32.totalorder %s412, %s413
    %p422 = scmp.eq.s32.totalorder %s31, 0
    %p423 = por %p421, %p422
    %p424 = scmp.ne.s32.totalorder %s412, %s413
    %p425 = scmp.eq.s32.totalorder %s32, 1
    %p426 = por %p424, %p425
    %p428 = scmp.ne.s32.totalorder %s413, %s427
    %p429 = scmp.eq.s32.totalorder %s32, 0
    %p430 = por %p428, %p429
    %s432 = sadd.s32 %s431, 1
    %p435 = scmp.eq.s32.totalorder %s26, 1
    %p436 = scmp.ne.s32.totalorder %s431, %s433
    %p437 = scmp.eq.s32.totalorder %s26, 0
    %p438 = por %p436, %p437
    %p439 = scmp.ne.s32.totalorder %s431, %s433
    %p440 = scmp.eq.s32.totalorder %s31, 1
    %p441 = por %p439, %p440
    %p442 = scmp.ne.s32.totalorder %s433, %s434
    %p443 = scmp.eq.s32.totalorder %s31, 0
    %p444 = por %p442, %p443
    %p445 = scmp.ne.s32.totalorder %s433, %s434
    %p446 = scmp.eq.s32.totalorder %s32, 1
    %p447 = por %p445, %p446
    %p449 = scmp.ne.s32.totalorder %s434, %s448
    %p450 = scmp.eq.s32.totalorder %s32, 0
    %p451 = por %p449, %p450
    %s453 = sadd.s32 %s452, 1
    %p456 = scmp.eq.s32.totalorder %s26, 1
    %p457 = scmp.ne.s32.totalorder %s452, %s454
    %p458 = scmp.eq.s32.totalorder %s26, 0
    %p459 = por %p457, %p458
    %p460 = scmp.ne.s32.totalorder %s452, %s454
    %p461 = scmp.eq.s32.totalorder %s31, 1
    %p462 = por %p460, %p461
    %p463 = scmp.ne.s32.totalorder %s454, %s455
    %p464 = scmp.eq.s32.totalorder %s31, 0
    %p465 = por %p463, %p464
    %p466 = scmp.ne.s32.totalorder %s454, %s455
    %p467 = scmp.eq.s32.totalorder %s32, 1
    %p468 = por %p466, %p467
    %p470 = scmp.ne.s32.totalorder %s455, %s469
    %p471 = scmp.eq.s32.totalorder %s32, 0
    %p472 = por %p470, %p471
    %s474 = sadd.s32 %s473, 1
    %p477 = scmp.eq.s32.totalorder %s26, 1
    %p478 = scmp.ne.s32.totalorder %s473, %s475
    %p479 = scmp.eq.s32.totalorder %s26, 0
    %p480 = por %p478, %p479
    %p481 = scmp.ne.s32.totalorder %s473, %s475
    %p482 = scmp.eq.s32.totalorder %s31, 1
    %p483 = por %p481, %p482
    %p484 = scmp.ne.s32.totalorder %s475, %s476
    %p485 = scmp.eq.s32.totalorder %s31, 0
    %p486 = por %p484, %p485
    %p487 = scmp.ne.s32.totalorder %s475, %s476
    %p488 = scmp.eq.s32.totalorder %s32, 1
    %p489 = por %p487, %p488
    %p491 = scmp.ne.s32.totalorder %s476, %s490
    %p492 = scmp.eq.s32.totalorder %s32, 0
    %p493 = por %p491, %p492
    %s495 = sadd.s32 %s494, 1
    %p498 = scmp.eq.s32.totalorder %s26, 1
    %p499 = scmp.ne.s32.totalorder %s494, %s496
    %p500 = scmp.eq.s32.totalorder %s26, 0
    %p501 = por %p499, %p500
    %p502 = scmp.ne.s32.totalorder %s494, %s496
    %p503 = scmp.eq.s32.totalorder %s31, 1
    %p504 = por %p502, %p503
    %p505 = scmp.ne.s32.totalorder %s496, %s497
    %p506 = scmp.eq.s32.totalorder %s31, 0
    %p507 = por %p505, %p506
    %p508 = scmp.ne.s32.totalorder %s496, %s497
    %p509 = scmp.eq.s32.totalorder %s32, 1
    %p510 = por %p508, %p509
    %p512 = scmp.ne.s32.totalorder %s497, %s511
    %p513 = scmp.eq.s32.totalorder %s32, 0
    %p514 = por %p512, %p513
    %p515 = scmp.le.s32.totalorder 1, %s26
    %p516 = scmp.lt.s32.totalorder %s26, 3
    %p517 = pnand %p515, %p516
    %p518 = pneg %p517
    // Predicated region
    $region9: #{qagnn_decoder_forward.11} parent=5 // pred_check
      _
    $region10: #{qagnn_decoder_forward.11} parent=5 // pred_check_branch
      %520 = sbr.rel (%p517) target = $region12
    $region11: #{qagnn_decoder_forward.11} parent=5 // pred_region
      %s521 = ssub.s32 %s26, 1
      // Predicated region
      $region13: #{qagnn_decoder_forward.11} parent=11 // pred_check
        %p522 = pneg %p47
      $region14: #{qagnn_decoder_forward.11} parent=11 // pred_check_branch
        %524 = sbr.rel (%p522) target = $region16
      $region15: #{qagnn_decoder_forward.11} parent=11 // pred_region
        _
      $region16: #{qagnn_decoder_forward.11} parent=11 // pred_fallthru
        _
      // Predicated region
      $region17: #{qagnn_decoder_forward.11} parent=11 // pred_check
        %p525 = pneg %p68
      $region18: #{qagnn_decoder_forward.11} parent=11 // pred_check_branch
        %527 = sbr.rel (%p525) target = $region20
      $region19: #{qagnn_decoder_forward.11} parent=11 // pred_region
        _
      $region20: #{qagnn_decoder_forward.11} parent=11 // pred_fallthru
        _
      // Predicated region
      $region21: #{qagnn_decoder_forward.11} parent=11 // pred_check
        %p528 = pneg %p89
      $region22: #{qagnn_decoder_forward.11} parent=11 // pred_check_branch
        %530 = sbr.rel (%p528) target = $region24
      $region23: #{qagnn_decoder_forward.11} parent=11 // pred_region
        _
      $region24: #{qagnn_decoder_forward.11} parent=11 // pred_fallthru
        _
      // Predicated region
      $region25: #{qagnn_decoder_forward.11} parent=11 // pred_check
        %p531 = pneg %p110
      $region26: #{qagnn_decoder_forward.11} parent=11 // pred_check_branch
        %533 = sbr.rel (%p531) target = $region28
      $region27: #{qagnn_decoder_forward.11} parent=11 // pred_region
        _
      $region28: #{qagnn_decoder_forward.11} parent=11 // pred_fallthru
        _
      // Predicated region
      $region29: #{qagnn_decoder_forward.11} parent=11 // pred_check
        %p534 = pneg %p131
      $region30: #{qagnn_decoder_forward.11} parent=11 // pred_check_branch
        %536 = sbr.rel (%p534) target = $region32
      $region31: #{qagnn_decoder_forward.11} parent=11 // pred_region
        _
      $region32: #{qagnn_decoder_forward.11} parent=11 // pred_fallthru
        _
      // Predicated region
      $region33: #{qagnn_decoder_forward.11} parent=11 // pred_check
        %p537 = pneg %p152
      $region34: #{qagnn_decoder_forward.11} parent=11 // pred_check_branch
        %539 = sbr.rel (%p537) target = $region36
      $region35: #{qagnn_decoder_forward.11} parent=11 // pred_region
        _
      $region36: #{qagnn_decoder_forward.11} parent=11 // pred_fallthru
        _
      // Predicated region
      $region37: #{qagnn_decoder_forward.11} parent=11 // pred_check
        %p540 = pneg %p173
      $region38: #{qagnn_decoder_forward.11} parent=11 // pred_check_branch
        %542 = sbr.rel (%p540) target = $region40
      $region39: #{qagnn_decoder_forward.11} parent=11 // pred_region
        _
      $region40: #{qagnn_decoder_forward.11} parent=11 // pred_fallthru
        _
      // Predicated region
      $region41: #{qagnn_decoder_forward.11} parent=11 // pred_check
        %p543 = pneg %p194
      $region42: #{qagnn_decoder_forward.11} parent=11 // pred_check_branch
        %545 = sbr.rel (%p543) target = $region44
      $region43: #{qagnn_decoder_forward.11} parent=11 // pred_region
        _
      $region44: #{qagnn_decoder_forward.11} parent=11 // pred_fallthru
        _
      // Predicated region
      $region45: #{qagnn_decoder_forward.11} parent=11 // pred_check
        %p546 = pneg %p423
      $region46: #{qagnn_decoder_forward.11} parent=11 // pred_check_branch
        %548 = sbr.rel (%p546) target = $region48
      $region47: #{qagnn_decoder_forward.11} parent=11 // pred_region
        _
      $region48: #{qagnn_decoder_forward.11} parent=11 // pred_fallthru
        _
      // Predicated region
      $region49: #{qagnn_decoder_forward.11} parent=11 // pred_check
        %p549 = pneg %p444
      $region50: #{qagnn_decoder_forward.11} parent=11 // pred_check_branch
        %551 = sbr.rel (%p549) target = $region52
      $region51: #{qagnn_decoder_forward.11} parent=11 // pred_region
        _
      $region52: #{qagnn_decoder_forward.11} parent=11 // pred_fallthru
        _
      // Predicated region
      $region53: #{qagnn_decoder_forward.11} parent=11 // pred_check
        %p552 = pneg %p465
      $region54: #{qagnn_decoder_forward.11} parent=11 // pred_check_branch
        %554 = sbr.rel (%p552) target = $region56
      $region55: #{qagnn_decoder_forward.11} parent=11 // pred_region
        _
      $region56: #{qagnn_decoder_forward.11} parent=11 // pred_fallthru
        _
      // Predicated region
      $region57: #{qagnn_decoder_forward.11} parent=11 // pred_check
        %p555 = pneg %p486
      $region58: #{qagnn_decoder_forward.11} parent=11 // pred_check_branch
        %557 = sbr.rel (%p555) target = $region60
      $region59: #{qagnn_decoder_forward.11} parent=11 // pred_region
        _
      $region60: #{qagnn_decoder_forward.11} parent=11 // pred_fallthru
        _
    $region12: #{qagnn_decoder_forward.11} parent=5 // pred_fallthru
      _
    %p558 = scmp.lt.s32.totalorder %s26, 2
    // Predicated region
    $region61: #{qagnn_decoder_forward.11} parent=5 // pred_check
      %p559 = pneg %p558
    $region62: #{qagnn_decoder_forward.11} parent=5 // pred_check_branch
      %561 = sbr.rel (%p559) target = $region64
    $region63: #{qagnn_decoder_forward.11} parent=5 // pred_region
      // Predicated region
      $region65: #{qagnn_decoder_forward.11} parent=63 // pred_check
        %p562 = pneg %p214
      $region66: #{qagnn_decoder_forward.11} parent=63 // pred_check_branch
        %564 = sbr.rel (%p562) target = $region68
      $region67: #{qagnn_decoder_forward.11} parent=63 // pred_region
        %p565 = scmp.lt.s32.totalorder %s26, 1
        %s566 = scalar_select %p565, %s26, 1
        %s567 = smul.addr %s566, 32
        %s568 = smul.addr %s567, 8
        %s569 = scalar_lea.vmem %s8, %s568
      $region68: #{qagnn_decoder_forward.11} parent=63 // pred_fallthru
        _
      // Predicated region
      $region69: #{qagnn_decoder_forward.11} parent=63 // pred_check
        %p570 = pneg %p240
      $region70: #{qagnn_decoder_forward.11} parent=63 // pred_check_branch
        %572 = sbr.rel (%p570) target = $region72
      $region71: #{qagnn_decoder_forward.11} parent=63 // pred_region
        %p573 = scmp.lt.s32.totalorder %s26, 1
        %s574 = scalar_select %p573, %s26, 1
        %s575 = smul.addr %s574, 32
        %s576 = smul.addr %s575, 8
        %s577 = scalar_lea.vmem %s9, %s576
      $region72: #{qagnn_decoder_forward.11} parent=63 // pred_fallthru
        _
      // Predicated region
      $region73: #{qagnn_decoder_forward.11} parent=63 // pred_check
        %p578 = pneg %p266
      $region74: #{qagnn_decoder_forward.11} parent=63 // pred_check_branch
        %580 = sbr.rel (%p578) target = $region76
      $region75: #{qagnn_decoder_forward.11} parent=63 // pred_region
        %p581 = scmp.lt.s32.totalorder %s26, 1
        %s582 = scalar_select %p581, %s26, 1
        %s583 = smul.addr %s582, 16
        %s584 = smul.addr %s583, 8
        %s585 = scalar_lea.vmem %s10, %s584
      $region76: #{qagnn_decoder_forward.11} parent=63 // pred_fallthru
        _
      // Predicated region
      $region77: #{qagnn_decoder_forward.11} parent=63 // pred_check
        %p586 = pneg %p292
      $region78: #{qagnn_decoder_forward.11} parent=63 // pred_check_branch
        %588 = sbr.rel (%p586) target = $region80
      $region79: #{qagnn_decoder_forward.11} parent=63 // pred_region
        %p589 = scmp.lt.s32.totalorder %s26, 1
        %s590 = scalar_select %p589, %s26, 1
        %s591 = smul.addr %s590, 2
        %s592 = scalar_lea.vmem %s11, %s591
      $region80: #{qagnn_decoder_forward.11} parent=63 // pred_fallthru
        _
      // Predicated region
      $region81: #{qagnn_decoder_forward.11} parent=63 // pred_check
        %p593 = pneg %p318
      $region82: #{qagnn_decoder_forward.11} parent=63 // pred_check_branch
        %595 = sbr.rel (%p593) target = $region84
      $region83: #{qagnn_decoder_forward.11} parent=63 // pred_region
        %p596 = scmp.lt.s32.totalorder %s26, 1
        %s597 = scalar_select %p596, %s26, 1
        %s598 = smul.addr %s597, 8
        %s599 = smul.addr %s598, 8
        %s600 = scalar_lea.vmem %s12, %s599
      $region84: #{qagnn_decoder_forward.11} parent=63 // pred_fallthru
        _
      // Predicated region
      $region85: #{qagnn_decoder_forward.11} parent=63 // pred_check
        %p601 = pneg %p344
      $region86: #{qagnn_decoder_forward.11} parent=63 // pred_check_branch
        %603 = sbr.rel (%p601) target = $region88
      $region87: #{qagnn_decoder_forward.11} parent=63 // pred_region
        %p604 = scmp.lt.s32.totalorder %s26, 1
        %s605 = scalar_select %p604, %s26, 1
        %s606 = scalar_lea.vmem %s13, %s605
      $region88: #{qagnn_decoder_forward.11} parent=63 // pred_fallthru
        _
      // Predicated region
      $region89: #{qagnn_decoder_forward.11} parent=63 // pred_check
        %p607 = pneg %p370
      $region90: #{qagnn_decoder_forward.11} parent=63 // pred_check_branch
        %609 = sbr.rel (%p607) target = $region92
      $region91: #{qagnn_decoder_forward.11} parent=63 // pred_region
        %p610 = scmp.lt.s32.totalorder %s26, 1
        %s611 = scalar_select %p610, %s26, 1
        %s612 = smul.addr %s611, 8
        %s613 = smul.addr %s612, 8
        %s614 = scalar_lea.vmem %s14, %s613
      $region92: #{qagnn_decoder_forward.11} parent=63 // pred_fallthru
        _
      // Predicated region
      $region93: #{qagnn_decoder_forward.11} parent=63 // pred_check
        %p615 = pneg %p396
      $region94: #{qagnn_decoder_forward.11} parent=63 // pred_check_branch
        %617 = sbr.rel (%p615) target = $region96
      $region95: #{qagnn_decoder_forward.11} parent=63 // pred_region
        %p618 = scmp.lt.s32.totalorder %s26, 1
        %s619 = scalar_select %p618, %s26, 1
        %s620 = scalar_lea.vmem %s15, %s619
      $region96: #{qagnn_decoder_forward.11} parent=63 // pred_fallthru
        _
    $region64: #{qagnn_decoder_forward.11} parent=5 // pred_fallthru
      _
    %p621 = scmp.le.s32.totalorder 1, %s26
    %p622 = scmp.lt.s32.totalorder %s26, 3
    %p623 = pnand %p621, %p622
    %p624 = pneg %p623
    // Predicated region
    $region97: #{qagnn_decoder_forward.11} parent=5 // pred_check
      _
    $region98: #{qagnn_decoder_forward.11} parent=5 // pred_check_branch
      %626 = sbr.rel (%p623) target = $region100
    $region99: #{qagnn_decoder_forward.11} parent=5 // pred_region
      %s627 = ssub.s32 %s26, 1
      %p628 = pneg %p47
      %p629 = pneg %p44
      %p630 = pneg %p68
      %p631 = pneg %p65
      %p632 = pneg %p89
      %p633 = pneg %p86
      %p634 = pneg %p110
      %p635 = pneg %p107
      %p636 = pneg %p131
      %p637 = pneg %p128
      %p638 = pneg %p152
      %p639 = pneg %p149
      %p640 = pneg %p173
      %p641 = pneg %p170
      %p642 = pneg %p194
      %p643 = pneg %p191
      %p644 = scmp.lt.s32.totalorder %s31, 1
      %s645 = scalar_select %p644, %s31, 1
      %s646 = smul.addr %s645, 32
      %s647 = smul.addr %s646, 8
      %s648 = scalar_lea.vmem %s8, %s647
      %p649 = pneg %p220
      %p650 = pneg %p217
      %p651 = scmp.lt.s32.totalorder %s31, 1
      %s652 = scalar_select %p651, %s31, 1
      %s653 = smul.addr %s652, 32
      %s654 = smul.addr %s653, 8
      %s655 = scalar_lea.vmem %s9, %s654
      %p656 = pneg %p246
      %p657 = pneg %p243
      %p658 = scmp.lt.s32.totalorder %s31, 1
      %s659 = scalar_select %p658, %s31, 1
      %s660 = smul.addr %s659, 16
      %s661 = smul.addr %s660, 8
      %s662 = scalar_lea.vmem %s10, %s661
      %p663 = pneg %p272
      %p664 = pneg %p269
      %p665 = scmp.lt.s32.totalorder %s31, 1
      %s666 = scalar_select %p665, %s31, 1
      %s667 = smul.addr %s666, 2
      %s668 = scalar_lea.vmem %s11, %s667
      %p669 = pneg %p298
      %p670 = pneg %p295
      %p671 = scmp.lt.s32.totalorder %s31, 1
      %s672 = scalar_select %p671, %s31, 1
      %s673 = smul.addr %s672, 8
      %s674 = smul.addr %s673, 8
      %s675 = scalar_lea.vmem %s12, %s674
      %p676 = pneg %p324
      %p677 = pneg %p321
      %p678 = scmp.lt.s32.totalorder %s31, 1
      %s679 = scalar_select %p678, %s31, 1
      %s680 = scalar_lea.vmem %s13, %s679
      %p681 = pneg %p350
      %p682 = pneg %p347
      %p683 = scmp.lt.s32.totalorder %s31, 1
      %s684 = scalar_select %p683, %s31, 1
      %s685 = smul.addr %s684, 8
      %s686 = smul.addr %s685, 8
      %s687 = scalar_lea.vmem %s14, %s686
      %p688 = pneg %p376
      %p689 = pneg %p373
      %p690 = scmp.lt.s32.totalorder %s31, 1
      %s691 = scalar_select %p690, %s31, 1
      %s692 = scalar_lea.vmem %s15, %s691
      %p693 = pneg %p402
      %p694 = pneg %p399
      %p695 = pneg %p423
      %p696 = pneg %p420
      %p697 = pneg %p444
      %p698 = pneg %p441
      %p699 = pneg %p465
      %p700 = pneg %p462
      %p701 = pneg %p486
      %p702 = pneg %p483
      %p703 = pneg %p507
      %p704 = pneg %p504
      %p705 = scmp.lt.s32.totalorder %s31, 1
      %s706 = scalar_select %p705, %s31, 1
      %s707 = smul.addr %s706, 32
      %s708 = smul.addr %s707, 8
      %s709 = scalar_lea.vmem %s8, %s708
      %p710 = scmp.lt.s32.totalorder %s31, 1
      %s711 = scalar_select %p710, %s31, 1
      %s712 = smul.addr %s711, 32
      %s713 = smul.addr %s712, 8
      %s714 = scalar_lea.vmem %s9, %s713
      %p715 = scmp.lt.s32.totalorder %s31, 1
      %s716 = scalar_select %p715, %s31, 1
      %s717 = smul.addr %s716, 16
      %s718 = smul.addr %s717, 8
      %s719 = scalar_lea.vmem %s10, %s718
      %p720 = scmp.lt.s32.totalorder %s31, 1
      %s721 = scalar_select %p720, %s31, 1
      %s722 = smul.addr %s721, 2
      %s723 = scalar_lea.vmem %s11, %s722
      %p724 = scmp.lt.s32.totalorder %s31, 1
      %s725 = scalar_select %p724, %s31, 1
      %s726 = smul.addr %s725, 8
      %s727 = smul.addr %s726, 8
      %s728 = scalar_lea.vmem %s12, %s727
      %p729 = scmp.lt.s32.totalorder %s31, 1
      %s730 = scalar_select %p729, %s31, 1
      %s731 = scalar_lea.vmem %s13, %s730
      %p732 = scmp.lt.s32.totalorder %s31, 1
      %s733 = scalar_select %p732, %s31, 1
      %s734 = smul.addr %s733, 8
      %s735 = smul.addr %s734, 8
      %s736 = scalar_lea.vmem %s14, %s735
      %p737 = scmp.lt.s32.totalorder %s31, 1
      %s738 = scalar_select %p737, %s31, 1
      %s739 = scalar_lea.vmem %s15, %s738
      %p740 = scmp.eq.s32.totalorder %s31, 0
      // Predicated region
      $region101: #{qagnn_decoder_forward.11} parent=99 // pred_check
        %p741 = pneg %p740
      $region102: #{qagnn_decoder_forward.11} parent=99 // pred_check_branch
        %743 = sbr.rel (%p741) target = $region104
      $region103: #{qagnn_decoder_forward.11} parent=99 // pred_region
        %v744 = vld [vmem:[%s0] sm:$0xff]
        %v745 = vld [vmem:[%s0 + $0x8] sm:$0xff]
        %v746 = vld [vmem:[%s0 + $0x10] sm:$0xff]
        %v747 = vld [vmem:[%s0 + $0x18] sm:$0xff]
        %v748 = vld [vmem:[%s0 + $0x20] sm:$0xff]
        %v749 = vld [vmem:[%s0 + $0x28] sm:$0xff]
        %v750 = vld [vmem:[%s0 + $0x30] sm:$0xff]
        %v751 = vld [vmem:[%s0 + $0x38] sm:$0xff]
        %vm752 = vcmask 523264
        %753 = vst.msk [vmem:[#allocation2] sm:$0xff] %vm752, %v744
        %754 = vst.msk [vmem:[#allocation2 + $0x8] sm:$0xff] %vm752, %v745
        %755 = vst.msk [vmem:[#allocation2 + $0x10] sm:$0xff] %vm752, %v746
        %756 = vst.msk [vmem:[#allocation2 + $0x18] sm:$0xff] %vm752, %v747
        %757 = vst.msk [vmem:[#allocation2 + $0x20] sm:$0xff] %vm752, %v748
        %758 = vst.msk [vmem:[#allocation2 + $0x28] sm:$0xff] %vm752, %v749
        %759 = vst.msk [vmem:[#allocation2 + $0x30] sm:$0xff] %vm752, %v750
        %760 = vst.msk [vmem:[#allocation2 + $0x38] sm:$0xff] %vm752, %v751
      $region104: #{qagnn_decoder_forward.11} parent=99 // pred_fallthru
        _
      %v761 = vld [vmem:[#allocation2] sm:$0xff]
      %v762 = vld [vmem:[#allocation2 + $0x8] sm:$0xff]
      %v763 = vld [vmem:[#allocation2 + $0x10] sm:$0xff]
      %v764 = vld [vmem:[#allocation2 + $0x18] sm:$0xff]
      %v765 = vld [vmem:[#allocation2 + $0x20] sm:$0xff]
      %v766 = vld [vmem:[#allocation2 + $0x28] sm:$0xff]
      %v767 = vld [vmem:[#allocation2 + $0x30] sm:$0xff]
      %v768 = vld [vmem:[#allocation2 + $0x38] sm:$0xff]
      %v769 = vld [vmem:[%s1] sm:$0xff]
      %v770 = vld [vmem:[%s1 + $0x8] sm:$0xff]
      %v771 = vld [vmem:[%s1 + $0x10] sm:$0xff]
      %v772 = vld [vmem:[%s1 + $0x18] sm:$0xff]
      %v773 = vld [vmem:[%s1 + $0x20] sm:$0xff]
      %v774 = vld [vmem:[%s1 + $0x28] sm:$0xff]
      %v775 = vld [vmem:[%s1 + $0x30] sm:$0xff]
      %v776 = vld [vmem:[%s1 + $0x38] sm:$0xff]
      %v777 = vld [vmem:[%s3] sm:$0xff]
      %v778 = vld [vmem:[%s3 + $0x8] sm:$0xff]
      %v779 = vld [vmem:[%s3 + $0x10] sm:$0xff]
      %v780 = vld [vmem:[%s3 + $0x18] sm:$0xff]
      %v781 = vld [vmem:[%s3 + $0x20] sm:$0xff]
      %v782 = vld [vmem:[%s3 + $0x28] sm:$0xff]
      %v783 = vld [vmem:[%s3 + $0x30] sm:$0xff]
      %v784 = vld [vmem:[%s3 + $0x38] sm:$0xff]
      %v785 = vld [vmem:[%s3 + $0x40] sm:$0xff]
      %v786 = vld [vmem:[%s3 + $0x48] sm:$0xff]
      %v787 = vld [vmem:[%s3 + $0x50] sm:$0xff]
      %v788 = vld [vmem:[%s3 + $0x58] sm:$0xff]
      %v789 = vld [vmem:[%s3 + $0x60] sm:$0xff]
      %v790 = vld [vmem:[%s4] sm:$0xff]
      %v791 = vld [vmem:[%s4 + $0x8] sm:$0xff]
      %v792 = vld [vmem:[%s4 + $0x10] sm:$0xff]
      %v793 = vld [vmem:[%s4 + $0x18] sm:$0xff]
      %v794 = vld [vmem:[%s4 + $0x20] sm:$0xff]
      %v795 = vld [vmem:[%s4 + $0x28] sm:$0xff]
      %v796 = vld [vmem:[%s4 + $0x30] sm:$0xff]
      %v797 = vld [vmem:[%s4 + $0x38] sm:$0xff]
      %v798 = vld [vmem:[%s709] sm:$0xff]
      %v799 = vld [vmem:[%s709 + $0x8] sm:$0xff]
      %v800 = vld [vmem:[%s709 + $0x10] sm:$0xff]
      %v801 = vld [vmem:[%s709 + $0x18] sm:$0xff]
      %v802 = vld [vmem:[%s709 + $0x20] sm:$0xff]
      %v803 = vld [vmem:[%s709 + $0x28] sm:$0xff]
      %v804 = vld [vmem:[%s709 + $0x30] sm:$0xff]
      %v805 = vld [vmem:[%s709 + $0x38] sm:$0xff]
      %v806 = vld [vmem:[%s709 + $0x40] sm:$0xff]
      %v807 = vld [vmem:[%s709 + $0x48] sm:$0xff]
      %v808 = vld [vmem:[%s709 + $0x50] sm:$0xff]
      %v809 = vld [vmem:[%s709 + $0x58] sm:$0xff]
      %v810 = vld [vmem:[%s709 + $0x60] sm:$0xff]
      %v811 = vld [vmem:[%s709 + $0x68] sm:$0xff]
      %v812 = vld [vmem:[%s709 + $0x70] sm:$0xff]
      %v813 = vld [vmem:[%s709 + $0x78] sm:$0xff]
      %v814 = vld [vmem:[%s709 + $0x80] sm:$0xff]
      %v815 = vld [vmem:[%s709 + $0x88] sm:$0xff]
      %v816 = vld [vmem:[%s709 + $0x90] sm:$0xff]
      %v817 = vld [vmem:[%s709 + $0x98] sm:$0xff]
      %v818 = vld [vmem:[%s709 + $0xa0] sm:$0xff]
      %v819 = vld [vmem:[%s709 + $0xa8] sm:$0xff]
      %v820 = vld [vmem:[%s709 + $0xb0] sm:$0xff]
      %v821 = vld [vmem:[%s709 + $0xb8] sm:$0xff]
      %v822 = vld [vmem:[%s709 + $0xc0] sm:$0xff]
      %v823 = vld [vmem:[%s709 + $0xc8] sm:$0xff]
      %v824 = vld [vmem:[%s709 + $0xd0] sm:$0xff]
      %v825 = vld [vmem:[%s709 + $0xd8] sm:$0xff]
      %v826 = vld [vmem:[%s709 + $0xe0] sm:$0xff]
      %v827 = vld [vmem:[%s709 + $0xe8] sm:$0xff]
      %v828 = vld [vmem:[%s709 + $0xf0] sm:$0xff]
      %v829 = vld [vmem:[%s709 + $0xf8] sm:$0xff]
      %v830 = vld [vmem:[%s714] sm:$0xff]
      %v831 = vld [vmem:[%s714 + $0x8] sm:$0xff]
      %v832 = vld [vmem:[%s714 + $0x10] sm:$0xff]
      %v833 = vld [vmem:[%s714 + $0x18] sm:$0xff]
      %v834 = vld [vmem:[%s714 + $0x20] sm:$0xff]
      %v835 = vld [vmem:[%s714 + $0x28] sm:$0xff]
      %v836 = vld [vmem:[%s714 + $0x30] sm:$0xff]
      %v837 = vld [vmem:[%s714 + $0x38] sm:$0xff]
      %v838 = vld [vmem:[%s714 + $0x40] sm:$0xff]
      %v839 = vld [vmem:[%s714 + $0x48] sm:$0xff]
      %v840 = vld [vmem:[%s714 + $0x50] sm:$0xff]
      %v841 = vld [vmem:[%s714 + $0x58] sm:$0xff]
      %v842 = vld [vmem:[%s714 + $0x60] sm:$0xff]
      %v843 = vld [vmem:[%s714 + $0x68] sm:$0xff]
      %v844 = vld [vmem:[%s714 + $0x70] sm:$0xff]
      %v845 = vld [vmem:[%s714 + $0x78] sm:$0xff]
      %v846 = vld [vmem:[%s714 + $0x80] sm:$0xff]
      %v847 = vld [vmem:[%s714 + $0x88] sm:$0xff]
      %v848 = vld [vmem:[%s714 + $0x90] sm:$0xff]
      %v849 = vld [vmem:[%s714 + $0x98] sm:$0xff]
      %v850 = vld [vmem:[%s714 + $0xa0] sm:$0xff]
      %v851 = vld [vmem:[%s714 + $0xa8] sm:$0xff]
      %v852 = vld [vmem:[%s714 + $0xb0] sm:$0xff]
      %v853 = vld [vmem:[%s714 + $0xb8] sm:$0xff]
      %v854 = vld [vmem:[%s714 + $0xc0] sm:$0xff]
      %v855 = vld [vmem:[%s714 + $0xc8] sm:$0xff]
      %v856 = vld [vmem:[%s714 + $0xd0] sm:$0xff]
      %v857 = vld [vmem:[%s714 + $0xd8] sm:$0xff]
      %v858 = vld [vmem:[%s714 + $0xe0] sm:$0xff]
      %v859 = vld [vmem:[%s714 + $0xe8] sm:$0xff]
      %v860 = vld [vmem:[%s714 + $0xf0] sm:$0xff]
      %v861 = vld [vmem:[%s714 + $0xf8] sm:$0xff]
      %vm862 = vcmask 523264
      %v864 = vsel %vm862, %v769, 0
      %v867 = vsel %vm862, %v770, 0
      %v870 = vsel %vm862, %v771, 0
      %v873 = vsel %vm862, %v772, 0
      %v876 = vsel %vm862, %v773, 0
      %v879 = vsel %vm862, %v774, 0
      %v882 = vsel %vm862, %v775, 0
      %v885 = vsel %vm862, %v776, 0
      %887 = vmatprep.subr.mxu0 %v815
      %888 = vmatpush1.msra.mxu0 %v814
      %889 = vmatprep.subr.mxu0 %v817
      %890 = vmatpush1.msra.mxu0 %v816
      %891 = vmatprep.subr.mxu0 %v819
      %892 = vmatpush1.msra.mxu0 %v818
      %893 = vmatprep.subr.mxu0 %v821
      %894 = vmatpush1.msra.mxu0 %v820
      %895 = vmatprep.subr.mxu0 %v823
      %896 = vmatpush1.msra.mxu0 %v822
      %897 = vmatprep.subr.mxu0 %v825
      %898 = vmatpush1.msra.mxu0 %v824
      %899 = vmatprep.subr.mxu0 %v827
      %900 = vmatpush1.msra.mxu0 %v826
      %901 = vmatprep.subr.mxu0 %v829
      %902 = vmatpush1.msra.mxu0 %v828
      %903 = vmatprep.subr.mxu0 0.0
      %904 = vmatpush1.msra.mxu0 0.0
      %905 = vmatprep.subr.mxu0 0.0
      %906 = vmatpush1.msra.mxu0 0.0
      %907 = vmatprep.subr.mxu0 0.0
      %908 = vmatpush1.msra.mxu0 0.0
      %909 = vmatprep.subr.mxu0 0.0
      %910 = vmatpush1.msra.mxu0 0.0
      %911 = vmatprep.subr.mxu0 0.0
      %912 = vmatpush1.msra.mxu0 0.0
      %913 = vmatprep.subr.mxu0 0.0
      %914 = vmatpush1.msra.mxu0 0.0
      %915 = vmatprep.subr.mxu0 0.0
      %916 = vmatpush1.msra.mxu0 0.0
      %917 = vmatprep.subr.mxu0 0.0
      %918 = vmatpush1.msra.mxu0 0.0
      %919 = vmatprep.subr.mxu0 0.0
      %920 = vmatpush1.msra.mxu0 0.0
      %921 = vmatprep.subr.mxu0 0.0
      %922 = vmatpush1.msra.mxu0 0.0
      %923 = vmatprep.subr.mxu0 0.0
      %924 = vmatpush1.msra.mxu0 0.0
      %925 = vmatprep.subr.mxu0 0.0
      %926 = vmatpush1.msra.mxu0 0.0
      %927 = vmatprep.subr.mxu0 0.0
      %928 = vmatpush1.msra.mxu0 0.0
      %929 = vmatprep.subr.mxu0 0.0
      %930 = vmatpush1.msra.mxu0 0.0
      %931 = vmatprep.subr.mxu0 0.0
      %932 = vmatpush1.msra.mxu0 0.0
      %933 = vmatprep.subr.mxu0 0.0
      %934 = vmatpush1.msra.mxu0 0.0
      %935 = vmatprep.subr.mxu0 0.0
      %936 = vmatpush1.msra.mxu0 0.0
      %937 = vmatprep.subr.mxu0 0.0
      %938 = vmatpush1.msra.mxu0 0.0
      %939 = vmatprep.subr.mxu0 0.0
      %940 = vmatpush1.msra.mxu0 0.0
      %941 = vmatprep.subr.mxu0 0.0
      %942 = vmatpush1.msra.mxu0 0.0
      %943 = vmatprep.subr.mxu0 0.0
      %944 = vmatpush1.msra.mxu0 0.0
      %945 = vmatprep.subr.mxu0 0.0
      %946 = vmatpush1.msra.mxu0 0.0
      %947 = vmatprep.subr.mxu0 0.0
      %948 = vmatpush1.msra.mxu0 0.0
      %949 = vmatprep.subr.mxu0 0.0
      %950 = vmatpush1.msra.mxu0 0.0
      %951 = vmatprep.mubr.f32.mxu0 0.0
      %952 = vmatmul.mubr.f32.gmra.mrb[0].mxu0 %v864
      %v953 = vpop.f32.mrb[0].mxu0
      %v954 = vadd.f32 0.0, %v953
      %v955 = vpop.f32.mrb[0].mxu0
      %v956 = vadd.f32 0.0, %v955
      %957 = vmatprep.mubr.f32.mxu0 0.0
      %958 = vmatmul.mubr.f32.gmra.mrb[0].mxu0 %v867
      %v959 = vpop.f32.mrb[0].mxu0
      %v960 = vadd.f32 0.0, %v959
      %v961 = vpop.f32.mrb[0].mxu0
      %v962 = vadd.f32 0.0, %v961
      %963 = vmatprep.mubr.f32.mxu0 0.0
      %964 = vmatmul.mubr.f32.gmra.mrb[0].mxu0 %v870
      %v965 = vpop.f32.mrb[0].mxu0
      %v966 = vadd.f32 0.0, %v965
      %v967 = vpop.f32.mrb[0].mxu0
      %v968 = vadd.f32 0.0, %v967
      %969 = vmatprep.mubr.f32.mxu0 0.0
      %970 = vmatmul.mubr.f32.gmra.mrb[0].mxu0 %v873
      %v971 = vpop.f32.mrb[0].mxu0
      %v972 = vadd.f32 0.0, %v971
      %v973 = vpop.f32.mrb[0].mxu0
      %v974 = vadd.f32 0.0, %v973
      %975 = vmatprep.mubr.f32.mxu0 0.0
      %976 = vmatmul.mubr.f32.gmra.mrb[0].mxu0 %v876
      %v977 = vpop.f32.mrb[0].mxu0
      %v978 = vadd.f32 0.0, %v977
      %v979 = vpop.f32.mrb[0].mxu0
      %v980 = vadd.f32 0.0, %v979
      %981 = vmatprep.mubr.f32.mxu0 0.0
      %982 = vmatmul.mubr.f32.gmra.mrb[0].mxu0 %v879
      %v983 = vpop.f32.mrb[0].mxu0
      %v984 = vadd.f32 0.0, %v983
      %v985 = vpop.f32.mrb[0].mxu0
      %v986 = vadd.f32 0.0, %v985
      %987 = vmatprep.mubr.f32.mxu0 0.0
      %988 = vmatmul.mubr.f32.gmra.mrb[0].mxu0 %v882
      %v989 = vpop.f32.mrb[0].mxu0
      %v990 = vadd.f32 0.0, %v989
      %v991 = vpop.f32.mrb[0].mxu0
      %v992 = vadd.f32 0.0, %v991
      %993 = vmatprep.mubr.f32.mxu0 0.0
      %994 = vmatmul.mubr.f32.gmra.mrb[0].mxu0 %v885
      %v995 = vpop.f32.mrb[0].mxu0
      %v996 = vadd.f32 0.0, %v995
      %v997 = vpop.f32.mrb[0].mxu0
      %v998 = vadd.f32 0.0, %v997
      %999 = vdwg.mxu0
      %v1001 = vsel %vm862, %v761, 0
      %v1004 = vsel %vm862, %v762, 0
      %v1007 = vsel %vm862, %v763, 0
      %v1010 = vsel %vm862, %v764, 0
      %v1013 = vsel %vm862, %v765, 0
      %v1016 = vsel %vm862, %v766, 0
      %v1019 = vsel %vm862, %v767, 0
      %v1022 = vsel %vm862, %v768, 0
      %1024 = vmatprep.subr.mxu0 %v799
      %1025 = vmatpush1.msra.mxu0 %v798
      %1026 = vmatprep.subr.mxu0 %v801
      %1027 = vmatpush1.msra.mxu0 %v800
      %1028 = vmatprep.subr.mxu0 %v803
      %1029 = vmatpush1.msra.mxu0 %v802
      %1030 = vmatprep.subr.mxu0 %v805
      %1031 = vmatpush1.msra.mxu0 %v804
      %1032 = vmatprep.subr.mxu0 %v807
      %1033 = vmatpush1.msra.mxu0 %v806
      %1034 = vmatprep.subr.mxu0 %v809
      %1035 = vmatpush1.msra.mxu0 %v808
      %1036 = vmatprep.subr.mxu0 %v811
      %1037 = vmatpush1.msra.mxu0 %v810
      %1038 = vmatprep.subr.mxu0 %v813
      %1039 = vmatpush1.msra.mxu0 %v812
      %1040 = vmatprep.subr.mxu0 0.0
      %1041 = vmatpush1.msra.mxu0 0.0
      %1042 = vmatprep.subr.mxu0 0.0
      %1043 = vmatpush1.msra.mxu0 0.0
      %1044 = vmatprep.subr.mxu0 0.0
      %1045 = vmatpush1.msra.mxu0 0.0
      %1046 = vmatprep.subr.mxu0 0.0
      %1047 = vmatpush1.msra.mxu0 0.0
      %1048 = vmatprep.subr.mxu0 0.0
      %1049 = vmatpush1.msra.mxu0 0.0
      %1050 = vmatprep.subr.mxu0 0.0
      %1051 = vmatpush1.msra.mxu0 0.0
      %1052 = vmatprep.subr.mxu0 0.0
      %1053 = vmatpush1.msra.mxu0 0.0
      %1054 = vmatprep.subr.mxu0 0.0
      %1055 = vmatpush1.msra.mxu0 0.0
      %1056 = vmatprep.subr.mxu0 0.0
      %1057 = vmatpush1.msra.mxu0 0.0
      %1058 = vmatprep.subr.mxu0 0.0
      %1059 = vmatpush1.msra.mxu0 0.0
      %1060 = vmatprep.subr.mxu0 0.0
      %1061 = vmatpush1.msra.mxu0 0.0
      %1062 = vmatprep.subr.mxu0 0.0
      %1063 = vmatpush1.msra.mxu0 0.0
      %1064 = vmatprep.subr.mxu0 0.0
      %1065 = vmatpush1.msra.mxu0 0.0
      %1066 = vmatprep.subr.mxu0 0.0
      %1067 = vmatpush1.msra.mxu0 0.0
      %1068 = vmatprep.subr.mxu0 0.0
      %1069 = vmatpush1.msra.mxu0 0.0
      %1070 = vmatprep.subr.mxu0 0.0
      %1071 = vmatpush1.msra.mxu0 0.0
      %1072 = vmatprep.subr.mxu0 0.0
      %1073 = vmatpush1.msra.mxu0 0.0
      %1074 = vmatprep.subr.mxu0 0.0
      %1075 = vmatpush1.msra.mxu0 0.0
      %1076 = vmatprep.subr.mxu0 0.0
      %1077 = vmatpush1.msra.mxu0 0.0
      %1078 = vmatprep.subr.mxu0 0.0
      %1079 = vmatpush1.msra.mxu0 0.0
      %1080 = vmatprep.subr.mxu0 0.0
      %1081 = vmatpush1.msra.mxu0 0.0
      %1082 = vmatprep.subr.mxu0 0.0
      %1083 = vmatpush1.msra.mxu0 0.0
      %1084 = vmatprep.subr.mxu0 0.0
      %1085 = vmatpush1.msra.mxu0 0.0
      %1086 = vmatprep.subr.mxu0 0.0
      %1087 = vmatpush1.msra.mxu0 0.0
      %1088 = vmatprep.mubr.f32.mxu0 0.0
      %1089 = vmatmul.mubr.f32.gmra.mrb[0].mxu0 %v1001
      %v1090 = vpop.f32.mrb[0].mxu0
      %v1091 = vadd.f32 %v954, %v1090
      %v1092 = vpop.f32.mrb[0].mxu0
      %v1093 = vadd.f32 %v956, %v1092
      %1094 = vmatprep.mubr.f32.mxu0 0.0
      %1095 = vmatmul.mubr.f32.gmra.mrb[0].mxu0 %v1004
      %v1096 = vpop.f32.mrb[0].mxu0
      %v1097 = vadd.f32 %v960, %v1096
      %v1098 = vpop.f32.mrb[0].mxu0
      %v1099 = vadd.f32 %v962, %v1098
      %1100 = vmatprep.mubr.f32.mxu0 0.0
      %1101 = vmatmul.mubr.f32.gmra.mrb[0].mxu0 %v1007
      %v1102 = vpop.f32.mrb[0].mxu0
      %v1103 = vadd.f32 %v966, %v1102
      %v1104 = vpop.f32.mrb[0].mxu0
      %v1105 = vadd.f32 %v968, %v1104
      %1106 = vmatprep.mubr.f32.mxu0 0.0
      %1107 = vmatmul.mubr.f32.gmra.mrb[0].mxu0 %v1010
      %v1108 = vpop.f32.mrb[0].mxu0
      %v1109 = vadd.f32 %v972, %v1108
      %v1110 = vpop.f32.mrb[0].mxu0
      %v1111 = vadd.f32 %v974, %v1110
      %1112 = vmatprep.mubr.f32.mxu0 0.0
      %1113 = vmatmul.mubr.f32.gmra.mrb[0].mxu0 %v1013
      %v1114 = vpop.f32.mrb[0].mxu0
      %v1115 = vadd.f32 %v978, %v1114
      %v1116 = vpop.f32.mrb[0].mxu0
      %v1117 = vadd.f32 %v980, %v1116
      %1118 = vmatprep.mubr.f32.mxu0 0.0
      %1119 = vmatmul.mubr.f32.gmra.mrb[0].mxu0 %v1016
      %v1120 = vpop.f32.mrb[0].mxu0
      %v1121 = vadd.f32 %v984, %v1120
      %v1122 = vpop.f32.mrb[0].mxu0
      %v1123 = vadd.f32 %v986, %v1122
      %1124 = vmatprep.mubr.f32.mxu0 0.0
      %1125 = vmatmul.mubr.f32.gmra.mrb[0].mxu0 %v1019
      %v1126 = vpop.f32.mrb[0].mxu0
      %v1127 = vadd.f32 %v990, %v1126
      %v1128 = vpop.f32.mrb[0].mxu0
      %v1129 = vadd.f32 %v992, %v1128
      %1130 = vmatprep.mubr.f32.mxu0 0.0
      %1131 = vmatmul.mubr.f32.gmra.mrb[0].mxu0 %v1022
      %v1132 = vpop.f32.mrb[0].mxu0
      %v1133 = vadd.f32 %v996, %v1132
      %v1134 = vpop.f32.mrb[0].mxu0
      %v1135 = vadd.f32 %v998, %v1134
      %1136 = vdwg.mxu0
      %1137 = vmatprep.subr.mxu0 %v847
      %1138 = vmatpush1.msra.mxu0 %v846
      %1139 = vmatprep.subr.mxu0 %v849
      %1140 = vmatpush1.msra.mxu0 %v848
      %1141 = vmatprep.subr.mxu0 %v851
      %1142 = vmatpush1.msra.mxu0 %v850
      %1143 = vmatprep.subr.mxu0 %v853
      %1144 = vmatpush1.msra.mxu0 %v852
      %1145 = vmatprep.subr.mxu0 %v855
      %1146 = vmatpush1.msra.mxu0 %v854
      %1147 = vmatprep.subr.mxu0 %v857
      %1148 = vmatpush1.msra.mxu0 %v856
      %1149 = vmatprep.subr.mxu0 %v859
      %1150 = vmatpush1.msra.mxu0 %v858
      %1151 = vmatprep.subr.mxu0 %v861
      %1152 = vmatpush1.msra.mxu0 %v860
      %1153 = vmatprep.subr.mxu0 0.0
      %1154 = vmatpush1.msra.mxu0 0.0
      %1155 = vmatprep.subr.mxu0 0.0
      %1156 = vmatpush1.msra.mxu0 0.0
      %1157 = vmatprep.subr.mxu0 0.0
      %1158 = vmatpush1.msra.mxu0 0.0
      %1159 = vmatprep.subr.mxu0 0.0
      %1160 = vmatpush1.msra.mxu0 0.0
      %1161 = vmatprep.subr.mxu0 0.0
      %1162 = vmatpush1.msra.mxu0 0.0
      %1163 = vmatprep.subr.mxu0 0.0
      %1164 = vmatpush1.msra.mxu0 0.0
      %1165 = vmatprep.subr.mxu0 0.0
      %1166 = vmatpush1.msra.mxu0 0.0
      %1167 = vmatprep.subr.mxu0 0.0
      %1168 = vmatpush1.msra.mxu0 0.0
      %1169 = vmatprep.subr.mxu0 0.0
      %1170 = vmatpush1.msra.mxu0 0.0
      %1171 = vmatprep.subr.mxu0 0.0
      %1172 = vmatpush1.msra.mxu0 0.0
      %1173 = vmatprep.subr.mxu0 0.0
      %1174 = vmatpush1.msra.mxu0 0.0
      %1175 = vmatprep.subr.mxu0 0.0
      %1176 = vmatpush1.msra.mxu0 0.0
      %1177 = vmatprep.subr.mxu0 0.0
      %1178 = vmatpush1.msra.mxu0 0.0
      %1179 = vmatprep.subr.mxu0 0.0
      %1180 = vmatpush1.msra.mxu0 0.0
      %1181 = vmatprep.subr.mxu0 0.0
      %1182 = vmatpush1.msra.mxu0 0.0
      %1183 = vmatprep.subr.mxu0 0.0
      %1184 = vmatpush1.msra.mxu0 0.0
      %1185 = vmatprep.subr.mxu0 0.0
      %1186 = vmatpush1.msra.mxu0 0.0
      %1187 = vmatprep.subr.mxu0 0.0
      %1188 = vmatpush1.msra.mxu0 0.0
      %1189 = vmatprep.subr.mxu0 0.0
      %1190 = vmatpush1.msra.mxu0 0.0
      %1191 = vmatprep.subr.mxu0 0.0
      %1192 = vmatpush1.msra.mxu0 0.0
      %1193 = vmatprep.subr.mxu0 0.0
      %1194 = vmatpush1.msra.mxu0 0.0
      %1195 = vmatprep.subr.mxu0 0.0
      %1196 = vmatpush1.msra.mxu0 0.0
      %1197 = vmatprep.subr.mxu0 0.0
      %1198 = vmatpush1.msra.mxu0 0.0
      %1199 = vmatprep.subr.mxu0 0.0
      %1200 = vmatpush1.msra.mxu0 0.0
      %1201 = vmatprep.mubr.f32.mxu0 0.0
      %1202 = vmatmul.mubr.f32.gmra.mrb[0].mxu0 %v864
      %v1203 = vpop.f32.mrb[0].mxu0
      %v1204 = vadd.f32 0.0, %v1203
      %v1205 = vpop.f32.mrb[0].mxu0
      %v1206 = vadd.f32 0.0, %v1205
      %1207 = vmatprep.mubr.f32.mxu0 0.0
      %1208 = vmatmul.mubr.f32.gmra.mrb[0].mxu0 %v867
      %v1209 = vpop.f32.mrb[0].mxu0
      %v1210 = vadd.f32 0.0, %v1209
      %v1211 = vpop.f32.mrb[0].mxu0
      %v1212 = vadd.f32 0.0, %v1211
      %1213 = vmatprep.mubr.f32.mxu0 0.0
      %1214 = vmatmul.mubr.f32.gmra.mrb[0].mxu0 %v870
      %v1215 = vpop.f32.mrb[0].mxu0
      %v1216 = vadd.f32 0.0, %v1215
      %v1217 = vpop.f32.mrb[0].mxu0
      %v1218 = vadd.f32 0.0, %v1217
      %1219 = vmatprep.mubr.f32.mxu0 0.0
      %1220 = vmatmul.mubr.f32.gmra.mrb[0].mxu0 %v873
      %v1221 = vpop.f32.mrb[0].mxu0
      %v1222 = vadd.f32 0.0, %v1221
      %v1223 = vpop.f32.mrb[0].mxu0
      %v1224 = vadd.f32 0.0, %v1223
      %1225 = vmatprep.mubr.f32.mxu0 0.0
      %1226 = vmatmul.mubr.f32.gmra.mrb[0].mxu0 %v876
      %v1227 = vpop.f32.mrb[0].mxu0
      %v1228 = vadd.f32 0.0, %v1227
      %v1229 = vpop.f32.mrb[0].mxu0
      %v1230 = vadd.f32 0.0, %v1229
      %1231 = vmatprep.mubr.f32.mxu0 0.0
      %1232 = vmatmul.mubr.f32.gmra.mrb[0].mxu0 %v879
      %v1233 = vpop.f32.mrb[0].mxu0
      %v1234 = vadd.f32 0.0, %v1233
      %v1235 = vpop.f32.mrb[0].mxu0
      %v1236 = vadd.f32 0.0, %v1235
      %1237 = vmatprep.mubr.f32.mxu0 0.0
      %1238 = vmatmul.mubr.f32.gmra.mrb[0].mxu0 %v882
      %v1239 = vpop.f32.mrb[0].mxu0
      %v1240 = vadd.f32 0.0, %v1239
      %v1241 = vpop.f32.mrb[0].mxu0
      %v1242 = vadd.f32 0.0, %v1241
      %1243 = vmatprep.mubr.f32.mxu0 0.0
      %1244 = vmatmul.mubr.f32.gmra.mrb[0].mxu0 %v885
      %v1245 = vpop.f32.mrb[0].mxu0
      %v1246 = vadd.f32 0.0, %v1245
      %v1247 = vpop.f32.mrb[0].mxu0
      %v1248 = vadd.f32 0.0, %v1247
      %1249 = vdwg.mxu0
      %1250 = vmatprep.subr.mxu0 %v831
      %1251 = vmatpush1.msra.mxu0 %v830
      %1252 = vmatprep.subr.mxu0 %v833
      %1253 = vmatpush1.msra.mxu0 %v832
      %1254 = vmatprep.subr.mxu0 %v835
      %1255 = vmatpush1.msra.mxu0 %v834
      %1256 = vmatprep.subr.mxu0 %v837
      %1257 = vmatpush1.msra.mxu0 %v836
      %1258 = vmatprep.subr.mxu0 %v839
      %1259 = vmatpush1.msra.mxu0 %v838
      %1260 = vmatprep.subr.mxu0 %v841
      %1261 = vmatpush1.msra.mxu0 %v840
      %1262 = vmatprep.subr.mxu0 %v843
      %1263 = vmatpush1.msra.mxu0 %v842
      %1264 = vmatprep.subr.mxu0 %v845
      %1265 = vmatpush1.msra.mxu0 %v844
      %1266 = vmatprep.subr.mxu0 0.0
      %1267 = vmatpush1.msra.mxu0 0.0
      %1268 = vmatprep.subr.mxu0 0.0
      %1269 = vmatpush1.msra.mxu0 0.0
      %1270 = vmatprep.subr.mxu0 0.0
      %1271 = vmatpush1.msra.mxu0 0.0
      %1272 = vmatprep.subr.mxu0 0.0
      %1273 = vmatpush1.msra.mxu0 0.0
      %1274 = vmatprep.subr.mxu0 0.0
      %1275 = vmatpush1.msra.mxu0 0.0
      %1276 = vmatprep.subr.mxu0 0.0
      %1277 = vmatpush1.msra.mxu0 0.0
      %1278 = vmatprep.subr.mxu0 0.0
      %1279 = vmatpush1.msra.mxu0 0.0
      %1280 = vmatprep.subr.mxu0 0.0
      %1281 = vmatpush1.msra.mxu0 0.0
      %1282 = vmatprep.subr.mxu0 0.0
      %1283 = vmatpush1.msra.mxu0 0.0
      %1284 = vmatprep.subr.mxu0 0.0
      %1285 = vmatpush1.msra.mxu0 0.0
      %1286 = vmatprep.subr.mxu0 0.0
      %1287 = vmatpush1.msra.mxu0 0.0
      %1288 = vmatprep.subr.mxu0 0.0
      %1289 = vmatpush1.msra.mxu0 0.0
      %1290 = vmatprep.subr.mxu0 0.0
      %1291 = vmatpush1.msra.mxu0 0.0
      %1292 = vmatprep.subr.mxu0 0.0
      %1293 = vmatpush1.msra.mxu0 0.0
      %1294 = vmatprep.subr.mxu0 0.0
      %1295 = vmatpush1.msra.mxu0 0.0
      %1296 = vmatprep.subr.mxu0 0.0
      %1297 = vmatpush1.msra.mxu0 0.0
      %1298 = vmatprep.subr.mxu0 0.0
      %1299 = vmatpush1.msra.mxu0 0.0
      %1300 = vmatprep.subr.mxu0 0.0
      %1301 = vmatpush1.msra.mxu0 0.0
      %1302 = vmatprep.subr.mxu0 0.0
      %1303 = vmatpush1.msra.mxu0 0.0
      %1304 = vmatprep.subr.mxu0 0.0
      %1305 = vmatpush1.msra.mxu0 0.0
      %1306 = vmatprep.subr.mxu0 0.0
      %1307 = vmatpush1.msra.mxu0 0.0
      %1308 = vmatprep.subr.mxu0 0.0
      %1309 = vmatpush1.msra.mxu0 0.0
      %1310 = vmatprep.subr.mxu0 0.0
      %1311 = vmatpush1.msra.mxu0 0.0
      %1312 = vmatprep.subr.mxu0 0.0
      %1313 = vmatpush1.msra.mxu0 0.0
      %1314 = vmatprep.mubr.f32.mxu0 0.0
      %1315 = vmatmul.mubr.f32.gmra.mrb[0].mxu0 %v1001
      %v1316 = vpop.f32.mrb[0].mxu0
      %v1317 = vadd.f32 %v1204, %v1316
      %v1318 = vpop.f32.mrb[0].mxu0
      %v1319 = vadd.f32 %v1206, %v1318
      %1320 = vmatprep.mubr.f32.mxu0 0.0
      %1321 = vmatmul.mubr.f32.gmra.mrb[0].mxu0 %v1004
      %v1322 = vpop.f32.mrb[0].mxu0
      %v1323 = vadd.f32 %v1210, %v1322
      %v1324 = vpop.f32.mrb[0].mxu0
      %v1325 = vadd.f32 %v1212, %v1324
      %1326 = vmatprep.mubr.f32.mxu0 0.0
      %1327 = vmatmul.mubr.f32.gmra.mrb[0].mxu0 %v1007
      %v1328 = vpop.f32.mrb[0].mxu0
      %v1329 = vadd.f32 %v1216, %v1328
      %v1330 = vpop.f32.mrb[0].mxu0
      %v1331 = vadd.f32 %v1218, %v1330
      %1332 = vmatprep.mubr.f32.mxu0 0.0
      %1333 = vmatmul.mubr.f32.gmra.mrb[0].mxu0 %v1010
      %v1334 = vpop.f32.mrb[0].mxu0
      %v1335 = vadd.f32 %v1222, %v1334
      %v1336 = vpop.f32.mrb[0].mxu0
      %v1337 = vadd.f32 %v1224, %v1336
      %1338 = vmatprep.mubr.f32.mxu0 0.0
      %1339 = vmatmul.mubr.f32.gmra.mrb[0].mxu0 %v1013
      %v1340 = vpop.f32.mrb[0].mxu0
      %v1341 = vadd.f32 %v1228, %v1340
      %v1342 = vpop.f32.mrb[0].mxu0
      %v1343 = vadd.f32 %v1230, %v1342
      %1344 = vmatprep.mubr.f32.mxu0 0.0
      %1345 = vmatmul.mubr.f32.gmra.mrb[0].mxu0 %v1016
      %v1346 = vpop.f32.mrb[0].mxu0
      %v1347 = vadd.f32 %v1234, %v1346
      %v1348 = vpop.f32.mrb[0].mxu0
      %v1349 = vadd.f32 %v1236, %v1348
      %1350 = vmatprep.mubr.f32.mxu0 0.0
      %1351 = vmatmul.mubr.f32.gmra.mrb[0].mxu0 %v1019
      %v1352 = vpop.f32.mrb[0].mxu0
      %v1353 = vadd.f32 %v1240, %v1352
      %v1354 = vpop.f32.mrb[0].mxu0
      %v1355 = vadd.f32 %v1242, %v1354
      %1356 = vmatprep.mubr.f32.mxu0 0.0
      %1357 = vmatmul.mubr.f32.gmra.mrb[0].mxu0 %v1022
      %v1358 = vpop.f32.mrb[0].mxu0
      %v1359 = vadd.f32 %v1246, %v1358
      %v1360 = vpop.f32.mrb[0].mxu0
      %v1361 = vadd.f32 %v1248, %v1360
      %1362 = vdwg.mxu0
      %v1363 = vld [vmem:[%s5] sm:$0xff]
      %v1364 = vld [vmem:[%s5 + $0x8] sm:$0xff]
      %v1365 = vld [vmem:[%s5 + $0x10] sm:$0xff]
      %v1366 = vld [vmem:[%s5 + $0x18] sm:$0xff]
      %v1367 = vld [vmem:[%s5 + $0x20] sm:$0xff]
      %v1368 = vld [vmem:[%s5 + $0x28] sm:$0xff]
      %v1369 = vld [vmem:[%s5 + $0x30] sm:$0xff]
      %v1370 = vld [vmem:[%s5 + $0x38] sm:$0xff]
      %v1371 = vld [vmem:[%s5 + $0x40] sm:$0xff]
      %v1372 = vld [vmem:[%s5 + $0x48] sm:$0xff]
      %v1373 = vld [vmem:[%s5 + $0x50] sm:$0xff]
      %v1374 = vld [vmem:[%s5 + $0x58] sm:$0xff]
      %v1375 = vld [vmem:[%s5 + $0x60] sm:$0xff]
      %v1377 = vsel %vm862, %v777, 0
      %v1380 = vsel %vm862, %v778, 0
      %v1383 = vsel %vm862, %v779, 0
      %v1386 = vsel %vm862, %v780, 0
      %v1389 = vsel %vm862, %v781, 0
      %v1392 = vsel %vm862, %v782, 0
      %v1395 = vsel %vm862, %v783, 0
      %v1398 = vsel %vm862, %v784, 0
      %v1401 = vsel %vm862, %v785, 0
      %v1404 = vsel %vm862, %v786, 0
      %v1407 = vsel %vm862, %v787, 0
      %v1410 = vsel %vm862, %v788, 0
      %v1413 = vsel %vm862, %v789, 0
      %1415 = vmatprep.subr.mxu0 %v1319
      %1416 = vmatpush1.msra.mxu0 %v1317
      %1417 = vmatprep.subr.mxu0 %v1325
      %1418 = vmatpush1.msra.mxu0 %v1323
      %1419 = vmatprep.subr.mxu0 %v1331
      %1420 = vmatpush1.msra.mxu0 %v1329
      %1421 = vmatprep.subr.mxu0 %v1337
      %1422 = vmatpush1.msra.mxu0 %v1335
      %1423 = vmatprep.subr.mxu0 %v1343
      %1424 = vmatpush1.msra.mxu0 %v1341
      %1425 = vmatprep.subr.mxu0 %v1349
      %1426 = vmatpush1.msra.mxu0 %v1347
      %1427 = vmatprep.subr.mxu0 %v1355
      %1428 = vmatpush1.msra.mxu0 %v1353
      %1429 = vmatprep.subr.mxu0 %v1361
      %1430 = vmatpush1.msra.mxu0 %v1359
      %1431 = vmatprep.subr.mxu0 0.0
      %1432 = vmatpush1.msra.mxu0 0.0
      %1433 = vmatprep.subr.mxu0 0.0
      %1434 = vmatpush1.msra.mxu0 0.0
      %1435 = vmatprep.subr.mxu0 0.0
      %1436 = vmatpush1.msra.mxu0 0.0
      %1437 = vmatprep.subr.mxu0 0.0
      %1438 = vmatpush1.msra.mxu0 0.0
      %1439 = vmatprep.subr.mxu0 0.0
      %1440 = vmatpush1.msra.mxu0 0.0
      %1441 = vmatprep.subr.mxu0 0.0
      %1442 = vmatpush1.msra.mxu0 0.0
      %1443 = vmatprep.subr.mxu0 0.0
      %1444 = vmatpush1.msra.mxu0 0.0
      %1445 = vmatprep.subr.mxu0 0.0
      %1446 = vmatpush1.msra.mxu0 0.0
      %1447 = vmatprep.subr.mxu0 0.0
      %1448 = vmatpush1.msra.mxu0 0.0
      %1449 = vmatprep.subr.mxu0 0.0
      %1450 = vmatpush1.msra.mxu0 0.0
      %1451 = vmatprep.subr.mxu0 0.0
      %1452 = vmatpush1.msra.mxu0 0.0
      %1453 = vmatprep.subr.mxu0 0.0
      %1454 = vmatpush1.msra.mxu0 0.0
      %1455 = vmatprep.subr.mxu0 0.0
      %1456 = vmatpush1.msra.mxu0 0.0
      %1457 = vmatprep.subr.mxu0 0.0
      %1458 = vmatpush1.msra.mxu0 0.0
      %1459 = vmatprep.subr.mxu0 0.0
      %1460 = vmatpush1.msra.mxu0 0.0
      %1461 = vmatprep.subr.mxu0 0.0
      %1462 = vmatpush1.msra.mxu0 0.0
      %1463 = vmatprep.subr.mxu0 0.0
      %1464 = vmatpush1.msra.mxu0 0.0
      %1465 = vmatprep.subr.mxu0 0.0
      %1466 = vmatpush1.msra.mxu0 0.0
      %1467 = vmatprep.subr.mxu0 0.0
      %1468 = vmatpush1.msra.mxu0 0.0
      %1469 = vmatprep.subr.mxu0 0.0
      %1470 = vmatpush1.msra.mxu0 0.0
      %1471 = vmatprep.subr.mxu0 0.0
      %1472 = vmatpush1.msra.mxu0 0.0
      %1473 = vmatprep.subr.mxu0 0.0
      %1474 = vmatpush1.msra.mxu0 0.0
      %1475 = vmatprep.subr.mxu0 0.0
      %1476 = vmatpush1.msra.mxu0 0.0
      %1477 = vmatprep.subr.mxu0 0.0
      %1478 = vmatpush1.msra.mxu0 0.0
      %1479 = vmatprep.mubr.f32.mxu0 0.0
      %1480 = vmatmul.mubr.f32.gmra.mrb[0].mxu0 %v1377
      %v1481 = vpop.f32.mrb[0].mxu0
      %v1482 = vadd.f32 0.0, %v1481
      %v1483 = vpop.f32.mrb[0].mxu0
      %v1484 = vadd.f32 0.0, %v1483
      %1485 = vmatprep.mubr.f32.mxu0 0.0
      %1486 = vmatmul.mubr.f32.gmra.mrb[0].mxu0 %v1380
      %v1487 = vpop.f32.mrb[0].mxu0
      %v1488 = vadd.f32 0.0, %v1487
      %v1489 = vpop.f32.mrb[0].mxu0
      %v1490 = vadd.f32 0.0, %v1489
      %1491 = vmatprep.mubr.f32.mxu0 0.0
      %1492 = vmatmul.mubr.f32.gmra.mrb[0].mxu0 %v1383
      %v1493 = vpop.f32.mrb[0].mxu0
      %v1494 = vadd.f32 0.0, %v1493
      %v1495 = vpop.f32.mrb[0].mxu0
      %v1496 = vadd.f32 0.0, %v1495
      %1497 = vmatprep.mubr.f32.mxu0 0.0
      %1498 = vmatmul.mubr.f32.gmra.mrb[0].mxu0 %v1386
      %v1499 = vpop.f32.mrb[0].mxu0
      %v1500 = vadd.f32 0.0, %v1499
      %v1501 = vpop.f32.mrb[0].mxu0
      %v1502 = vadd.f32 0.0, %v1501
      %1503 = vmatprep.mubr.f32.mxu0 0.0
      %1504 = vmatmul.mubr.f32.gmra.mrb[0].mxu0 %v1389
      %v1505 = vpop.f32.mrb[0].mxu0
      %v1506 = vadd.f32 0.0, %v1505
      %v1507 = vpop.f32.mrb[0].mxu0
      %v1508 = vadd.f32 0.0, %v1507
      %1509 = vmatprep.mubr.f32.mxu0 0.0
      %1510 = vmatmul.mubr.f32.gmra.mrb[0].mxu0 %v1392
      %v1511 = vpop.f32.mrb[0].mxu0
      %v1512 = vadd.f32 0.0, %v1511
      %v1513 = vpop.f32.mrb[0].mxu0
      %v1514 = vadd.f32 0.0, %v1513
      %1515 = vmatprep.mubr.f32.mxu0 0.0
      %1516 = vmatmul.mubr.f32.gmra.mrb[0].mxu0 %v1395
      %v1517 = vpop.f32.mrb[0].mxu0
      %v1518 = vadd.f32 0.0, %v1517
      %v1519 = vpop.f32.mrb[0].mxu0
      %v1520 = vadd.f32 0.0, %v1519
      %1521 = vmatprep.mubr.f32.mxu0 0.0
      %1522 = vmatmul.mubr.f32.gmra.mrb[0].mxu0 %v1398
      %v1523 = vpop.f32.mrb[0].mxu0
      %v1524 = vadd.f32 0.0, %v1523
      %v1525 = vpop.f32.mrb[0].mxu0
      %v1526 = vadd.f32 0.0, %v1525
      %1527 = vmatprep.mubr.f32.mxu0 0.0
      %1528 = vmatmul.mubr.f32.gmra.mrb[0].mxu0 %v1401
      %v1529 = vpop.f32.mrb[0].mxu0
      %v1530 = vadd.f32 0.0, %v1529
      %v1531 = vpop.f32.mrb[0].mxu0
      %v1532 = vadd.f32 0.0, %v1531
      %1533 = vmatprep.mubr.f32.mxu0 0.0
      %1534 = vmatmul.mubr.f32.gmra.mrb[0].mxu0 %v1404
      %v1535 = vpop.f32.mrb[0].mxu0
      %v1536 = vadd.f32 0.0, %v1535
      %v1537 = vpop.f32.mrb[0].mxu0
      %v1538 = vadd.f32 0.0, %v1537
      %1539 = vmatprep.mubr.f32.mxu0 0.0
      %1540 = vmatmul.mubr.f32.gmra.mrb[0].mxu0 %v1407
      %v1541 = vpop.f32.mrb[0].mxu0
      %v1542 = vadd.f32 0.0, %v1541
      %v1543 = vpop.f32.mrb[0].mxu0
      %v1544 = vadd.f32 0.0, %v1543
      %1545 = vmatprep.mubr.f32.mxu0 0.0
      %1546 = vmatmul.mubr.f32.gmra.mrb[0].mxu0 %v1410
      %v1547 = vpop.f32.mrb[0].mxu0
      %v1548 = vadd.f32 0.0, %v1547
      %v1549 = vpop.f32.mrb[0].mxu0
      %v1550 = vadd.f32 0.0, %v1549
      %1551 = vmatprep.mubr.f32.mxu0 0.0
      %1552 = vmatmul.mubr.f32.gmra.mrb[0].mxu0 %v1413
      %v1553 = vpop.f32.mrb[0].mxu0
      %v1554 = vadd.f32 0.0, %v1553
      %v1555 = vpop.f32.mrb[0].mxu0
      %v1556 = vadd.f32 0.0, %v1555
      %1557 = vdwg.mxu0
      %v1559 = vsel %vm862, %v1363, 0
      %v1562 = vsel %vm862, %v1364, 0
      %v1565 = vsel %vm862, %v1365, 0
      %v1568 = vsel %vm862, %v1366, 0
      %v1571 = vsel %vm862, %v1367, 0
      %v1574 = vsel %vm862, %v1368, 0
      %v1577 = vsel %vm862, %v1369, 0
      %v1580 = vsel %vm862, %v1370, 0
      %v1583 = vsel %vm862, %v1371, 0
      %v1586 = vsel %vm862, %v1372, 0
      %v1589 = vsel %vm862, %v1373, 0
      %v1592 = vsel %vm862, %v1374, 0
      %v1595 = vsel %vm862, %v1375, 0
      %1597 = vmatprep.subr.mxu0 %v1093
      %1598 = vmatpush1.msra.mxu0 %v1091
      %1599 = vmatprep.subr.mxu0 %v1099
      %1600 = vmatpush1.msra.mxu0 %v1097
      %1601 = vmatprep.subr.mxu0 %v1105
      %1602 = vmatpush1.msra.mxu0 %v1103
      %1603 = vmatprep.subr.mxu0 %v1111
      %1604 = vmatpush1.msra.mxu0 %v1109
      %1605 = vmatprep.subr.mxu0 %v1117
      %1606 = vmatpush1.msra.mxu0 %v1115
      %1607 = vmatprep.subr.mxu0 %v1123
      %1608 = vmatpush1.msra.mxu0 %v1121
      %1609 = vmatprep.subr.mxu0 %v1129
      %1610 = vmatpush1.msra.mxu0 %v1127
      %1611 = vmatprep.subr.mxu0 %v1135
      %1612 = vmatpush1.msra.mxu0 %v1133
      %1613 = vmatprep.subr.mxu0 0.0
      %1614 = vmatpush1.msra.mxu0 0.0
      %1615 = vmatprep.subr.mxu0 0.0
      %1616 = vmatpush1.msra.mxu0 0.0
      %1617 = vmatprep.subr.mxu0 0.0
      %1618 = vmatpush1.msra.mxu0 0.0
      %1619 = vmatprep.subr.mxu0 0.0
      %1620 = vmatpush1.msra.mxu0 0.0
      %1621 = vmatprep.subr.mxu0 0.0
      %1622 = vmatpush1.msra.mxu0 0.0
      %1623 = vmatprep.subr.mxu0 0.0
      %1624 = vmatpush1.msra.mxu0 0.0
      %1625 = vmatprep.subr.mxu0 0.0
      %1626 = vmatpush1.msra.mxu0 0.0
      %1627 = vmatprep.subr.mxu0 0.0
      %1628 = vmatpush1.msra.mxu0 0.0
      %1629 = vmatprep.subr.mxu0 0.0
      %1630 = vmatpush1.msra.mxu0 0.0
      %1631 = vmatprep.subr.mxu0 0.0
      %1632 = vmatpush1.msra.mxu0 0.0
      %1633 = vmatprep.subr.mxu0 0.0
      %1634 = vmatpush1.msra.mxu0 0.0
      %1635 = vmatprep.subr.mxu0 0.0
      %1636 = vmatpush1.msra.mxu0 0.0
      %1637 = vmatprep.subr.mxu0 0.0
      %1638 = vmatpush1.msra.mxu0 0.0
      %1639 = vmatprep.subr.mxu0 0.0
      %1640 = vmatpush1.msra.mxu0 0.0
      %1641 = vmatprep.subr.mxu0 0.0
      %1642 = vmatpush1.msra.mxu0 0.0
      %1643 = vmatprep.subr.mxu0 0.0
      %1644 = vmatpush1.msra.mxu0 0.0
      %1645 = vmatprep.subr.mxu0 0.0
      %1646 = vmatpush1.msra.mxu0 0.0
      %1647 = vmatprep.subr.mxu0 0.0
      %1648 = vmatpush1.msra.mxu0 0.0
      %1649 = vmatprep.subr.mxu0 0.0
      %1650 = vmatpush1.msra.mxu0 0.0
      %1651 = vmatprep.subr.mxu0 0.0
      %1652 = vmatpush1.msra.mxu0 0.0
      %1653 = vmatprep.subr.mxu0 0.0
      %1654 = vmatpush1.msra.mxu0 0.0
      %1655 = vmatprep.subr.mxu0 0.0
      %1656 = vmatpush1.msra.mxu0 0.0
      %1657 = vmatprep.subr.mxu0 0.0
      %1658 = vmatpush1.msra.mxu0 0.0
      %1659 = vmatprep.subr.mxu0 0.0
      %1660 = vmatpush1.msra.mxu0 0.0
      %1661 = vmatprep.mubr.f32.mxu0 0.0
      %1662 = vmatmul.mubr.f32.gmra.mrb[0].mxu0 %v1559
      %v1663 = vpop.f32.mrb[0].mxu0
      %v1664 = vadd.f32 %v1482, %v1663
      %v1665 = vpop.f32.mrb[0].mxu0
      %v1666 = vadd.f32 %v1484, %v1665
      %1667 = vmatprep.mubr.f32.mxu0 0.0
      %1668 = vmatmul.mubr.f32.gmra.mrb[0].mxu0 %v1562
      %v1669 = vpop.f32.mrb[0].mxu0
      %v1670 = vadd.f32 %v1488, %v1669
      %v1671 = vpop.f32.mrb[0].mxu0
      %v1672 = vadd.f32 %v1490, %v1671
      %1673 = vmatprep.mubr.f32.mxu0 0.0
      %1674 = vmatmul.mubr.f32.gmra.mrb[0].mxu0 %v1565
      %v1675 = vpop.f32.mrb[0].mxu0
      %v1676 = vadd.f32 %v1494, %v1675
      %v1677 = vpop.f32.mrb[0].mxu0
      %v1678 = vadd.f32 %v1496, %v1677
      %1679 = vmatprep.mubr.f32.mxu0 0.0
      %1680 = vmatmul.mubr.f32.gmra.mrb[0].mxu0 %v1568
      %v1681 = vpop.f32.mrb[0].mxu0
      %v1682 = vadd.f32 %v1500, %v1681
      %v1683 = vpop.f32.mrb[0].mxu0
      %v1684 = vadd.f32 %v1502, %v1683
      %1685 = vmatprep.mubr.f32.mxu0 0.0
      %1686 = vmatmul.mubr.f32.gmra.mrb[0].mxu0 %v1571
      %v1687 = vpop.f32.mrb[0].mxu0
      %v1688 = vadd.f32 %v1506, %v1687
      %v1689 = vpop.f32.mrb[0].mxu0
      %v1690 = vadd.f32 %v1508, %v1689
      %1691 = vmatprep.mubr.f32.mxu0 0.0
      %1692 = vmatmul.mubr.f32.gmra.mrb[0].mxu0 %v1574
      %v1693 = vpop.f32.mrb[0].mxu0
      %v1694 = vadd.f32 %v1512, %v1693
      %v1695 = vpop.f32.mrb[0].mxu0
      %v1696 = vadd.f32 %v1514, %v1695
      %1697 = vmatprep.mubr.f32.mxu0 0.0
      %1698 = vmatmul.mubr.f32.gmra.mrb[0].mxu0 %v1577
      %v1699 = vpop.f32.mrb[0].mxu0
      %v1700 = vadd.f32 %v1518, %v1699
      %v1701 = vpop.f32.mrb[0].mxu0
      %v1702 = vadd.f32 %v1520, %v1701
      %1703 = vmatprep.mubr.f32.mxu0 0.0
      %1704 = vmatmul.mubr.f32.gmra.mrb[0].mxu0 %v1580
      %v1705 = vpop.f32.mrb[0].mxu0
      %v1706 = vadd.f32 %v1524, %v1705
      %v1707 = vpop.f32.mrb[0].mxu0
      %v1708 = vadd.f32 %v1526, %v1707
      %1709 = vmatprep.mubr.f32.mxu0 0.0
      %1710 = vmatmul.mubr.f32.gmra.mrb[0].mxu0 %v1583
      %v1711 = vpop.f32.mrb[0].mxu0
      %v1712 = vadd.f32 %v1530, %v1711
      %v1713 = vpop.f32.mrb[0].mxu0
      %v1714 = vadd.f32 %v1532, %v1713
      %1715 = vmatprep.mubr.f32.mxu0 0.0
      %1716 = vmatmul.mubr.f32.gmra.mrb[0].mxu0 %v1586
      %v1717 = vpop.f32.mrb[0].mxu0
      %v1718 = vadd.f32 %v1536, %v1717
      %v1719 = vpop.f32.mrb[0].mxu0
      %v1720 = vadd.f32 %v1538, %v1719
      %1721 = vmatprep.mubr.f32.mxu0 0.0
      %1722 = vmatmul.mubr.f32.gmra.mrb[0].mxu0 %v1589
      %v1723 = vpop.f32.mrb[0].mxu0
      %v1724 = vadd.f32 %v1542, %v1723
      %v1725 = vpop.f32.mrb[0].mxu0
      %v1726 = vadd.f32 %v1544, %v1725
      %1727 = vmatprep.mubr.f32.mxu0 0.0
      %1728 = vmatmul.mubr.f32.gmra.mrb[0].mxu0 %v1592
      %v1729 = vpop.f32.mrb[0].mxu0
      %v1730 = vadd.f32 %v1548, %v1729
      %v1731 = vpop.f32.mrb[0].mxu0
      %v1732 = vadd.f32 %v1550, %v1731
      %1733 = vmatprep.mubr.f32.mxu0 0.0
      %1734 = vmatmul.mubr.f32.gmra.mrb[0].mxu0 %v1595
      %v1735 = vpop.f32.mrb[0].mxu0
      %v1736 = vadd.f32 %v1554, %v1735
      %v1737 = vpop.f32.mrb[0].mxu0
      %v1738 = vadd.f32 %v1556, %v1737
      %1739 = vdwg.mxu0
      %v1740 = vld [vmem:[%s2] sm:$0xff]
      %v1741 = vld [vmem:[%s2 + $0x8] sm:$0xff]
      %v1742 = vld [vmem:[%s2 + $0x10] sm:$0xff]
      %v1743 = vld [vmem:[%s2 + $0x18] sm:$0xff]
      %v1744 = vld [vmem:[%s2 + $0x20] sm:$0xff]
      %v1745 = vld [vmem:[%s2 + $0x28] sm:$0xff]
      %v1746 = vld [vmem:[%s2 + $0x30] sm:$0xff]
      %v1747 = vld [vmem:[%s2 + $0x38] sm:$0xff]
      %v1748 = vld [vmem:[%s2 + $0x40] sm:$0xff]
      %v1749 = vld [vmem:[%s2 + $0x48] sm:$0xff]
      %v1750 = vld [vmem:[%s2 + $0x50] sm:$0xff]
      %v1751 = vld [vmem:[%s2 + $0x58] sm:$0xff]
      %v1752 = vld [vmem:[%s2 + $0x60] sm:$0xff]
      %v1753 = vld [vmem:[%s719] sm:$0xff]
      %v1754 = vld [vmem:[%s719 + $0x8] sm:$0xff]
      %v1755 = vld [vmem:[%s719 + $0x10] sm:$0xff]
      %v1756 = vld [vmem:[%s719 + $0x18] sm:$0xff]
      %v1757 = vld [vmem:[%s719 + $0x20] sm:$0xff]
      %v1758 = vld [vmem:[%s719 + $0x28] sm:$0xff]
      %v1759 = vld [vmem:[%s719 + $0x30] sm:$0xff]
      %v1760 = vld [vmem:[%s719 + $0x38] sm:$0xff]
      %v1761 = vld [vmem:[%s719 + $0x40] sm:$0xff]
      %v1762 = vld [vmem:[%s719 + $0x48] sm:$0xff]
      %v1763 = vld [vmem:[%s719 + $0x50] sm:$0xff]
      %v1764 = vld [vmem:[%s719 + $0x58] sm:$0xff]
      %v1765 = vld [vmem:[%s719 + $0x60] sm:$0xff]
      %v1766 = vld [vmem:[%s719 + $0x68] sm:$0xff]
      %v1767 = vld [vmem:[%s719 + $0x70] sm:$0xff]
      %v1768 = vld [vmem:[%s719 + $0x78] sm:$0xff]
      %v1770 = vsel %vm862, %v1740, 0
      %v1773 = vsel %vm862, %v1741, 0
      %v1776 = vsel %vm862, %v1742, 0
      %v1779 = vsel %vm862, %v1743, 0
      %v1782 = vsel %vm862, %v1744, 0
      %v1785 = vsel %vm862, %v1745, 0
      %v1788 = vsel %vm862, %v1746, 0
      %v1791 = vsel %vm862, %v1747, 0
      %v1794 = vsel %vm862, %v1748, 0
      %v1797 = vsel %vm862, %v1749, 0
      %v1800 = vsel %vm862, %v1750, 0
      %v1803 = vsel %vm862, %v1751, 0
      %v1806 = vsel %vm862, %v1752, 0
      %1808 = vmatprep.subr.mxu0 %v1754
      %1809 = vmatpush1.msra.mxu0 %v1753
      %1810 = vmatprep.subr.mxu0 %v1756
      %1811 = vmatpush1.msra.mxu0 %v1755
      %1812 = vmatprep.subr.mxu0 %v1758
      %1813 = vmatpush1.msra.mxu0 %v1757
      %1814 = vmatprep.subr.mxu0 %v1760
      %1815 = vmatpush1.msra.mxu0 %v1759
      %1816 = vmatprep.subr.mxu0 %v1762
      %1817 = vmatpush1.msra.mxu0 %v1761
      %1818 = vmatprep.subr.mxu0 %v1764
      %1819 = vmatpush1.msra.mxu0 %v1763
      %1820 = vmatprep.subr.mxu0 %v1766
      %1821 = vmatpush1.msra.mxu0 %v1765
      %1822 = vmatprep.subr.mxu0 %v1768
      %1823 = vmatpush1.msra.mxu0 %v1767
      %1824 = vmatprep.subr.mxu0 0.0
      %1825 = vmatpush1.msra.mxu0 0.0
      %1826 = vmatprep.subr.mxu0 0.0
      %1827 = vmatpush1.msra.mxu0 0.0
      %1828 = vmatprep.subr.mxu0 0.0
      %1829 = vmatpush1.msra.mxu0 0.0
      %1830 = vmatprep.subr.mxu0 0.0
      %1831 = vmatpush1.msra.mxu0 0.0
      %1832 = vmatprep.subr.mxu0 0.0
      %1833 = vmatpush1.msra.mxu0 0.0
      %1834 = vmatprep.subr.mxu0 0.0
      %1835 = vmatpush1.msra.mxu0 0.0
      %1836 = vmatprep.subr.mxu0 0.0
      %1837 = vmatpush1.msra.mxu0 0.0
      %1838 = vmatprep.subr.mxu0 0.0
      %1839 = vmatpush1.msra.mxu0 0.0
      %1840 = vmatprep.subr.mxu0 0.0
      %1841 = vmatpush1.msra.mxu0 0.0
      %1842 = vmatprep.subr.mxu0 0.0
      %1843 = vmatpush1.msra.mxu0 0.0
      %1844 = vmatprep.subr.mxu0 0.0
      %1845 = vmatpush1.msra.mxu0 0.0
      %1846 = vmatprep.subr.mxu0 0.0
      %1847 = vmatpush1.msra.mxu0 0.0
      %1848 = vmatprep.subr.mxu0 0.0
      %1849 = vmatpush1.msra.mxu0 0.0
      %1850 = vmatprep.subr.mxu0 0.0
      %1851 = vmatpush1.msra.mxu0 0.0
      %1852 = vmatprep.subr.mxu0 0.0
      %1853 = vmatpush1.msra.mxu0 0.0
      %1854 = vmatprep.subr.mxu0 0.0
      %1855 = vmatpush1.msra.mxu0 0.0
      %1856 = vmatprep.subr.mxu0 0.0
      %1857 = vmatpush1.msra.mxu0 0.0
      %1858 = vmatprep.subr.mxu0 0.0
      %1859 = vmatpush1.msra.mxu0 0.0
      %1860 = vmatprep.subr.mxu0 0.0
      %1861 = vmatpush1.msra.mxu0 0.0
      %1862 = vmatprep.subr.mxu0 0.0
      %1863 = vmatpush1.msra.mxu0 0.0
      %1864 = vmatprep.subr.mxu0 0.0
      %1865 = vmatpush1.msra.mxu0 0.0
      %1866 = vmatprep.subr.mxu0 0.0
      %1867 = vmatpush1.msra.mxu0 0.0
      %1868 = vmatprep.subr.mxu0 0.0
      %1869 = vmatpush1.msra.mxu0 0.0
      %1870 = vmatprep.subr.mxu0 0.0
      %1871 = vmatpush1.msra.mxu0 0.0
      %1872 = vmatprep.mubr.f32.mxu0 0.0
      %1873 = vmatmul.mubr.f32.gmra.mrb[0].mxu0 %v1770
      %v1874 = vpop.f32.mrb[0].mxu0
      %v1875 = vadd.f32 0.0, %v1874
      %v1876 = vpop.f32.mrb[0].mxu0
      %v1877 = vadd.f32 0.0, %v1876
      %1878 = vmatprep.mubr.f32.mxu0 0.0
      %1879 = vmatmul.mubr.f32.gmra.mrb[0].mxu0 %v1773
      %v1880 = vpop.f32.mrb[0].mxu0
      %v1881 = vadd.f32 0.0, %v1880
      %v1882 = vpop.f32.mrb[0].mxu0
      %v1883 = vadd.f32 0.0, %v1882
      %1884 = vmatprep.mubr.f32.mxu0 0.0
      %1885 = vmatmul.mubr.f32.gmra.mrb[0].mxu0 %v1776
      %v1886 = vpop.f32.mrb[0].mxu0
      %v1887 = vadd.f32 0.0, %v1886
      %v1888 = vpop.f32.mrb[0].mxu0
      %v1889 = vadd.f32 0.0, %v1888
      %1890 = vmatprep.mubr.f32.mxu0 0.0
      %1891 = vmatmul.mubr.f32.gmra.mrb[0].mxu0 %v1779
      %v1892 = vpop.f32.mrb[0].mxu0
      %v1893 = vadd.f32 0.0, %v1892
      %v1894 = vpop.f32.mrb[0].mxu0
      %v1895 = vadd.f32 0.0, %v1894
      %1896 = vmatprep.mubr.f32.mxu0 0.0
      %1897 = vmatmul.mubr.f32.gmra.mrb[0].mxu0 %v1782
      %v1898 = vpop.f32.mrb[0].mxu0
      %v1899 = vadd.f32 0.0, %v1898
      %v1900 = vpop.f32.mrb[0].mxu0
      %v1901 = vadd.f32 0.0, %v1900
      %1902 = vmatprep.mubr.f32.mxu0 0.0
      %1903 = vmatmul.mubr.f32.gmra.mrb[0].mxu0 %v1785
      %v1904 = vpop.f32.mrb[0].mxu0
      %v1905 = vadd.f32 0.0, %v1904
      %v1906 = vpop.f32.mrb[0].mxu0
      %v1907 = vadd.f32 0.0, %v1906
      %1908 = vmatprep.mubr.f32.mxu0 0.0
      %1909 = vmatmul.mubr.f32.gmra.mrb[0].mxu0 %v1788
      %v1910 = vpop.f32.mrb[0].mxu0
      %v1911 = vadd.f32 0.0, %v1910
      %v1912 = vpop.f32.mrb[0].mxu0
      %v1913 = vadd.f32 0.0, %v1912
      %1914 = vmatprep.mubr.f32.mxu0 0.0
      %1915 = vmatmul.mubr.f32.gmra.mrb[0].mxu0 %v1791
      %v1916 = vpop.f32.mrb[0].mxu0
      %v1917 = vadd.f32 0.0, %v1916
      %v1918 = vpop.f32.mrb[0].mxu0
      %v1919 = vadd.f32 0.0, %v1918
      %1920 = vmatprep.mubr.f32.mxu0 0.0
      %1921 = vmatmul.mubr.f32.gmra.mrb[0].mxu0 %v1794
      %v1922 = vpop.f32.mrb[0].mxu0
      %v1923 = vadd.f32 0.0, %v1922
      %v1924 = vpop.f32.mrb[0].mxu0
      %v1925 = vadd.f32 0.0, %v1924
      %1926 = vmatprep.mubr.f32.mxu0 0.0
      %1927 = vmatmul.mubr.f32.gmra.mrb[0].mxu0 %v1797
      %v1928 = vpop.f32.mrb[0].mxu0
      %v1929 = vadd.f32 0.0, %v1928
      %v1930 = vpop.f32.mrb[0].mxu0
      %v1931 = vadd.f32 0.0, %v1930
      %1932 = vmatprep.mubr.f32.mxu0 0.0
      %1933 = vmatmul.mubr.f32.gmra.mrb[0].mxu0 %v1800
      %v1934 = vpop.f32.mrb[0].mxu0
      %v1935 = vadd.f32 0.0, %v1934
      %v1936 = vpop.f32.mrb[0].mxu0
      %v1937 = vadd.f32 0.0, %v1936
      %1938 = vmatprep.mubr.f32.mxu0 0.0
      %1939 = vmatmul.mubr.f32.gmra.mrb[0].mxu0 %v1803
      %v1940 = vpop.f32.mrb[0].mxu0
      %v1941 = vadd.f32 0.0, %v1940
      %v1942 = vpop.f32.mrb[0].mxu0
      %v1943 = vadd.f32 0.0, %v1942
      %1944 = vmatprep.mubr.f32.mxu0 0.0
      %1945 = vmatmul.mubr.f32.gmra.mrb[0].mxu0 %v1806
      %v1946 = vpop.f32.mrb[0].mxu0
      %v1947 = vadd.f32 0.0, %v1946
      %v1948 = vpop.f32.mrb[0].mxu0
      %v1949 = vadd.f32 0.0, %v1948
      %1950 = vdwg.mxu0
      %v1951 = vadd.f32 %v1664, %v1875
      %v1952 = vadd.f32 %v1666, %v1877
      %v1953 = vadd.f32 %v1670, %v1881
      %v1954 = vadd.f32 %v1672, %v1883
      %v1955 = vadd.f32 %v1676, %v1887
      %v1956 = vadd.f32 %v1678, %v1889
      %v1957 = vadd.f32 %v1682, %v1893
      %v1958 = vadd.f32 %v1684, %v1895
      %v1959 = vadd.f32 %v1688, %v1899
      %v1960 = vadd.f32 %v1690, %v1901
      %v1961 = vadd.f32 %v1694, %v1905
      %v1962 = vadd.f32 %v1696, %v1907
      %v1963 = vadd.f32 %v1700, %v1911
      %v1964 = vadd.f32 %v1702, %v1913
      %v1965 = vadd.f32 %v1706, %v1917
      %v1966 = vadd.f32 %v1708, %v1919
      %v1967 = vadd.f32 %v1712, %v1923
      %v1968 = vadd.f32 %v1714, %v1925
      %v1969 = vadd.f32 %v1718, %v1929
      %v1970 = vadd.f32 %v1720, %v1931
      %v1971 = vadd.f32 %v1724, %v1935
      %v1972 = vadd.f32 %v1726, %v1937
      %v1973 = vadd.f32 %v1730, %v1941
      %v1974 = vadd.f32 %v1732, %v1943
      %v1975 = vadd.f32 %v1736, %v1947
      %v1976 = vadd.f32 %v1738, %v1949
      %v1977 = vld [vmem:[%s723] sm:$0x3]
      %v1979 = vlaneseq
      %v1980 = vshrl.u32 %v1979, 7
      %v1981 = vsub.s32 0, %v1980
      %v1982 = vrot.slane %v1977, %v1981
      %v1983 = vlaneseq
      %v1984 = vshrl.u32 %v1983, 7
      %v1985 = vsub.s32 1, %v1984
      %v1986 = vrot.slane %v1977, %v1985
      %v1989 = vadd.f32 %v1951, %v1982
      %v1990 = vadd.f32 %v1952, %v1986
      %v1991 = vadd.f32 %v1953, %v1982
      %v1992 = vadd.f32 %v1954, %v1986
      %v1993 = vadd.f32 %v1955, %v1982
      %v1994 = vadd.f32 %v1956, %v1986
      %v1995 = vadd.f32 %v1957, %v1982
      %v1996 = vadd.f32 %v1958, %v1986
      %v1997 = vadd.f32 %v1959, %v1982
      %v1998 = vadd.f32 %v1960, %v1986
      %v1999 = vadd.f32 %v1961, %v1982
      %v2000 = vadd.f32 %v1962, %v1986
      %v2001 = vadd.f32 %v1963, %v1982
      %v2002 = vadd.f32 %v1964, %v1986
      %v2003 = vadd.f32 %v1965, %v1982
      %v2004 = vadd.f32 %v1966, %v1986
      %v2005 = vadd.f32 %v1967, %v1982
      %v2006 = vadd.f32 %v1968, %v1986
      %v2007 = vadd.f32 %v1969, %v1982
      %v2008 = vadd.f32 %v1970, %v1986
      %v2009 = vadd.f32 %v1971, %v1982
      %v2010 = vadd.f32 %v1972, %v1986
      %v2011 = vadd.f32 %v1973, %v1982
      %v2012 = vadd.f32 %v1974, %v1986
      %v2013 = vadd.f32 %v1975, %v1982
      %v2014 = vadd.f32 %v1976, %v1986
      %v2015 = vmul.f32 %v1990, 0.25
      %v2016 = vmul.f32 %v1992, 0.25
      %v2017 = vmul.f32 %v1994, 0.25
      %v2018 = vmul.f32 %v1996, 0.25
      %v2019 = vmul.f32 %v1998, 0.25
      %v2020 = vmul.f32 %v2000, 0.25
      %v2021 = vmul.f32 %v2002, 0.25
      %v2022 = vmul.f32 %v2004, 0.25
      %v2023 = vmul.f32 %v2006, 0.25
      %v2024 = vmul.f32 %v2008, 0.25
      %v2025 = vmul.f32 %v2010, 0.25
      %v2026 = vmul.f32 %v2012, 0.25
      %v2027 = vmul.f32 %v2014, 0.25
      %v2028 = vmul.f32 %v2015, %v1989
      %v2029 = vmul.f32 %v2016, %v1991
      %v2030 = vmul.f32 %v2017, %v1993
      %v2031 = vmul.f32 %v2018, %v1995
      %v2032 = vmul.f32 %v2019, %v1997
      %v2033 = vmul.f32 %v2020, %v1999
      %v2034 = vmul.f32 %v2021, %v2001
      %v2035 = vmul.f32 %v2022, %v2003
      %v2036 = vmul.f32 %v2023, %v2005
      %v2037 = vmul.f32 %v2024, %v2007
      %v2038 = vmul.f32 %v2025, %v2009
      %v2039 = vmul.f32 %v2026, %v2011
      %v2040 = vmul.f32 %v2027, %v2013
      %v2041 = vld [vmem:[%s7] sm:$0xff]
      %v2042 = vld [vmem:[%s7 + $0x8] sm:$0xff]
      %v2043 = vld [vmem:[%s7 + $0x10] sm:$0xff]
      %v2044 = vld [vmem:[%s7 + $0x18] sm:$0xff]
      %v2045 = vld [vmem:[%s7 + $0x20] sm:$0xff]
      %v2046 = vld [vmem:[%s7 + $0x28] sm:$0xff]
      %v2047 = vld [vmem:[%s7 + $0x30] sm:$0xff]
      %v2048 = vld [vmem:[%s7 + $0x38] sm:$0xff]
      %v2050 = vsel %vm862, %v2028, 0
      %v2053 = vsel %vm862, %v2029, 0
      %v2056 = vsel %vm862, %v2030, 0
      %v2059 = vsel %vm862, %v2031, 0
      %v2062 = vsel %vm862, %v2032, 0
      %v2065 = vsel %vm862, %v2033, 0
      %v2068 = vsel %vm862, %v2034, 0
      %v2071 = vsel %vm862, %v2035, 0
      %v2074 = vsel %vm862, %v2036, 0
      %v2077 = vsel %vm862, %v2037, 0
      %v2080 = vsel %vm862, %v2038, 0
      %v2083 = vsel %vm862, %v2039, 0
      %v2086 = vsel %vm862, %v2040, 0
      %2088 = vmatprep.subr.mxu0 0.0
      %2089 = vmatpush1.msra.mxu0 %v2041
      %2090 = vmatprep.subr.mxu0 0.0
      %2091 = vmatpush1.msra.mxu0 %v2042
      %2092 = vmatprep.subr.mxu0 0.0
      %2093 = vmatpush1.msra.mxu0 %v2043
      %2094 = vmatprep.subr.mxu0 0.0
      %2095 = vmatpush1.msra.mxu0 %v2044
      %2096 = vmatprep.subr.mxu0 0.0
      %2097 = vmatpush1.msra.mxu0 %v2045
      %2098 = vmatprep.subr.mxu0 0.0
      %2099 = vmatpush1.msra.mxu0 %v2046
      %2100 = vmatprep.subr.mxu0 0.0
      %2101 = vmatpush1.msra.mxu0 %v2047
      %2102 = vmatprep.subr.mxu0 0.0
      %2103 = vmatpush1.msra.mxu0 %v2048
      %2104 = vmatprep.subr.mxu0 0.0
      %2105 = vmatpush1.msra.mxu0 0.0
      %2106 = vmatprep.subr.mxu0 0.0
      %2107 = vmatpush1.msra.mxu0 0.0
      %2108 = vmatprep.subr.mxu0 0.0
      %2109 = vmatpush1.msra.mxu0 0.0
      %2110 = vmatprep.subr.mxu0 0.0
      %2111 = vmatpush1.msra.mxu0 0.0
      %2112 = vmatprep.subr.mxu0 0.0
      %2113 = vmatpush1.msra.mxu0 0.0
      %2114 = vmatprep.subr.mxu0 0.0
      %2115 = vmatpush1.msra.mxu0 0.0
      %2116 = vmatprep.subr.mxu0 0.0
      %2117 = vmatpush1.msra.mxu0 0.0
      %2118 = vmatprep.subr.mxu0 0.0
      %2119 = vmatpush1.msra.mxu0 0.0
      %2120 = vmatprep.subr.mxu0 0.0
      %2121 = vmatpush1.msra.mxu0 0.0
      %2122 = vmatprep.subr.mxu0 0.0
      %2123 = vmatpush1.msra.mxu0 0.0
      %2124 = vmatprep.subr.mxu0 0.0
      %2125 = vmatpush1.msra.mxu0 0.0
      %2126 = vmatprep.subr.mxu0 0.0
      %2127 = vmatpush1.msra.mxu0 0.0
      %2128 = vmatprep.subr.mxu0 0.0
      %2129 = vmatpush1.msra.mxu0 0.0
      %2130 = vmatprep.subr.mxu0 0.0
      %2131 = vmatpush1.msra.mxu0 0.0
      %2132 = vmatprep.subr.mxu0 0.0
      %2133 = vmatpush1.msra.mxu0 0.0
      %2134 = vmatprep.subr.mxu0 0.0
      %2135 = vmatpush1.msra.mxu0 0.0
      %2136 = vmatprep.subr.mxu0 0.0
      %2137 = vmatpush1.msra.mxu0 0.0
      %2138 = vmatprep.subr.mxu0 0.0
      %2139 = vmatpush1.msra.mxu0 0.0
      %2140 = vmatprep.subr.mxu0 0.0
      %2141 = vmatpush1.msra.mxu0 0.0
      %2142 = vmatprep.subr.mxu0 0.0
      %2143 = vmatpush1.msra.mxu0 0.0
      %2144 = vmatprep.subr.mxu0 0.0
      %2145 = vmatpush1.msra.mxu0 0.0
      %2146 = vmatprep.subr.mxu0 0.0
      %2147 = vmatpush1.msra.mxu0 0.0
      %2148 = vmatprep.subr.mxu0 0.0
      %2149 = vmatpush1.msra.mxu0 0.0
      %2150 = vmatprep.subr.mxu0 0.0
      %2151 = vmatpush1.msra.mxu0 0.0
      %2152 = vmatprep.mubr.f32.mxu0 0.0
      %2153 = vmatmul.mubr.f32.gmra.mrb[0].mxu0 %v2050
      %v2154 = vpop.f32.mrb[0].mxu0
      %v2155 = vadd.f32 0.0, %v2154
      %v2156 = vpop.f32.mrb[0].mxu0
      %2157 = vmatprep.mubr.f32.mxu0 0.0
      %2158 = vmatmul.mubr.f32.gmra.mrb[0].mxu0 %v2053
      %v2159 = vpop.f32.mrb[0].mxu0
      %v2160 = vadd.f32 0.0, %v2159
      %v2161 = vpop.f32.mrb[0].mxu0
      %2162 = vmatprep.mubr.f32.mxu0 0.0
      %2163 = vmatmul.mubr.f32.gmra.mrb[0].mxu0 %v2056
      %v2164 = vpop.f32.mrb[0].mxu0
      %v2165 = vadd.f32 0.0, %v2164
      %v2166 = vpop.f32.mrb[0].mxu0
      %2167 = vmatprep.mubr.f32.mxu0 0.0
      %2168 = vmatmul.mubr.f32.gmra.mrb[0].mxu0 %v2059
      %v2169 = vpop.f32.mrb[0].mxu0
      %v2170 = vadd.f32 0.0, %v2169
      %v2171 = vpop.f32.mrb[0].mxu0
      %2172 = vmatprep.mubr.f32.mxu0 0.0
      %2173 = vmatmul.mubr.f32.gmra.mrb[0].mxu0 %v2062
      %v2174 = vpop.f32.mrb[0].mxu0
      %v2175 = vadd.f32 0.0, %v2174
      %v2176 = vpop.f32.mrb[0].mxu0
      %2177 = vmatprep.mubr.f32.mxu0 0.0
      %2178 = vmatmul.mubr.f32.gmra.mrb[0].mxu0 %v2065
      %v2179 = vpop.f32.mrb[0].mxu0
      %v2180 = vadd.f32 0.0, %v2179
      %v2181 = vpop.f32.mrb[0].mxu0
      %2182 = vmatprep.mubr.f32.mxu0 0.0
      %2183 = vmatmul.mubr.f32.gmra.mrb[0].mxu0 %v2068
      %v2184 = vpop.f32.mrb[0].mxu0
      %v2185 = vadd.f32 0.0, %v2184
      %v2186 = vpop.f32.mrb[0].mxu0
      %2187 = vmatprep.mubr.f32.mxu0 0.0
      %2188 = vmatmul.mubr.f32.gmra.mrb[0].mxu0 %v2071
      %v2189 = vpop.f32.mrb[0].mxu0
      %v2190 = vadd.f32 0.0, %v2189
      %v2191 = vpop.f32.mrb[0].mxu0
      %2192 = vmatprep.mubr.f32.mxu0 0.0
      %2193 = vmatmul.mubr.f32.gmra.mrb[0].mxu0 %v2074
      %v2194 = vpop.f32.mrb[0].mxu0
      %v2195 = vadd.f32 0.0, %v2194
      %v2196 = vpop.f32.mrb[0].mxu0
      %2197 = vmatprep.mubr.f32.mxu0 0.0
      %2198 = vmatmul.mubr.f32.gmra.mrb[0].mxu0 %v2077
      %v2199 = vpop.f32.mrb[0].mxu0
      %v2200 = vadd.f32 0.0, %v2199
      %v2201 = vpop.f32.mrb[0].mxu0
      %2202 = vmatprep.mubr.f32.mxu0 0.0
      %2203 = vmatmul.mubr.f32.gmra.mrb[0].mxu0 %v2080
      %v2204 = vpop.f32.mrb[0].mxu0
      %v2205 = vadd.f32 0.0, %v2204
      %v2206 = vpop.f32.mrb[0].mxu0
      %2207 = vmatprep.mubr.f32.mxu0 0.0
      %2208 = vmatmul.mubr.f32.gmra.mrb[0].mxu0 %v2083
      %v2209 = vpop.f32.mrb[0].mxu0
      %v2210 = vadd.f32 0.0, %v2209
      %v2211 = vpop.f32.mrb[0].mxu0
      %2212 = vmatprep.mubr.f32.mxu0 0.0
      %2213 = vmatmul.mubr.f32.gmra.mrb[0].mxu0 %v2086
      %v2214 = vpop.f32.mrb[0].mxu0
      %v2215 = vadd.f32 0.0, %v2214
      %v2216 = vpop.f32.mrb[0].mxu0
      %2217 = vdwg.mxu0
      %v2218 = vsel %vm862, %v2155, -inf
      %v2219 = vsel %vm862, %v2160, -inf
      %v2220 = vsel %vm862, %v2165, -inf
      %v2221 = vsel %vm862, %v2170, -inf
      %v2222 = vsel %vm862, %v2175, -inf
      %v2223 = vmax.f32 %v2218, %v2222
      %v2224 = vsel %vm862, %v2180, -inf
      %v2225 = vmax.f32 %v2219, %v2224
      %v2226 = vsel %vm862, %v2185, -inf
      %v2227 = vmax.f32 %v2220, %v2226
      %v2228 = vsel %vm862, %v2190, -inf
      %v2229 = vmax.f32 %v2221, %v2228
      %v2230 = vsel %vm862, %v2195, -inf
      %v2231 = vmax.f32 %v2223, %v2230
      %v2232 = vsel %vm862, %v2200, -inf
      %v2233 = vmax.f32 %v2225, %v2232
      %v2234 = vsel %vm862, %v2205, -inf
      %v2235 = vmax.f32 %v2227, %v2234
      %v2236 = vsel %vm862, %v2210, -inf
      %v2237 = vmax.f32 %v2229, %v2236
      %v2238 = vsel %vm862, %v2215, -inf
      %v2239 = vmax.f32 %v2231, %v2238
      %v2240 = vmax.f32 %v2239, %v2233
      %v2241 = vmax.f32 %v2235, %v2237
      %v2242 = vmax.f32 %v2240, %v2241
      %2243 = vmax.xlane.f32.xlu0 %v2242
      %v2244 = vpop.xlane.xlu0 %2243
      %v2245 = vrot.slane %v2244, 4
      %v2246 = vmax.f32 %v2244, %v2245
      %v2247 = vrot.slane %v2246, 2
      %v2248 = vmax.f32 %v2246, %v2247
      %v2249 = vrot.slane %v2248, 1
      %v2250 = vmax.f32 %v2248, %v2249
      %s2251 = vtos %v2250
      %v2252 = vstv %s2251
      %v2253 = vsub.f32 %v2155, %v2252
      %v2254 = vsub.f32 %v2160, %v2252
      %v2255 = vsub.f32 %v2165, %v2252
      %v2256 = vsub.f32 %v2170, %v2252
      %v2257 = vsub.f32 %v2175, %v2252
      %v2258 = vsub.f32 %v2180, %v2252
      %v2259 = vsub.f32 %v2185, %v2252
      %v2260 = vsub.f32 %v2190, %v2252
      %v2261 = vsub.f32 %v2195, %v2252
      %v2262 = vsub.f32 %v2200, %v2252
      %v2263 = vsub.f32 %v2205, %v2252
      %v2264 = vsub.f32 %v2210, %v2252
      %v2265 = vsub.f32 %v2215, %v2252
      %v2266 = vmax.f32 %v2253, -60.0
      %v2267 = vmax.f32 %v2254, -60.0
      %v2268 = vmax.f32 %v2255, -60.0
      %v2269 = vmax.f32 %v2256, -60.0
      %v2270 = vmax.f32 %v2257, -60.0
      %v2271 = vmax.f32 %v2258, -60.0
      %v2272 = vmax.f32 %v2259, -60.0
      %v2273 = vmax.f32 %v2260, -60.0
      %v2274 = vmax.f32 %v2261, -60.0
      %v2275 = vmax.f32 %v2262, -60.0
      %v2276 = vmax.f32 %v2263, -60.0
      %v2277 = vmax.f32 %v2264, -60.0
      %v2278 = vmax.f32 %v2265, -60.0
      %v2279 = vmul.f32 %v2266, 1.442695
      %v2280 = vpow.pop %v2279
      %v2281 = vmul.f32 %v2267, 1.442695
      %v2282 = vpow.pop %v2281
      %v2283 = vmul.f32 %v2268, 1.442695
      %v2284 = vpow.pop %v2283
      %v2285 = vmul.f32 %v2269, 1.442695
      %v2286 = vpow.pop %v2285
      %v2287 = vmul.f32 %v2270, 1.442695
      %v2288 = vpow.pop %v2287
      %v2289 = vmul.f32 %v2271, 1.442695
      %v2290 = vpow.pop %v2289
      %v2291 = vmul.f32 %v2272, 1.442695
      %v2292 = vpow.pop %v2291
      %v2293 = vmul.f32 %v2273, 1.442695
      %v2294 = vpow.pop %v2293
      %v2295 = vmul.f32 %v2274, 1.442695
      %v2296 = vpow.pop %v2295
      %v2297 = vmul.f32 %v2275, 1.442695
      %v2298 = vpow.pop %v2297
      %v2299 = vmul.f32 %v2276, 1.442695
      %v2300 = vpow.pop %v2299
      %v2301 = vmul.f32 %v2277, 1.442695
      %v2302 = vpow.pop %v2301
      %v2303 = vmul.f32 %v2278, 1.442695
      %v2304 = vpow.pop %v2303
      %vm2305 = vcmask 850944
      %v2307 = vsel %vm2305, %v790, 0
      %v2310 = vsel %vm2305, %v791, 0
      %v2313 = vsel %vm2305, %v792, 0
      %v2316 = vsel %vm2305, %v793, 0
      %v2319 = vsel %vm2305, %v794, 0
      %v2322 = vsel %vm2305, %v795, 0
      %v2325 = vsel %vm2305, %v796, 0
      %v2328 = vsel %vm2305, %v797, 0
      %2330 = vmatprep.subr.mxu0 0.0
      %2331 = vmatpush1.msra.mxu0 %v2280
      %2332 = vmatprep.subr.mxu0 0.0
      %2333 = vmatpush1.msra.mxu0 %v2282
      %2334 = vmatprep.subr.mxu0 0.0
      %2335 = vmatpush1.msra.mxu0 %v2284
      %2336 = vmatprep.subr.mxu0 0.0
      %2337 = vmatpush1.msra.mxu0 %v2286
      %2338 = vmatprep.subr.mxu0 0.0
      %2339 = vmatpush1.msra.mxu0 %v2288
      %2340 = vmatprep.subr.mxu0 0.0
      %2341 = vmatpush1.msra.mxu0 %v2290
      %2342 = vmatprep.subr.mxu0 0.0
      %2343 = vmatpush1.msra.mxu0 %v2292
      %2344 = vmatprep.subr.mxu0 0.0
      %2345 = vmatpush1.msra.mxu0 %v2294
      %2346 = vmatprep.subr.mxu0 0.0
      %2347 = vmatpush1.msra.mxu0 %v2296
      %2348 = vmatprep.subr.mxu0 0.0
      %2349 = vmatpush1.msra.mxu0 %v2298
      %2350 = vmatprep.subr.mxu0 0.0
      %2351 = vmatpush1.msra.mxu0 %v2300
      %2352 = vmatprep.subr.mxu0 0.0
      %2353 = vmatpush1.msra.mxu0 %v2302
      %2354 = vmatprep.subr.mxu0 0.0
      %2355 = vmatpush1.msra.mxu0 %v2304
      %2356 = vmatprep.subr.mxu0 0.0
      %2357 = vmatpush1.msra.mxu0 0.0
      %2358 = vmatprep.subr.mxu0 0.0
      %2359 = vmatpush1.msra.mxu0 0.0
      %2360 = vmatprep.subr.mxu0 0.0
      %2361 = vmatpush1.msra.mxu0 0.0
      %2362 = vmatprep.subr.mxu0 0.0
      %2363 = vmatpush1.msra.mxu0 0.0
      %2364 = vmatprep.subr.mxu0 0.0
      %2365 = vmatpush1.msra.mxu0 0.0
      %2366 = vmatprep.subr.mxu0 0.0
      %2367 = vmatpush1.msra.mxu0 0.0
      %2368 = vmatprep.subr.mxu0 0.0
      %2369 = vmatpush1.msra.mxu0 0.0
      %2370 = vmatprep.subr.mxu0 0.0
      %2371 = vmatpush1.msra.mxu0 0.0
      %2372 = vmatprep.subr.mxu0 0.0
      %2373 = vmatpush1.msra.mxu0 0.0
      %2374 = vmatprep.subr.mxu0 0.0
      %2375 = vmatpush1.msra.mxu0 0.0
      %2376 = vmatprep.subr.mxu0 0.0
      %2377 = vmatpush1.msra.mxu0 0.0
      %2378 = vmatprep.subr.mxu0 0.0
      %2379 = vmatpush1.msra.mxu0 0.0
      %2380 = vmatprep.subr.mxu0 0.0
      %2381 = vmatpush1.msra.mxu0 0.0
      %2382 = vmatprep.subr.mxu0 0.0
      %2383 = vmatpush1.msra.mxu0 0.0
      %2384 = vmatprep.subr.mxu0 0.0
      %2385 = vmatpush1.msra.mxu0 0.0
      %2386 = vmatprep.subr.mxu0 0.0
      %2387 = vmatpush1.msra.mxu0 0.0
      %2388 = vmatprep.subr.mxu0 0.0
      %2389 = vmatpush1.msra.mxu0 0.0
      %2390 = vmatprep.subr.mxu0 0.0
      %2391 = vmatpush1.msra.mxu0 0.0
      %2392 = vmatprep.subr.mxu0 0.0
      %2393 = vmatpush1.msra.mxu0 0.0
      %2394 = vmatprep.mubr.f32.mxu0 0.0
      %2395 = vmatmul.mubr.f32.gmra.mrb[0].mxu0 %v2307
      %v2396 = vpop.f32.mrb[0].mxu0
      %v2397 = vadd.f32 0.0, %v2396
      %v2398 = vpop.f32.mrb[0].mxu0
      %2399 = vmatprep.mubr.f32.mxu0 0.0
      %2400 = vmatmul.mubr.f32.gmra.mrb[0].mxu0 %v2310
      %v2401 = vpop.f32.mrb[0].mxu0
      %v2402 = vadd.f32 0.0, %v2401
      %v2403 = vpop.f32.mrb[0].mxu0
      %2404 = vmatprep.mubr.f32.mxu0 0.0
      %2405 = vmatmul.mubr.f32.gmra.mrb[0].mxu0 %v2313
      %v2406 = vpop.f32.mrb[0].mxu0
      %v2407 = vadd.f32 0.0, %v2406
      %v2408 = vpop.f32.mrb[0].mxu0
      %2409 = vmatprep.mubr.f32.mxu0 0.0
      %2410 = vmatmul.mubr.f32.gmra.mrb[0].mxu0 %v2316
      %v2411 = vpop.f32.mrb[0].mxu0
      %v2412 = vadd.f32 0.0, %v2411
      %v2413 = vpop.f32.mrb[0].mxu0
      %2414 = vmatprep.mubr.f32.mxu0 0.0
      %2415 = vmatmul.mubr.f32.gmra.mrb[0].mxu0 %v2319
      %v2416 = vpop.f32.mrb[0].mxu0
      %v2417 = vadd.f32 0.0, %v2416
      %v2418 = vpop.f32.mrb[0].mxu0
      %2419 = vmatprep.mubr.f32.mxu0 0.0
      %2420 = vmatmul.mubr.f32.gmra.mrb[0].mxu0 %v2322
      %v2421 = vpop.f32.mrb[0].mxu0
      %v2422 = vadd.f32 0.0, %v2421
      %v2423 = vpop.f32.mrb[0].mxu0
      %2424 = vmatprep.mubr.f32.mxu0 0.0
      %2425 = vmatmul.mubr.f32.gmra.mrb[0].mxu0 %v2325
      %v2426 = vpop.f32.mrb[0].mxu0
      %v2427 = vadd.f32 0.0, %v2426
      %v2428 = vpop.f32.mrb[0].mxu0
      %2429 = vmatprep.mubr.f32.mxu0 0.0
      %2430 = vmatmul.mubr.f32.gmra.mrb[0].mxu0 %v2328
      %v2431 = vpop.f32.mrb[0].mxu0
      %v2432 = vadd.f32 0.0, %v2431
      %v2433 = vpop.f32.mrb[0].mxu0
      %2434 = vdwg.mxu0
      %v2435 = vsel %vm2305, %v790, 0.0
      %2436 = vadd.xlane.f32.xlu0 %v2435
      %v2437 = vpop.xlane.xlu0 %2436
      %v2438 = vsel %vm2305, %v791, 0.0
      %2439 = vadd.xlane.f32.xlu0 %v2438
      %v2440 = vpop.xlane.xlu0 %2439
      %v2441 = vsel %vm2305, %v792, 0.0
      %2442 = vadd.xlane.f32.xlu0 %v2441
      %v2443 = vpop.xlane.xlu0 %2442
      %v2444 = vsel %vm2305, %v793, 0.0
      %2445 = vadd.xlane.f32.xlu0 %v2444
      %v2446 = vpop.xlane.xlu0 %2445
      %v2447 = vsel %vm2305, %v794, 0.0
      %2448 = vadd.xlane.f32.xlu0 %v2447
      %v2449 = vpop.xlane.xlu0 %2448
      %v2450 = vsel %vm2305, %v795, 0.0
      %2451 = vadd.xlane.f32.xlu0 %v2450
      %v2452 = vpop.xlane.xlu0 %2451
      %v2453 = vsel %vm2305, %v796, 0.0
      %2454 = vadd.xlane.f32.xlu0 %v2453
      %v2455 = vpop.xlane.xlu0 %2454
      %v2456 = vsel %vm2305, %v797, 0.0
      %2457 = vadd.xlane.f32.xlu0 %v2456
      %v2458 = vpop.xlane.xlu0 %2457
      %v2459 = vrcp.pop %v2397
      %v2460 = vmul.f32 %v2437, %v2459
      %v2461 = vrcp.pop %v2402
      %v2462 = vmul.f32 %v2440, %v2461
      %v2463 = vrcp.pop %v2407
      %v2464 = vmul.f32 %v2443, %v2463
      %v2465 = vrcp.pop %v2412
      %v2466 = vmul.f32 %v2446, %v2465
      %v2467 = vrcp.pop %v2417
      %v2468 = vmul.f32 %v2449, %v2467
      %v2469 = vrcp.pop %v2422
      %v2470 = vmul.f32 %v2452, %v2469
      %v2471 = vrcp.pop %v2427
      %v2472 = vmul.f32 %v2455, %v2471
      %v2473 = vrcp.pop %v2432
      %v2474 = vmul.f32 %v2458, %v2473
      %2475 = vmatprep.subr.mxu0 0.0
      %2476 = vmatpush1.msra.mxu0 %v2460
      %2477 = vmatprep.subr.mxu0 0.0
      %2478 = vmatpush1.msra.mxu0 %v2462
      %2479 = vmatprep.subr.mxu0 0.0
      %2480 = vmatpush1.msra.mxu0 %v2464
      %2481 = vmatprep.subr.mxu0 0.0
      %2482 = vmatpush1.msra.mxu0 %v2466
      %2483 = vmatprep.subr.mxu0 0.0
      %2484 = vmatpush1.msra.mxu0 %v2468
      %2485 = vmatprep.subr.mxu0 0.0
      %2486 = vmatpush1.msra.mxu0 %v2470
      %2487 = vmatprep.subr.mxu0 0.0
      %2488 = vmatpush1.msra.mxu0 %v2472
      %2489 = vmatprep.subr.mxu0 0.0
      %2490 = vmatpush1.msra.mxu0 %v2474
      %2491 = vmatprep.subr.mxu0 0.0
      %2492 = vmatpush1.msra.mxu0 0.0
      %2493 = vmatprep.subr.mxu0 0.0
      %2494 = vmatpush1.msra.mxu0 0.0
      %2495 = vmatprep.subr.mxu0 0.0
      %2496 = vmatpush1.msra.mxu0 0.0
      %2497 = vmatprep.subr.mxu0 0.0
      %2498 = vmatpush1.msra.mxu0 0.0
      %2499 = vmatprep.subr.mxu0 0.0
      %2500 = vmatpush1.msra.mxu0 0.0
      %2501 = vmatprep.subr.mxu0 0.0
      %2502 = vmatpush1.msra.mxu0 0.0
      %2503 = vmatprep.subr.mxu0 0.0
      %2504 = vmatpush1.msra.mxu0 0.0
      %2505 = vmatprep.subr.mxu0 0.0
      %2506 = vmatpush1.msra.mxu0 0.0
      %2507 = vmatprep.subr.mxu0 0.0
      %2508 = vmatpush1.msra.mxu0 0.0
      %2509 = vmatprep.subr.mxu0 0.0
      %2510 = vmatpush1.msra.mxu0 0.0
      %2511 = vmatprep.subr.mxu0 0.0
      %2512 = vmatpush1.msra.mxu0 0.0
      %2513 = vmatprep.subr.mxu0 0.0
      %2514 = vmatpush1.msra.mxu0 0.0
      %2515 = vmatprep.subr.mxu0 0.0
      %2516 = vmatpush1.msra.mxu0 0.0
      %2517 = vmatprep.subr.mxu0 0.0
      %2518 = vmatpush1.msra.mxu0 0.0
      %2519 = vmatprep.subr.mxu0 0.0
      %2520 = vmatpush1.msra.mxu0 0.0
      %2521 = vmatprep.subr.mxu0 0.0
      %2522 = vmatpush1.msra.mxu0 0.0
      %2523 = vmatprep.subr.mxu0 0.0
      %2524 = vmatpush1.msra.mxu0 0.0
      %2525 = vmatprep.subr.mxu0 0.0
      %2526 = vmatpush1.msra.mxu0 0.0
      %2527 = vmatprep.subr.mxu0 0.0
      %2528 = vmatpush1.msra.mxu0 0.0
      %2529 = vmatprep.subr.mxu0 0.0
      %2530 = vmatpush1.msra.mxu0 0.0
      %2531 = vmatprep.subr.mxu0 0.0
      %2532 = vmatpush1.msra.mxu0 0.0
      %2533 = vmatprep.subr.mxu0 0.0
      %2534 = vmatpush1.msra.mxu0 0.0
      %2535 = vmatprep.subr.mxu0 0.0
      %2536 = vmatpush1.msra.mxu0 0.0
      %2537 = vmatprep.subr.mxu0 0.0
      %2538 = vmatpush1.msra.mxu0 0.0
      %2539 = vmatprep.mubr.f32.mxu0 0.0
      %2540 = vmatmul.mubr.f32.gmra.mrb[0].mxu0 %v1377
      %v2541 = vpop.f32.mrb[0].mxu0
      %v2542 = vadd.f32 0.0, %v2541
      %v2543 = vpop.f32.mrb[0].mxu0
      %2544 = vmatprep.mubr.f32.mxu0 0.0
      %2545 = vmatmul.mubr.f32.gmra.mrb[0].mxu0 %v1380
      %v2546 = vpop.f32.mrb[0].mxu0
      %v2547 = vadd.f32 0.0, %v2546
      %v2548 = vpop.f32.mrb[0].mxu0
      %2549 = vmatprep.mubr.f32.mxu0 0.0
      %2550 = vmatmul.mubr.f32.gmra.mrb[0].mxu0 %v1383
      %v2551 = vpop.f32.mrb[0].mxu0
      %v2552 = vadd.f32 0.0, %v2551
      %v2553 = vpop.f32.mrb[0].mxu0
      %2554 = vmatprep.mubr.f32.mxu0 0.0
      %2555 = vmatmul.mubr.f32.gmra.mrb[0].mxu0 %v1386
      %v2556 = vpop.f32.mrb[0].mxu0
      %v2557 = vadd.f32 0.0, %v2556
      %v2558 = vpop.f32.mrb[0].mxu0
      %2559 = vmatprep.mubr.f32.mxu0 0.0
      %2560 = vmatmul.mubr.f32.gmra.mrb[0].mxu0 %v1389
      %v2561 = vpop.f32.mrb[0].mxu0
      %v2562 = vadd.f32 0.0, %v2561
      %v2563 = vpop.f32.mrb[0].mxu0
      %2564 = vmatprep.mubr.f32.mxu0 0.0
      %2565 = vmatmul.mubr.f32.gmra.mrb[0].mxu0 %v1392
      %v2566 = vpop.f32.mrb[0].mxu0
      %v2567 = vadd.f32 0.0, %v2566
      %v2568 = vpop.f32.mrb[0].mxu0
      %2569 = vmatprep.mubr.f32.mxu0 0.0
      %2570 = vmatmul.mubr.f32.gmra.mrb[0].mxu0 %v1395
      %v2571 = vpop.f32.mrb[0].mxu0
      %v2572 = vadd.f32 0.0, %v2571
      %v2573 = vpop.f32.mrb[0].mxu0
      %2574 = vmatprep.mubr.f32.mxu0 0.0
      %2575 = vmatmul.mubr.f32.gmra.mrb[0].mxu0 %v1398
      %v2576 = vpop.f32.mrb[0].mxu0
      %v2577 = vadd.f32 0.0, %v2576
      %v2578 = vpop.f32.mrb[0].mxu0
      %2579 = vmatprep.mubr.f32.mxu0 0.0
      %2580 = vmatmul.mubr.f32.gmra.mrb[0].mxu0 %v1401
      %v2581 = vpop.f32.mrb[0].mxu0
      %v2582 = vadd.f32 0.0, %v2581
      %v2583 = vpop.f32.mrb[0].mxu0
      %2584 = vmatprep.mubr.f32.mxu0 0.0
      %2585 = vmatmul.mubr.f32.gmra.mrb[0].mxu0 %v1404
      %v2586 = vpop.f32.mrb[0].mxu0
      %v2587 = vadd.f32 0.0, %v2586
      %v2588 = vpop.f32.mrb[0].mxu0
      %2589 = vmatprep.mubr.f32.mxu0 0.0
      %2590 = vmatmul.mubr.f32.gmra.mrb[0].mxu0 %v1407
      %v2591 = vpop.f32.mrb[0].mxu0
      %v2592 = vadd.f32 0.0, %v2591
      %v2593 = vpop.f32.mrb[0].mxu0
      %2594 = vmatprep.mubr.f32.mxu0 0.0
      %2595 = vmatmul.mubr.f32.gmra.mrb[0].mxu0 %v1410
      %v2596 = vpop.f32.mrb[0].mxu0
      %v2597 = vadd.f32 0.0, %v2596
      %v2598 = vpop.f32.mrb[0].mxu0
      %2599 = vmatprep.mubr.f32.mxu0 0.0
      %2600 = vmatmul.mubr.f32.gmra.mrb[0].mxu0 %v1413
      %v2601 = vpop.f32.mrb[0].mxu0
      %v2602 = vadd.f32 0.0, %v2601
      %v2603 = vpop.f32.mrb[0].mxu0
      %2604 = vdwg.mxu0
      %v2605 = vmul.f32 %v2280, %v2542
      %v2606 = vmul.f32 %v2282, %v2547
      %v2607 = vmul.f32 %v2284, %v2552
      %v2608 = vmul.f32 %v2286, %v2557
      %v2609 = vmul.f32 %v2288, %v2562
      %v2610 = vmul.f32 %v2290, %v2567
      %v2611 = vmul.f32 %v2292, %v2572
      %v2612 = vmul.f32 %v2294, %v2577
      %v2613 = vmul.f32 %v2296, %v2582
      %v2614 = vmul.f32 %v2298, %v2587
      %v2615 = vmul.f32 %v2300, %v2592
      %v2616 = vmul.f32 %v2302, %v2597
      %v2617 = vmul.f32 %v2304, %v2602
      %v2618 = vld [vmem:[%s6] sm:$0xff]
      %v2619 = vld [vmem:[%s6 + $0x8] sm:$0xff]
      %v2620 = vld [vmem:[%s6 + $0x10] sm:$0xff]
      %v2621 = vld [vmem:[%s6 + $0x18] sm:$0xff]
      %v2622 = vld [vmem:[%s6 + $0x20] sm:$0xff]
      %v2623 = vld [vmem:[%s6 + $0x28] sm:$0xff]
      %v2624 = vld [vmem:[%s6 + $0x30] sm:$0xff]
      %v2625 = vld [vmem:[%s6 + $0x38] sm:$0xff]
      %2639 = vrot.lane.b32.xlu0 %v2605, 64
      %v2640 = vpop.permute.xlu0 %2639
      %2641 = vrot.lane.b32.xlu0 %v2606, 64
      %v2642 = vpop.permute.xlu0 %2641
      %2643 = vrot.lane.b32.xlu0 %v2607, 64
      %v2644 = vpop.permute.xlu0 %2643
      %2645 = vrot.lane.b32.xlu0 %v2608, 64
      %v2646 = vpop.permute.xlu0 %2645
      %2647 = vrot.lane.b32.xlu0 %v2609, 64
      %v2648 = vpop.permute.xlu0 %2647
      %2649 = vrot.lane.b32.xlu0 %v2610, 64
      %v2650 = vpop.permute.xlu0 %2649
      %2651 = vrot.lane.b32.xlu0 %v2611, 64
      %v2652 = vpop.permute.xlu0 %2651
      %2653 = vrot.lane.b32.xlu0 %v2612, 64
      %v2654 = vpop.permute.xlu0 %2653
      %2655 = vrot.lane.b32.xlu0 %v2613, 64
      %v2656 = vpop.permute.xlu0 %2655
      %2657 = vrot.lane.b32.xlu0 %v2614, 64
      %v2658 = vpop.permute.xlu0 %2657
      %2659 = vrot.lane.b32.xlu0 %v2615, 64
      %v2660 = vpop.permute.xlu0 %2659
      %2661 = vrot.lane.b32.xlu0 %v2616, 64
      %v2662 = vpop.permute.xlu0 %2661
      %2663 = vrot.lane.b32.xlu0 %v2617, 64
      %v2664 = vpop.permute.xlu0 %2663
      %v2678 = vmul.f32 %v1989, %v2640
      %v2679 = vmul.f32 %v1991, %v2642
      %v2680 = vmul.f32 %v1993, %v2644
      %v2681 = vmul.f32 %v1995, %v2646
      %v2682 = vmul.f32 %v1997, %v2648
      %v2683 = vmul.f32 %v1999, %v2650
      %v2684 = vmul.f32 %v2001, %v2652
      %v2685 = vmul.f32 %v2003, %v2654
      %v2686 = vmul.f32 %v2005, %v2656
      %v2687 = vmul.f32 %v2007, %v2658
      %v2688 = vmul.f32 %v2009, %v2660
      %v2689 = vmul.f32 %v2011, %v2662
      %v2690 = vmul.f32 %v2013, %v2664
      %2704 = vrot.lane.b32.xlu0 %v2678, 64
      %v2705 = vpop.permute.xlu0 %2704
      %2706 = vrot.lane.b32.xlu0 %v2679, 64
      %v2707 = vpop.permute.xlu0 %2706
      %2708 = vrot.lane.b32.xlu0 %v2680, 64
      %v2709 = vpop.permute.xlu0 %2708
      %2710 = vrot.lane.b32.xlu0 %v2681, 64
      %v2711 = vpop.permute.xlu0 %2710
      %2712 = vrot.lane.b32.xlu0 %v2682, 64
      %v2713 = vpop.permute.xlu0 %2712
      %2714 = vrot.lane.b32.xlu0 %v2683, 64
      %v2715 = vpop.permute.xlu0 %2714
      %2716 = vrot.lane.b32.xlu0 %v2684, 64
      %v2717 = vpop.permute.xlu0 %2716
      %2718 = vrot.lane.b32.xlu0 %v2685, 64
      %v2719 = vpop.permute.xlu0 %2718
      %2720 = vrot.lane.b32.xlu0 %v2686, 64
      %v2721 = vpop.permute.xlu0 %2720
      %2722 = vrot.lane.b32.xlu0 %v2687, 64
      %v2723 = vpop.permute.xlu0 %2722
      %2724 = vrot.lane.b32.xlu0 %v2688, 64
      %v2725 = vpop.permute.xlu0 %2724
      %2726 = vrot.lane.b32.xlu0 %v2689, 64
      %v2727 = vpop.permute.xlu0 %2726
      %2728 = vrot.lane.b32.xlu0 %v2690, 64
      %v2729 = vpop.permute.xlu0 %2728
      %v2744 = vsel %vm2305, %v2618, 0
      %v2747 = vsel %vm2305, %v2619, 0
      %v2750 = vsel %vm2305, %v2620, 0
      %v2753 = vsel %vm2305, %v2621, 0
      %v2756 = vsel %vm2305, %v2622, 0
      %v2759 = vsel %vm2305, %v2623, 0
      %v2762 = vsel %vm2305, %v2624, 0
      %v2765 = vsel %vm2305, %v2625, 0
      %2767 = vmatprep.subr.mxu0 0.0
      %2768 = vmatpush1.msra.mxu0 %v2705
      %2769 = vmatprep.subr.mxu0 0.0
      %2770 = vmatpush1.msra.mxu0 %v2707
      %2771 = vmatprep.subr.mxu0 0.0
      %2772 = vmatpush1.msra.mxu0 %v2709
      %2773 = vmatprep.subr.mxu0 0.0
      %2774 = vmatpush1.msra.mxu0 %v2711
      %2775 = vmatprep.subr.mxu0 0.0
      %2776 = vmatpush1.msra.mxu0 %v2713
      %2777 = vmatprep.subr.mxu0 0.0
      %2778 = vmatpush1.msra.mxu0 %v2715
      %2779 = vmatprep.subr.mxu0 0.0
      %2780 = vmatpush1.msra.mxu0 %v2717
      %2781 = vmatprep.subr.mxu0 0.0
      %2782 = vmatpush1.msra.mxu0 %v2719
      %2783 = vmatprep.subr.mxu0 0.0
      %2784 = vmatpush1.msra.mxu0 %v2721
      %2785 = vmatprep.subr.mxu0 0.0
      %2786 = vmatpush1.msra.mxu0 %v2723
      %2787 = vmatprep.subr.mxu0 0.0
      %2788 = vmatpush1.msra.mxu0 %v2725
      %2789 = vmatprep.subr.mxu0 0.0
      %2790 = vmatpush1.msra.mxu0 %v2727
      %2791 = vmatprep.subr.mxu0 0.0
      %2792 = vmatpush1.msra.mxu0 %v2729
      %2793 = vmatprep.subr.mxu0 0.0
      %2794 = vmatpush1.msra.mxu0 0.0
      %2795 = vmatprep.subr.mxu0 0.0
      %2796 = vmatpush1.msra.mxu0 0.0
      %2797 = vmatprep.subr.mxu0 0.0
      %2798 = vmatpush1.msra.mxu0 0.0
      %2799 = vmatprep.subr.mxu0 0.0
      %2800 = vmatpush1.msra.mxu0 0.0
      %2801 = vmatprep.subr.mxu0 0.0
      %2802 = vmatpush1.msra.mxu0 0.0
      %2803 = vmatprep.subr.mxu0 0.0
      %2804 = vmatpush1.msra.mxu0 0.0
      %2805 = vmatprep.subr.mxu0 0.0
      %2806 = vmatpush1.msra.mxu0 0.0
      %2807 = vmatprep.subr.mxu0 0.0
      %2808 = vmatpush1.msra.mxu0 0.0
      %2809 = vmatprep.subr.mxu0 0.0
      %2810 = vmatpush1.msra.mxu0 0.0
      %2811 = vmatprep.subr.mxu0 0.0
      %2812 = vmatpush1.msra.mxu0 0.0
      %2813 = vmatprep.subr.mxu0 0.0
      %2814 = vmatpush1.msra.mxu0 0.0
      %2815 = vmatprep.subr.mxu0 0.0
      %2816 = vmatpush1.msra.mxu0 0.0
      %2817 = vmatprep.subr.mxu0 0.0
      %2818 = vmatpush1.msra.mxu0 0.0
      %2819 = vmatprep.subr.mxu0 0.0
      %2820 = vmatpush1.msra.mxu0 0.0
      %2821 = vmatprep.subr.mxu0 0.0
      %2822 = vmatpush1.msra.mxu0 0.0
      %2823 = vmatprep.subr.mxu0 0.0
      %2824 = vmatpush1.msra.mxu0 0.0
      %2825 = vmatprep.subr.mxu0 0.0
      %2826 = vmatpush1.msra.mxu0 0.0
      %2827 = vmatprep.subr.mxu0 0.0
      %2828 = vmatpush1.msra.mxu0 0.0
      %2829 = vmatprep.subr.mxu0 0.0
      %2830 = vmatpush1.msra.mxu0 0.0
      %2831 = vmatprep.mubr.f32.mxu0 0.0
      %2832 = vmatmul.mubr.f32.gmra.mrb[0].mxu0 %v2744
      %v2833 = vpop.f32.mrb[0].mxu0
      %v2834 = vadd.f32 0.0, %v2833
      %v2835 = vpop.f32.mrb[0].mxu0
      %2836 = vmatprep.mubr.f32.mxu0 0.0
      %2837 = vmatmul.mubr.f32.gmra.mrb[0].mxu0 %v2747
      %v2838 = vpop.f32.mrb[0].mxu0
      %v2839 = vadd.f32 0.0, %v2838
      %v2840 = vpop.f32.mrb[0].mxu0
      %2841 = vmatprep.mubr.f32.mxu0 0.0
      %2842 = vmatmul.mubr.f32.gmra.mrb[0].mxu0 %v2750
      %v2843 = vpop.f32.mrb[0].mxu0
      %v2844 = vadd.f32 0.0, %v2843
      %v2845 = vpop.f32.mrb[0].mxu0
      %2846 = vmatprep.mubr.f32.mxu0 0.0
      %2847 = vmatmul.mubr.f32.gmra.mrb[0].mxu0 %v2753
      %v2848 = vpop.f32.mrb[0].mxu0
      %v2849 = vadd.f32 0.0, %v2848
      %v2850 = vpop.f32.mrb[0].mxu0
      %2851 = vmatprep.mubr.f32.mxu0 0.0
      %2852 = vmatmul.mubr.f32.gmra.mrb[0].mxu0 %v2756
      %v2853 = vpop.f32.mrb[0].mxu0
      %v2854 = vadd.f32 0.0, %v2853
      %v2855 = vpop.f32.mrb[0].mxu0
      %2856 = vmatprep.mubr.f32.mxu0 0.0
      %2857 = vmatmul.mubr.f32.gmra.mrb[0].mxu0 %v2759
      %v2858 = vpop.f32.mrb[0].mxu0
      %v2859 = vadd.f32 0.0, %v2858
      %v2860 = vpop.f32.mrb[0].mxu0
      %2861 = vmatprep.mubr.f32.mxu0 0.0
      %2862 = vmatmul.mubr.f32.gmra.mrb[0].mxu0 %v2762
      %v2863 = vpop.f32.mrb[0].mxu0
      %v2864 = vadd.f32 0.0, %v2863
      %v2865 = vpop.f32.mrb[0].mxu0
      %2866 = vmatprep.mubr.f32.mxu0 0.0
      %2867 = vmatmul.mubr.f32.gmra.mrb[0].mxu0 %v2765
      %v2868 = vpop.f32.mrb[0].mxu0
      %v2869 = vadd.f32 0.0, %v2868
      %v2870 = vpop.f32.mrb[0].mxu0
      %2871 = vdwg.mxu0
      %v2872 = vld [vmem:[%s728] sm:$0xff]
      %v2873 = vld [vmem:[%s728 + $0x8] sm:$0xff]
      %v2874 = vld [vmem:[%s728 + $0x10] sm:$0xff]
      %v2875 = vld [vmem:[%s728 + $0x18] sm:$0xff]
      %v2876 = vld [vmem:[%s728 + $0x20] sm:$0xff]
      %v2877 = vld [vmem:[%s728 + $0x28] sm:$0xff]
      %v2878 = vld [vmem:[%s728 + $0x30] sm:$0xff]
      %v2879 = vld [vmem:[%s728 + $0x38] sm:$0xff]
      %v2880 = vld [vmem:[%s731] sm:$0x1]
      %v2882 = vlaneseq
      %v2883 = vshrl.u32 %v2882, 7
      %v2884 = vsub.s32 0, %v2883
      %v2885 = vrot.slane %v2880, %v2884
      %v2888 = vsel %vm862, %v2834, 0
      %v2891 = vsel %vm862, %v2839, 0
      %v2894 = vsel %vm862, %v2844, 0
      %v2897 = vsel %vm862, %v2849, 0
      %v2900 = vsel %vm862, %v2854, 0
      %v2903 = vsel %vm862, %v2859, 0
      %v2906 = vsel %vm862, %v2864, 0
      %v2909 = vsel %vm862, %v2869, 0
      %2911 = vmatprep.subr.mxu0 0.0
      %2912 = vmatpush1.msra.mxu0 %v2872
      %2913 = vmatprep.subr.mxu0 0.0
      %2914 = vmatpush1.msra.mxu0 %v2873
      %2915 = vmatprep.subr.mxu0 0.0
      %2916 = vmatpush1.msra.mxu0 %v2874
      %2917 = vmatprep.subr.mxu0 0.0
      %2918 = vmatpush1.msra.mxu0 %v2875
      %2919 = vmatprep.subr.mxu0 0.0
      %2920 = vmatpush1.msra.mxu0 %v2876
      %2921 = vmatprep.subr.mxu0 0.0
      %2922 = vmatpush1.msra.mxu0 %v2877
      %2923 = vmatprep.subr.mxu0 0.0
      %2924 = vmatpush1.msra.mxu0 %v2878
      %2925 = vmatprep.subr.mxu0 0.0
      %2926 = vmatpush1.msra.mxu0 %v2879
      %2927 = vmatprep.subr.mxu0 0.0
      %2928 = vmatpush1.msra.mxu0 0.0
      %2929 = vmatprep.subr.mxu0 0.0
      %2930 = vmatpush1.msra.mxu0 0.0
      %2931 = vmatprep.subr.mxu0 0.0
      %2932 = vmatpush1.msra.mxu0 0.0
      %2933 = vmatprep.subr.mxu0 0.0
      %2934 = vmatpush1.msra.mxu0 0.0
      %2935 = vmatprep.subr.mxu0 0.0
      %2936 = vmatpush1.msra.mxu0 0.0
      %2937 = vmatprep.subr.mxu0 0.0
      %2938 = vmatpush1.msra.mxu0 0.0
      %2939 = vmatprep.subr.mxu0 0.0
      %2940 = vmatpush1.msra.mxu0 0.0
      %2941 = vmatprep.subr.mxu0 0.0
      %2942 = vmatpush1.msra.mxu0 0.0
      %2943 = vmatprep.subr.mxu0 0.0
      %2944 = vmatpush1.msra.mxu0 0.0
      %2945 = vmatprep.subr.mxu0 0.0
      %2946 = vmatpush1.msra.mxu0 0.0
      %2947 = vmatprep.subr.mxu0 0.0
      %2948 = vmatpush1.msra.mxu0 0.0
      %2949 = vmatprep.subr.mxu0 0.0
      %2950 = vmatpush1.msra.mxu0 0.0
      %2951 = vmatprep.subr.mxu0 0.0
      %2952 = vmatpush1.msra.mxu0 0.0
      %2953 = vmatprep.subr.mxu0 0.0
      %2954 = vmatpush1.msra.mxu0 0.0
      %2955 = vmatprep.subr.mxu0 0.0
      %2956 = vmatpush1.msra.mxu0 0.0
      %2957 = vmatprep.subr.mxu0 0.0
      %2958 = vmatpush1.msra.mxu0 0.0
      %2959 = vmatprep.subr.mxu0 0.0
      %2960 = vmatpush1.msra.mxu0 0.0
      %2961 = vmatprep.subr.mxu0 0.0
      %2962 = vmatpush1.msra.mxu0 0.0
      %2963 = vmatprep.subr.mxu0 0.0
      %2964 = vmatpush1.msra.mxu0 0.0
      %2965 = vmatprep.subr.mxu0 0.0
      %2966 = vmatpush1.msra.mxu0 0.0
      %2967 = vmatprep.subr.mxu0 0.0
      %2968 = vmatpush1.msra.mxu0 0.0
      %2969 = vmatprep.subr.mxu0 0.0
      %2970 = vmatpush1.msra.mxu0 0.0
      %2971 = vmatprep.subr.mxu0 0.0
      %2972 = vmatpush1.msra.mxu0 0.0
      %2973 = vmatprep.subr.mxu0 0.0
      %2974 = vmatpush1.msra.mxu0 0.0
      %2975 = vmatprep.mubr.f32.mxu0 0.0
      %2976 = vmatmul.mubr.f32.gmra.mrb[0].mxu0 %v2888
      %v2977 = vpop.f32.mrb[0].mxu0
      %v2978 = vadd.f32 %v2885, %v2977
      %v2979 = vpop.f32.mrb[0].mxu0
      %2980 = vmatprep.mubr.f32.mxu0 0.0
      %2981 = vmatmul.mubr.f32.gmra.mrb[0].mxu0 %v2891
      %v2982 = vpop.f32.mrb[0].mxu0
      %v2983 = vadd.f32 %v2885, %v2982
      %v2984 = vpop.f32.mrb[0].mxu0
      %2985 = vmatprep.mubr.f32.mxu0 0.0
      %2986 = vmatmul.mubr.f32.gmra.mrb[0].mxu0 %v2894
      %v2987 = vpop.f32.mrb[0].mxu0
      %v2988 = vadd.f32 %v2885, %v2987
      %v2989 = vpop.f32.mrb[0].mxu0
      %2990 = vmatprep.mubr.f32.mxu0 0.0
      %2991 = vmatmul.mubr.f32.gmra.mrb[0].mxu0 %v2897
      %v2992 = vpop.f32.mrb[0].mxu0
      %v2993 = vadd.f32 %v2885, %v2992
      %v2994 = vpop.f32.mrb[0].mxu0
      %2995 = vmatprep.mubr.f32.mxu0 0.0
      %2996 = vmatmul.mubr.f32.gmra.mrb[0].mxu0 %v2900
      %v2997 = vpop.f32.mrb[0].mxu0
      %v2998 = vadd.f32 %v2885, %v2997
      %v2999 = vpop.f32.mrb[0].mxu0
      %3000 = vmatprep.mubr.f32.mxu0 0.0
      %3001 = vmatmul.mubr.f32.gmra.mrb[0].mxu0 %v2903
      %v3002 = vpop.f32.mrb[0].mxu0
      %v3003 = vadd.f32 %v2885, %v3002
      %v3004 = vpop.f32.mrb[0].mxu0
      %3005 = vmatprep.mubr.f32.mxu0 0.0
      %3006 = vmatmul.mubr.f32.gmra.mrb[0].mxu0 %v2906
      %v3007 = vpop.f32.mrb[0].mxu0
      %v3008 = vadd.f32 %v2885, %v3007
      %v3009 = vpop.f32.mrb[0].mxu0
      %3010 = vmatprep.mubr.f32.mxu0 0.0
      %3011 = vmatmul.mubr.f32.gmra.mrb[0].mxu0 %v2909
      %v3012 = vpop.f32.mrb[0].mxu0
      %v3013 = vadd.f32 %v2885, %v3012
      %v3014 = vpop.f32.mrb[0].mxu0
      %3015 = vdwg.mxu0
      %v3016 = vmax.f32 %v2978, 0.0
      %v3017 = vmax.f32 %v2983, 0.0
      %v3018 = vmax.f32 %v2988, 0.0
      %v3019 = vmax.f32 %v2993, 0.0
      %v3020 = vmax.f32 %v2998, 0.0
      %v3021 = vmax.f32 %v3003, 0.0
      %v3022 = vmax.f32 %v3008, 0.0
      %v3023 = vmax.f32 %v3013, 0.0
      %v3024 = vld [vmem:[%s736] sm:$0xff]
      %v3025 = vld [vmem:[%s736 + $0x8] sm:$0xff]
      %v3026 = vld [vmem:[%s736 + $0x10] sm:$0xff]
      %v3027 = vld [vmem:[%s736 + $0x18] sm:$0xff]
      %v3028 = vld [vmem:[%s736 + $0x20] sm:$0xff]
      %v3029 = vld [vmem:[%s736 + $0x28] sm:$0xff]
      %v3030 = vld [vmem:[%s736 + $0x30] sm:$0xff]
      %v3031 = vld [vmem:[%s736 + $0x38] sm:$0xff]
      %v3032 = vld [vmem:[%s739] sm:$0x1]
      %v3034 = vlaneseq
      %v3035 = vshrl.u32 %v3034, 7
      %v3036 = vsub.s32 0, %v3035
      %v3037 = vrot.slane %v3032, %v3036
      %v3040 = vsel %vm862, %v3016, 0
      %v3043 = vsel %vm862, %v3017, 0
      %v3046 = vsel %vm862, %v3018, 0
      %v3049 = vsel %vm862, %v3019, 0
      %v3052 = vsel %vm862, %v3020, 0
      %v3055 = vsel %vm862, %v3021, 0
      %v3058 = vsel %vm862, %v3022, 0
      %v3061 = vsel %vm862, %v3023, 0
      %3063 = vmatprep.subr.mxu0 0.0
      %3064 = vmatpush1.msra.mxu0 %v3024
      %3065 = vmatprep.subr.mxu0 0.0
      %3066 = vmatpush1.msra.mxu0 %v3025
      %3067 = vmatprep.subr.mxu0 0.0
      %3068 = vmatpush1.msra.mxu0 %v3026
      %3069 = vmatprep.subr.mxu0 0.0
      %3070 = vmatpush1.msra.mxu0 %v3027
      %3071 = vmatprep.subr.mxu0 0.0
      %3072 = vmatpush1.msra.mxu0 %v3028
      %3073 = vmatprep.subr.mxu0 0.0
      %3074 = vmatpush1.msra.mxu0 %v3029
      %3075 = vmatprep.subr.mxu0 0.0
      %3076 = vmatpush1.msra.mxu0 %v3030
      %3077 = vmatprep.subr.mxu0 0.0
      %3078 = vmatpush1.msra.mxu0 %v3031
      %3079 = vmatprep.subr.mxu0 0.0
      %3080 = vmatpush1.msra.mxu0 0.0
      %3081 = vmatprep.subr.mxu0 0.0
      %3082 = vmatpush1.msra.mxu0 0.0
      %3083 = vmatprep.subr.mxu0 0.0
      %3084 = vmatpush1.msra.mxu0 0.0
      %3085 = vmatprep.subr.mxu0 0.0
      %3086 = vmatpush1.msra.mxu0 0.0
      %3087 = vmatprep.subr.mxu0 0.0
      %3088 = vmatpush1.msra.mxu0 0.0
      %3089 = vmatprep.subr.mxu0 0.0
      %3090 = vmatpush1.msra.mxu0 0.0
      %3091 = vmatprep.subr.mxu0 0.0
      %3092 = vmatpush1.msra.mxu0 0.0
      %3093 = vmatprep.subr.mxu0 0.0
      %3094 = vmatpush1.msra.mxu0 0.0
      %3095 = vmatprep.subr.mxu0 0.0
      %3096 = vmatpush1.msra.mxu0 0.0
      %3097 = vmatprep.subr.mxu0 0.0
      %3098 = vmatpush1.msra.mxu0 0.0
      %3099 = vmatprep.subr.mxu0 0.0
      %3100 = vmatpush1.msra.mxu0 0.0
      %3101 = vmatprep.subr.mxu0 0.0
      %3102 = vmatpush1.msra.mxu0 0.0
      %3103 = vmatprep.subr.mxu0 0.0
      %3104 = vmatpush1.msra.mxu0 0.0
      %3105 = vmatprep.subr.mxu0 0.0
      %3106 = vmatpush1.msra.mxu0 0.0
      %3107 = vmatprep.subr.mxu0 0.0
      %3108 = vmatpush1.msra.mxu0 0.0
      %3109 = vmatprep.subr.mxu0 0.0
      %3110 = vmatpush1.msra.mxu0 0.0
      %3111 = vmatprep.subr.mxu0 0.0
      %3112 = vmatpush1.msra.mxu0 0.0
      %3113 = vmatprep.subr.mxu0 0.0
      %3114 = vmatpush1.msra.mxu0 0.0
      %3115 = vmatprep.subr.mxu0 0.0
      %3116 = vmatpush1.msra.mxu0 0.0
      %3117 = vmatprep.subr.mxu0 0.0
      %3118 = vmatpush1.msra.mxu0 0.0
      %3119 = vmatprep.subr.mxu0 0.0
      %3120 = vmatpush1.msra.mxu0 0.0
      %3121 = vmatprep.subr.mxu0 0.0
      %3122 = vmatpush1.msra.mxu0 0.0
      %3123 = vmatprep.subr.mxu0 0.0
      %3124 = vmatpush1.msra.mxu0 0.0
      %3125 = vmatprep.subr.mxu0 0.0
      %3126 = vmatpush1.msra.mxu0 0.0
      %3127 = vmatprep.mubr.f32.mxu0 0.0
      %3128 = vmatmul.mubr.f32.gmra.mrb[0].mxu0 %v3040
      %v3129 = vpop.f32.mrb[0].mxu0
      %v3130 = vadd.f32 %v3037, %v3129
      %v3131 = vpop.f32.mrb[0].mxu0
      %3132 = vmatprep.mubr.f32.mxu0 0.0
      %3133 = vmatmul.mubr.f32.gmra.mrb[0].mxu0 %v3043
      %v3134 = vpop.f32.mrb[0].mxu0
      %v3135 = vadd.f32 %v3037, %v3134
      %v3136 = vpop.f32.mrb[0].mxu0
      %3137 = vmatprep.mubr.f32.mxu0 0.0
      %3138 = vmatmul.mubr.f32.gmra.mrb[0].mxu0 %v3046
      %v3139 = vpop.f32.mrb[0].mxu0
      %v3140 = vadd.f32 %v3037, %v3139
      %v3141 = vpop.f32.mrb[0].mxu0
      %3142 = vmatprep.mubr.f32.mxu0 0.0
      %3143 = vmatmul.mubr.f32.gmra.mrb[0].mxu0 %v3049
      %v3144 = vpop.f32.mrb[0].mxu0
      %v3145 = vadd.f32 %v3037, %v3144
      %v3146 = vpop.f32.mrb[0].mxu0
      %3147 = vmatprep.mubr.f32.mxu0 0.0
      %3148 = vmatmul.mubr.f32.gmra.mrb[0].mxu0 %v3052
      %v3149 = vpop.f32.mrb[0].mxu0
      %v3150 = vadd.f32 %v3037, %v3149
      %v3151 = vpop.f32.mrb[0].mxu0
      %3152 = vmatprep.mubr.f32.mxu0 0.0
      %3153 = vmatmul.mubr.f32.gmra.mrb[0].mxu0 %v3055
      %v3154 = vpop.f32.mrb[0].mxu0
      %v3155 = vadd.f32 %v3037, %v3154
      %v3156 = vpop.f32.mrb[0].mxu0
      %3157 = vmatprep.mubr.f32.mxu0 0.0
      %3158 = vmatmul.mubr.f32.gmra.mrb[0].mxu0 %v3058
      %v3159 = vpop.f32.mrb[0].mxu0
      %v3160 = vadd.f32 %v3037, %v3159
      %v3161 = vpop.f32.mrb[0].mxu0
      %3162 = vmatprep.mubr.f32.mxu0 0.0
      %3163 = vmatmul.mubr.f32.gmra.mrb[0].mxu0 %v3061
      %v3164 = vpop.f32.mrb[0].mxu0
      %v3165 = vadd.f32 %v3037, %v3164
      %v3166 = vpop.f32.mrb[0].mxu0
      %3167 = vdwg.mxu0
      %v3168 = vmul.f32 %v3130, 0.5
      %v3169 = vmul.f32 %v3135, 0.5
      %v3170 = vmul.f32 %v3140, 0.5
      %v3171 = vmul.f32 %v3145, 0.5
      %v3172 = vmul.f32 %v3150, 0.5
      %v3173 = vmul.f32 %v3155, 0.5
      %v3174 = vmul.f32 %v3160, 0.5
      %v3175 = vmul.f32 %v3165, 0.5
      %v3176 = vmul.f32 %v3130, 0.044715
      %v3177 = vmul.f32 %v3135, 0.044715
      %v3178 = vmul.f32 %v3140, 0.044715
      %v3179 = vmul.f32 %v3145, 0.044715
      %v3180 = vmul.f32 %v3150, 0.044715
      %v3181 = vmul.f32 %v3155, 0.044715
      %v3182 = vmul.f32 %v3160, 0.044715
      %v3183 = vmul.f32 %v3165, 0.044715
      %v3184 = vmul.f32 %v3176, %v3130
      %v3185 = vmul.f32 %v3177, %v3135
      %v3186 = vmul.f32 %v3178, %v3140
      %v3187 = vmul.f32 %v3179, %v3145
      %v3188 = vmul.f32 %v3180, %v3150
      %v3189 = vmul.f32 %v3181, %v3155
      %v3190 = vmul.f32 %v3182, %v3160
      %v3191 = vmul.f32 %v3183, %v3165
      %v3192 = vmul.f32 %v3184, %v3130
      %v3193 = vmul.f32 %v3185, %v3135
      %v3194 = vmul.f32 %v3186, %v3140
      %v3195 = vmul.f32 %v3187, %v3145
      %v3196 = vmul.f32 %v3188, %v3150
      %v3197 = vmul.f32 %v3189, %v3155
      %v3198 = vmul.f32 %v3190, %v3160
      %v3199 = vmul.f32 %v3191, %v3165
      %v3200 = vadd.f32 %v3130, %v3192
      %v3201 = vadd.f32 %v3135, %v3193
      %v3202 = vadd.f32 %v3140, %v3194
      %v3203 = vadd.f32 %v3145, %v3195
      %v3204 = vadd.f32 %v3150, %v3196
      %v3205 = vadd.f32 %v3155, %v3197
      %v3206 = vadd.f32 %v3160, %v3198
      %v3207 = vadd.f32 %v3165, %v3199
      %v3208 = vmul.f32 %v3200, 0.7978846
      %v3209 = vmul.f32 %v3201, 0.7978846
      %v3210 = vmul.f32 %v3202, 0.7978846
      %v3211 = vmul.f32 %v3203, 0.7978846
      %v3212 = vmul.f32 %v3204, 0.7978846
      %v3213 = vmul.f32 %v3205, 0.7978846
      %v3214 = vmul.f32 %v3206, 0.7978846
      %v3215 = vmul.f32 %v3207, 0.7978846
      %v3216 = vtanh.pop %v3208
      %v3217 = vtanh.pop %v3209
      %v3218 = vtanh.pop %v3210
      %v3219 = vtanh.pop %v3211
      %v3220 = vtanh.pop %v3212
      %v3221 = vtanh.pop %v3213
      %v3222 = vtanh.pop %v3214
      %v3223 = vtanh.pop %v3215
      %v3224 = vadd.f32 %v3216, 1.0
      %v3225 = vadd.f32 %v3217, 1.0
      %v3226 = vadd.f32 %v3218, 1.0
      %v3227 = vadd.f32 %v3219, 1.0
      %v3228 = vadd.f32 %v3220, 1.0
      %v3229 = vadd.f32 %v3221, 1.0
      %v3230 = vadd.f32 %v3222, 1.0
      %v3231 = vadd.f32 %v3223, 1.0
      %v3232 = vmul.f32 %v3168, %v3224
      %v3233 = vmul.f32 %v3169, %v3225
      %v3234 = vmul.f32 %v3170, %v3226
      %v3235 = vmul.f32 %v3171, %v3227
      %v3236 = vmul.f32 %v3172, %v3228
      %v3237 = vmul.f32 %v3173, %v3229
      %v3238 = vmul.f32 %v3174, %v3230
      %v3239 = vmul.f32 %v3175, %v3231
      %3240 = vst.msk [vmem:[#allocation2] sm:$0xff] %vm862, %v3232
      %3241 = vst.msk [vmem:[#allocation2 + $0x8] sm:$0xff] %vm862, %v3233
      %3242 = vst.msk [vmem:[#allocation2 + $0x10] sm:$0xff] %vm862, %v3234
      %3243 = vst.msk [vmem:[#allocation2 + $0x18] sm:$0xff] %vm862, %v3235
      %3244 = vst.msk [vmem:[#allocation2 + $0x20] sm:$0xff] %vm862, %v3236
      %3245 = vst.msk [vmem:[#allocation2 + $0x28] sm:$0xff] %vm862, %v3237
      %3246 = vst.msk [vmem:[#allocation2 + $0x30] sm:$0xff] %vm862, %v3238
      %3247 = vst.msk [vmem:[#allocation2 + $0x38] sm:$0xff] %vm862, %v3239
      %p3248 = scmp.eq.s32.totalorder %s31, 1
      // Predicated region
      $region105: #{qagnn_decoder_forward.11} parent=99 // pred_check
        %p3249 = pneg %p3248
      $region106: #{qagnn_decoder_forward.11} parent=99 // pred_check_branch
        %3251 = sbr.rel (%p3249) target = $region108
      $region107: #{qagnn_decoder_forward.11} parent=99 // pred_region
        %v3252 = vld [vmem:[%s0] sm:$0xff]
        %v3253 = vld [vmem:[%s0 + $0x8] sm:$0xff]
        %v3254 = vld [vmem:[%s0 + $0x10] sm:$0xff]
        %v3255 = vld [vmem:[%s0 + $0x18] sm:$0xff]
        %v3256 = vld [vmem:[%s0 + $0x20] sm:$0xff]
        %v3257 = vld [vmem:[%s0 + $0x28] sm:$0xff]
        %v3258 = vld [vmem:[%s0 + $0x30] sm:$0xff]
        %v3259 = vld [vmem:[%s0 + $0x38] sm:$0xff]
        %v3260 = vld [vmem:[%s16] sm:$0xff]
        %v3261 = vld [vmem:[%s16 + $0x8] sm:$0xff]
        %v3262 = vld [vmem:[%s16 + $0x10] sm:$0xff]
        %v3263 = vld [vmem:[%s16 + $0x18] sm:$0xff]
        %v3264 = vld [vmem:[%s16 + $0x20] sm:$0xff]
        %v3265 = vld [vmem:[%s16 + $0x28] sm:$0xff]
        %v3266 = vld [vmem:[%s16 + $0x30] sm:$0xff]
        %v3267 = vld [vmem:[%s16 + $0x38] sm:$0xff]
        %v3268 = vld [vmem:[%s17] sm:$0x1]
        %v3270 = vlaneseq
        %v3271 = vshrl.u32 %v3270, 7
        %v3272 = vsub.s32 0, %v3271
        %v3273 = vrot.slane %v3268, %v3272
        %v3276 = vsel %vm862, %v3252, 0
        %v3279 = vsel %vm862, %v3253, 0
        %v3282 = vsel %vm862, %v3254, 0
        %v3285 = vsel %vm862, %v3255, 0
        %v3288 = vsel %vm862, %v3256, 0
        %v3291 = vsel %vm862, %v3257, 0
        %v3294 = vsel %vm862, %v3258, 0
        %v3297 = vsel %vm862, %v3259, 0
        %3299 = vmatprep.subr.mxu0 0.0
        %3300 = vmatpush1.msra.mxu0 %v3260
        %3301 = vmatprep.subr.mxu0 0.0
        %3302 = vmatpush1.msra.mxu0 %v3261
        %3303 = vmatprep.subr.mxu0 0.0
        %3304 = vmatpush1.msra.mxu0 %v3262
        %3305 = vmatprep.subr.mxu0 0.0
        %3306 = vmatpush1.msra.mxu0 %v3263
        %3307 = vmatprep.subr.mxu0 0.0
        %3308 = vmatpush1.msra.mxu0 %v3264
        %3309 = vmatprep.subr.mxu0 0.0
        %3310 = vmatpush1.msra.mxu0 %v3265
        %3311 = vmatprep.subr.mxu0 0.0
        %3312 = vmatpush1.msra.mxu0 %v3266
        %3313 = vmatprep.subr.mxu0 0.0
        %3314 = vmatpush1.msra.mxu0 %v3267
        %3315 = vmatprep.subr.mxu0 0.0
        %3316 = vmatpush1.msra.mxu0 0.0
        %3317 = vmatprep.subr.mxu0 0.0
        %3318 = vmatpush1.msra.mxu0 0.0
        %3319 = vmatprep.subr.mxu0 0.0
        %3320 = vmatpush1.msra.mxu0 0.0
        %3321 = vmatprep.subr.mxu0 0.0
        %3322 = vmatpush1.msra.mxu0 0.0
        %3323 = vmatprep.subr.mxu0 0.0
        %3324 = vmatpush1.msra.mxu0 0.0
        %3325 = vmatprep.subr.mxu0 0.0
        %3326 = vmatpush1.msra.mxu0 0.0
        %3327 = vmatprep.subr.mxu0 0.0
        %3328 = vmatpush1.msra.mxu0 0.0
        %3329 = vmatprep.subr.mxu0 0.0
        %3330 = vmatpush1.msra.mxu0 0.0
        %3331 = vmatprep.subr.mxu0 0.0
        %3332 = vmatpush1.msra.mxu0 0.0
        %3333 = vmatprep.subr.mxu0 0.0
        %3334 = vmatpush1.msra.mxu0 0.0
        %3335 = vmatprep.subr.mxu0 0.0
        %3336 = vmatpush1.msra.mxu0 0.0
        %3337 = vmatprep.subr.mxu0 0.0
        %3338 = vmatpush1.msra.mxu0 0.0
        %3339 = vmatprep.subr.mxu0 0.0
        %3340 = vmatpush1.msra.mxu0 0.0
        %3341 = vmatprep.subr.mxu0 0.0
        %3342 = vmatpush1.msra.mxu0 0.0
        %3343 = vmatprep.subr.mxu0 0.0
        %3344 = vmatpush1.msra.mxu0 0.0
        %3345 = vmatprep.subr.mxu0 0.0
        %3346 = vmatpush1.msra.mxu0 0.0
        %3347 = vmatprep.subr.mxu0 0.0
        %3348 = vmatpush1.msra.mxu0 0.0
        %3349 = vmatprep.subr.mxu0 0.0
        %3350 = vmatpush1.msra.mxu0 0.0
        %3351 = vmatprep.subr.mxu0 0.0
        %3352 = vmatpush1.msra.mxu0 0.0
        %3353 = vmatprep.subr.mxu0 0.0
        %3354 = vmatpush1.msra.mxu0 0.0
        %3355 = vmatprep.subr.mxu0 0.0
        %3356 = vmatpush1.msra.mxu0 0.0
        %3357 = vmatprep.subr.mxu0 0.0
        %3358 = vmatpush1.msra.mxu0 0.0
        %3359 = vmatprep.subr.mxu0 0.0
        %3360 = vmatpush1.msra.mxu0 0.0
        %3361 = vmatprep.subr.mxu0 0.0
        %3362 = vmatpush1.msra.mxu0 0.0
        %3363 = vmatprep.mubr.f32.mxu0 0.0
        %3364 = vmatmul.mubr.f32.gmra.mrb[0].mxu0 %v3276
        %v3365 = vpop.f32.mrb[0].mxu0
        %v3366 = vadd.f32 %v3273, %v3365
        %v3367 = vpop.f32.mrb[0].mxu0
        %3368 = vmatprep.mubr.f32.mxu0 0.0
        %3369 = vmatmul.mubr.f32.gmra.mrb[0].mxu0 %v3279
        %v3370 = vpop.f32.mrb[0].mxu0
        %v3371 = vadd.f32 %v3273, %v3370
        %v3372 = vpop.f32.mrb[0].mxu0
        %3373 = vmatprep.mubr.f32.mxu0 0.0
        %3374 = vmatmul.mubr.f32.gmra.mrb[0].mxu0 %v3282
        %v3375 = vpop.f32.mrb[0].mxu0
        %v3376 = vadd.f32 %v3273, %v3375
        %v3377 = vpop.f32.mrb[0].mxu0
        %3378 = vmatprep.mubr.f32.mxu0 0.0
        %3379 = vmatmul.mubr.f32.gmra.mrb[0].mxu0 %v3285
        %v3380 = vpop.f32.mrb[0].mxu0
        %v3381 = vadd.f32 %v3273, %v3380
        %v3382 = vpop.f32.mrb[0].mxu0
        %3383 = vmatprep.mubr.f32.mxu0 0.0
        %3384 = vmatmul.mubr.f32.gmra.mrb[0].mxu0 %v3288
        %v3385 = vpop.f32.mrb[0].mxu0
        %v3386 = vadd.f32 %v3273, %v3385
        %v3387 = vpop.f32.mrb[0].mxu0
        %3388 = vmatprep.mubr.f32.mxu0 0.0
        %3389 = vmatmul.mubr.f32.gmra.mrb[0].mxu0 %v3291
        %v3390 = vpop.f32.mrb[0].mxu0
        %v3391 = vadd.f32 %v3273, %v3390
        %v3392 = vpop.f32.mrb[0].mxu0
        %3393 = vmatprep.mubr.f32.mxu0 0.0
        %3394 = vmatmul.mubr.f32.gmra.mrb[0].mxu0 %v3294
        %v3395 = vpop.f32.mrb[0].mxu0
        %v3396 = vadd.f32 %v3273, %v3395
        %v3397 = vpop.f32.mrb[0].mxu0
        %3398 = vmatprep.mubr.f32.mxu0 0.0
        %3399 = vmatmul.mubr.f32.gmra.mrb[0].mxu0 %v3297
        %v3400 = vpop.f32.mrb[0].mxu0
        %v3401 = vadd.f32 %v3273, %v3400
        %v3402 = vpop.f32.mrb[0].mxu0
        %3403 = vdwg.mxu0
        %v3404 = vld [vmem:[%s18] sm:$0xff]
        %v3405 = vld [vmem:[%s18 + $0x8] sm:$0xff]
        %v3406 = vld [vmem:[%s18 + $0x10] sm:$0xff]
        %v3407 = vld [vmem:[%s18 + $0x18] sm:$0xff]
        %v3408 = vld [vmem:[%s18 + $0x20] sm:$0xff]
        %v3409 = vld [vmem:[%s18 + $0x28] sm:$0xff]
        %v3410 = vld [vmem:[%s18 + $0x30] sm:$0xff]
        %v3411 = vld [vmem:[%s18 + $0x38] sm:$0xff]
        %v3413 = vsel %vm862, %v3232, 0
        %v3416 = vsel %vm862, %v3233, 0
        %v3419 = vsel %vm862, %v3234, 0
        %v3422 = vsel %vm862, %v3235, 0
        %v3425 = vsel %vm862, %v3236, 0
        %v3428 = vsel %vm862, %v3237, 0
        %v3431 = vsel %vm862, %v3238, 0
        %v3434 = vsel %vm862, %v3239, 0
        %3436 = vmatprep.subr.mxu0 0.0
        %3437 = vmatpush1.msra.mxu0 %v3404
        %3438 = vmatprep.subr.mxu0 0.0
        %3439 = vmatpush1.msra.mxu0 %v3405
        %3440 = vmatprep.subr.mxu0 0.0
        %3441 = vmatpush1.msra.mxu0 %v3406
        %3442 = vmatprep.subr.mxu0 0.0
        %3443 = vmatpush1.msra.mxu0 %v3407
        %3444 = vmatprep.subr.mxu0 0.0
        %3445 = vmatpush1.msra.mxu0 %v3408
        %3446 = vmatprep.subr.mxu0 0.0
        %3447 = vmatpush1.msra.mxu0 %v3409
        %3448 = vmatprep.subr.mxu0 0.0
        %3449 = vmatpush1.msra.mxu0 %v3410
        %3450 = vmatprep.subr.mxu0 0.0
        %3451 = vmatpush1.msra.mxu0 %v3411
        %3452 = vmatprep.subr.mxu0 0.0
        %3453 = vmatpush1.msra.mxu0 0.0
        %3454 = vmatprep.subr.mxu0 0.0
        %3455 = vmatpush1.msra.mxu0 0.0
        %3456 = vmatprep.subr.mxu0 0.0
        %3457 = vmatpush1.msra.mxu0 0.0
        %3458 = vmatprep.subr.mxu0 0.0
        %3459 = vmatpush1.msra.mxu0 0.0
        %3460 = vmatprep.subr.mxu0 0.0
        %3461 = vmatpush1.msra.mxu0 0.0
        %3462 = vmatprep.subr.mxu0 0.0
        %3463 = vmatpush1.msra.mxu0 0.0
        %3464 = vmatprep.subr.mxu0 0.0
        %3465 = vmatpush1.msra.mxu0 0.0
        %3466 = vmatprep.subr.mxu0 0.0
        %3467 = vmatpush1.msra.mxu0 0.0
        %3468 = vmatprep.subr.mxu0 0.0
        %3469 = vmatpush1.msra.mxu0 0.0
        %3470 = vmatprep.subr.mxu0 0.0
        %3471 = vmatpush1.msra.mxu0 0.0
        %3472 = vmatprep.subr.mxu0 0.0
        %3473 = vmatpush1.msra.mxu0 0.0
        %3474 = vmatprep.subr.mxu0 0.0
        %3475 = vmatpush1.msra.mxu0 0.0
        %3476 = vmatprep.subr.mxu0 0.0
        %3477 = vmatpush1.msra.mxu0 0.0
        %3478 = vmatprep.subr.mxu0 0.0
        %3479 = vmatpush1.msra.mxu0 0.0
        %3480 = vmatprep.subr.mxu0 0.0
        %3481 = vmatpush1.msra.mxu0 0.0
        %3482 = vmatprep.subr.mxu0 0.0
        %3483 = vmatpush1.msra.mxu0 0.0
        %3484 = vmatprep.subr.mxu0 0.0
        %3485 = vmatpush1.msra.mxu0 0.0
        %3486 = vmatprep.subr.mxu0 0.0
        %3487 = vmatpush1.msra.mxu0 0.0
        %3488 = vmatprep.subr.mxu0 0.0
        %3489 = vmatpush1.msra.mxu0 0.0
        %3490 = vmatprep.subr.mxu0 0.0
        %3491 = vmatpush1.msra.mxu0 0.0
        %3492 = vmatprep.subr.mxu0 0.0
        %3493 = vmatpush1.msra.mxu0 0.0
        %3494 = vmatprep.subr.mxu0 0.0
        %3495 = vmatpush1.msra.mxu0 0.0
        %3496 = vmatprep.subr.mxu0 0.0
        %3497 = vmatpush1.msra.mxu0 0.0
        %3498 = vmatprep.subr.mxu0 0.0
        %3499 = vmatpush1.msra.mxu0 0.0
        %3500 = vmatprep.mubr.f32.mxu0 0.0
        %3501 = vmatmul.mubr.f32.gmra.mrb[0].mxu0 %v3413
        %v3502 = vpop.f32.mrb[0].mxu0
        %v3503 = vadd.f32 0.0, %v3502
        %v3504 = vpop.f32.mrb[0].mxu0
        %3505 = vmatprep.mubr.f32.mxu0 0.0
        %3506 = vmatmul.mubr.f32.gmra.mrb[0].mxu0 %v3416
        %v3507 = vpop.f32.mrb[0].mxu0
        %v3508 = vadd.f32 0.0, %v3507
        %v3509 = vpop.f32.mrb[0].mxu0
        %3510 = vmatprep.mubr.f32.mxu0 0.0
        %3511 = vmatmul.mubr.f32.gmra.mrb[0].mxu0 %v3419
        %v3512 = vpop.f32.mrb[0].mxu0
        %v3513 = vadd.f32 0.0, %v3512
        %v3514 = vpop.f32.mrb[0].mxu0
        %3515 = vmatprep.mubr.f32.mxu0 0.0
        %3516 = vmatmul.mubr.f32.gmra.mrb[0].mxu0 %v3422
        %v3517 = vpop.f32.mrb[0].mxu0
        %v3518 = vadd.f32 0.0, %v3517
        %v3519 = vpop.f32.mrb[0].mxu0
        %3520 = vmatprep.mubr.f32.mxu0 0.0
        %3521 = vmatmul.mubr.f32.gmra.mrb[0].mxu0 %v3425
        %v3522 = vpop.f32.mrb[0].mxu0
        %v3523 = vadd.f32 0.0, %v3522
        %v3524 = vpop.f32.mrb[0].mxu0
        %3525 = vmatprep.mubr.f32.mxu0 0.0
        %3526 = vmatmul.mubr.f32.gmra.mrb[0].mxu0 %v3428
        %v3527 = vpop.f32.mrb[0].mxu0
        %v3528 = vadd.f32 0.0, %v3527
        %v3529 = vpop.f32.mrb[0].mxu0
        %3530 = vmatprep.mubr.f32.mxu0 0.0
        %3531 = vmatmul.mubr.f32.gmra.mrb[0].mxu0 %v3431
        %v3532 = vpop.f32.mrb[0].mxu0
        %v3533 = vadd.f32 0.0, %v3532
        %v3534 = vpop.f32.mrb[0].mxu0
        %3535 = vmatprep.mubr.f32.mxu0 0.0
        %3536 = vmatmul.mubr.f32.gmra.mrb[0].mxu0 %v3434
        %v3537 = vpop.f32.mrb[0].mxu0
        %v3538 = vadd.f32 0.0, %v3537
        %v3539 = vpop.f32.mrb[0].mxu0
        %3540 = vdwg.mxu0
        %v3541 = vadd.f32 %v3366, %v3503
        %v3542 = vadd.f32 %v3371, %v3508
        %v3543 = vadd.f32 %v3376, %v3513
        %v3544 = vadd.f32 %v3381, %v3518
        %v3545 = vadd.f32 %v3386, %v3523
        %v3546 = vadd.f32 %v3391, %v3528
        %v3547 = vadd.f32 %v3396, %v3533
        %v3548 = vadd.f32 %v3401, %v3538
        %v3549 = vld [vmem:[%s19] sm:$0x1]
        %v3551 = vlaneseq
        %v3552 = vshrl.u32 %v3551, 7
        %v3553 = vsub.s32 0, %v3552
        %v3554 = vrot.slane %v3549, %v3553
        %v3556 = vadd.f32 %v3541, %v3554
        %v3557 = vadd.f32 %v3542, %v3554
        %v3558 = vadd.f32 %v3543, %v3554
        %v3559 = vadd.f32 %v3544, %v3554
        %v3560 = vadd.f32 %v3545, %v3554
        %v3561 = vadd.f32 %v3546, %v3554
        %v3562 = vadd.f32 %v3547, %v3554
        %v3563 = vadd.f32 %v3548, %v3554
        %v3564 = vmul.f32 %v3556, 0.5
        %v3565 = vmul.f32 %v3557, 0.5
        %v3566 = vmul.f32 %v3558, 0.5
        %v3567 = vmul.f32 %v3559, 0.5
        %v3568 = vmul.f32 %v3560, 0.5
        %v3569 = vmul.f32 %v3561, 0.5
        %v3570 = vmul.f32 %v3562, 0.5
        %v3571 = vmul.f32 %v3563, 0.5
        %v3572 = vmul.f32 %v3556, 0.044715
        %v3573 = vmul.f32 %v3557, 0.044715
        %v3574 = vmul.f32 %v3558, 0.044715
        %v3575 = vmul.f32 %v3559, 0.044715
        %v3576 = vmul.f32 %v3560, 0.044715
        %v3577 = vmul.f32 %v3561, 0.044715
        %v3578 = vmul.f32 %v3562, 0.044715
        %v3579 = vmul.f32 %v3563, 0.044715
        %v3580 = vmul.f32 %v3572, %v3556
        %v3581 = vmul.f32 %v3573, %v3557
        %v3582 = vmul.f32 %v3574, %v3558
        %v3583 = vmul.f32 %v3575, %v3559
        %v3584 = vmul.f32 %v3576, %v3560
        %v3585 = vmul.f32 %v3577, %v3561
        %v3586 = vmul.f32 %v3578, %v3562
        %v3587 = vmul.f32 %v3579, %v3563
        %v3588 = vmul.f32 %v3580, %v3556
        %v3589 = vmul.f32 %v3581, %v3557
        %v3590 = vmul.f32 %v3582, %v3558
        %v3591 = vmul.f32 %v3583, %v3559
        %v3592 = vmul.f32 %v3584, %v3560
        %v3593 = vmul.f32 %v3585, %v3561
        %v3594 = vmul.f32 %v3586, %v3562
        %v3595 = vmul.f32 %v3587, %v3563
        %v3596 = vadd.f32 %v3556, %v3588
        %v3597 = vadd.f32 %v3557, %v3589
        %v3598 = vadd.f32 %v3558, %v3590
        %v3599 = vadd.f32 %v3559, %v3591
        %v3600 = vadd.f32 %v3560, %v3592
        %v3601 = vadd.f32 %v3561, %v3593
        %v3602 = vadd.f32 %v3562, %v3594
        %v3603 = vadd.f32 %v3563, %v3595
        %v3604 = vmul.f32 %v3596, 0.7978846
        %v3605 = vmul.f32 %v3597, 0.7978846
        %v3606 = vmul.f32 %v3598, 0.7978846
        %v3607 = vmul.f32 %v3599, 0.7978846
        %v3608 = vmul.f32 %v3600, 0.7978846
        %v3609 = vmul.f32 %v3601, 0.7978846
        %v3610 = vmul.f32 %v3602, 0.7978846
        %v3611 = vmul.f32 %v3603, 0.7978846
        %v3612 = vtanh.pop %v3604
        %v3613 = vtanh.pop %v3605
        %v3614 = vtanh.pop %v3606
        %v3615 = vtanh.pop %v3607
        %v3616 = vtanh.pop %v3608
        %v3617 = vtanh.pop %v3609
        %v3618 = vtanh.pop %v3610
        %v3619 = vtanh.pop %v3611
        %v3620 = vadd.f32 %v3612, 1.0
        %v3621 = vadd.f32 %v3613, 1.0
        %v3622 = vadd.f32 %v3614, 1.0
        %v3623 = vadd.f32 %v3615, 1.0
        %v3624 = vadd.f32 %v3616, 1.0
        %v3625 = vadd.f32 %v3617, 1.0
        %v3626 = vadd.f32 %v3618, 1.0
        %v3627 = vadd.f32 %v3619, 1.0
        %v3628 = vmul.f32 %v3564, %v3620
        %v3629 = vmul.f32 %v3565, %v3621
        %v3630 = vmul.f32 %v3566, %v3622
        %v3631 = vmul.f32 %v3567, %v3623
        %v3632 = vmul.f32 %v3568, %v3624
        %v3633 = vmul.f32 %v3569, %v3625
        %v3634 = vmul.f32 %v3570, %v3626
        %v3635 = vmul.f32 %v3571, %v3627
        %3636 = vst.msk [vmem:[%s20] sm:$0xff] %vm862, %v3628
        %3637 = vst.msk [vmem:[%s20 + $0x8] sm:$0xff] %vm862, %v3629
        %3638 = vst.msk [vmem:[%s20 + $0x10] sm:$0xff] %vm862, %v3630
        %3639 = vst.msk [vmem:[%s20 + $0x18] sm:$0xff] %vm862, %v3631
        %3640 = vst.msk [vmem:[%s20 + $0x20] sm:$0xff] %vm862, %v3632
        %3641 = vst.msk [vmem:[%s20 + $0x28] sm:$0xff] %vm862, %v3633
        %3642 = vst.msk [vmem:[%s20 + $0x30] sm:$0xff] %vm862, %v3634
        %3643 = vst.msk [vmem:[%s20 + $0x38] sm:$0xff] %vm862, %v3635
      $region108: #{qagnn_decoder_forward.11} parent=99 // pred_fallthru
        _
      // Predicated region
      $region109: #{qagnn_decoder_forward.11} parent=99 // pred_check
        %p3644 = pneg %p504
      $region110: #{qagnn_decoder_forward.11} parent=99 // pred_check_branch
        %3646 = sbr.rel (%p3644) target = $region112
      $region111: #{qagnn_decoder_forward.11} parent=99 // pred_region
        _
      $region112: #{qagnn_decoder_forward.11} parent=99 // pred_fallthru
        _
      // Predicated region
      $region113: #{qagnn_decoder_forward.11} parent=99 // pred_check
        %p3647 = pneg %p504
      $region114: #{qagnn_decoder_forward.11} parent=99 // pred_check_branch
        %3649 = sbr.rel (%p3647) target = $region116
      $region115: #{qagnn_decoder_forward.11} parent=99 // pred_region
        _
      $region116: #{qagnn_decoder_forward.11} parent=99 // pred_fallthru
        _
    $region100: #{qagnn_decoder_forward.11} parent=5 // pred_fallthru
      _
    %p3650 = scmp.le.s32.totalorder 2, %s26
    // Predicated region
    $region117: #{qagnn_decoder_forward.11} parent=5 // pred_check
      %p3651 = pneg %p3650
    $region118: #{qagnn_decoder_forward.11} parent=5 // pred_check_branch
      %3653 = sbr.rel (%p3651) target = $region120
    $region119: #{qagnn_decoder_forward.11} parent=5 // pred_region
      %s3654 = ssub.s32 %s26, 2
    $region120: #{qagnn_decoder_forward.11} parent=5 // pred_fallthru
      _
  $region6: #{qagnn_decoder_forward.11} parent=0 // loop_footer
    %s30 = sadd.s32 1, %s26
  $region7: #{qagnn_decoder_forward.11} parent=0 // loop_footer_branch
    %25 = sbr.rel target = $region3
  $region8: #{qagnn_decoder_forward.11} parent=0 // loop_exit
    _

</llo_original>
